<compile_context>
chip_gen: v6e
topology: v6e:2x2x1
jax: 0.10.0
libtpu: 0.0.40
codegen_flags: <defaults>
</compile_context>

<pallas_src>
import jax
import jax.numpy as jnp
from jax.experimental import pallas as pl
from jax.experimental.pallas import tpu as pltpu


RB1 = 8    # conv1 output rows computed per inner block
RB2 = 8    # conv2 output rows computed per inner block
PADW = 8   # sublane-tile-aligned left pad of the pooled-conv1 scratch


# ----------------------------------------------------------------------------
# Kernel 1: fused conv1(3x3,pad=1)+ReLU+pool2  ->  conv2(3x3,pad=1)+ReLU+pool2
# for one batch element.  conv1 input arrives pre-im2col'd: (H, W, 27).
# ----------------------------------------------------------------------------
def conv_stack_kernel(xcol_ref, w1_ref, b1_ref, w2_ref, b2_ref, o_ref,
                      p1_scr, r1_scr, r2_scr):
    H1, W1, K1 = xcol_ref.shape         # 64, 64, 27
    C1 = w1_ref.shape[1]                # 32
    C2 = w2_ref.shape[2]                # 64
    H2, W2 = H1 // 2, W1 // 2           # 32, 32  (conv2 spatial size)
    Hp, Wp = H2 + 2, W2 + 2 * PADW      # padded pool1 scratch extents

    # conv1's pooled output lives at rows [1, H2], cols [PADW, PADW+W2) of
    # p1_scr; the zeroed halo IS conv2's 'same' padding.  Zero ONLY the halo
    # actually read by conv2 (rows 0 / H2+1, cols PADW-1 / PADW+W2); the
    # interior is fully overwritten below.  Done every grid step because the
    # scratch persists across grid iterations.
    zrow = jnp.zeros((1, Wp, C1), p1_scr.dtype)
    zcol = jnp.zeros((Hp, 1, C1), p1_scr.dtype)
    p1_scr[pl.ds(0, 1), :, :] = zrow
    p1_scr[pl.ds(H2 + 1, 1), :, :] = zrow
    p1_scr[:, pl.ds(PADW - 1, 1), :] = zcol
    p1_scr[:, pl.ds(PADW + W2, 1), :] = zcol

    # Loop-invariant operands hoisted out of the row-block loops.
    w1 = w1_ref[...]                    # (27, C1) bf16
    b1 = b1_ref[...]                    # (1, C1)  f32
    b2 = b2_ref[...]                    # (1, C2)  f32

    # ---- conv1: single K=27 bf16 matmul per RB1-row block, f32 epilogue ----
    def conv1_body(i, carry):
        r0 = pl.multiple_of(i * RB1, RB1)
        patch = xcol_ref[pl.ds(r0, RB1), :, :].reshape(RB1 * W1, K1)
        y = jnp.dot(patch, w1, preferred_element_type=jnp.float32)
        y = jnp.maximum(y + b1, 0.0)                          # bias + ReLU (f32)
        y = y.reshape(RB1 // 2, 2, W1, C1)
        r1_scr[...] = jnp.maximum(y[:, 0], y[:, 1])           # max-pool H pairs
        p1_scr[pl.ds(1 + i * (RB1 // 2), RB1 // 2),
               pl.ds(PADW, W2), :] = jnp.maximum(             # max-pool W pairs
            r1_scr[:, pl.ds(0, W2, stride=2), :],
            r1_scr[:, pl.ds(1, W2, stride=2), :]).astype(p1_scr.dtype)
        return carry

    jax.lax.fori_loop(0, H1 // RB1, conv1_body, 0)

    # ---- conv2: 9 taps (K=32) accumulated per RB2-row block, f32 epilogue --
    def conv2_body(i, carry):
        r0 = pl.multiple_of(i * RB2, RB2)
        acc = jnp.zeros((RB2 * W2, C2), jnp.float32)
        for kh in range(3):
            for kw in range(3):
                patch = p1_scr[pl.ds(r0 + kh, RB2),
                               pl.ds(PADW - 1 + kw, W2), :].reshape(RB2 * W2, C1)
                acc = acc + jnp.dot(patch, w2_ref[kh * 3 + kw],
                                    preferred_element_type=jnp.float32)
        y = jnp.maximum(acc + b2, 0.0)                        # bias + ReLU (f32)
        y = y.reshape(RB2 // 2, 2, W2, C2)
        r2_scr[...] = jnp.maximum(y[:, 0], y[:, 1])           # max-pool H pairs
        o_ref[pl.ds(i * (RB2 // 2), RB2 // 2), :, :] = (      # max-pool W pairs
            jnp.maximum(r2_scr[:, pl.ds(0, W2 // 2, stride=2), :],
                        r2_scr[:, pl.ds(1, W2 // 2, stride=2), :])
            .astype(o_ref.dtype))
        return carry

    jax.lax.fori_loop(0, H2 // RB2, conv2_body, 0)


def conv_stack(xcol, w1r, b1, w2r, b2):
    B, H1, W1, K1 = xcol.shape
    C1 = w1r.shape[1]
    C2 = w2r.shape[2]
    H2, W2 = H1 // 2, W1 // 2
    Ho, Wo = H1 // 4, W1 // 4
    return pl.pallas_call(
        conv_stack_kernel,
        out_shape=jax.ShapeDtypeStruct((B, Ho, Wo, C2), jnp.bfloat16),
        grid=(B,),
        in_specs=[
            pl.BlockSpec((pl.Squeezed(), H1, W1, K1), lambda b: (b, 0, 0, 0)),
            pl.BlockSpec((K1, C1), lambda b: (0, 0)),
            pl.BlockSpec((1, C1), lambda b: (0, 0)),
            pl.BlockSpec((9, C1, C2), lambda b: (0, 0, 0)),
            pl.BlockSpec((1, C2), lambda b: (0, 0)),
        ],
        out_specs=pl.BlockSpec((pl.Squeezed(), Ho, Wo, C2),
                               lambda b: (b, 0, 0, 0)),
        scratch_shapes=[
            pltpu.VMEM((H2 + 2, W2 + 2 * PADW, C1), jnp.bfloat16),  # padded pool1
            pltpu.VMEM((RB1 // 2, W1, C1), jnp.float32),            # conv1 H-pooled
            pltpu.VMEM((RB2 // 2, W2, C2), jnp.float32),            # conv2 H-pooled
        ],
        compiler_params=pltpu.CompilerParams(
            dimension_semantics=("parallel",)),
    )(xcol, w1r, b1.reshape(1, -1), w2r, b2.reshape(1, -1))


# ----------------------------------------------------------------------------
# Kernel 2: K-tiled Linear(16384->128) + ReLU + Linear(128->2) + LogSoftmax.
# The big fc1 weight streams through VMEM in (tk,128) bf16 tiles (2 grid steps).
# ----------------------------------------------------------------------------
def fc_head_kernel(x_ref, w1_ref, b1_ref, w2_ref, b2_ref, o_ref, acc_ref):
    k = pl.program_id(0)

    @pl.when(k == 0)
    def _():
        acc_ref[...] = jnp.zeros_like(acc_ref)

    acc_ref[...] += jnp.dot(x_ref[...], w1_ref[...],
                            preferred_element_type=jnp.float32)

    @pl.when(k == pl.num_programs(0) - 1)
    def _():
        h = jnp.maximum(acc_ref[...] + b1_ref[...], 0.0)            # f32
        logits = jnp.dot(h, w2_ref[...].astype(jnp.float32),
                         preferred_element_type=jnp.float32) + b2_ref[...]
        m = jnp.max(logits, axis=1, keepdims=True)
        z = logits - m
        o_ref[...] = z - jnp.log(jnp.sum(jnp.exp(z), axis=1, keepdims=True))


def fc_head(x, w1, b1, w2, b2, *, tk=8192):
    B, K = x.shape
    F = w1.shape[1]
    n_cls = w2.shape[1]
    assert K % tk == 0
    nk = K // tk
    return pl.pallas_call(
        fc_head_kernel,
        out_shape=jax.ShapeDtypeStruct((B, n_cls), jnp.float32),
        grid=(nk,),
        in_specs=[
            pl.BlockSpec((B, tk), lambda k: (0, k)),
            pl.BlockSpec((tk, F), lambda k: (k, 0)),
            pl.BlockSpec((1, F), lambda k: (0, 0)),
            pl.BlockSpec((F, n_cls), lambda k: (0, 0)),
            pl.BlockSpec((1, n_cls), lambda k: (0, 0)),
        ],
        out_specs=pl.BlockSpec((B, n_cls), lambda k: (0, 0)),
        scratch_shapes=[pltpu.VMEM((B, F), jnp.float32)],
        compiler_params=pltpu.CompilerParams(
            dimension_semantics=("arbitrary",)),
    )(x, w1, b1.reshape(1, -1), w2, b2.reshape(1, -1))


# ----------------------------------------------------------------------------
# Wrapper glue (layout plumbing only).
# ----------------------------------------------------------------------------
def im2col_3x3_same(x):            # (B, H, W, C) -> (B, H, W, 9*C), zero padded
    B, H, W, C = x.shape
    xp = jnp.pad(x, ((0, 0), (1, 1), (1, 1), (0, 0)))
    cols = [xp[:, kh:kh + H, kw:kw + W, :] for kh in range(3) for kw in range(3)]
    return jnp.concatenate(cols, axis=-1)


def prepare_params(p):
    # bf16 weights (f32 biases), kernel-friendly shapes, and fw1 rows permuted
    # from PyTorch's CHW flatten order to the kernel's HWC flatten order.
    Cf, Hf, Wf = 64, 16, 16
    fw1 = (p["fw1"].reshape(Cf, Hf, Wf, -1)
           .transpose(1, 2, 0, 3).reshape(Cf * Hf * Wf, -1))
    return {
        "w1r": p["w1"].reshape(27, 32).astype(jnp.bfloat16),
        "b1": p["b1"].astype(jnp.float32),
        "w2r": p["w2"].reshape(9, 32, 64).astype(jnp.bfloat16),
        "b2": p["b2"].astype(jnp.float32),
        "fw1": fw1.astype(jnp.bfloat16),
        "fb1": p["fb1"].astype(jnp.float32),
        "fw2": p["fw2"].astype(jnp.bfloat16),
        "fb2": p["fb2"].astype(jnp.float32),
    }


@jax.jit
def simple_cnn_forward(x_nchw, kp):
    x = jnp.transpose(x_nchw, (0, 2, 3, 1)).astype(jnp.bfloat16)     # NHWC bf16
    xcol = im2col_3x3_same(x)                                        # (B,64,64,27)
    y = conv_stack(xcol, kp["w1r"], kp["b1"], kp["w2r"], kp["b2"])   # (B,16,16,64)
    y = y.reshape(y.shape[0], -1)         # HWC flatten (fw1 rows pre-permuted)
    return fc_head(y, kp["fw1"], kp["fb1"], kp["fw2"], kp["fb2"])    # (B,2) f32


# Pure-JAX / PyTorch-faithful reference (f32, CHW flatten + original fw1).
def reference_forward(x_nchw, p):
    hi = jax.lax.Precision.HIGHEST

    def block(x, w, b):
        y = jax.lax.conv_general_dilated(
            x, w, window_strides=(1, 1), padding="SAME",
            dimension_numbers=("NHWC", "HWIO", "NHWC"), precision=hi) + b
        y = jnp.maximum(y, 0.0)
        return jax.lax.reduce_window(y, -jnp.inf, jax.lax.max,
                                     (1, 2, 2, 1), (1, 2, 2, 1), "VALID")

    x = jnp.transpose(x_nchw, (0, 2, 3, 1))
    x = block(x, p["w1"], p["b1"])
    x = block(x, p["w2"], p["b2"])
    x = jnp.transpose(x, (0, 3, 1, 2)).reshape(x.shape[0], -1)   # CHW flatten
    h = jnp.maximum(jnp.dot(x, p["fw1"], precision=hi) + p["fb1"], 0.0)
    logits = jnp.dot(h, p["fw2"], precision=hi) + p["fb2"]
    return jax.nn.log_softmax(logits, axis=1)


if __name__ == "__main__":
    key = jax.random.PRNGKey(0)
    ks = jax.random.split(key, 9)

    def bf16_round(a):      # weights/inputs representable exactly in bf16
        return a.astype(jnp.bfloat16).astype(jnp.float32)

    # Deterministic synthetic parameters (shapes from SimpleCNN.__init__).
    params = {
        "w1": bf16_round(jax.random.normal(ks[0], (3, 3, 3, 32), jnp.float32)
                         / jnp.sqrt(27.0)),
        "b1": jax.random.normal(ks[1], (32,), jnp.float32) * 0.01,
        "w2": bf16_round(jax.random.normal(ks[2], (3, 3, 32, 64), jnp.float32)
                         / jnp.sqrt(288.0)),
        "b2": jax.random.normal(ks[3], (64,), jnp.float32) * 0.01,
        "fw1": bf16_round(jax.random.normal(ks[4], (64 * 16 * 16, 128),
                                            jnp.float32) / 128.0),
        "fb1": jax.random.normal(ks[5], (128,), jnp.float32) * 0.01,
        "fw2": bf16_round(jax.random.normal(ks[6], (128, 2), jnp.float32)
                          / jnp.sqrt(128.0)),
        "fb2": jax.random.normal(ks[7], (2,), jnp.float32) * 0.01,
    }

    # FC layer (64*16*16) implies a 64x64 spatial input after two /2 pools.
    x = bf16_round(jax.random.normal(ks[8], (2, 3, 64, 64), jnp.float32))

    kparams = prepare_params(params)
    out = jax.block_until_ready(simple_cnn_forward(x, kparams))
    ref = jax.block_until_ready(reference_forward(x, params))

    assert out.shape == (2, 2) and out.dtype == jnp.float32
    # 2e-2 absorbs the two bf16 activation casts (conv1->conv2, conv2->fc);
    # weights are identical (bf16-rounded) in both paths.
    assert jnp.allclose(out, ref, atol=2e-2, rtol=2e-2), (out, ref)

    print("KERNEL_OK")
</pallas_src>

<mosaic_0001>
module attributes {stable_mosaic.version = 11 : i64} {
  func.func @conv_stack_kernel(%arg0: i32, %arg1: memref<1x64x64x27xbf16, #tpu.memory_space<vmem>>, %arg2: memref<27x32xbf16, #tpu.memory_space<vmem>>, %arg3: memref<1x32xf32, #tpu.memory_space<vmem>>, %arg4: memref<9x32x64xbf16, #tpu.memory_space<vmem>>, %arg5: memref<1x64xf32, #tpu.memory_space<vmem>>, %arg6: memref<1x16x16x64xbf16, #tpu.memory_space<vmem>>, %arg7: memref<34x48x32xbf16, #tpu.memory_space<vmem>>, %arg8: memref<4x64x32xf32, #tpu.memory_space<vmem>>, %arg9: memref<4x32x64xf32, #tpu.memory_space<vmem>>) attributes {dimension_semantics = [#tpu.dimension_semantics<parallel>], iteration_bounds = array<i64: 2>, scalar_prefetch = 0 : i64, scratch_operands = 3 : i64, tpu.core_type = #tpu.core_type<tc>, window_params = [{transform_indices = @transform_0, window_bounds = array<i64: 1, 64, 64, 27>}, {pipeline_mode = #tpu.pipeline_mode<synchronous>, transform_indices = @transform_1, window_bounds = array<i64: 27, 32>}, {pipeline_mode = #tpu.pipeline_mode<synchronous>, transform_indices = @transform_2, window_bounds = array<i64: 1, 32>}, {pipeline_mode = #tpu.pipeline_mode<synchronous>, transform_indices = @transform_3, window_bounds = array<i64: 9, 32, 64>}, {pipeline_mode = #tpu.pipeline_mode<synchronous>, transform_indices = @transform_4, window_bounds = array<i64: 1, 64>}, {transform_indices = @transform_5, window_bounds = array<i64: 1, 16, 16, 64>}]} {
    %cst = arith.constant 0.000000e+00 : bf16
    %0 = vector.broadcast %cst : bf16 to vector<1x48x32xbf16>
    %cst_0 = arith.constant 0.000000e+00 : bf16
    %1 = vector.broadcast %cst_0 : bf16 to vector<34x1x32xbf16>
    %c0 = arith.constant 0 : index
    %c0_1 = arith.constant 0 : index
    %c0_2 = arith.constant 0 : index
    %2 = vector.load %arg7[%c0, %c0_1, %c0_2] : memref<34x48x32xbf16, #tpu.memory_space<vmem>>, vector<1x48x32xbf16>
    tpu.vector_store %arg7[%c0, %c0_1, %c0_2], %0 {strides = array<i32>} : memref<34x48x32xbf16, #tpu.memory_space<vmem>>, vector<1x48x32xbf16>,
    %c33 = arith.constant 33 : index
    %c0_3 = arith.constant 0 : index
    %c0_4 = arith.constant 0 : index
    %3 = vector.load %arg7[%c33, %c0_3, %c0_4] : memref<34x48x32xbf16, #tpu.memory_space<vmem>>, vector<1x48x32xbf16>
    tpu.vector_store %arg7[%c33, %c0_3, %c0_4], %0 {strides = array<i32>} : memref<34x48x32xbf16, #tpu.memory_space<vmem>>, vector<1x48x32xbf16>,
    %c0_5 = arith.constant 0 : index
    %c7 = arith.constant 7 : index
    %c0_6 = arith.constant 0 : index
    %4 = vector.load %arg7[%c0_5, %c7, %c0_6] : memref<34x48x32xbf16, #tpu.memory_space<vmem>>, vector<34x1x32xbf16>
    tpu.vector_store %arg7[%c0_5, %c7, %c0_6], %1 {strides = array<i32>} : memref<34x48x32xbf16, #tpu.memory_space<vmem>>, vector<34x1x32xbf16>,
    %c0_7 = arith.constant 0 : index
    %c40 = arith.constant 40 : index
    %c0_8 = arith.constant 0 : index
    %5 = vector.load %arg7[%c0_7, %c40, %c0_8] : memref<34x48x32xbf16, #tpu.memory_space<vmem>>, vector<34x1x32xbf16>
    tpu.vector_store %arg7[%c0_7, %c40, %c0_8], %1 {strides = array<i32>} : memref<34x48x32xbf16, #tpu.memory_space<vmem>>, vector<34x1x32xbf16>,
    %c0_9 = arith.constant 0 : index
    %c0_10 = arith.constant 0 : index
    %6 = vector.load %arg2[%c0_9, %c0_10] : memref<27x32xbf16, #tpu.memory_space<vmem>>, vector<27x32xbf16>
    %c0_11 = arith.constant 0 : index
    %c0_12 = arith.constant 0 : index
    %7 = vector.load %arg3[%c0_11, %c0_12] : memref<1x32xf32, #tpu.memory_space<vmem>>, vector<1x32xf32>
    %c0_13 = arith.constant 0 : index
    %c0_14 = arith.constant 0 : index
    %8 = vector.load %arg5[%c0_13, %c0_14] : memref<1x64xf32, #tpu.memory_space<vmem>>, vector<1x64xf32>
    %c0_i32 = arith.constant 0 : i32
    %c8_i32 = arith.constant 8 : i32
    %9 = arith.addi %c0_i32, %c8_i32 : i32
    %c1_i32 = arith.constant 1 : i32
    scf.for %arg10 = %c0_i32 to %9 step %c1_i32  : i32 {
      %c8_i32_19 = arith.constant 8 : i32
      %11 = arith.muli %arg10, %c8_i32_19 : i32
      %12 = tpu.assume_multiple %11, 8 : i32
      %c0_20 = arith.constant 0 : index
      %13 = arith.index_cast %12 : i32 to index
      %c0_21 = arith.constant 0 : index
      %c0_22 = arith.constant 0 : index
      %14 = vector.load %arg1[%c0_20, %13, %c0_21, %c0_22] : memref<1x64x64x27xbf16, #tpu.memory_space<vmem>>, vector<1x8x64x27xbf16>
      %15 = vector.shape_cast %14 : vector<1x8x64x27xbf16> to vector<8x64x27xbf16>
      %16 = vector.shape_cast %15 : vector<8x64x27xbf16> to vector<512x27xbf16>
      %cst_23 = arith.constant dense<0.000000e+00> : vector<512x32xf32>
      %17 = tpu.matmul %16, %6, %cst_23 {dimension_numbers = #tpu.dot_dimension_numbers<[1], [0], [0], [1], [0, 0, 1, 1], [], []>} : vector<512x27xbf16>, vector<27x32xbf16>, vector<512x32xf32> -> vector<512x32xf32>
      %18 = vector.broadcast %7 : vector<1x32xf32> to vector<512x32xf32>
      %19 = arith.addf %17, %18 : vector<512x32xf32>
      %cst_24 = arith.constant 0.000000e+00 : f32
      %20 = vector.broadcast %cst_24 : f32 to vector<512x32xf32>
      %21 = arith.maximumf %19, %20 : vector<512x32xf32>
      %22 = vector.shape_cast %21 : vector<512x32xf32> to vector<4x2x64x32xf32>
      %23 = vector.extract_strided_slice %22 {offsets = [0, 0, 0, 0], sizes = [4, 1, 64, 32], strides = [1, 1, 1, 1]} : vector<4x2x64x32xf32> to vector<4x1x64x32xf32>
      %24 = vector.shape_cast %23 : vector<4x1x64x32xf32> to vector<4x64x32xf32>
      %25 = vector.extract_strided_slice %22 {offsets = [0, 1, 0, 0], sizes = [4, 1, 64, 32], strides = [1, 1, 1, 1]} : vector<4x2x64x32xf32> to vector<4x1x64x32xf32>
      %26 = vector.shape_cast %25 : vector<4x1x64x32xf32> to vector<4x64x32xf32>
      %27 = arith.maximumf %24, %26 : vector<4x64x32xf32>
      %c0_25 = arith.constant 0 : index
      %c0_26 = arith.constant 0 : index
      %c0_27 = arith.constant 0 : index
      %28 = vector.load %arg8[%c0_25, %c0_26, %c0_27] : memref<4x64x32xf32, #tpu.memory_space<vmem>>, vector<4x64x32xf32>
      tpu.vector_store %arg8[%c0_25, %c0_26, %c0_27], %27 {strides = array<i32>} : memref<4x64x32xf32, #tpu.memory_space<vmem>>, vector<4x64x32xf32>,
      %c0_28 = arith.constant 0 : index
      %c0_29 = arith.constant 0 : index
      %c0_30 = arith.constant 0 : index
      %29 = tpu.strided_load %arg8[%c0_28, %c0_29, %c0_30] {strides = array<i32: 1, 2, 1>} : memref<4x64x32xf32, #tpu.memory_space<vmem>>, vector<4x32x32xf32>
      %c0_31 = arith.constant 0 : index
      %c1 = arith.constant 1 : index
      %c0_32 = arith.constant 0 : index
      %30 = tpu.strided_load %arg8[%c0_31, %c1, %c0_32] {strides = array<i32: 1, 2, 1>} : memref<4x64x32xf32, #tpu.memory_space<vmem>>, vector<4x32x32xf32>
      %31 = arith.maximumf %29, %30 : vector<4x32x32xf32>
      %32 = arith.truncf %31 : vector<4x32x32xf32> to vector<4x32x32xbf16>
      %c4_i32_33 = arith.constant 4 : i32
      %33 = arith.muli %arg10, %c4_i32_33 : i32
      %c1_i32_34 = arith.constant 1 : i32
      %34 = arith.addi %c1_i32_34, %33 : i32
      %35 = arith.index_cast %34 : i32 to index
      %c8 = arith.constant 8 : index
      %c0_35 = arith.constant 0 : index
      %36 = vector.load %arg7[%35, %c8, %c0_35] : memref<34x48x32xbf16, #tpu.memory_space<vmem>>, vector<4x32x32xbf16>
      tpu.vector_store %arg7[%35, %c8, %c0_35], %32 {strides = array<i32>} : memref<34x48x32xbf16, #tpu.memory_space<vmem>>, vector<4x32x32xbf16>,
    }
    %c8_i32_15 = arith.constant 8 : i32
    %c0_i32_16 = arith.constant 0 : i32
    %c4_i32 = arith.constant 4 : i32
    %10 = arith.addi %c0_i32_16, %c4_i32 : i32
    %c1_i32_17 = arith.constant 1 : i32
    scf.for %arg10 = %c0_i32_16 to %10 step %c1_i32_17  : i32 {
      %c8_i32_19 = arith.constant 8 : i32
      %11 = arith.muli %arg10, %c8_i32_19 : i32
      %12 = tpu.assume_multiple %11, 8 : i32
      %cst_20 = arith.constant 0.000000e+00 : f32
      %13 = vector.broadcast %cst_20 : f32 to vector<256x64xf32>
      %c0_i32_21 = arith.constant 0 : i32
      %14 = arith.addi %12, %c0_i32_21 : i32
      %15 = arith.index_cast %14 : i32 to index
      %c7_22 = arith.constant 7 : index
      %c0_23 = arith.constant 0 : index
      %16 = vector.load %arg7[%15, %c7_22, %c0_23] : memref<34x48x32xbf16, #tpu.memory_space<vmem>>, vector<8x32x32xbf16>
      %17 = vector.shape_cast %16 : vector<8x32x32xbf16> to vector<256x32xbf16>
      %c0_24 = arith.constant 0 : index
      %c0_25 = arith.constant 0 : index
      %c0_26 = arith.constant 0 : index
      %18 = vector.load %arg4[%c0_24, %c0_25, %c0_26] : memref<9x32x64xbf16, #tpu.memory_space<vmem>>, vector<1x32x64xbf16>
      %19 = vector.shape_cast %18 : vector<1x32x64xbf16> to vector<32x64xbf16>
      %cst_27 = arith.constant dense<0.000000e+00> : vector<256x64xf32>
      %20 = tpu.matmul %17, %19, %cst_27 {dimension_numbers = #tpu.dot_dimension_numbers<[1], [0], [0], [1], [0, 0, 1, 1], [], []>} : vector<256x32xbf16>, vector<32x64xbf16>, vector<256x64xf32> -> vector<256x64xf32>
      %21 = arith.addf %13, %20 : vector<256x64xf32>
      %c0_i32_28 = arith.constant 0 : i32
      %22 = arith.addi %12, %c0_i32_28 : i32
      %23 = arith.index_cast %22 : i32 to index
      %c8 = arith.constant 8 : index
      %c0_29 = arith.constant 0 : index
      %24 = vector.load %arg7[%23, %c8, %c0_29] : memref<34x48x32xbf16, #tpu.memory_space<vmem>>, vector<8x32x32xbf16>
      %25 = vector.shape_cast %24 : vector<8x32x32xbf16> to vector<256x32xbf16>
      %c1 = arith.constant 1 : index
      %c0_30 = arith.constant 0 : index
      %c0_31 = arith.constant 0 : index
      %26 = vector.load %arg4[%c1, %c0_30, %c0_31] : memref<9x32x64xbf16, #tpu.memory_space<vmem>>, vector<1x32x64xbf16>
      %27 = vector.shape_cast %26 : vector<1x32x64xbf16> to vector<32x64xbf16>
      %cst_32 = arith.constant dense<0.000000e+00> : vector<256x64xf32>
      %28 = tpu.matmul %25, %27, %cst_32 {dimension_numbers = #tpu.dot_dimension_numbers<[1], [0], [0], [1], [0, 0, 1, 1], [], []>} : vector<256x32xbf16>, vector<32x64xbf16>, vector<256x64xf32> -> vector<256x64xf32>
      %29 = arith.addf %21, %28 : vector<256x64xf32>
      %c0_i32_33 = arith.constant 0 : i32
      %30 = arith.addi %12, %c0_i32_33 : i32
      %31 = arith.index_cast %30 : i32 to index
      %c9 = arith.constant 9 : index
      %c0_34 = arith.constant 0 : index
      %32 = vector.load %arg7[%31, %c9, %c0_34] : memref<34x48x32xbf16, #tpu.memory_space<vmem>>, vector<8x32x32xbf16>
      %33 = vector.shape_cast %32 : vector<8x32x32xbf16> to vector<256x32xbf16>
      %c2 = arith.constant 2 : index
      %c0_35 = arith.constant 0 : index
      %c0_36 = arith.constant 0 : index
      %34 = vector.load %arg4[%c2, %c0_35, %c0_36] : memref<9x32x64xbf16, #tpu.memory_space<vmem>>, vector<1x32x64xbf16>
      %35 = vector.shape_cast %34 : vector<1x32x64xbf16> to vector<32x64xbf16>
      %cst_37 = arith.constant dense<0.000000e+00> : vector<256x64xf32>
      %36 = tpu.matmul %33, %35, %cst_37 {dimension_numbers = #tpu.dot_dimension_numbers<[1], [0], [0], [1], [0, 0, 1, 1], [], []>} : vector<256x32xbf16>, vector<32x64xbf16>, vector<256x64xf32> -> vector<256x64xf32>
      %37 = arith.addf %29, %36 : vector<256x64xf32>
      %c1_i32_38 = arith.constant 1 : i32
      %38 = arith.addi %12, %c1_i32_38 : i32
      %39 = arith.index_cast %38 : i32 to index
      %c7_39 = arith.constant 7 : index
      %c0_40 = arith.constant 0 : index
      %40 = vector.load %arg7[%39, %c7_39, %c0_40] : memref<34x48x32xbf16, #tpu.memory_space<vmem>>, vector<8x32x32xbf16>
      %41 = vector.shape_cast %40 : vector<8x32x32xbf16> to vector<256x32xbf16>
      %c3 = arith.constant 3 : index
      %c0_41 = arith.constant 0 : index
      %c0_42 = arith.constant 0 : index
      %42 = vector.load %arg4[%c3, %c0_41, %c0_42] : memref<9x32x64xbf16, #tpu.memory_space<vmem>>, vector<1x32x64xbf16>
      %43 = vector.shape_cast %42 : vector<1x32x64xbf16> to vector<32x64xbf16>
      %cst_43 = arith.constant dense<0.000000e+00> : vector<256x64xf32>
      %44 = tpu.matmul %41, %43, %cst_43 {dimension_numbers = #tpu.dot_dimension_numbers<[1], [0], [0], [1], [0, 0, 1, 1], [], []>} : vector<256x32xbf16>, vector<32x64xbf16>, vector<256x64xf32> -> vector<256x64xf32>
      %45 = arith.addf %37, %44 : vector<256x64xf32>
      %c1_i32_44 = arith.constant 1 : i32
      %46 = arith.addi %12, %c1_i32_44 : i32
      %47 = arith.index_cast %46 : i32 to index
      %c8_45 = arith.constant 8 : index
      %c0_46 = arith.constant 0 : index
      %48 = vector.load %arg7[%47, %c8_45, %c0_46] : memref<34x48x32xbf16, #tpu.memory_space<vmem>>, vector<8x32x32xbf16>
      %49 = vector.shape_cast %48 : vector<8x32x32xbf16> to vector<256x32xbf16>
      %c4 = arith.constant 4 : index
      %c0_47 = arith.constant 0 : index
      %c0_48 = arith.constant 0 : index
      %50 = vector.load %arg4[%c4, %c0_47, %c0_48] : memref<9x32x64xbf16, #tpu.memory_space<vmem>>, vector<1x32x64xbf16>
      %51 = vector.shape_cast %50 : vector<1x32x64xbf16> to vector<32x64xbf16>
      %cst_49 = arith.constant dense<0.000000e+00> : vector<256x64xf32>
      %52 = tpu.matmul %49, %51, %cst_49 {dimension_numbers = #tpu.dot_dimension_numbers<[1], [0], [0], [1], [0, 0, 1, 1], [], []>} : vector<256x32xbf16>, vector<32x64xbf16>, vector<256x64xf32> -> vector<256x64xf32>
      %53 = arith.addf %45, %52 : vector<256x64xf32>
      %c1_i32_50 = arith.constant 1 : i32
      %54 = arith.addi %12, %c1_i32_50 : i32
      %55 = arith.index_cast %54 : i32 to index
      %c9_51 = arith.constant 9 : index
      %c0_52 = arith.constant 0 : index
      %56 = vector.load %arg7[%55, %c9_51, %c0_52] : memref<34x48x32xbf16, #tpu.memory_space<vmem>>, vector<8x32x32xbf16>
      %57 = vector.shape_cast %56 : vector<8x32x32xbf16> to vector<256x32xbf16>
      %c5 = arith.constant 5 : index
      %c0_53 = arith.constant 0 : index
      %c0_54 = arith.constant 0 : index
      %58 = vector.load %arg4[%c5, %c0_53, %c0_54] : memref<9x32x64xbf16, #tpu.memory_space<vmem>>, vector<1x32x64xbf16>
      %59 = vector.shape_cast %58 : vector<1x32x64xbf16> to vector<32x64xbf16>
      %cst_55 = arith.constant dense<0.000000e+00> : vector<256x64xf32>
      %60 = tpu.matmul %57, %59, %cst_55 {dimension_numbers = #tpu.dot_dimension_numbers<[1], [0], [0], [1], [0, 0, 1, 1], [], []>} : vector<256x32xbf16>, vector<32x64xbf16>, vector<256x64xf32> -> vector<256x64xf32>
      %61 = arith.addf %53, %60 : vector<256x64xf32>
      %c2_i32 = arith.constant 2 : i32
      %62 = arith.addi %12, %c2_i32 : i32
      %63 = arith.index_cast %62 : i32 to index
      %c7_56 = arith.constant 7 : index
      %c0_57 = arith.constant 0 : index
      %64 = vector.load %arg7[%63, %c7_56, %c0_57] : memref<34x48x32xbf16, #tpu.memory_space<vmem>>, vector<8x32x32xbf16>
      %65 = vector.shape_cast %64 : vector<8x32x32xbf16> to vector<256x32xbf16>
      %c6 = arith.constant 6 : index
      %c0_58 = arith.constant 0 : index
      %c0_59 = arith.constant 0 : index
      %66 = vector.load %arg4[%c6, %c0_58, %c0_59] : memref<9x32x64xbf16, #tpu.memory_space<vmem>>, vector<1x32x64xbf16>
      %67 = vector.shape_cast %66 : vector<1x32x64xbf16> to vector<32x64xbf16>
      %cst_60 = arith.constant dense<0.000000e+00> : vector<256x64xf32>
      %68 = tpu.matmul %65, %67, %cst_60 {dimension_numbers = #tpu.dot_dimension_numbers<[1], [0], [0], [1], [0, 0, 1, 1], [], []>} : vector<256x32xbf16>, vector<32x64xbf16>, vector<256x64xf32> -> vector<256x64xf32>
      %69 = arith.addf %61, %68 : vector<256x64xf32>
      %c2_i32_61 = arith.constant 2 : i32
      %70 = arith.addi %12, %c2_i32_61 : i32
      %71 = arith.index_cast %70 : i32 to index
      %c8_62 = arith.constant 8 : index
      %c0_63 = arith.constant 0 : index
      %72 = vector.load %arg7[%71, %c8_62, %c0_63] : memref<34x48x32xbf16, #tpu.memory_space<vmem>>, vector<8x32x32xbf16>
      %73 = vector.shape_cast %72 : vector<8x32x32xbf16> to vector<256x32xbf16>
      %c7_64 = arith.constant 7 : index
      %c0_65 = arith.constant 0 : index
      %c0_66 = arith.constant 0 : index
      %74 = vector.load %arg4[%c7_64, %c0_65, %c0_66] : memref<9x32x64xbf16, #tpu.memory_space<vmem>>, vector<1x32x64xbf16>
      %75 = vector.shape_cast %74 : vector<1x32x64xbf16> to vector<32x64xbf16>
      %cst_67 = arith.constant dense<0.000000e+00> : vector<256x64xf32>
      %76 = tpu.matmul %73, %75, %cst_67 {dimension_numbers = #tpu.dot_dimension_numbers<[1], [0], [0], [1], [0, 0, 1, 1], [], []>} : vector<256x32xbf16>, vector<32x64xbf16>, vector<256x64xf32> -> vector<256x64xf32>
      %77 = arith.addf %69, %76 : vector<256x64xf32>
      %c2_i32_68 = arith.constant 2 : i32
      %78 = arith.addi %12, %c2_i32_68 : i32
      %79 = arith.index_cast %78 : i32 to index
      %c9_69 = arith.constant 9 : index
      %c0_70 = arith.constant 0 : index
      %80 = vector.load %arg7[%79, %c9_69, %c0_70] : memref<34x48x32xbf16, #tpu.memory_space<vmem>>, vector<8x32x32xbf16>
      %81 = vector.shape_cast %80 : vector<8x32x32xbf16> to vector<256x32xbf16>
      %c8_71 = arith.constant 8 : index
      %c0_72 = arith.constant 0 : index
      %c0_73 = arith.constant 0 : index
      %82 = vector.load %arg4[%c8_71, %c0_72, %c0_73] : memref<9x32x64xbf16, #tpu.memory_space<vmem>>, vector<1x32x64xbf16>
      %83 = vector.shape_cast %82 : vector<1x32x64xbf16> to vector<32x64xbf16>
      %cst_74 = arith.constant dense<0.000000e+00> : vector<256x64xf32>
      %84 = tpu.matmul %81, %83, %cst_74 {dimension_numbers = #tpu.dot_dimension_numbers<[1], [0], [0], [1], [0, 0, 1, 1], [], []>} : vector<256x32xbf16>, vector<32x64xbf16>, vector<256x64xf32> -> vector<256x64xf32>
      %85 = arith.addf %77, %84 : vector<256x64xf32>
      %86 = vector.broadcast %8 : vector<1x64xf32> to vector<256x64xf32>
      %87 = arith.addf %85, %86 : vector<256x64xf32>
      %cst_75 = arith.constant 0.000000e+00 : f32
      %88 = vector.broadcast %cst_75 : f32 to vector<256x64xf32>
      %89 = arith.maximumf %87, %88 : vector<256x64xf32>
      %90 = vector.shape_cast %89 : vector<256x64xf32> to vector<4x2x32x64xf32>
      %91 = vector.extract_strided_slice %90 {offsets = [0, 0, 0, 0], sizes = [4, 1, 32, 64], strides = [1, 1, 1, 1]} : vector<4x2x32x64xf32> to vector<4x1x32x64xf32>
      %92 = vector.shape_cast %91 : vector<4x1x32x64xf32> to vector<4x32x64xf32>
      %93 = vector.extract_strided_slice %90 {offsets = [0, 1, 0, 0], sizes = [4, 1, 32, 64], strides = [1, 1, 1, 1]} : vector<4x2x32x64xf32> to vector<4x1x32x64xf32>
      %94 = vector.shape_cast %93 : vector<4x1x32x64xf32> to vector<4x32x64xf32>
      %95 = arith.maximumf %92, %94 : vector<4x32x64xf32>
      %c0_76 = arith.constant 0 : index
      %c0_77 = arith.constant 0 : index
      %c0_78 = arith.constant 0 : index
      %96 = vector.load %arg9[%c0_76, %c0_77, %c0_78] : memref<4x32x64xf32, #tpu.memory_space<vmem>>, vector<4x32x64xf32>
      tpu.vector_store %arg9[%c0_76, %c0_77, %c0_78], %95 {strides = array<i32>} : memref<4x32x64xf32, #tpu.memory_space<vmem>>, vector<4x32x64xf32>,
      %c0_79 = arith.constant 0 : index
      %c0_80 = arith.constant 0 : index
      %c0_81 = arith.constant 0 : index
      %97 = tpu.strided_load %arg9[%c0_79, %c0_80, %c0_81] {strides = array<i32: 1, 2, 1>} : memref<4x32x64xf32, #tpu.memory_space<vmem>>, vector<4x16x64xf32>
      %c0_82 = arith.constant 0 : index
      %c1_83 = arith.constant 1 : index
      %c0_84 = arith.constant 0 : index
      %98 = tpu.strided_load %arg9[%c0_82, %c1_83, %c0_84] {strides = array<i32: 1, 2, 1>} : memref<4x32x64xf32, #tpu.memory_space<vmem>>, vector<4x16x64xf32>
      %99 = arith.maximumf %97, %98 : vector<4x16x64xf32>
      %100 = arith.truncf %99 : vector<4x16x64xf32> to vector<4x16x64xbf16>
      %c4_i32_85 = arith.constant 4 : i32
      %101 = arith.muli %arg10, %c4_i32_85 : i32
      %c0_86 = arith.constant 0 : index
      %102 = arith.index_cast %101 : i32 to index
      %c0_87 = arith.constant 0 : index
      %c0_88 = arith.constant 0 : index
      %103 = vector.load %arg6[%c0_86, %102, %c0_87, %c0_88] : memref<1x16x16x64xbf16, #tpu.memory_space<vmem>>, vector<1x4x16x64xbf16>
      %104 = vector.shape_cast %103 : vector<1x4x16x64xbf16> to vector<4x16x64xbf16>
      %105 = vector.shape_cast %100 : vector<4x16x64xbf16> to vector<1x4x16x64xbf16>
      tpu.vector_store %arg6[%c0_86, %102, %c0_87, %c0_88], %105 {strides = array<i32>} : memref<1x16x16x64xbf16, #tpu.memory_space<vmem>>, vector<1x4x16x64xbf16>,
    }
    %c4_i32_18 = arith.constant 4 : i32
    return
  }
  func.func @transform_0(%arg0: i32) -> (i32, i32, i32, i32) {
    %c0_i32 = arith.constant 0 : i32
    %c0_i32_0 = arith.constant 0 : i32
    %c0_i32_1 = arith.constant 0 : i32
    %c0_i32_2 = arith.constant 0 : i32
    return %arg0, %c0_i32, %c0_i32_0, %c0_i32_1 : i32, i32, i32, i32
  }
  func.func @transform_1(%arg0: i32) -> (i32, i32) {
    %c0_i32 = arith.constant 0 : i32
    %c0_i32_0 = arith.constant 0 : i32
    %c0_i32_1 = arith.constant 0 : i32
    return %c0_i32, %c0_i32_0 : i32, i32
  }
  func.func @transform_2(%arg0: i32) -> (i32, i32) {
    %c0_i32 = arith.constant 0 : i32
    %c0_i32_0 = arith.constant 0 : i32
    %c0_i32_1 = arith.constant 0 : i32
    return %c0_i32, %c0_i32_0 : i32, i32
  }
  func.func @transform_3(%arg0: i32) -> (i32, i32, i32) {
    %c0_i32 = arith.constant 0 : i32
    %c0_i32_0 = arith.constant 0 : i32
    %c0_i32_1 = arith.constant 0 : i32
    %c0_i32_2 = arith.constant 0 : i32
    return %c0_i32, %c0_i32_0, %c0_i32_1 : i32, i32, i32
  }
  func.func @transform_4(%arg0: i32) -> (i32, i32) {
    %c0_i32 = arith.constant 0 : i32
    %c0_i32_0 = arith.constant 0 : i32
    %c0_i32_1 = arith.constant 0 : i32
    return %c0_i32, %c0_i32_0 : i32, i32
  }
  func.func @transform_5(%arg0: i32) -> (i32, i32, i32, i32) {
    %c0_i32 = arith.constant 0 : i32
    %c0_i32_0 = arith.constant 0 : i32
    %c0_i32_1 = arith.constant 0 : i32
    %c0_i32_2 = arith.constant 0 : i32
    return %arg0, %c0_i32, %c0_i32_0, %c0_i32_1 : i32, i32, i32, i32
  }
}

module attributes {stable_mosaic.version = 11 : i64} {
  func.func @fc_head_kernel(%arg0: i32, %arg1: memref<2x8192xbf16, #tpu.memory_space<vmem>>, %arg2: memref<8192x128xbf16, #tpu.memory_space<vmem>>, %arg3: memref<1x128xf32, #tpu.memory_space<vmem>>, %arg4: memref<128x2xbf16, #tpu.memory_space<vmem>>, %arg5: memref<1x2xf32, #tpu.memory_space<vmem>>, %arg6: memref<2x2xf32, #tpu.memory_space<vmem>>, %arg7: memref<2x128xf32, #tpu.memory_space<vmem>>) attributes {dimension_semantics = [#tpu.dimension_semantics<arbitrary>], iteration_bounds = array<i64: 2>, scalar_prefetch = 0 : i64, scratch_operands = 1 : i64, tpu.core_type = #tpu.core_type<tc>, window_params = [{transform_indices = @transform_0, window_bounds = array<i64: 2, 8192>}, {transform_indices = @transform_1, window_bounds = array<i64: 8192, 128>}, {pipeline_mode = #tpu.pipeline_mode<synchronous>, transform_indices = @transform_2, window_bounds = array<i64: 1, 128>}, {pipeline_mode = #tpu.pipeline_mode<synchronous>, transform_indices = @transform_3, window_bounds = array<i64: 128, 2>}, {pipeline_mode = #tpu.pipeline_mode<synchronous>, transform_indices = @transform_4, window_bounds = array<i64: 1, 2>}, {pipeline_mode = #tpu.pipeline_mode<synchronous>, transform_indices = @transform_5, window_bounds = array<i64: 2, 2>}]} {
    %c0_i32 = arith.constant 0 : i32
    %0 = arith.cmpi eq, %arg0, %c0_i32 : i32
    %1 = arith.extui %0 : i1 to i32
    %c0_i32_0 = arith.constant 0 : i32
    %2 = arith.cmpi ne, %1, %c0_i32_0 : i32
    scf.if %2 {
      %cst_9 = arith.constant 0.000000e+00 : f32
      %12 = vector.broadcast %cst_9 : f32 to vector<2x128xf32>
      %c0_10 = arith.constant 0 : index
      %c0_11 = arith.constant 0 : index
      %13 = vector.load %arg7[%c0_10, %c0_11] : memref<2x128xf32, #tpu.memory_space<vmem>>, vector<2x128xf32>
      tpu.vector_store %arg7[%c0_10, %c0_11], %12 {strides = array<i32>} : memref<2x128xf32, #tpu.memory_space<vmem>>, vector<2x128xf32>,
    } else {
    }
    %c0 = arith.constant 0 : index
    %c0_1 = arith.constant 0 : index
    %3 = vector.load %arg7[%c0, %c0_1] : memref<2x128xf32, #tpu.memory_space<vmem>>, vector<2x128xf32>
    %c0_2 = arith.constant 0 : index
    %c0_3 = arith.constant 0 : index
    %4 = vector.load %arg1[%c0_2, %c0_3] : memref<2x8192xbf16, #tpu.memory_space<vmem>>, vector<2x8192xbf16>
    %c0_4 = arith.constant 0 : index
    %c0_5 = arith.constant 0 : index
    %5 = vector.load %arg2[%c0_4, %c0_5] : memref<8192x128xbf16, #tpu.memory_space<vmem>>, vector<8192x128xbf16>
    %cst = arith.constant dense<0.000000e+00> : vector<2x128xf32>
    %6 = tpu.matmul %4, %5, %cst {dimension_numbers = #tpu.dot_dimension_numbers<[1], [0], [0], [1], [0, 0, 1, 1], [], []>} : vector<2x8192xbf16>, vector<8192x128xbf16>, vector<2x128xf32> -> vector<2x128xf32>
    %7 = arith.addf %3, %6 : vector<2x128xf32>
    %c0_6 = arith.constant 0 : index
    %c0_7 = arith.constant 0 : index
    %8 = vector.load %arg7[%c0_6, %c0_7] : memref<2x128xf32, #tpu.memory_space<vmem>>, vector<2x128xf32>
    tpu.vector_store %arg7[%c0_6, %c0_7], %7 {strides = array<i32>} : memref<2x128xf32, #tpu.memory_space<vmem>>, vector<2x128xf32>,
    %c1_i32 = arith.constant 1 : i32
    %9 = arith.cmpi eq, %arg0, %c1_i32 : i32
    %10 = arith.extui %9 : i1 to i32
    %c0_i32_8 = arith.constant 0 : i32
    %11 = arith.cmpi ne, %10, %c0_i32_8 : i32
    scf.if %11 {
      %c0_9 = arith.constant 0 : index
      %c0_10 = arith.constant 0 : index
      %12 = vector.load %arg7[%c0_9, %c0_10] : memref<2x128xf32, #tpu.memory_space<vmem>>, vector<2x128xf32>
      %c0_11 = arith.constant 0 : index
      %c0_12 = arith.constant 0 : index
      %13 = vector.load %arg3[%c0_11, %c0_12] : memref<1x128xf32, #tpu.memory_space<vmem>>, vector<1x128xf32>
      %14 = vector.broadcast %13 : vector<1x128xf32> to vector<2x128xf32>
      %15 = arith.addf %12, %14 : vector<2x128xf32>
      %cst_13 = arith.constant 0.000000e+00 : f32
      %16 = vector.broadcast %cst_13 : f32 to vector<2x128xf32>
      %17 = arith.maximumf %15, %16 : vector<2x128xf32>
      %c0_14 = arith.constant 0 : index
      %c0_15 = arith.constant 0 : index
      %18 = vector.load %arg4[%c0_14, %c0_15] : memref<128x2xbf16, #tpu.memory_space<vmem>>, vector<128x2xbf16>
      %19 = arith.extf %18 : vector<128x2xbf16> to vector<128x2xf32>
      %cst_16 = arith.constant dense<0.000000e+00> : vector<2x2xf32>
      %20 = tpu.matmul %17, %19, %cst_16 {dimension_numbers = #tpu.dot_dimension_numbers<[1], [0], [0], [1], [0, 0, 1, 1], [], []>} : vector<2x128xf32>, vector<128x2xf32>, vector<2x2xf32> -> vector<2x2xf32>
      %c0_17 = arith.constant 0 : index
      %c0_18 = arith.constant 0 : index
      %21 = vector.load %arg5[%c0_17, %c0_18] : memref<1x2xf32, #tpu.memory_space<vmem>>, vector<1x2xf32>
      %22 = vector.broadcast %21 : vector<1x2xf32> to vector<2x2xf32>
      %23 = arith.addf %20, %22 : vector<2x2xf32>
      %cst_19 = arith.constant dense<0xFF800000> : vector<2xf32>
      %24 = vector.multi_reduction <maximumf>, %23, %cst_19 [1] : vector<2x2xf32> to vector<2xf32>
      %25 = vector.shape_cast %24 : vector<2xf32> to vector<2x1xf32>
      %26 = vector.broadcast %25 : vector<2x1xf32> to vector<2x2xf32>
      %27 = arith.subf %23, %26 : vector<2x2xf32>
      %28 = math.exp %27 : vector<2x2xf32>
      %cst_20 = arith.constant dense<0.000000e+00> : vector<2xf32>
      %29 = vector.multi_reduction <add>, %28, %cst_20 [1] : vector<2x2xf32> to vector<2xf32>
      %30 = vector.shape_cast %29 : vector<2xf32> to vector<2x1xf32>
      %31 = math.log %30 : vector<2x1xf32>
      %32 = vector.broadcast %31 : vector<2x1xf32> to vector<2x2xf32>
      %33 = arith.subf %27, %32 : vector<2x2xf32>
      %c0_21 = arith.constant 0 : index
      %c0_22 = arith.constant 0 : index
      %34 = vector.load %arg6[%c0_21, %c0_22] : memref<2x2xf32, #tpu.memory_space<vmem>>, vector<2x2xf32>
      tpu.vector_store %arg6[%c0_21, %c0_22], %33 {strides = array<i32>} : memref<2x2xf32, #tpu.memory_space<vmem>>, vector<2x2xf32>,
    } else {
    }
    return
  }
  func.func @transform_0(%arg0: i32) -> (i32, i32) {
    %c0_i32 = arith.constant 0 : i32
    %c0_i32_0 = arith.constant 0 : i32
    return %c0_i32, %arg0 : i32, i32
  }
  func.func @transform_1(%arg0: i32) -> (i32, i32) {
    %c0_i32 = arith.constant 0 : i32
    %c0_i32_0 = arith.constant 0 : i32
    return %arg0, %c0_i32 : i32, i32
  }
  func.func @transform_2(%arg0: i32) -> (i32, i32) {
    %c0_i32 = arith.constant 0 : i32
    %c0_i32_0 = arith.constant 0 : i32
    %c0_i32_1 = arith.constant 0 : i32
    return %c0_i32, %c0_i32_0 : i32, i32
  }
  func.func @transform_3(%arg0: i32) -> (i32, i32) {
    %c0_i32 = arith.constant 0 : i32
    %c0_i32_0 = arith.constant 0 : i32
    %c0_i32_1 = arith.constant 0 : i32
    return %c0_i32, %c0_i32_0 : i32, i32
  }
  func.func @transform_4(%arg0: i32) -> (i32, i32) {
    %c0_i32 = arith.constant 0 : i32
    %c0_i32_0 = arith.constant 0 : i32
    %c0_i32_1 = arith.constant 0 : i32
    return %c0_i32, %c0_i32_0 : i32, i32
  }
  func.func @transform_5(%arg0: i32) -> (i32, i32) {
    %c0_i32 = arith.constant 0 : i32
    %c0_i32_0 = arith.constant 0 : i32
    %c0_i32_1 = arith.constant 0 : i32
    return %c0_i32, %c0_i32_0 : i32, i32
  }
}

</mosaic_0001>

<llo_original>
// kernel: simple_cnn_forward.3
$region0: #{simple_cnn_forward.3}
  #allocation0 [shape = 'u32[]', space=smem, size = 0x4, offset = 0x4, fixed_abs, tag = 'smem constant byte address 0x4 - core index']
  #allocation1 [shape = 'u32[144,128]{1,0:T(1,128)}', space=vmem, size = 0x12000, scoped, tag = 'internal scratch']
  #allocation2 [shape = 'f32[2,128]{1,0:T(2,128)}', space=vmem, size = 0x400, scoped, tag = 'scratch operand']
  %s0 = inlined_call_operand.vmem [shape: bf16[2,16384], index: 0, kind: input, shape index: {}]
  %s1 = inlined_call_operand.vmem [shape: bf16[16384,128], index: 1, kind: input, shape index: {}]
  %s2 = inlined_call_operand.vmem [shape: f32[1,128], index: 2, kind: input, shape index: {}]
  %s3 = inlined_call_operand.vmem [shape: bf16[128,2], index: 3, kind: input, shape index: {}]
  %s4 = inlined_call_operand.vmem [shape: f32[1,2], index: 4, kind: input, shape index: {}]
  %s5 = inlined_call_operand.hbm [shape: f32[2,2], index: 5, kind: output, shape index: {}]
  %s6 = sld [smem:[#allocation0]]
  $region61: #{simple_cnn_forward.3} parent=0
    _
  %s8 = ssub.s32 1, %s6
  %s9 = scalar_select 0, %s8, %s6
  $region1: #{simple_cnn_forward.3} parent=0
    #allocation3 [shape = 'u8[1024]{0}', space=vmem, size = 0x400, scoped, tag = 'output window, operand 0, single buffered']
    #allocation4 [shape = 's32[2]{0}', space=sflag, size = 0x8, scoped, tag = 'scoped memory for simple_cnn_forward.3']
    %10 = vsyncpa [#allocation4], 0
    loop: start=0, step=1, limit=4
    $region2: #{simple_cnn_forward.3} parent=1 // loop_pre_header
      _
    $region3: #{simple_cnn_forward.3} parent=1 // loop_header
      %s12 = sphi 0, %s16
      %p13 = scmp.ge.s32.totalorder %s12, 4
      %s22 = sphi 0, %s24
      %s25 = sphi 0, %s22
      %s26 = sphi 0, %s25
      %s42 = sphi 0, %s26
      %s48 = sphi 0, %s50
      %s51 = sphi 0, %s48
      %s52 = sphi 0, %s51
      %s68 = sphi 0, %s52
      %s72 = sphi 0, %s72
      %s74 = sphi 0, %s72
      %s75 = sphi 0, %s74
      %s89 = sphi 0, %s75
      %s93 = sphi 0, %s93
      %s95 = sphi 0, %s93
      %s96 = sphi 0, %s95
      %s110 = sphi 0, %s96
      %s114 = sphi 0, %s114
      %s116 = sphi 0, %s114
      %s117 = sphi 0, %s116
      %s131 = sphi 0, %s117
      %s135 = sphi 0, %s135
      %s137 = sphi 0, %s135
      %s138 = sphi 0, %s137
      %s152 = sphi 0, %s138
    $region4: #{simple_cnn_forward.3} parent=1 // loop_header_branch
      %15 = sbr.rel (%p13) target = $region8
    $region5: #{simple_cnn_forward.3} parent=1 // loop_body
      %s17 = ssub.s32 %s12, 1
      %s18 = ssub.s32 %s12, 2
      %s19 = sadd.s32 %s12, 1
      %s20 = ssub.s32 %s12, %s19
      %p21 = scmp.eq.s32.totalorder %s20, 0
      %s23 = sadd.s32 %s22, 1
      %s24 = scalar_select %p21, %s22, %s23
      %p27 = pneg %p21
      %p28 = scmp.eq.s32.totalorder %s12, 1
      %p29 = por %p27, %p28
      %p30 = scmp.ne.s32.totalorder %s22, %s25
      %p31 = scmp.eq.s32.totalorder %s12, 0
      %p32 = por %p30, %p31
      %p33 = scmp.ne.s32.totalorder %s22, %s25
      %p34 = scmp.eq.s32.totalorder %s17, 1
      %p35 = por %p33, %p34
      %p36 = scmp.ne.s32.totalorder %s25, %s26
      %p37 = scmp.eq.s32.totalorder %s17, 0
      %p38 = por %p36, %p37
      %p39 = scmp.ne.s32.totalorder %s25, %s26
      %p40 = scmp.eq.s32.totalorder %s18, 1
      %p41 = por %p39, %p40
      %p43 = scmp.ne.s32.totalorder %s26, %s42
      %p44 = scmp.eq.s32.totalorder %s18, 0
      %p45 = por %p43, %p44
      %s46 = ssub.s32 %s12, %s19
      %p47 = scmp.eq.s32.totalorder %s46, 0
      %s49 = sadd.s32 %s48, 1
      %s50 = scalar_select %p47, %s48, %s49
      %p53 = pneg %p47
      %p54 = scmp.eq.s32.totalorder %s12, 1
      %p55 = por %p53, %p54
      %p56 = scmp.ne.s32.totalorder %s48, %s51
      %p57 = scmp.eq.s32.totalorder %s12, 0
      %p58 = por %p56, %p57
      %p59 = scmp.ne.s32.totalorder %s48, %s51
      %p60 = scmp.eq.s32.totalorder %s17, 1
      %p61 = por %p59, %p60
      %p62 = scmp.ne.s32.totalorder %s51, %s52
      %p63 = scmp.eq.s32.totalorder %s17, 0
      %p64 = por %p62, %p63
      %p65 = scmp.ne.s32.totalorder %s51, %s52
      %p66 = scmp.eq.s32.totalorder %s18, 1
      %p67 = por %p65, %p66
      %p69 = scmp.ne.s32.totalorder %s52, %s68
      %p70 = scmp.eq.s32.totalorder %s18, 0
      %p71 = por %p69, %p70
      %s73 = sadd.s32 %s72, 1
      %p76 = scmp.eq.s32.totalorder %s12, 1
      %p77 = scmp.ne.s32.totalorder %s72, %s74
      %p78 = scmp.eq.s32.totalorder %s12, 0
      %p79 = por %p77, %p78
      %p80 = scmp.ne.s32.totalorder %s72, %s74
      %p81 = scmp.eq.s32.totalorder %s17, 1
      %p82 = por %p80, %p81
      %p83 = scmp.ne.s32.totalorder %s74, %s75
      %p84 = scmp.eq.s32.totalorder %s17, 0
      %p85 = por %p83, %p84
      %p86 = scmp.ne.s32.totalorder %s74, %s75
      %p87 = scmp.eq.s32.totalorder %s18, 1
      %p88 = por %p86, %p87
      %p90 = scmp.ne.s32.totalorder %s75, %s89
      %p91 = scmp.eq.s32.totalorder %s18, 0
      %p92 = por %p90, %p91
      %s94 = sadd.s32 %s93, 1
      %p97 = scmp.eq.s32.totalorder %s12, 1
      %p98 = scmp.ne.s32.totalorder %s93, %s95
      %p99 = scmp.eq.s32.totalorder %s12, 0
      %p100 = por %p98, %p99
      %p101 = scmp.ne.s32.totalorder %s93, %s95
      %p102 = scmp.eq.s32.totalorder %s17, 1
      %p103 = por %p101, %p102
      %p104 = scmp.ne.s32.totalorder %s95, %s96
      %p105 = scmp.eq.s32.totalorder %s17, 0
      %p106 = por %p104, %p105
      %p107 = scmp.ne.s32.totalorder %s95, %s96
      %p108 = scmp.eq.s32.totalorder %s18, 1
      %p109 = por %p107, %p108
      %p111 = scmp.ne.s32.totalorder %s96, %s110
      %p112 = scmp.eq.s32.totalorder %s18, 0
      %p113 = por %p111, %p112
      %s115 = sadd.s32 %s114, 1
      %p118 = scmp.eq.s32.totalorder %s12, 1
      %p119 = scmp.ne.s32.totalorder %s114, %s116
      %p120 = scmp.eq.s32.totalorder %s12, 0
      %p121 = por %p119, %p120
      %p122 = scmp.ne.s32.totalorder %s114, %s116
      %p123 = scmp.eq.s32.totalorder %s17, 1
      %p124 = por %p122, %p123
      %p125 = scmp.ne.s32.totalorder %s116, %s117
      %p126 = scmp.eq.s32.totalorder %s17, 0
      %p127 = por %p125, %p126
      %p128 = scmp.ne.s32.totalorder %s116, %s117
      %p129 = scmp.eq.s32.totalorder %s18, 1
      %p130 = por %p128, %p129
      %p132 = scmp.ne.s32.totalorder %s117, %s131
      %p133 = scmp.eq.s32.totalorder %s18, 0
      %p134 = por %p132, %p133
      %s136 = sadd.s32 %s135, 1
      %p139 = scmp.eq.s32.totalorder %s12, 1
      %p140 = scmp.ne.s32.totalorder %s135, %s137
      %p141 = scmp.eq.s32.totalorder %s12, 0
      %p142 = por %p140, %p141
      %p143 = scmp.ne.s32.totalorder %s135, %s137
      %p144 = scmp.eq.s32.totalorder %s17, 1
      %p145 = por %p143, %p144
      %p146 = scmp.ne.s32.totalorder %s137, %s138
      %p147 = scmp.eq.s32.totalorder %s17, 0
      %p148 = por %p146, %p147
      %p149 = scmp.ne.s32.totalorder %s137, %s138
      %p150 = scmp.eq.s32.totalorder %s18, 1
      %p151 = por %p149, %p150
      %p153 = scmp.ne.s32.totalorder %s138, %s152
      %p154 = scmp.eq.s32.totalorder %s18, 0
      %p155 = por %p153, %p154
      %p156 = scmp.le.s32.totalorder 1, %s12
      %p157 = scmp.lt.s32.totalorder %s12, 3
      %p158 = pnand %p156, %p157
      %p159 = pneg %p158
      // Predicated region
      $region9: #{simple_cnn_forward.3} parent=5 // pred_check
        _
      $region10: #{simple_cnn_forward.3} parent=5 // pred_check_branch
        %161 = sbr.rel (%p158) target = $region12
      $region11: #{simple_cnn_forward.3} parent=5 // pred_region
        %s162 = ssub.s32 %s12, 1
        // Predicated region
        $region13: #{simple_cnn_forward.3} parent=11 // pred_check
          %p163 = pneg %p85
        $region14: #{simple_cnn_forward.3} parent=11 // pred_check_branch
          %165 = sbr.rel (%p163) target = $region16
        $region15: #{simple_cnn_forward.3} parent=11 // pred_region
          _
        $region16: #{simple_cnn_forward.3} parent=11 // pred_fallthru
          _
        // Predicated region
        $region17: #{simple_cnn_forward.3} parent=11 // pred_check
          %p166 = pneg %p106
        $region18: #{simple_cnn_forward.3} parent=11 // pred_check_branch
          %168 = sbr.rel (%p166) target = $region20
        $region19: #{simple_cnn_forward.3} parent=11 // pred_region
          _
        $region20: #{simple_cnn_forward.3} parent=11 // pred_fallthru
          _
        // Predicated region
        $region21: #{simple_cnn_forward.3} parent=11 // pred_check
          %p169 = pneg %p127
        $region22: #{simple_cnn_forward.3} parent=11 // pred_check_branch
          %171 = sbr.rel (%p169) target = $region24
        $region23: #{simple_cnn_forward.3} parent=11 // pred_region
          _
        $region24: #{simple_cnn_forward.3} parent=11 // pred_fallthru
          _
      $region12: #{simple_cnn_forward.3} parent=5 // pred_fallthru
        _
      %p172 = scmp.lt.s32.totalorder %s12, 2
      // Predicated region
      $region25: #{simple_cnn_forward.3} parent=5 // pred_check
        %p173 = pneg %p172
      $region26: #{simple_cnn_forward.3} parent=5 // pred_check_branch
        %175 = sbr.rel (%p173) target = $region28
      $region27: #{simple_cnn_forward.3} parent=5 // pred_region
        // Predicated region
        $region29: #{simple_cnn_forward.3} parent=27 // pred_check
          %p176 = pneg %p32
        $region30: #{simple_cnn_forward.3} parent=27 // pred_check_branch
          %178 = sbr.rel (%p176) target = $region32
        $region31: #{simple_cnn_forward.3} parent=27 // pred_region
          %s179 = smul.u32 64, %s12
          %p180 = scmp.lt.s32.totalorder %s179, 127
          %s181 = scalar_select %p180, %s179, 127
          %s182 = scalar_lea.vmem %s0, %s181
          %s183 = smul.u32 64, %s12
        $region32: #{simple_cnn_forward.3} parent=27 // pred_fallthru
          _
        // Predicated region
        $region33: #{simple_cnn_forward.3} parent=27 // pred_check
          %p184 = pneg %p58
        $region34: #{simple_cnn_forward.3} parent=27 // pred_check_branch
          %186 = sbr.rel (%p184) target = $region36
        $region35: #{simple_cnn_forward.3} parent=27 // pred_region
          %s187 = smul.u32 1024, %s12
          %p188 = scmp.lt.s32.totalorder %s187, 2047
          %s189 = scalar_select %p188, %s187, 2047
          %s190 = smul.addr %s189, 4
          %s191 = scalar_lea.vmem %s1, %s190
          %s192 = smul.u32 1024, %s12
        $region36: #{simple_cnn_forward.3} parent=27 // pred_fallthru
          _
      $region28: #{simple_cnn_forward.3} parent=5 // pred_fallthru
        _
      %p193 = scmp.le.s32.totalorder 1, %s12
      %p194 = scmp.lt.s32.totalorder %s12, 3
      %p195 = pnand %p193, %p194
      %p196 = pneg %p195
      // Predicated region
      $region37: #{simple_cnn_forward.3} parent=5 // pred_check
        _
      $region38: #{simple_cnn_forward.3} parent=5 // pred_check_branch
        %198 = sbr.rel (%p195) target = $region40
      $region39: #{simple_cnn_forward.3} parent=5 // pred_region
        %s199 = ssub.s32 %s12, 1
        %s200 = smul.u32 64, %s17
        %p201 = scmp.lt.s32.totalorder %s200, 127
        %s202 = scalar_select %p201, %s200, 127
        %s203 = scalar_lea.vmem %s0, %s202
        %p204 = pneg %p38
        %p205 = pneg %p35
        %s206 = smul.u32 1024, %s17
        %p207 = scmp.lt.s32.totalorder %s206, 2047
        %s208 = scalar_select %p207, %s206, 2047
        %s209 = smul.addr %s208, 4
        %s210 = scalar_lea.vmem %s1, %s209
        %p211 = pneg %p64
        %p212 = pneg %p61
        %p213 = pneg %p85
        %p214 = pneg %p82
        %p215 = pneg %p106
        %p216 = pneg %p103
        %p217 = pneg %p127
        %p218 = pneg %p124
        %p219 = pneg %p148
        %p220 = pneg %p145
        %s221 = smul.u32 64, %s17
        %p222 = scmp.lt.s32.totalorder %s221, 127
        %s223 = scalar_select %p222, %s221, 127
        %s224 = scalar_lea.vmem %s0, %s223
        %s225 = smul.u32 64, %s17
        %s226 = smul.u32 1024, %s17
        %p227 = scmp.lt.s32.totalorder %s226, 2047
        %s228 = scalar_select %p227, %s226, 2047
        %s229 = smul.addr %s228, 4
        %s230 = scalar_lea.vmem %s1, %s229
        %s231 = smul.u32 1024, %s17
        %p233 = scmp.eq.s32.totalorder %s17, 0
        // Predicated region
        $region41: #{simple_cnn_forward.3} parent=39 // pred_check
          %p234 = pneg %p233
        $region42: #{simple_cnn_forward.3} parent=39 // pred_check_branch
          %236 = sbr.rel (%p234) target = $region44
        $region43: #{simple_cnn_forward.3} parent=39 // pred_region
          %237 = vst [vmem:[#allocation2] sm:$0x3] 0.0
        $region44: #{simple_cnn_forward.3} parent=39 // pred_fallthru
          _
        %v238 = vld [vmem:[#allocation2] sm:$0x3]
        %v239 = vld [vmem:[%s224] sm:$0xff]
        %v240 = vld [vmem:[%s224 + $0x8] sm:$0xff]
        %v241 = vld [vmem:[%s224 + $0x10] sm:$0xff]
        %v242 = vld [vmem:[%s224 + $0x18] sm:$0xff]
        %v243 = vld [vmem:[%s224 + $0x20] sm:$0xff]
        %v244 = vld [vmem:[%s224 + $0x28] sm:$0xff]
        %v245 = vld [vmem:[%s224 + $0x30] sm:$0xff]
        %v246 = vld [vmem:[%s224 + $0x38] sm:$0xff]
        %v247 = vld [vmem:[%s230] sm:$0xf]
        %v248 = vld [vmem:[%s230 + $0x4] sm:$0xf]
        %v249 = vld [vmem:[%s230 + $0x8] sm:$0xf]
        %v250 = vld [vmem:[%s230 + $0xc] sm:$0xf]
        %v251 = vld [vmem:[%s230 + $0x10] sm:$0xf]
        %v252 = vld [vmem:[%s230 + $0x14] sm:$0xf]
        %v253 = vld [vmem:[%s230 + $0x18] sm:$0xf]
        %v254 = vld [vmem:[%s230 + $0x1c] sm:$0xf]
        %v255 = vld [vmem:[%s230 + $0x20] sm:$0xf]
        %v256 = vld [vmem:[%s230 + $0x24] sm:$0xf]
        %v257 = vld [vmem:[%s230 + $0x28] sm:$0xf]
        %v258 = vld [vmem:[%s230 + $0x2c] sm:$0xf]
        %v259 = vld [vmem:[%s230 + $0x30] sm:$0xf]
        %v260 = vld [vmem:[%s230 + $0x34] sm:$0xf]
        %v261 = vld [vmem:[%s230 + $0x38] sm:$0xf]
        %v262 = vld [vmem:[%s230 + $0x3c] sm:$0xf]
        %v263 = vld [vmem:[%s230 + $0x40] sm:$0xf]
        %v264 = vld [vmem:[%s230 + $0x44] sm:$0xf]
        %v265 = vld [vmem:[%s230 + $0x48] sm:$0xf]
        %v266 = vld [vmem:[%s230 + $0x4c] sm:$0xf]
        %v267 = vld [vmem:[%s230 + $0x50] sm:$0xf]
        %v268 = vld [vmem:[%s230 + $0x54] sm:$0xf]
        %v269 = vld [vmem:[%s230 + $0x58] sm:$0xf]
        %v270 = vld [vmem:[%s230 + $0x5c] sm:$0xf]
        %v271 = vld [vmem:[%s230 + $0x60] sm:$0xf]
        %v272 = vld [vmem:[%s230 + $0x64] sm:$0xf]
        %v273 = vld [vmem:[%s230 + $0x68] sm:$0xf]
        %v274 = vld [vmem:[%s230 + $0x6c] sm:$0xf]
        %v275 = vld [vmem:[%s230 + $0x70] sm:$0xf]
        %v276 = vld [vmem:[%s230 + $0x74] sm:$0xf]
        %v277 = vld [vmem:[%s230 + $0x78] sm:$0xf]
        %v278 = vld [vmem:[%s230 + $0x7c] sm:$0xf]
        %v279 = vld [vmem:[%s230 + $0x80] sm:$0xf]
        %v280 = vld [vmem:[%s230 + $0x84] sm:$0xf]
        %v281 = vld [vmem:[%s230 + $0x88] sm:$0xf]
        %v282 = vld [vmem:[%s230 + $0x8c] sm:$0xf]
        %v283 = vld [vmem:[%s230 + $0x90] sm:$0xf]
        %v284 = vld [vmem:[%s230 + $0x94] sm:$0xf]
        %v285 = vld [vmem:[%s230 + $0x98] sm:$0xf]
        %v286 = vld [vmem:[%s230 + $0x9c] sm:$0xf]
        %v287 = vld [vmem:[%s230 + $0xa0] sm:$0xf]
        %v288 = vld [vmem:[%s230 + $0xa4] sm:$0xf]
        %v289 = vld [vmem:[%s230 + $0xa8] sm:$0xf]
        %v290 = vld [vmem:[%s230 + $0xac] sm:$0xf]
        %v291 = vld [vmem:[%s230 + $0xb0] sm:$0xf]
        %v292 = vld [vmem:[%s230 + $0xb4] sm:$0xf]
        %v293 = vld [vmem:[%s230 + $0xb8] sm:$0xf]
        %v294 = vld [vmem:[%s230 + $0xbc] sm:$0xf]
        %v295 = vld [vmem:[%s230 + $0xc0] sm:$0xf]
        %v296 = vld [vmem:[%s230 + $0xc4] sm:$0xf]
        %v297 = vld [vmem:[%s230 + $0xc8] sm:$0xf]
        %v298 = vld [vmem:[%s230 + $0xcc] sm:$0xf]
        %v299 = vld [vmem:[%s230 + $0xd0] sm:$0xf]
        %v300 = vld [vmem:[%s230 + $0xd4] sm:$0xf]
        %v301 = vld [vmem:[%s230 + $0xd8] sm:$0xf]
        %v302 = vld [vmem:[%s230 + $0xdc] sm:$0xf]
        %v303 = vld [vmem:[%s230 + $0xe0] sm:$0xf]
        %v304 = vld [vmem:[%s230 + $0xe4] sm:$0xf]
        %v305 = vld [vmem:[%s230 + $0xe8] sm:$0xf]
        %v306 = vld [vmem:[%s230 + $0xec] sm:$0xf]
        %v307 = vld [vmem:[%s230 + $0xf0] sm:$0xf]
        %v308 = vld [vmem:[%s230 + $0xf4] sm:$0xf]
        %v309 = vld [vmem:[%s230 + $0xf8] sm:$0xf]
        %v310 = vld [vmem:[%s230 + $0xfc] sm:$0xf]
        %v311 = vld [vmem:[%s230 + $0x100] sm:$0xf]
        %v312 = vld [vmem:[%s230 + $0x104] sm:$0xf]
        %v313 = vld [vmem:[%s230 + $0x108] sm:$0xf]
        %v314 = vld [vmem:[%s230 + $0x10c] sm:$0xf]
        %v315 = vld [vmem:[%s230 + $0x110] sm:$0xf]
        %v316 = vld [vmem:[%s230 + $0x114] sm:$0xf]
        %v317 = vld [vmem:[%s230 + $0x118] sm:$0xf]
        %v318 = vld [vmem:[%s230 + $0x11c] sm:$0xf]
        %v319 = vld [vmem:[%s230 + $0x120] sm:$0xf]
        %v320 = vld [vmem:[%s230 + $0x124] sm:$0xf]
        %v321 = vld [vmem:[%s230 + $0x128] sm:$0xf]
        %v322 = vld [vmem:[%s230 + $0x12c] sm:$0xf]
        %v323 = vld [vmem:[%s230 + $0x130] sm:$0xf]
        %v324 = vld [vmem:[%s230 + $0x134] sm:$0xf]
        %v325 = vld [vmem:[%s230 + $0x138] sm:$0xf]
        %v326 = vld [vmem:[%s230 + $0x13c] sm:$0xf]
        %v327 = vld [vmem:[%s230 + $0x140] sm:$0xf]
        %v328 = vld [vmem:[%s230 + $0x144] sm:$0xf]
        %v329 = vld [vmem:[%s230 + $0x148] sm:$0xf]
        %v330 = vld [vmem:[%s230 + $0x14c] sm:$0xf]
        %v331 = vld [vmem:[%s230 + $0x150] sm:$0xf]
        %v332 = vld [vmem:[%s230 + $0x154] sm:$0xf]
        %v333 = vld [vmem:[%s230 + $0x158] sm:$0xf]
        %v334 = vld [vmem:[%s230 + $0x15c] sm:$0xf]
        %v335 = vld [vmem:[%s230 + $0x160] sm:$0xf]
        %v336 = vld [vmem:[%s230 + $0x164] sm:$0xf]
        %v337 = vld [vmem:[%s230 + $0x168] sm:$0xf]
        %v338 = vld [vmem:[%s230 + $0x16c] sm:$0xf]
        %v339 = vld [vmem:[%s230 + $0x170] sm:$0xf]
        %v340 = vld [vmem:[%s230 + $0x174] sm:$0xf]
        %v341 = vld [vmem:[%s230 + $0x178] sm:$0xf]
        %v342 = vld [vmem:[%s230 + $0x17c] sm:$0xf]
        %v343 = vld [vmem:[%s230 + $0x180] sm:$0xf]
        %v344 = vld [vmem:[%s230 + $0x184] sm:$0xf]
        %v345 = vld [vmem:[%s230 + $0x188] sm:$0xf]
        %v346 = vld [vmem:[%s230 + $0x18c] sm:$0xf]
        %v347 = vld [vmem:[%s230 + $0x190] sm:$0xf]
        %v348 = vld [vmem:[%s230 + $0x194] sm:$0xf]
        %v349 = vld [vmem:[%s230 + $0x198] sm:$0xf]
        %v350 = vld [vmem:[%s230 + $0x19c] sm:$0xf]
        %v351 = vld [vmem:[%s230 + $0x1a0] sm:$0xf]
        %v352 = vld [vmem:[%s230 + $0x1a4] sm:$0xf]
        %v353 = vld [vmem:[%s230 + $0x1a8] sm:$0xf]
        %v354 = vld [vmem:[%s230 + $0x1ac] sm:$0xf]
        %v355 = vld [vmem:[%s230 + $0x1b0] sm:$0xf]
        %v356 = vld [vmem:[%s230 + $0x1b4] sm:$0xf]
        %v357 = vld [vmem:[%s230 + $0x1b8] sm:$0xf]
        %v358 = vld [vmem:[%s230 + $0x1bc] sm:$0xf]
        %v359 = vld [vmem:[%s230 + $0x1c0] sm:$0xf]
        %v360 = vld [vmem:[%s230 + $0x1c4] sm:$0xf]
        %v361 = vld [vmem:[%s230 + $0x1c8] sm:$0xf]
        %v362 = vld [vmem:[%s230 + $0x1cc] sm:$0xf]
        %v363 = vld [vmem:[%s230 + $0x1d0] sm:$0xf]
        %v364 = vld [vmem:[%s230 + $0x1d4] sm:$0xf]
        %v365 = vld [vmem:[%s230 + $0x1d8] sm:$0xf]
        %v366 = vld [vmem:[%s230 + $0x1dc] sm:$0xf]
        %v367 = vld [vmem:[%s230 + $0x1e0] sm:$0xf]
        %v368 = vld [vmem:[%s230 + $0x1e4] sm:$0xf]
        %v369 = vld [vmem:[%s230 + $0x1e8] sm:$0xf]
        %v370 = vld [vmem:[%s230 + $0x1ec] sm:$0xf]
        %v371 = vld [vmem:[%s230 + $0x1f0] sm:$0xf]
        %v372 = vld [vmem:[%s230 + $0x1f4] sm:$0xf]
        %v373 = vld [vmem:[%s230 + $0x1f8] sm:$0xf]
        %v374 = vld [vmem:[%s230 + $0x1fc] sm:$0xf]
        %v375 = vld [vmem:[%s230 + $0x200] sm:$0xf]
        %v376 = vld [vmem:[%s230 + $0x204] sm:$0xf]
        %v377 = vld [vmem:[%s230 + $0x208] sm:$0xf]
        %v378 = vld [vmem:[%s230 + $0x20c] sm:$0xf]
        %v379 = vld [vmem:[%s230 + $0x210] sm:$0xf]
        %v380 = vld [vmem:[%s230 + $0x214] sm:$0xf]
        %v381 = vld [vmem:[%s230 + $0x218] sm:$0xf]
        %v382 = vld [vmem:[%s230 + $0x21c] sm:$0xf]
        %v383 = vld [vmem:[%s230 + $0x220] sm:$0xf]
        %v384 = vld [vmem:[%s230 + $0x224] sm:$0xf]
        %v385 = vld [vmem:[%s230 + $0x228] sm:$0xf]
        %v386 = vld [vmem:[%s230 + $0x22c] sm:$0xf]
        %v387 = vld [vmem:[%s230 + $0x230] sm:$0xf]
        %v388 = vld [vmem:[%s230 + $0x234] sm:$0xf]
        %v389 = vld [vmem:[%s230 + $0x238] sm:$0xf]
        %v390 = vld [vmem:[%s230 + $0x23c] sm:$0xf]
        %v391 = vld [vmem:[%s230 + $0x240] sm:$0xf]
        %v392 = vld [vmem:[%s230 + $0x244] sm:$0xf]
        %v393 = vld [vmem:[%s230 + $0x248] sm:$0xf]
        %v394 = vld [vmem:[%s230 + $0x24c] sm:$0xf]
        %v395 = vld [vmem:[%s230 + $0x250] sm:$0xf]
        %v396 = vld [vmem:[%s230 + $0x254] sm:$0xf]
        %v397 = vld [vmem:[%s230 + $0x258] sm:$0xf]
        %v398 = vld [vmem:[%s230 + $0x25c] sm:$0xf]
        %v399 = vld [vmem:[%s230 + $0x260] sm:$0xf]
        %v400 = vld [vmem:[%s230 + $0x264] sm:$0xf]
        %v401 = vld [vmem:[%s230 + $0x268] sm:$0xf]
        %v402 = vld [vmem:[%s230 + $0x26c] sm:$0xf]
        %v403 = vld [vmem:[%s230 + $0x270] sm:$0xf]
        %v404 = vld [vmem:[%s230 + $0x274] sm:$0xf]
        %v405 = vld [vmem:[%s230 + $0x278] sm:$0xf]
        %v406 = vld [vmem:[%s230 + $0x27c] sm:$0xf]
        %v407 = vld [vmem:[%s230 + $0x280] sm:$0xf]
        %v408 = vld [vmem:[%s230 + $0x284] sm:$0xf]
        %v409 = vld [vmem:[%s230 + $0x288] sm:$0xf]
        %v410 = vld [vmem:[%s230 + $0x28c] sm:$0xf]
        %v411 = vld [vmem:[%s230 + $0x290] sm:$0xf]
        %v412 = vld [vmem:[%s230 + $0x294] sm:$0xf]
        %v413 = vld [vmem:[%s230 + $0x298] sm:$0xf]
        %v414 = vld [vmem:[%s230 + $0x29c] sm:$0xf]
        %v415 = vld [vmem:[%s230 + $0x2a0] sm:$0xf]
        %v416 = vld [vmem:[%s230 + $0x2a4] sm:$0xf]
        %v417 = vld [vmem:[%s230 + $0x2a8] sm:$0xf]
        %v418 = vld [vmem:[%s230 + $0x2ac] sm:$0xf]
        %v419 = vld [vmem:[%s230 + $0x2b0] sm:$0xf]
        %v420 = vld [vmem:[%s230 + $0x2b4] sm:$0xf]
        %v421 = vld [vmem:[%s230 + $0x2b8] sm:$0xf]
        %v422 = vld [vmem:[%s230 + $0x2bc] sm:$0xf]
        %v423 = vld [vmem:[%s230 + $0x2c0] sm:$0xf]
        %v424 = vld [vmem:[%s230 + $0x2c4] sm:$0xf]
        %v425 = vld [vmem:[%s230 + $0x2c8] sm:$0xf]
        %v426 = vld [vmem:[%s230 + $0x2cc] sm:$0xf]
        %v427 = vld [vmem:[%s230 + $0x2d0] sm:$0xf]
        %v428 = vld [vmem:[%s230 + $0x2d4] sm:$0xf]
        %v429 = vld [vmem:[%s230 + $0x2d8] sm:$0xf]
        %v430 = vld [vmem:[%s230 + $0x2dc] sm:$0xf]
        %v431 = vld [vmem:[%s230 + $0x2e0] sm:$0xf]
        %v432 = vld [vmem:[%s230 + $0x2e4] sm:$0xf]
        %v433 = vld [vmem:[%s230 + $0x2e8] sm:$0xf]
        %v434 = vld [vmem:[%s230 + $0x2ec] sm:$0xf]
        %v435 = vld [vmem:[%s230 + $0x2f0] sm:$0xf]
        %v436 = vld [vmem:[%s230 + $0x2f4] sm:$0xf]
        %v437 = vld [vmem:[%s230 + $0x2f8] sm:$0xf]
        %v438 = vld [vmem:[%s230 + $0x2fc] sm:$0xf]
        %v439 = vld [vmem:[%s230 + $0x300] sm:$0xf]
        %v440 = vld [vmem:[%s230 + $0x304] sm:$0xf]
        %v441 = vld [vmem:[%s230 + $0x308] sm:$0xf]
        %v442 = vld [vmem:[%s230 + $0x30c] sm:$0xf]
        %v443 = vld [vmem:[%s230 + $0x310] sm:$0xf]
        %v444 = vld [vmem:[%s230 + $0x314] sm:$0xf]
        %v445 = vld [vmem:[%s230 + $0x318] sm:$0xf]
        %v446 = vld [vmem:[%s230 + $0x31c] sm:$0xf]
        %v447 = vld [vmem:[%s230 + $0x320] sm:$0xf]
        %v448 = vld [vmem:[%s230 + $0x324] sm:$0xf]
        %v449 = vld [vmem:[%s230 + $0x328] sm:$0xf]
        %v450 = vld [vmem:[%s230 + $0x32c] sm:$0xf]
        %v451 = vld [vmem:[%s230 + $0x330] sm:$0xf]
        %v452 = vld [vmem:[%s230 + $0x334] sm:$0xf]
        %v453 = vld [vmem:[%s230 + $0x338] sm:$0xf]
        %v454 = vld [vmem:[%s230 + $0x33c] sm:$0xf]
        %v455 = vld [vmem:[%s230 + $0x340] sm:$0xf]
        %v456 = vld [vmem:[%s230 + $0x344] sm:$0xf]
        %v457 = vld [vmem:[%s230 + $0x348] sm:$0xf]
        %v458 = vld [vmem:[%s230 + $0x34c] sm:$0xf]
        %v459 = vld [vmem:[%s230 + $0x350] sm:$0xf]
        %v460 = vld [vmem:[%s230 + $0x354] sm:$0xf]
        %v461 = vld [vmem:[%s230 + $0x358] sm:$0xf]
        %v462 = vld [vmem:[%s230 + $0x35c] sm:$0xf]
        %v463 = vld [vmem:[%s230 + $0x360] sm:$0xf]
        %v464 = vld [vmem:[%s230 + $0x364] sm:$0xf]
        %v465 = vld [vmem:[%s230 + $0x368] sm:$0xf]
        %v466 = vld [vmem:[%s230 + $0x36c] sm:$0xf]
        %v467 = vld [vmem:[%s230 + $0x370] sm:$0xf]
        %v468 = vld [vmem:[%s230 + $0x374] sm:$0xf]
        %v469 = vld [vmem:[%s230 + $0x378] sm:$0xf]
        %v470 = vld [vmem:[%s230 + $0x37c] sm:$0xf]
        %v471 = vld [vmem:[%s230 + $0x380] sm:$0xf]
        %v472 = vld [vmem:[%s230 + $0x384] sm:$0xf]
        %v473 = vld [vmem:[%s230 + $0x388] sm:$0xf]
        %v474 = vld [vmem:[%s230 + $0x38c] sm:$0xf]
        %v475 = vld [vmem:[%s230 + $0x390] sm:$0xf]
        %v476 = vld [vmem:[%s230 + $0x394] sm:$0xf]
        %v477 = vld [vmem:[%s230 + $0x398] sm:$0xf]
        %v478 = vld [vmem:[%s230 + $0x39c] sm:$0xf]
        %v479 = vld [vmem:[%s230 + $0x3a0] sm:$0xf]
        %v480 = vld [vmem:[%s230 + $0x3a4] sm:$0xf]
        %v481 = vld [vmem:[%s230 + $0x3a8] sm:$0xf]
        %v482 = vld [vmem:[%s230 + $0x3ac] sm:$0xf]
        %v483 = vld [vmem:[%s230 + $0x3b0] sm:$0xf]
        %v484 = vld [vmem:[%s230 + $0x3b4] sm:$0xf]
        %v485 = vld [vmem:[%s230 + $0x3b8] sm:$0xf]
        %v486 = vld [vmem:[%s230 + $0x3bc] sm:$0xf]
        %v487 = vld [vmem:[%s230 + $0x3c0] sm:$0xf]
        %v488 = vld [vmem:[%s230 + $0x3c4] sm:$0xf]
        %v489 = vld [vmem:[%s230 + $0x3c8] sm:$0xf]
        %v490 = vld [vmem:[%s230 + $0x3cc] sm:$0xf]
        %v491 = vld [vmem:[%s230 + $0x3d0] sm:$0xf]
        %v492 = vld [vmem:[%s230 + $0x3d4] sm:$0xf]
        %v493 = vld [vmem:[%s230 + $0x3d8] sm:$0xf]
        %v494 = vld [vmem:[%s230 + $0x3dc] sm:$0xf]
        %v495 = vld [vmem:[%s230 + $0x3e0] sm:$0xf]
        %v496 = vld [vmem:[%s230 + $0x3e4] sm:$0xf]
        %v497 = vld [vmem:[%s230 + $0x3e8] sm:$0xf]
        %v498 = vld [vmem:[%s230 + $0x3ec] sm:$0xf]
        %v499 = vld [vmem:[%s230 + $0x3f0] sm:$0xf]
        %v500 = vld [vmem:[%s230 + $0x3f4] sm:$0xf]
        %v501 = vld [vmem:[%s230 + $0x3f8] sm:$0xf]
        %v502 = vld [vmem:[%s230 + $0x3fc] sm:$0xf]
        %v503 = vld [vmem:[%s230 + $0x400] sm:$0xf]
        %v504 = vld [vmem:[%s230 + $0x404] sm:$0xf]
        %v505 = vld [vmem:[%s230 + $0x408] sm:$0xf]
        %v506 = vld [vmem:[%s230 + $0x40c] sm:$0xf]
        %v507 = vld [vmem:[%s230 + $0x410] sm:$0xf]
        %v508 = vld [vmem:[%s230 + $0x414] sm:$0xf]
        %v509 = vld [vmem:[%s230 + $0x418] sm:$0xf]
        %v510 = vld [vmem:[%s230 + $0x41c] sm:$0xf]
        %v511 = vld [vmem:[%s230 + $0x420] sm:$0xf]
        %v512 = vld [vmem:[%s230 + $0x424] sm:$0xf]
        %v513 = vld [vmem:[%s230 + $0x428] sm:$0xf]
        %v514 = vld [vmem:[%s230 + $0x42c] sm:$0xf]
        %v515 = vld [vmem:[%s230 + $0x430] sm:$0xf]
        %v516 = vld [vmem:[%s230 + $0x434] sm:$0xf]
        %v517 = vld [vmem:[%s230 + $0x438] sm:$0xf]
        %v518 = vld [vmem:[%s230 + $0x43c] sm:$0xf]
        %v519 = vld [vmem:[%s230 + $0x440] sm:$0xf]
        %v520 = vld [vmem:[%s230 + $0x444] sm:$0xf]
        %v521 = vld [vmem:[%s230 + $0x448] sm:$0xf]
        %v522 = vld [vmem:[%s230 + $0x44c] sm:$0xf]
        %v523 = vld [vmem:[%s230 + $0x450] sm:$0xf]
        %v524 = vld [vmem:[%s230 + $0x454] sm:$0xf]
        %v525 = vld [vmem:[%s230 + $0x458] sm:$0xf]
        %v526 = vld [vmem:[%s230 + $0x45c] sm:$0xf]
        %v527 = vld [vmem:[%s230 + $0x460] sm:$0xf]
        %v528 = vld [vmem:[%s230 + $0x464] sm:$0xf]
        %v529 = vld [vmem:[%s230 + $0x468] sm:$0xf]
        %v530 = vld [vmem:[%s230 + $0x46c] sm:$0xf]
        %v531 = vld [vmem:[%s230 + $0x470] sm:$0xf]
        %v532 = vld [vmem:[%s230 + $0x474] sm:$0xf]
        %v533 = vld [vmem:[%s230 + $0x478] sm:$0xf]
        %v534 = vld [vmem:[%s230 + $0x47c] sm:$0xf]
        %v535 = vld [vmem:[%s230 + $0x480] sm:$0xf]
        %v536 = vld [vmem:[%s230 + $0x484] sm:$0xf]
        %v537 = vld [vmem:[%s230 + $0x488] sm:$0xf]
        %v538 = vld [vmem:[%s230 + $0x48c] sm:$0xf]
        %v539 = vld [vmem:[%s230 + $0x490] sm:$0xf]
        %v540 = vld [vmem:[%s230 + $0x494] sm:$0xf]
        %v541 = vld [vmem:[%s230 + $0x498] sm:$0xf]
        %v542 = vld [vmem:[%s230 + $0x49c] sm:$0xf]
        %v543 = vld [vmem:[%s230 + $0x4a0] sm:$0xf]
        %v544 = vld [vmem:[%s230 + $0x4a4] sm:$0xf]
        %v545 = vld [vmem:[%s230 + $0x4a8] sm:$0xf]
        %v546 = vld [vmem:[%s230 + $0x4ac] sm:$0xf]
        %v547 = vld [vmem:[%s230 + $0x4b0] sm:$0xf]
        %v548 = vld [vmem:[%s230 + $0x4b4] sm:$0xf]
        %v549 = vld [vmem:[%s230 + $0x4b8] sm:$0xf]
        %v550 = vld [vmem:[%s230 + $0x4bc] sm:$0xf]
        %v551 = vld [vmem:[%s230 + $0x4c0] sm:$0xf]
        %v552 = vld [vmem:[%s230 + $0x4c4] sm:$0xf]
        %v553 = vld [vmem:[%s230 + $0x4c8] sm:$0xf]
        %v554 = vld [vmem:[%s230 + $0x4cc] sm:$0xf]
        %v555 = vld [vmem:[%s230 + $0x4d0] sm:$0xf]
        %v556 = vld [vmem:[%s230 + $0x4d4] sm:$0xf]
        %v557 = vld [vmem:[%s230 + $0x4d8] sm:$0xf]
        %v558 = vld [vmem:[%s230 + $0x4dc] sm:$0xf]
        %v559 = vld [vmem:[%s230 + $0x4e0] sm:$0xf]
        %v560 = vld [vmem:[%s230 + $0x4e4] sm:$0xf]
        %v561 = vld [vmem:[%s230 + $0x4e8] sm:$0xf]
        %v562 = vld [vmem:[%s230 + $0x4ec] sm:$0xf]
        %v563 = vld [vmem:[%s230 + $0x4f0] sm:$0xf]
        %v564 = vld [vmem:[%s230 + $0x4f4] sm:$0xf]
        %v565 = vld [vmem:[%s230 + $0x4f8] sm:$0xf]
        %v566 = vld [vmem:[%s230 + $0x4fc] sm:$0xf]
        %v567 = vld [vmem:[%s230 + $0x500] sm:$0xf]
        %v568 = vld [vmem:[%s230 + $0x504] sm:$0xf]
        %v569 = vld [vmem:[%s230 + $0x508] sm:$0xf]
        %v570 = vld [vmem:[%s230 + $0x50c] sm:$0xf]
        %v571 = vld [vmem:[%s230 + $0x510] sm:$0xf]
        %v572 = vld [vmem:[%s230 + $0x514] sm:$0xf]
        %v573 = vld [vmem:[%s230 + $0x518] sm:$0xf]
        %v574 = vld [vmem:[%s230 + $0x51c] sm:$0xf]
        %v575 = vld [vmem:[%s230 + $0x520] sm:$0xf]
        %v576 = vld [vmem:[%s230 + $0x524] sm:$0xf]
        %v577 = vld [vmem:[%s230 + $0x528] sm:$0xf]
        %v578 = vld [vmem:[%s230 + $0x52c] sm:$0xf]
        %v579 = vld [vmem:[%s230 + $0x530] sm:$0xf]
        %v580 = vld [vmem:[%s230 + $0x534] sm:$0xf]
        %v581 = vld [vmem:[%s230 + $0x538] sm:$0xf]
        %v582 = vld [vmem:[%s230 + $0x53c] sm:$0xf]
        %v583 = vld [vmem:[%s230 + $0x540] sm:$0xf]
        %v584 = vld [vmem:[%s230 + $0x544] sm:$0xf]
        %v585 = vld [vmem:[%s230 + $0x548] sm:$0xf]
        %v586 = vld [vmem:[%s230 + $0x54c] sm:$0xf]
        %v587 = vld [vmem:[%s230 + $0x550] sm:$0xf]
        %v588 = vld [vmem:[%s230 + $0x554] sm:$0xf]
        %v589 = vld [vmem:[%s230 + $0x558] sm:$0xf]
        %v590 = vld [vmem:[%s230 + $0x55c] sm:$0xf]
        %v591 = vld [vmem:[%s230 + $0x560] sm:$0xf]
        %v592 = vld [vmem:[%s230 + $0x564] sm:$0xf]
        %v593 = vld [vmem:[%s230 + $0x568] sm:$0xf]
        %v594 = vld [vmem:[%s230 + $0x56c] sm:$0xf]
        %v595 = vld [vmem:[%s230 + $0x570] sm:$0xf]
        %v596 = vld [vmem:[%s230 + $0x574] sm:$0xf]
        %v597 = vld [vmem:[%s230 + $0x578] sm:$0xf]
        %v598 = vld [vmem:[%s230 + $0x57c] sm:$0xf]
        %v599 = vld [vmem:[%s230 + $0x580] sm:$0xf]
        %v600 = vld [vmem:[%s230 + $0x584] sm:$0xf]
        %v601 = vld [vmem:[%s230 + $0x588] sm:$0xf]
        %v602 = vld [vmem:[%s230 + $0x58c] sm:$0xf]
        %v603 = vld [vmem:[%s230 + $0x590] sm:$0xf]
        %v604 = vld [vmem:[%s230 + $0x594] sm:$0xf]
        %v605 = vld [vmem:[%s230 + $0x598] sm:$0xf]
        %v606 = vld [vmem:[%s230 + $0x59c] sm:$0xf]
        %v607 = vld [vmem:[%s230 + $0x5a0] sm:$0xf]
        %v608 = vld [vmem:[%s230 + $0x5a4] sm:$0xf]
        %v609 = vld [vmem:[%s230 + $0x5a8] sm:$0xf]
        %v610 = vld [vmem:[%s230 + $0x5ac] sm:$0xf]
        %v611 = vld [vmem:[%s230 + $0x5b0] sm:$0xf]
        %v612 = vld [vmem:[%s230 + $0x5b4] sm:$0xf]
        %v613 = vld [vmem:[%s230 + $0x5b8] sm:$0xf]
        %v614 = vld [vmem:[%s230 + $0x5bc] sm:$0xf]
        %v615 = vld [vmem:[%s230 + $0x5c0] sm:$0xf]
        %v616 = vld [vmem:[%s230 + $0x5c4] sm:$0xf]
        %v617 = vld [vmem:[%s230 + $0x5c8] sm:$0xf]
        %v618 = vld [vmem:[%s230 + $0x5cc] sm:$0xf]
        %v619 = vld [vmem:[%s230 + $0x5d0] sm:$0xf]
        %v620 = vld [vmem:[%s230 + $0x5d4] sm:$0xf]
        %v621 = vld [vmem:[%s230 + $0x5d8] sm:$0xf]
        %v622 = vld [vmem:[%s230 + $0x5dc] sm:$0xf]
        %v623 = vld [vmem:[%s230 + $0x5e0] sm:$0xf]
        %v624 = vld [vmem:[%s230 + $0x5e4] sm:$0xf]
        %v625 = vld [vmem:[%s230 + $0x5e8] sm:$0xf]
        %v626 = vld [vmem:[%s230 + $0x5ec] sm:$0xf]
        %v627 = vld [vmem:[%s230 + $0x5f0] sm:$0xf]
        %v628 = vld [vmem:[%s230 + $0x5f4] sm:$0xf]
        %v629 = vld [vmem:[%s230 + $0x5f8] sm:$0xf]
        %v630 = vld [vmem:[%s230 + $0x5fc] sm:$0xf]
        %v631 = vld [vmem:[%s230 + $0x600] sm:$0xf]
        %v632 = vld [vmem:[%s230 + $0x604] sm:$0xf]
        %v633 = vld [vmem:[%s230 + $0x608] sm:$0xf]
        %v634 = vld [vmem:[%s230 + $0x60c] sm:$0xf]
        %v635 = vld [vmem:[%s230 + $0x610] sm:$0xf]
        %v636 = vld [vmem:[%s230 + $0x614] sm:$0xf]
        %v637 = vld [vmem:[%s230 + $0x618] sm:$0xf]
        %v638 = vld [vmem:[%s230 + $0x61c] sm:$0xf]
        %v639 = vld [vmem:[%s230 + $0x620] sm:$0xf]
        %v640 = vld [vmem:[%s230 + $0x624] sm:$0xf]
        %v641 = vld [vmem:[%s230 + $0x628] sm:$0xf]
        %v642 = vld [vmem:[%s230 + $0x62c] sm:$0xf]
        %v643 = vld [vmem:[%s230 + $0x630] sm:$0xf]
        %v644 = vld [vmem:[%s230 + $0x634] sm:$0xf]
        %v645 = vld [vmem:[%s230 + $0x638] sm:$0xf]
        %v646 = vld [vmem:[%s230 + $0x63c] sm:$0xf]
        %v647 = vld [vmem:[%s230 + $0x640] sm:$0xf]
        %v648 = vld [vmem:[%s230 + $0x644] sm:$0xf]
        %v649 = vld [vmem:[%s230 + $0x648] sm:$0xf]
        %v650 = vld [vmem:[%s230 + $0x64c] sm:$0xf]
        %v651 = vld [vmem:[%s230 + $0x650] sm:$0xf]
        %v652 = vld [vmem:[%s230 + $0x654] sm:$0xf]
        %v653 = vld [vmem:[%s230 + $0x658] sm:$0xf]
        %v654 = vld [vmem:[%s230 + $0x65c] sm:$0xf]
        %v655 = vld [vmem:[%s230 + $0x660] sm:$0xf]
        %v656 = vld [vmem:[%s230 + $0x664] sm:$0xf]
        %v657 = vld [vmem:[%s230 + $0x668] sm:$0xf]
        %v658 = vld [vmem:[%s230 + $0x66c] sm:$0xf]
        %v659 = vld [vmem:[%s230 + $0x670] sm:$0xf]
        %v660 = vld [vmem:[%s230 + $0x674] sm:$0xf]
        %v661 = vld [vmem:[%s230 + $0x678] sm:$0xf]
        %v662 = vld [vmem:[%s230 + $0x67c] sm:$0xf]
        %v663 = vld [vmem:[%s230 + $0x680] sm:$0xf]
        %v664 = vld [vmem:[%s230 + $0x684] sm:$0xf]
        %v665 = vld [vmem:[%s230 + $0x688] sm:$0xf]
        %v666 = vld [vmem:[%s230 + $0x68c] sm:$0xf]
        %v667 = vld [vmem:[%s230 + $0x690] sm:$0xf]
        %v668 = vld [vmem:[%s230 + $0x694] sm:$0xf]
        %v669 = vld [vmem:[%s230 + $0x698] sm:$0xf]
        %v670 = vld [vmem:[%s230 + $0x69c] sm:$0xf]
        %v671 = vld [vmem:[%s230 + $0x6a0] sm:$0xf]
        %v672 = vld [vmem:[%s230 + $0x6a4] sm:$0xf]
        %v673 = vld [vmem:[%s230 + $0x6a8] sm:$0xf]
        %v674 = vld [vmem:[%s230 + $0x6ac] sm:$0xf]
        %v675 = vld [vmem:[%s230 + $0x6b0] sm:$0xf]
        %v676 = vld [vmem:[%s230 + $0x6b4] sm:$0xf]
        %v677 = vld [vmem:[%s230 + $0x6b8] sm:$0xf]
        %v678 = vld [vmem:[%s230 + $0x6bc] sm:$0xf]
        %v679 = vld [vmem:[%s230 + $0x6c0] sm:$0xf]
        %v680 = vld [vmem:[%s230 + $0x6c4] sm:$0xf]
        %v681 = vld [vmem:[%s230 + $0x6c8] sm:$0xf]
        %v682 = vld [vmem:[%s230 + $0x6cc] sm:$0xf]
        %v683 = vld [vmem:[%s230 + $0x6d0] sm:$0xf]
        %v684 = vld [vmem:[%s230 + $0x6d4] sm:$0xf]
        %v685 = vld [vmem:[%s230 + $0x6d8] sm:$0xf]
        %v686 = vld [vmem:[%s230 + $0x6dc] sm:$0xf]
        %v687 = vld [vmem:[%s230 + $0x6e0] sm:$0xf]
        %v688 = vld [vmem:[%s230 + $0x6e4] sm:$0xf]
        %v689 = vld [vmem:[%s230 + $0x6e8] sm:$0xf]
        %v690 = vld [vmem:[%s230 + $0x6ec] sm:$0xf]
        %v691 = vld [vmem:[%s230 + $0x6f0] sm:$0xf]
        %v692 = vld [vmem:[%s230 + $0x6f4] sm:$0xf]
        %v693 = vld [vmem:[%s230 + $0x6f8] sm:$0xf]
        %v694 = vld [vmem:[%s230 + $0x6fc] sm:$0xf]
        %v695 = vld [vmem:[%s230 + $0x700] sm:$0xf]
        %v696 = vld [vmem:[%s230 + $0x704] sm:$0xf]
        %v697 = vld [vmem:[%s230 + $0x708] sm:$0xf]
        %v698 = vld [vmem:[%s230 + $0x70c] sm:$0xf]
        %v699 = vld [vmem:[%s230 + $0x710] sm:$0xf]
        %v700 = vld [vmem:[%s230 + $0x714] sm:$0xf]
        %v701 = vld [vmem:[%s230 + $0x718] sm:$0xf]
        %v702 = vld [vmem:[%s230 + $0x71c] sm:$0xf]
        %v703 = vld [vmem:[%s230 + $0x720] sm:$0xf]
        %v704 = vld [vmem:[%s230 + $0x724] sm:$0xf]
        %v705 = vld [vmem:[%s230 + $0x728] sm:$0xf]
        %v706 = vld [vmem:[%s230 + $0x72c] sm:$0xf]
        %v707 = vld [vmem:[%s230 + $0x730] sm:$0xf]
        %v708 = vld [vmem:[%s230 + $0x734] sm:$0xf]
        %v709 = vld [vmem:[%s230 + $0x738] sm:$0xf]
        %v710 = vld [vmem:[%s230 + $0x73c] sm:$0xf]
        %v711 = vld [vmem:[%s230 + $0x740] sm:$0xf]
        %v712 = vld [vmem:[%s230 + $0x744] sm:$0xf]
        %v713 = vld [vmem:[%s230 + $0x748] sm:$0xf]
        %v714 = vld [vmem:[%s230 + $0x74c] sm:$0xf]
        %v715 = vld [vmem:[%s230 + $0x750] sm:$0xf]
        %v716 = vld [vmem:[%s230 + $0x754] sm:$0xf]
        %v717 = vld [vmem:[%s230 + $0x758] sm:$0xf]
        %v718 = vld [vmem:[%s230 + $0x75c] sm:$0xf]
        %v719 = vld [vmem:[%s230 + $0x760] sm:$0xf]
        %v720 = vld [vmem:[%s230 + $0x764] sm:$0xf]
        %v721 = vld [vmem:[%s230 + $0x768] sm:$0xf]
        %v722 = vld [vmem:[%s230 + $0x76c] sm:$0xf]
        %v723 = vld [vmem:[%s230 + $0x770] sm:$0xf]
        %v724 = vld [vmem:[%s230 + $0x774] sm:$0xf]
        %v725 = vld [vmem:[%s230 + $0x778] sm:$0xf]
        %v726 = vld [vmem:[%s230 + $0x77c] sm:$0xf]
        %v727 = vld [vmem:[%s230 + $0x780] sm:$0xf]
        %v728 = vld [vmem:[%s230 + $0x784] sm:$0xf]
        %v729 = vld [vmem:[%s230 + $0x788] sm:$0xf]
        %v730 = vld [vmem:[%s230 + $0x78c] sm:$0xf]
        %v731 = vld [vmem:[%s230 + $0x790] sm:$0xf]
        %v732 = vld [vmem:[%s230 + $0x794] sm:$0xf]
        %v733 = vld [vmem:[%s230 + $0x798] sm:$0xf]
        %v734 = vld [vmem:[%s230 + $0x79c] sm:$0xf]
        %v735 = vld [vmem:[%s230 + $0x7a0] sm:$0xf]
        %v736 = vld [vmem:[%s230 + $0x7a4] sm:$0xf]
        %v737 = vld [vmem:[%s230 + $0x7a8] sm:$0xf]
        %v738 = vld [vmem:[%s230 + $0x7ac] sm:$0xf]
        %v739 = vld [vmem:[%s230 + $0x7b0] sm:$0xf]
        %v740 = vld [vmem:[%s230 + $0x7b4] sm:$0xf]
        %v741 = vld [vmem:[%s230 + $0x7b8] sm:$0xf]
        %v742 = vld [vmem:[%s230 + $0x7bc] sm:$0xf]
        %v743 = vld [vmem:[%s230 + $0x7c0] sm:$0xf]
        %v744 = vld [vmem:[%s230 + $0x7c4] sm:$0xf]
        %v745 = vld [vmem:[%s230 + $0x7c8] sm:$0xf]
        %v746 = vld [vmem:[%s230 + $0x7cc] sm:$0xf]
        %v747 = vld [vmem:[%s230 + $0x7d0] sm:$0xf]
        %v748 = vld [vmem:[%s230 + $0x7d4] sm:$0xf]
        %v749 = vld [vmem:[%s230 + $0x7d8] sm:$0xf]
        %v750 = vld [vmem:[%s230 + $0x7dc] sm:$0xf]
        %v751 = vld [vmem:[%s230 + $0x7e0] sm:$0xf]
        %v752 = vld [vmem:[%s230 + $0x7e4] sm:$0xf]
        %v753 = vld [vmem:[%s230 + $0x7e8] sm:$0xf]
        %v754 = vld [vmem:[%s230 + $0x7ec] sm:$0xf]
        %v755 = vld [vmem:[%s230 + $0x7f0] sm:$0xf]
        %v756 = vld [vmem:[%s230 + $0x7f4] sm:$0xf]
        %v757 = vld [vmem:[%s230 + $0x7f8] sm:$0xf]
        %v758 = vld [vmem:[%s230 + $0x7fc] sm:$0xf]
        %v759 = vld [vmem:[%s230 + $0x800] sm:$0xf]
        %v760 = vld [vmem:[%s230 + $0x804] sm:$0xf]
        %v761 = vld [vmem:[%s230 + $0x808] sm:$0xf]
        %v762 = vld [vmem:[%s230 + $0x80c] sm:$0xf]
        %v763 = vld [vmem:[%s230 + $0x810] sm:$0xf]
        %v764 = vld [vmem:[%s230 + $0x814] sm:$0xf]
        %v765 = vld [vmem:[%s230 + $0x818] sm:$0xf]
        %v766 = vld [vmem:[%s230 + $0x81c] sm:$0xf]
        %v767 = vld [vmem:[%s230 + $0x820] sm:$0xf]
        %v768 = vld [vmem:[%s230 + $0x824] sm:$0xf]
        %v769 = vld [vmem:[%s230 + $0x828] sm:$0xf]
        %v770 = vld [vmem:[%s230 + $0x82c] sm:$0xf]
        %v771 = vld [vmem:[%s230 + $0x830] sm:$0xf]
        %v772 = vld [vmem:[%s230 + $0x834] sm:$0xf]
        %v773 = vld [vmem:[%s230 + $0x838] sm:$0xf]
        %v774 = vld [vmem:[%s230 + $0x83c] sm:$0xf]
        %v775 = vld [vmem:[%s230 + $0x840] sm:$0xf]
        %v776 = vld [vmem:[%s230 + $0x844] sm:$0xf]
        %v777 = vld [vmem:[%s230 + $0x848] sm:$0xf]
        %v778 = vld [vmem:[%s230 + $0x84c] sm:$0xf]
        %v779 = vld [vmem:[%s230 + $0x850] sm:$0xf]
        %v780 = vld [vmem:[%s230 + $0x854] sm:$0xf]
        %v781 = vld [vmem:[%s230 + $0x858] sm:$0xf]
        %v782 = vld [vmem:[%s230 + $0x85c] sm:$0xf]
        %v783 = vld [vmem:[%s230 + $0x860] sm:$0xf]
        %v784 = vld [vmem:[%s230 + $0x864] sm:$0xf]
        %v785 = vld [vmem:[%s230 + $0x868] sm:$0xf]
        %v786 = vld [vmem:[%s230 + $0x86c] sm:$0xf]
        %v787 = vld [vmem:[%s230 + $0x870] sm:$0xf]
        %v788 = vld [vmem:[%s230 + $0x874] sm:$0xf]
        %v789 = vld [vmem:[%s230 + $0x878] sm:$0xf]
        %v790 = vld [vmem:[%s230 + $0x87c] sm:$0xf]
        %v791 = vld [vmem:[%s230 + $0x880] sm:$0xf]
        %v792 = vld [vmem:[%s230 + $0x884] sm:$0xf]
        %v793 = vld [vmem:[%s230 + $0x888] sm:$0xf]
        %v794 = vld [vmem:[%s230 + $0x88c] sm:$0xf]
        %v795 = vld [vmem:[%s230 + $0x890] sm:$0xf]
        %v796 = vld [vmem:[%s230 + $0x894] sm:$0xf]
        %v797 = vld [vmem:[%s230 + $0x898] sm:$0xf]
        %v798 = vld [vmem:[%s230 + $0x89c] sm:$0xf]
        %v799 = vld [vmem:[%s230 + $0x8a0] sm:$0xf]
        %v800 = vld [vmem:[%s230 + $0x8a4] sm:$0xf]
        %v801 = vld [vmem:[%s230 + $0x8a8] sm:$0xf]
        %v802 = vld [vmem:[%s230 + $0x8ac] sm:$0xf]
        %v803 = vld [vmem:[%s230 + $0x8b0] sm:$0xf]
        %v804 = vld [vmem:[%s230 + $0x8b4] sm:$0xf]
        %v805 = vld [vmem:[%s230 + $0x8b8] sm:$0xf]
        %v806 = vld [vmem:[%s230 + $0x8bc] sm:$0xf]
        %v807 = vld [vmem:[%s230 + $0x8c0] sm:$0xf]
        %v808 = vld [vmem:[%s230 + $0x8c4] sm:$0xf]
        %v809 = vld [vmem:[%s230 + $0x8c8] sm:$0xf]
        %v810 = vld [vmem:[%s230 + $0x8cc] sm:$0xf]
        %v811 = vld [vmem:[%s230 + $0x8d0] sm:$0xf]
        %v812 = vld [vmem:[%s230 + $0x8d4] sm:$0xf]
        %v813 = vld [vmem:[%s230 + $0x8d8] sm:$0xf]
        %v814 = vld [vmem:[%s230 + $0x8dc] sm:$0xf]
        %v815 = vld [vmem:[%s230 + $0x8e0] sm:$0xf]
        %v816 = vld [vmem:[%s230 + $0x8e4] sm:$0xf]
        %v817 = vld [vmem:[%s230 + $0x8e8] sm:$0xf]
        %v818 = vld [vmem:[%s230 + $0x8ec] sm:$0xf]
        %v819 = vld [vmem:[%s230 + $0x8f0] sm:$0xf]
        %v820 = vld [vmem:[%s230 + $0x8f4] sm:$0xf]
        %v821 = vld [vmem:[%s230 + $0x8f8] sm:$0xf]
        %v822 = vld [vmem:[%s230 + $0x8fc] sm:$0xf]
        %v823 = vld [vmem:[%s230 + $0x900] sm:$0xf]
        %v824 = vld [vmem:[%s230 + $0x904] sm:$0xf]
        %v825 = vld [vmem:[%s230 + $0x908] sm:$0xf]
        %v826 = vld [vmem:[%s230 + $0x90c] sm:$0xf]
        %v827 = vld [vmem:[%s230 + $0x910] sm:$0xf]
        %v828 = vld [vmem:[%s230 + $0x914] sm:$0xf]
        %v829 = vld [vmem:[%s230 + $0x918] sm:$0xf]
        %v830 = vld [vmem:[%s230 + $0x91c] sm:$0xf]
        %v831 = vld [vmem:[%s230 + $0x920] sm:$0xf]
        %v832 = vld [vmem:[%s230 + $0x924] sm:$0xf]
        %v833 = vld [vmem:[%s230 + $0x928] sm:$0xf]
        %v834 = vld [vmem:[%s230 + $0x92c] sm:$0xf]
        %v835 = vld [vmem:[%s230 + $0x930] sm:$0xf]
        %v836 = vld [vmem:[%s230 + $0x934] sm:$0xf]
        %v837 = vld [vmem:[%s230 + $0x938] sm:$0xf]
        %v838 = vld [vmem:[%s230 + $0x93c] sm:$0xf]
        %v839 = vld [vmem:[%s230 + $0x940] sm:$0xf]
        %v840 = vld [vmem:[%s230 + $0x944] sm:$0xf]
        %v841 = vld [vmem:[%s230 + $0x948] sm:$0xf]
        %v842 = vld [vmem:[%s230 + $0x94c] sm:$0xf]
        %v843 = vld [vmem:[%s230 + $0x950] sm:$0xf]
        %v844 = vld [vmem:[%s230 + $0x954] sm:$0xf]
        %v845 = vld [vmem:[%s230 + $0x958] sm:$0xf]
        %v846 = vld [vmem:[%s230 + $0x95c] sm:$0xf]
        %v847 = vld [vmem:[%s230 + $0x960] sm:$0xf]
        %v848 = vld [vmem:[%s230 + $0x964] sm:$0xf]
        %v849 = vld [vmem:[%s230 + $0x968] sm:$0xf]
        %v850 = vld [vmem:[%s230 + $0x96c] sm:$0xf]
        %v851 = vld [vmem:[%s230 + $0x970] sm:$0xf]
        %v852 = vld [vmem:[%s230 + $0x974] sm:$0xf]
        %v853 = vld [vmem:[%s230 + $0x978] sm:$0xf]
        %v854 = vld [vmem:[%s230 + $0x97c] sm:$0xf]
        %v855 = vld [vmem:[%s230 + $0x980] sm:$0xf]
        %v856 = vld [vmem:[%s230 + $0x984] sm:$0xf]
        %v857 = vld [vmem:[%s230 + $0x988] sm:$0xf]
        %v858 = vld [vmem:[%s230 + $0x98c] sm:$0xf]
        %v859 = vld [vmem:[%s230 + $0x990] sm:$0xf]
        %v860 = vld [vmem:[%s230 + $0x994] sm:$0xf]
        %v861 = vld [vmem:[%s230 + $0x998] sm:$0xf]
        %v862 = vld [vmem:[%s230 + $0x99c] sm:$0xf]
        %v863 = vld [vmem:[%s230 + $0x9a0] sm:$0xf]
        %v864 = vld [vmem:[%s230 + $0x9a4] sm:$0xf]
        %v865 = vld [vmem:[%s230 + $0x9a8] sm:$0xf]
        %v866 = vld [vmem:[%s230 + $0x9ac] sm:$0xf]
        %v867 = vld [vmem:[%s230 + $0x9b0] sm:$0xf]
        %v868 = vld [vmem:[%s230 + $0x9b4] sm:$0xf]
        %v869 = vld [vmem:[%s230 + $0x9b8] sm:$0xf]
        %v870 = vld [vmem:[%s230 + $0x9bc] sm:$0xf]
        %v871 = vld [vmem:[%s230 + $0x9c0] sm:$0xf]
        %v872 = vld [vmem:[%s230 + $0x9c4] sm:$0xf]
        %v873 = vld [vmem:[%s230 + $0x9c8] sm:$0xf]
        %v874 = vld [vmem:[%s230 + $0x9cc] sm:$0xf]
        %v875 = vld [vmem:[%s230 + $0x9d0] sm:$0xf]
        %v876 = vld [vmem:[%s230 + $0x9d4] sm:$0xf]
        %v877 = vld [vmem:[%s230 + $0x9d8] sm:$0xf]
        %v878 = vld [vmem:[%s230 + $0x9dc] sm:$0xf]
        %v879 = vld [vmem:[%s230 + $0x9e0] sm:$0xf]
        %v880 = vld [vmem:[%s230 + $0x9e4] sm:$0xf]
        %v881 = vld [vmem:[%s230 + $0x9e8] sm:$0xf]
        %v882 = vld [vmem:[%s230 + $0x9ec] sm:$0xf]
        %v883 = vld [vmem:[%s230 + $0x9f0] sm:$0xf]
        %v884 = vld [vmem:[%s230 + $0x9f4] sm:$0xf]
        %v885 = vld [vmem:[%s230 + $0x9f8] sm:$0xf]
        %v886 = vld [vmem:[%s230 + $0x9fc] sm:$0xf]
        %v887 = vld [vmem:[%s230 + $0xa00] sm:$0xf]
        %v888 = vld [vmem:[%s230 + $0xa04] sm:$0xf]
        %v889 = vld [vmem:[%s230 + $0xa08] sm:$0xf]
        %v890 = vld [vmem:[%s230 + $0xa0c] sm:$0xf]
        %v891 = vld [vmem:[%s230 + $0xa10] sm:$0xf]
        %v892 = vld [vmem:[%s230 + $0xa14] sm:$0xf]
        %v893 = vld [vmem:[%s230 + $0xa18] sm:$0xf]
        %v894 = vld [vmem:[%s230 + $0xa1c] sm:$0xf]
        %v895 = vld [vmem:[%s230 + $0xa20] sm:$0xf]
        %v896 = vld [vmem:[%s230 + $0xa24] sm:$0xf]
        %v897 = vld [vmem:[%s230 + $0xa28] sm:$0xf]
        %v898 = vld [vmem:[%s230 + $0xa2c] sm:$0xf]
        %v899 = vld [vmem:[%s230 + $0xa30] sm:$0xf]
        %v900 = vld [vmem:[%s230 + $0xa34] sm:$0xf]
        %v901 = vld [vmem:[%s230 + $0xa38] sm:$0xf]
        %v902 = vld [vmem:[%s230 + $0xa3c] sm:$0xf]
        %v903 = vld [vmem:[%s230 + $0xa40] sm:$0xf]
        %v904 = vld [vmem:[%s230 + $0xa44] sm:$0xf]
        %v905 = vld [vmem:[%s230 + $0xa48] sm:$0xf]
        %v906 = vld [vmem:[%s230 + $0xa4c] sm:$0xf]
        %v907 = vld [vmem:[%s230 + $0xa50] sm:$0xf]
        %v908 = vld [vmem:[%s230 + $0xa54] sm:$0xf]
        %v909 = vld [vmem:[%s230 + $0xa58] sm:$0xf]
        %v910 = vld [vmem:[%s230 + $0xa5c] sm:$0xf]
        %v911 = vld [vmem:[%s230 + $0xa60] sm:$0xf]
        %v912 = vld [vmem:[%s230 + $0xa64] sm:$0xf]
        %v913 = vld [vmem:[%s230 + $0xa68] sm:$0xf]
        %v914 = vld [vmem:[%s230 + $0xa6c] sm:$0xf]
        %v915 = vld [vmem:[%s230 + $0xa70] sm:$0xf]
        %v916 = vld [vmem:[%s230 + $0xa74] sm:$0xf]
        %v917 = vld [vmem:[%s230 + $0xa78] sm:$0xf]
        %v918 = vld [vmem:[%s230 + $0xa7c] sm:$0xf]
        %v919 = vld [vmem:[%s230 + $0xa80] sm:$0xf]
        %v920 = vld [vmem:[%s230 + $0xa84] sm:$0xf]
        %v921 = vld [vmem:[%s230 + $0xa88] sm:$0xf]
        %v922 = vld [vmem:[%s230 + $0xa8c] sm:$0xf]
        %v923 = vld [vmem:[%s230 + $0xa90] sm:$0xf]
        %v924 = vld [vmem:[%s230 + $0xa94] sm:$0xf]
        %v925 = vld [vmem:[%s230 + $0xa98] sm:$0xf]
        %v926 = vld [vmem:[%s230 + $0xa9c] sm:$0xf]
        %v927 = vld [vmem:[%s230 + $0xaa0] sm:$0xf]
        %v928 = vld [vmem:[%s230 + $0xaa4] sm:$0xf]
        %v929 = vld [vmem:[%s230 + $0xaa8] sm:$0xf]
        %v930 = vld [vmem:[%s230 + $0xaac] sm:$0xf]
        %v931 = vld [vmem:[%s230 + $0xab0] sm:$0xf]
        %v932 = vld [vmem:[%s230 + $0xab4] sm:$0xf]
        %v933 = vld [vmem:[%s230 + $0xab8] sm:$0xf]
        %v934 = vld [vmem:[%s230 + $0xabc] sm:$0xf]
        %v935 = vld [vmem:[%s230 + $0xac0] sm:$0xf]
        %v936 = vld [vmem:[%s230 + $0xac4] sm:$0xf]
        %v937 = vld [vmem:[%s230 + $0xac8] sm:$0xf]
        %v938 = vld [vmem:[%s230 + $0xacc] sm:$0xf]
        %v939 = vld [vmem:[%s230 + $0xad0] sm:$0xf]
        %v940 = vld [vmem:[%s230 + $0xad4] sm:$0xf]
        %v941 = vld [vmem:[%s230 + $0xad8] sm:$0xf]
        %v942 = vld [vmem:[%s230 + $0xadc] sm:$0xf]
        %v943 = vld [vmem:[%s230 + $0xae0] sm:$0xf]
        %v944 = vld [vmem:[%s230 + $0xae4] sm:$0xf]
        %v945 = vld [vmem:[%s230 + $0xae8] sm:$0xf]
        %v946 = vld [vmem:[%s230 + $0xaec] sm:$0xf]
        %v947 = vld [vmem:[%s230 + $0xaf0] sm:$0xf]
        %v948 = vld [vmem:[%s230 + $0xaf4] sm:$0xf]
        %v949 = vld [vmem:[%s230 + $0xaf8] sm:$0xf]
        %v950 = vld [vmem:[%s230 + $0xafc] sm:$0xf]
        %v951 = vld [vmem:[%s230 + $0xb00] sm:$0xf]
        %v952 = vld [vmem:[%s230 + $0xb04] sm:$0xf]
        %v953 = vld [vmem:[%s230 + $0xb08] sm:$0xf]
        %v954 = vld [vmem:[%s230 + $0xb0c] sm:$0xf]
        %v955 = vld [vmem:[%s230 + $0xb10] sm:$0xf]
        %v956 = vld [vmem:[%s230 + $0xb14] sm:$0xf]
        %v957 = vld [vmem:[%s230 + $0xb18] sm:$0xf]
        %v958 = vld [vmem:[%s230 + $0xb1c] sm:$0xf]
        %v959 = vld [vmem:[%s230 + $0xb20] sm:$0xf]
        %v960 = vld [vmem:[%s230 + $0xb24] sm:$0xf]
        %v961 = vld [vmem:[%s230 + $0xb28] sm:$0xf]
        %v962 = vld [vmem:[%s230 + $0xb2c] sm:$0xf]
        %v963 = vld [vmem:[%s230 + $0xb30] sm:$0xf]
        %v964 = vld [vmem:[%s230 + $0xb34] sm:$0xf]
        %v965 = vld [vmem:[%s230 + $0xb38] sm:$0xf]
        %v966 = vld [vmem:[%s230 + $0xb3c] sm:$0xf]
        %v967 = vld [vmem:[%s230 + $0xb40] sm:$0xf]
        %v968 = vld [vmem:[%s230 + $0xb44] sm:$0xf]
        %v969 = vld [vmem:[%s230 + $0xb48] sm:$0xf]
        %v970 = vld [vmem:[%s230 + $0xb4c] sm:$0xf]
        %v971 = vld [vmem:[%s230 + $0xb50] sm:$0xf]
        %v972 = vld [vmem:[%s230 + $0xb54] sm:$0xf]
        %v973 = vld [vmem:[%s230 + $0xb58] sm:$0xf]
        %v974 = vld [vmem:[%s230 + $0xb5c] sm:$0xf]
        %v975 = vld [vmem:[%s230 + $0xb60] sm:$0xf]
        %v976 = vld [vmem:[%s230 + $0xb64] sm:$0xf]
        %v977 = vld [vmem:[%s230 + $0xb68] sm:$0xf]
        %v978 = vld [vmem:[%s230 + $0xb6c] sm:$0xf]
        %v979 = vld [vmem:[%s230 + $0xb70] sm:$0xf]
        %v980 = vld [vmem:[%s230 + $0xb74] sm:$0xf]
        %v981 = vld [vmem:[%s230 + $0xb78] sm:$0xf]
        %v982 = vld [vmem:[%s230 + $0xb7c] sm:$0xf]
        %v983 = vld [vmem:[%s230 + $0xb80] sm:$0xf]
        %v984 = vld [vmem:[%s230 + $0xb84] sm:$0xf]
        %v985 = vld [vmem:[%s230 + $0xb88] sm:$0xf]
        %v986 = vld [vmem:[%s230 + $0xb8c] sm:$0xf]
        %v987 = vld [vmem:[%s230 + $0xb90] sm:$0xf]
        %v988 = vld [vmem:[%s230 + $0xb94] sm:$0xf]
        %v989 = vld [vmem:[%s230 + $0xb98] sm:$0xf]
        %v990 = vld [vmem:[%s230 + $0xb9c] sm:$0xf]
        %v991 = vld [vmem:[%s230 + $0xba0] sm:$0xf]
        %v992 = vld [vmem:[%s230 + $0xba4] sm:$0xf]
        %v993 = vld [vmem:[%s230 + $0xba8] sm:$0xf]
        %v994 = vld [vmem:[%s230 + $0xbac] sm:$0xf]
        %v995 = vld [vmem:[%s230 + $0xbb0] sm:$0xf]
        %v996 = vld [vmem:[%s230 + $0xbb4] sm:$0xf]
        %v997 = vld [vmem:[%s230 + $0xbb8] sm:$0xf]
        %v998 = vld [vmem:[%s230 + $0xbbc] sm:$0xf]
        %v999 = vld [vmem:[%s230 + $0xbc0] sm:$0xf]
        %v1000 = vld [vmem:[%s230 + $0xbc4] sm:$0xf]
        %v1001 = vld [vmem:[%s230 + $0xbc8] sm:$0xf]
        %v1002 = vld [vmem:[%s230 + $0xbcc] sm:$0xf]
        %v1003 = vld [vmem:[%s230 + $0xbd0] sm:$0xf]
        %v1004 = vld [vmem:[%s230 + $0xbd4] sm:$0xf]
        %v1005 = vld [vmem:[%s230 + $0xbd8] sm:$0xf]
        %v1006 = vld [vmem:[%s230 + $0xbdc] sm:$0xf]
        %v1007 = vld [vmem:[%s230 + $0xbe0] sm:$0xf]
        %v1008 = vld [vmem:[%s230 + $0xbe4] sm:$0xf]
        %v1009 = vld [vmem:[%s230 + $0xbe8] sm:$0xf]
        %v1010 = vld [vmem:[%s230 + $0xbec] sm:$0xf]
        %v1011 = vld [vmem:[%s230 + $0xbf0] sm:$0xf]
        %v1012 = vld [vmem:[%s230 + $0xbf4] sm:$0xf]
        %v1013 = vld [vmem:[%s230 + $0xbf8] sm:$0xf]
        %v1014 = vld [vmem:[%s230 + $0xbfc] sm:$0xf]
        %v1015 = vld [vmem:[%s230 + $0xc00] sm:$0xf]
        %v1016 = vld [vmem:[%s230 + $0xc04] sm:$0xf]
        %v1017 = vld [vmem:[%s230 + $0xc08] sm:$0xf]
        %v1018 = vld [vmem:[%s230 + $0xc0c] sm:$0xf]
        %v1019 = vld [vmem:[%s230 + $0xc10] sm:$0xf]
        %v1020 = vld [vmem:[%s230 + $0xc14] sm:$0xf]
        %v1021 = vld [vmem:[%s230 + $0xc18] sm:$0xf]
        %v1022 = vld [vmem:[%s230 + $0xc1c] sm:$0xf]
        %v1023 = vld [vmem:[%s230 + $0xc20] sm:$0xf]
        %v1024 = vld [vmem:[%s230 + $0xc24] sm:$0xf]
        %v1025 = vld [vmem:[%s230 + $0xc28] sm:$0xf]
        %v1026 = vld [vmem:[%s230 + $0xc2c] sm:$0xf]
        %v1027 = vld [vmem:[%s230 + $0xc30] sm:$0xf]
        %v1028 = vld [vmem:[%s230 + $0xc34] sm:$0xf]
        %v1029 = vld [vmem:[%s230 + $0xc38] sm:$0xf]
        %v1030 = vld [vmem:[%s230 + $0xc3c] sm:$0xf]
        %v1031 = vld [vmem:[%s230 + $0xc40] sm:$0xf]
        %v1032 = vld [vmem:[%s230 + $0xc44] sm:$0xf]
        %v1033 = vld [vmem:[%s230 + $0xc48] sm:$0xf]
        %v1034 = vld [vmem:[%s230 + $0xc4c] sm:$0xf]
        %v1035 = vld [vmem:[%s230 + $0xc50] sm:$0xf]
        %v1036 = vld [vmem:[%s230 + $0xc54] sm:$0xf]
        %v1037 = vld [vmem:[%s230 + $0xc58] sm:$0xf]
        %v1038 = vld [vmem:[%s230 + $0xc5c] sm:$0xf]
        %v1039 = vld [vmem:[%s230 + $0xc60] sm:$0xf]
        %v1040 = vld [vmem:[%s230 + $0xc64] sm:$0xf]
        %v1041 = vld [vmem:[%s230 + $0xc68] sm:$0xf]
        %v1042 = vld [vmem:[%s230 + $0xc6c] sm:$0xf]
        %v1043 = vld [vmem:[%s230 + $0xc70] sm:$0xf]
        %v1044 = vld [vmem:[%s230 + $0xc74] sm:$0xf]
        %v1045 = vld [vmem:[%s230 + $0xc78] sm:$0xf]
        %v1046 = vld [vmem:[%s230 + $0xc7c] sm:$0xf]
        %v1047 = vld [vmem:[%s230 + $0xc80] sm:$0xf]
        %v1048 = vld [vmem:[%s230 + $0xc84] sm:$0xf]
        %v1049 = vld [vmem:[%s230 + $0xc88] sm:$0xf]
        %v1050 = vld [vmem:[%s230 + $0xc8c] sm:$0xf]
        %v1051 = vld [vmem:[%s230 + $0xc90] sm:$0xf]
        %v1052 = vld [vmem:[%s230 + $0xc94] sm:$0xf]
        %v1053 = vld [vmem:[%s230 + $0xc98] sm:$0xf]
        %v1054 = vld [vmem:[%s230 + $0xc9c] sm:$0xf]
        %v1055 = vld [vmem:[%s230 + $0xca0] sm:$0xf]
        %v1056 = vld [vmem:[%s230 + $0xca4] sm:$0xf]
        %v1057 = vld [vmem:[%s230 + $0xca8] sm:$0xf]
        %v1058 = vld [vmem:[%s230 + $0xcac] sm:$0xf]
        %v1059 = vld [vmem:[%s230 + $0xcb0] sm:$0xf]
        %v1060 = vld [vmem:[%s230 + $0xcb4] sm:$0xf]
        %v1061 = vld [vmem:[%s230 + $0xcb8] sm:$0xf]
        %v1062 = vld [vmem:[%s230 + $0xcbc] sm:$0xf]
        %v1063 = vld [vmem:[%s230 + $0xcc0] sm:$0xf]
        %v1064 = vld [vmem:[%s230 + $0xcc4] sm:$0xf]
        %v1065 = vld [vmem:[%s230 + $0xcc8] sm:$0xf]
        %v1066 = vld [vmem:[%s230 + $0xccc] sm:$0xf]
        %v1067 = vld [vmem:[%s230 + $0xcd0] sm:$0xf]
        %v1068 = vld [vmem:[%s230 + $0xcd4] sm:$0xf]
        %v1069 = vld [vmem:[%s230 + $0xcd8] sm:$0xf]
        %v1070 = vld [vmem:[%s230 + $0xcdc] sm:$0xf]
        %v1071 = vld [vmem:[%s230 + $0xce0] sm:$0xf]
        %v1072 = vld [vmem:[%s230 + $0xce4] sm:$0xf]
        %v1073 = vld [vmem:[%s230 + $0xce8] sm:$0xf]
        %v1074 = vld [vmem:[%s230 + $0xcec] sm:$0xf]
        %v1075 = vld [vmem:[%s230 + $0xcf0] sm:$0xf]
        %v1076 = vld [vmem:[%s230 + $0xcf4] sm:$0xf]
        %v1077 = vld [vmem:[%s230 + $0xcf8] sm:$0xf]
        %v1078 = vld [vmem:[%s230 + $0xcfc] sm:$0xf]
        %v1079 = vld [vmem:[%s230 + $0xd00] sm:$0xf]
        %v1080 = vld [vmem:[%s230 + $0xd04] sm:$0xf]
        %v1081 = vld [vmem:[%s230 + $0xd08] sm:$0xf]
        %v1082 = vld [vmem:[%s230 + $0xd0c] sm:$0xf]
        %v1083 = vld [vmem:[%s230 + $0xd10] sm:$0xf]
        %v1084 = vld [vmem:[%s230 + $0xd14] sm:$0xf]
        %v1085 = vld [vmem:[%s230 + $0xd18] sm:$0xf]
        %v1086 = vld [vmem:[%s230 + $0xd1c] sm:$0xf]
        %v1087 = vld [vmem:[%s230 + $0xd20] sm:$0xf]
        %v1088 = vld [vmem:[%s230 + $0xd24] sm:$0xf]
        %v1089 = vld [vmem:[%s230 + $0xd28] sm:$0xf]
        %v1090 = vld [vmem:[%s230 + $0xd2c] sm:$0xf]
        %v1091 = vld [vmem:[%s230 + $0xd30] sm:$0xf]
        %v1092 = vld [vmem:[%s230 + $0xd34] sm:$0xf]
        %v1093 = vld [vmem:[%s230 + $0xd38] sm:$0xf]
        %v1094 = vld [vmem:[%s230 + $0xd3c] sm:$0xf]
        %v1095 = vld [vmem:[%s230 + $0xd40] sm:$0xf]
        %v1096 = vld [vmem:[%s230 + $0xd44] sm:$0xf]
        %v1097 = vld [vmem:[%s230 + $0xd48] sm:$0xf]
        %v1098 = vld [vmem:[%s230 + $0xd4c] sm:$0xf]
        %v1099 = vld [vmem:[%s230 + $0xd50] sm:$0xf]
        %v1100 = vld [vmem:[%s230 + $0xd54] sm:$0xf]
        %v1101 = vld [vmem:[%s230 + $0xd58] sm:$0xf]
        %v1102 = vld [vmem:[%s230 + $0xd5c] sm:$0xf]
        %v1103 = vld [vmem:[%s230 + $0xd60] sm:$0xf]
        %v1104 = vld [vmem:[%s230 + $0xd64] sm:$0xf]
        %v1105 = vld [vmem:[%s230 + $0xd68] sm:$0xf]
        %v1106 = vld [vmem:[%s230 + $0xd6c] sm:$0xf]
        %v1107 = vld [vmem:[%s230 + $0xd70] sm:$0xf]
        %v1108 = vld [vmem:[%s230 + $0xd74] sm:$0xf]
        %v1109 = vld [vmem:[%s230 + $0xd78] sm:$0xf]
        %v1110 = vld [vmem:[%s230 + $0xd7c] sm:$0xf]
        %v1111 = vld [vmem:[%s230 + $0xd80] sm:$0xf]
        %v1112 = vld [vmem:[%s230 + $0xd84] sm:$0xf]
        %v1113 = vld [vmem:[%s230 + $0xd88] sm:$0xf]
        %v1114 = vld [vmem:[%s230 + $0xd8c] sm:$0xf]
        %v1115 = vld [vmem:[%s230 + $0xd90] sm:$0xf]
        %v1116 = vld [vmem:[%s230 + $0xd94] sm:$0xf]
        %v1117 = vld [vmem:[%s230 + $0xd98] sm:$0xf]
        %v1118 = vld [vmem:[%s230 + $0xd9c] sm:$0xf]
        %v1119 = vld [vmem:[%s230 + $0xda0] sm:$0xf]
        %v1120 = vld [vmem:[%s230 + $0xda4] sm:$0xf]
        %v1121 = vld [vmem:[%s230 + $0xda8] sm:$0xf]
        %v1122 = vld [vmem:[%s230 + $0xdac] sm:$0xf]
        %v1123 = vld [vmem:[%s230 + $0xdb0] sm:$0xf]
        %v1124 = vld [vmem:[%s230 + $0xdb4] sm:$0xf]
        %v1125 = vld [vmem:[%s230 + $0xdb8] sm:$0xf]
        %v1126 = vld [vmem:[%s230 + $0xdbc] sm:$0xf]
        %v1127 = vld [vmem:[%s230 + $0xdc0] sm:$0xf]
        %v1128 = vld [vmem:[%s230 + $0xdc4] sm:$0xf]
        %v1129 = vld [vmem:[%s230 + $0xdc8] sm:$0xf]
        %v1130 = vld [vmem:[%s230 + $0xdcc] sm:$0xf]
        %v1131 = vld [vmem:[%s230 + $0xdd0] sm:$0xf]
        %v1132 = vld [vmem:[%s230 + $0xdd4] sm:$0xf]
        %v1133 = vld [vmem:[%s230 + $0xdd8] sm:$0xf]
        %v1134 = vld [vmem:[%s230 + $0xddc] sm:$0xf]
        %v1135 = vld [vmem:[%s230 + $0xde0] sm:$0xf]
        %v1136 = vld [vmem:[%s230 + $0xde4] sm:$0xf]
        %v1137 = vld [vmem:[%s230 + $0xde8] sm:$0xf]
        %v1138 = vld [vmem:[%s230 + $0xdec] sm:$0xf]
        %v1139 = vld [vmem:[%s230 + $0xdf0] sm:$0xf]
        %v1140 = vld [vmem:[%s230 + $0xdf4] sm:$0xf]
        %v1141 = vld [vmem:[%s230 + $0xdf8] sm:$0xf]
        %v1142 = vld [vmem:[%s230 + $0xdfc] sm:$0xf]
        %v1143 = vld [vmem:[%s230 + $0xe00] sm:$0xf]
        %v1144 = vld [vmem:[%s230 + $0xe04] sm:$0xf]
        %v1145 = vld [vmem:[%s230 + $0xe08] sm:$0xf]
        %v1146 = vld [vmem:[%s230 + $0xe0c] sm:$0xf]
        %v1147 = vld [vmem:[%s230 + $0xe10] sm:$0xf]
        %v1148 = vld [vmem:[%s230 + $0xe14] sm:$0xf]
        %v1149 = vld [vmem:[%s230 + $0xe18] sm:$0xf]
        %v1150 = vld [vmem:[%s230 + $0xe1c] sm:$0xf]
        %v1151 = vld [vmem:[%s230 + $0xe20] sm:$0xf]
        %v1152 = vld [vmem:[%s230 + $0xe24] sm:$0xf]
        %v1153 = vld [vmem:[%s230 + $0xe28] sm:$0xf]
        %v1154 = vld [vmem:[%s230 + $0xe2c] sm:$0xf]
        %v1155 = vld [vmem:[%s230 + $0xe30] sm:$0xf]
        %v1156 = vld [vmem:[%s230 + $0xe34] sm:$0xf]
        %v1157 = vld [vmem:[%s230 + $0xe38] sm:$0xf]
        %v1158 = vld [vmem:[%s230 + $0xe3c] sm:$0xf]
        %v1159 = vld [vmem:[%s230 + $0xe40] sm:$0xf]
        %v1160 = vld [vmem:[%s230 + $0xe44] sm:$0xf]
        %v1161 = vld [vmem:[%s230 + $0xe48] sm:$0xf]
        %v1162 = vld [vmem:[%s230 + $0xe4c] sm:$0xf]
        %v1163 = vld [vmem:[%s230 + $0xe50] sm:$0xf]
        %v1164 = vld [vmem:[%s230 + $0xe54] sm:$0xf]
        %v1165 = vld [vmem:[%s230 + $0xe58] sm:$0xf]
        %v1166 = vld [vmem:[%s230 + $0xe5c] sm:$0xf]
        %v1167 = vld [vmem:[%s230 + $0xe60] sm:$0xf]
        %v1168 = vld [vmem:[%s230 + $0xe64] sm:$0xf]
        %v1169 = vld [vmem:[%s230 + $0xe68] sm:$0xf]
        %v1170 = vld [vmem:[%s230 + $0xe6c] sm:$0xf]
        %v1171 = vld [vmem:[%s230 + $0xe70] sm:$0xf]
        %v1172 = vld [vmem:[%s230 + $0xe74] sm:$0xf]
        %v1173 = vld [vmem:[%s230 + $0xe78] sm:$0xf]
        %v1174 = vld [vmem:[%s230 + $0xe7c] sm:$0xf]
        %v1175 = vld [vmem:[%s230 + $0xe80] sm:$0xf]
        %v1176 = vld [vmem:[%s230 + $0xe84] sm:$0xf]
        %v1177 = vld [vmem:[%s230 + $0xe88] sm:$0xf]
        %v1178 = vld [vmem:[%s230 + $0xe8c] sm:$0xf]
        %v1179 = vld [vmem:[%s230 + $0xe90] sm:$0xf]
        %v1180 = vld [vmem:[%s230 + $0xe94] sm:$0xf]
        %v1181 = vld [vmem:[%s230 + $0xe98] sm:$0xf]
        %v1182 = vld [vmem:[%s230 + $0xe9c] sm:$0xf]
        %v1183 = vld [vmem:[%s230 + $0xea0] sm:$0xf]
        %v1184 = vld [vmem:[%s230 + $0xea4] sm:$0xf]
        %v1185 = vld [vmem:[%s230 + $0xea8] sm:$0xf]
        %v1186 = vld [vmem:[%s230 + $0xeac] sm:$0xf]
        %v1187 = vld [vmem:[%s230 + $0xeb0] sm:$0xf]
        %v1188 = vld [vmem:[%s230 + $0xeb4] sm:$0xf]
        %v1189 = vld [vmem:[%s230 + $0xeb8] sm:$0xf]
        %v1190 = vld [vmem:[%s230 + $0xebc] sm:$0xf]
        %v1191 = vld [vmem:[%s230 + $0xec0] sm:$0xf]
        %v1192 = vld [vmem:[%s230 + $0xec4] sm:$0xf]
        %v1193 = vld [vmem:[%s230 + $0xec8] sm:$0xf]
        %v1194 = vld [vmem:[%s230 + $0xecc] sm:$0xf]
        %v1195 = vld [vmem:[%s230 + $0xed0] sm:$0xf]
        %v1196 = vld [vmem:[%s230 + $0xed4] sm:$0xf]
        %v1197 = vld [vmem:[%s230 + $0xed8] sm:$0xf]
        %v1198 = vld [vmem:[%s230 + $0xedc] sm:$0xf]
        %v1199 = vld [vmem:[%s230 + $0xee0] sm:$0xf]
        %v1200 = vld [vmem:[%s230 + $0xee4] sm:$0xf]
        %v1201 = vld [vmem:[%s230 + $0xee8] sm:$0xf]
        %v1202 = vld [vmem:[%s230 + $0xeec] sm:$0xf]
        %v1203 = vld [vmem:[%s230 + $0xef0] sm:$0xf]
        %v1204 = vld [vmem:[%s230 + $0xef4] sm:$0xf]
        %v1205 = vld [vmem:[%s230 + $0xef8] sm:$0xf]
        %v1206 = vld [vmem:[%s230 + $0xefc] sm:$0xf]
        %v1207 = vld [vmem:[%s230 + $0xf00] sm:$0xf]
        %v1208 = vld [vmem:[%s230 + $0xf04] sm:$0xf]
        %v1209 = vld [vmem:[%s230 + $0xf08] sm:$0xf]
        %v1210 = vld [vmem:[%s230 + $0xf0c] sm:$0xf]
        %v1211 = vld [vmem:[%s230 + $0xf10] sm:$0xf]
        %v1212 = vld [vmem:[%s230 + $0xf14] sm:$0xf]
        %v1213 = vld [vmem:[%s230 + $0xf18] sm:$0xf]
        %v1214 = vld [vmem:[%s230 + $0xf1c] sm:$0xf]
        %v1215 = vld [vmem:[%s230 + $0xf20] sm:$0xf]
        %v1216 = vld [vmem:[%s230 + $0xf24] sm:$0xf]
        %v1217 = vld [vmem:[%s230 + $0xf28] sm:$0xf]
        %v1218 = vld [vmem:[%s230 + $0xf2c] sm:$0xf]
        %v1219 = vld [vmem:[%s230 + $0xf30] sm:$0xf]
        %v1220 = vld [vmem:[%s230 + $0xf34] sm:$0xf]
        %v1221 = vld [vmem:[%s230 + $0xf38] sm:$0xf]
        %v1222 = vld [vmem:[%s230 + $0xf3c] sm:$0xf]
        %v1223 = vld [vmem:[%s230 + $0xf40] sm:$0xf]
        %v1224 = vld [vmem:[%s230 + $0xf44] sm:$0xf]
        %v1225 = vld [vmem:[%s230 + $0xf48] sm:$0xf]
        %v1226 = vld [vmem:[%s230 + $0xf4c] sm:$0xf]
        %v1227 = vld [vmem:[%s230 + $0xf50] sm:$0xf]
        %v1228 = vld [vmem:[%s230 + $0xf54] sm:$0xf]
        %v1229 = vld [vmem:[%s230 + $0xf58] sm:$0xf]
        %v1230 = vld [vmem:[%s230 + $0xf5c] sm:$0xf]
        %v1231 = vld [vmem:[%s230 + $0xf60] sm:$0xf]
        %v1232 = vld [vmem:[%s230 + $0xf64] sm:$0xf]
        %v1233 = vld [vmem:[%s230 + $0xf68] sm:$0xf]
        %v1234 = vld [vmem:[%s230 + $0xf6c] sm:$0xf]
        %v1235 = vld [vmem:[%s230 + $0xf70] sm:$0xf]
        %v1236 = vld [vmem:[%s230 + $0xf74] sm:$0xf]
        %v1237 = vld [vmem:[%s230 + $0xf78] sm:$0xf]
        %v1238 = vld [vmem:[%s230 + $0xf7c] sm:$0xf]
        %v1239 = vld [vmem:[%s230 + $0xf80] sm:$0xf]
        %v1240 = vld [vmem:[%s230 + $0xf84] sm:$0xf]
        %v1241 = vld [vmem:[%s230 + $0xf88] sm:$0xf]
        %v1242 = vld [vmem:[%s230 + $0xf8c] sm:$0xf]
        %v1243 = vld [vmem:[%s230 + $0xf90] sm:$0xf]
        %v1244 = vld [vmem:[%s230 + $0xf94] sm:$0xf]
        %v1245 = vld [vmem:[%s230 + $0xf98] sm:$0xf]
        %v1246 = vld [vmem:[%s230 + $0xf9c] sm:$0xf]
        %v1247 = vld [vmem:[%s230 + $0xfa0] sm:$0xf]
        %v1248 = vld [vmem:[%s230 + $0xfa4] sm:$0xf]
        %v1249 = vld [vmem:[%s230 + $0xfa8] sm:$0xf]
        %v1250 = vld [vmem:[%s230 + $0xfac] sm:$0xf]
        %v1251 = vld [vmem:[%s230 + $0xfb0] sm:$0xf]
        %v1252 = vld [vmem:[%s230 + $0xfb4] sm:$0xf]
        %v1253 = vld [vmem:[%s230 + $0xfb8] sm:$0xf]
        %v1254 = vld [vmem:[%s230 + $0xfbc] sm:$0xf]
        %v1255 = vld [vmem:[%s230 + $0xfc0] sm:$0xf]
        %v1256 = vld [vmem:[%s230 + $0xfc4] sm:$0xf]
        %v1257 = vld [vmem:[%s230 + $0xfc8] sm:$0xf]
        %v1258 = vld [vmem:[%s230 + $0xfcc] sm:$0xf]
        %v1259 = vld [vmem:[%s230 + $0xfd0] sm:$0xf]
        %v1260 = vld [vmem:[%s230 + $0xfd4] sm:$0xf]
        %v1261 = vld [vmem:[%s230 + $0xfd8] sm:$0xf]
        %v1262 = vld [vmem:[%s230 + $0xfdc] sm:$0xf]
        %v1263 = vld [vmem:[%s230 + $0xfe0] sm:$0xf]
        %v1264 = vld [vmem:[%s230 + $0xfe4] sm:$0xf]
        %v1265 = vld [vmem:[%s230 + $0xfe8] sm:$0xf]
        %v1266 = vld [vmem:[%s230 + $0xfec] sm:$0xf]
        %v1267 = vld [vmem:[%s230 + $0xff0] sm:$0xf]
        %v1268 = vld [vmem:[%s230 + $0xff4] sm:$0xf]
        %v1269 = vld [vmem:[%s230 + $0xff8] sm:$0xf]
        %v1270 = vld [vmem:[%s230 + $0xffc] sm:$0xf]
        %v1279 = vcombine.high %v239, %v239
        %v1281 = vunpack.c.l.s4 1966171168
        %v1282 = vunpack.c.0.s8 %v1281
        %v1283 = vlaneseq
        %v1284 = vshrl.u32 %v1283, 7
        %v1285 = vsub.s32 %v1282, %v1284
        %v1286 = vrot.slane %v239, %v1285
        %v1288 = vunpack.c.l.s4 1966171168
        %v1289 = vunpack.c.0.s8 %v1288
        %v1290 = vlaneseq
        %v1291 = vshrl.u32 %v1290, 7
        %v1292 = vsub.s32 %v1289, %v1291
        %v1293 = vrot.slane %v1279, %v1292
        %v1294 = vcombine.high %v1286, %v1286
        %v1295 = vcombine.high %v1293, %v1293
        %v1297 = vunpack.c.l.s4 1966171168
        %v1298 = vunpack.c.0.s8 %v1297
        %v1299 = vlaneseq
        %v1300 = vshrl.u32 %v1299, 7
        %v1301 = vsub.s32 %v1298, %v1300
        %v1302 = vrot.slane %v1286, %v1301
        %v1304 = vunpack.c.l.s4 1966171168
        %v1305 = vunpack.c.0.s8 %v1304
        %v1306 = vlaneseq
        %v1307 = vshrl.u32 %v1306, 7
        %v1308 = vsub.s32 %v1305, %v1307
        %v1309 = vrot.slane %v1293, %v1308
        %v1311 = vunpack.c.l.s4 1966171168
        %v1312 = vunpack.c.0.s8 %v1311
        %v1313 = vlaneseq
        %v1314 = vshrl.u32 %v1313, 7
        %v1315 = vsub.s32 %v1312, %v1314
        %v1316 = vrot.slane %v1294, %v1315
        %v1318 = vunpack.c.l.s4 1966171168
        %v1319 = vunpack.c.0.s8 %v1318
        %v1320 = vlaneseq
        %v1321 = vshrl.u32 %v1320, 7
        %v1322 = vsub.s32 %v1319, %v1321
        %v1323 = vrot.slane %v1295, %v1322
        %v1324 = vcombine.high %v1302, %v1302
        %v1325 = vcombine.high %v1309, %v1309
        %v1326 = vcombine.high %v1316, %v1316
        %v1327 = vcombine.high %v1323, %v1323
        %v1328 = vcombine.high %v240, %v240
        %v1330 = vunpack.c.l.s4 1966171168
        %v1331 = vunpack.c.0.s8 %v1330
        %v1332 = vlaneseq
        %v1333 = vshrl.u32 %v1332, 7
        %v1334 = vsub.s32 %v1331, %v1333
        %v1335 = vrot.slane %v240, %v1334
        %v1337 = vunpack.c.l.s4 1966171168
        %v1338 = vunpack.c.0.s8 %v1337
        %v1339 = vlaneseq
        %v1340 = vshrl.u32 %v1339, 7
        %v1341 = vsub.s32 %v1338, %v1340
        %v1342 = vrot.slane %v1328, %v1341
        %v1343 = vcombine.high %v1335, %v1335
        %v1344 = vcombine.high %v1342, %v1342
        %v1346 = vunpack.c.l.s4 1966171168
        %v1347 = vunpack.c.0.s8 %v1346
        %v1348 = vlaneseq
        %v1349 = vshrl.u32 %v1348, 7
        %v1350 = vsub.s32 %v1347, %v1349
        %v1351 = vrot.slane %v1335, %v1350
        %v1353 = vunpack.c.l.s4 1966171168
        %v1354 = vunpack.c.0.s8 %v1353
        %v1355 = vlaneseq
        %v1356 = vshrl.u32 %v1355, 7
        %v1357 = vsub.s32 %v1354, %v1356
        %v1358 = vrot.slane %v1342, %v1357
        %v1360 = vunpack.c.l.s4 1966171168
        %v1361 = vunpack.c.0.s8 %v1360
        %v1362 = vlaneseq
        %v1363 = vshrl.u32 %v1362, 7
        %v1364 = vsub.s32 %v1361, %v1363
        %v1365 = vrot.slane %v1343, %v1364
        %v1367 = vunpack.c.l.s4 1966171168
        %v1368 = vunpack.c.0.s8 %v1367
        %v1369 = vlaneseq
        %v1370 = vshrl.u32 %v1369, 7
        %v1371 = vsub.s32 %v1368, %v1370
        %v1372 = vrot.slane %v1344, %v1371
        %v1373 = vcombine.high %v1351, %v1351
        %v1374 = vcombine.high %v1358, %v1358
        %v1375 = vcombine.high %v1365, %v1365
        %v1376 = vcombine.high %v1372, %v1372
        %v1377 = vcombine.high %v241, %v241
        %v1379 = vunpack.c.l.s4 1966171168
        %v1380 = vunpack.c.0.s8 %v1379
        %v1381 = vlaneseq
        %v1382 = vshrl.u32 %v1381, 7
        %v1383 = vsub.s32 %v1380, %v1382
        %v1384 = vrot.slane %v241, %v1383
        %v1386 = vunpack.c.l.s4 1966171168
        %v1387 = vunpack.c.0.s8 %v1386
        %v1388 = vlaneseq
        %v1389 = vshrl.u32 %v1388, 7
        %v1390 = vsub.s32 %v1387, %v1389
        %v1391 = vrot.slane %v1377, %v1390
        %v1392 = vcombine.high %v1384, %v1384
        %v1393 = vcombine.high %v1391, %v1391
        %v1395 = vunpack.c.l.s4 1966171168
        %v1396 = vunpack.c.0.s8 %v1395
        %v1397 = vlaneseq
        %v1398 = vshrl.u32 %v1397, 7
        %v1399 = vsub.s32 %v1396, %v1398
        %v1400 = vrot.slane %v1384, %v1399
        %v1402 = vunpack.c.l.s4 1966171168
        %v1403 = vunpack.c.0.s8 %v1402
        %v1404 = vlaneseq
        %v1405 = vshrl.u32 %v1404, 7
        %v1406 = vsub.s32 %v1403, %v1405
        %v1407 = vrot.slane %v1391, %v1406
        %v1409 = vunpack.c.l.s4 1966171168
        %v1410 = vunpack.c.0.s8 %v1409
        %v1411 = vlaneseq
        %v1412 = vshrl.u32 %v1411, 7
        %v1413 = vsub.s32 %v1410, %v1412
        %v1414 = vrot.slane %v1392, %v1413
        %v1416 = vunpack.c.l.s4 1966171168
        %v1417 = vunpack.c.0.s8 %v1416
        %v1418 = vlaneseq
        %v1419 = vshrl.u32 %v1418, 7
        %v1420 = vsub.s32 %v1417, %v1419
        %v1421 = vrot.slane %v1393, %v1420
        %v1422 = vcombine.high %v1400, %v1400
        %v1423 = vcombine.high %v1407, %v1407
        %v1424 = vcombine.high %v1414, %v1414
        %v1425 = vcombine.high %v1421, %v1421
        %v1426 = vcombine.high %v242, %v242
        %v1428 = vunpack.c.l.s4 1966171168
        %v1429 = vunpack.c.0.s8 %v1428
        %v1430 = vlaneseq
        %v1431 = vshrl.u32 %v1430, 7
        %v1432 = vsub.s32 %v1429, %v1431
        %v1433 = vrot.slane %v242, %v1432
        %v1435 = vunpack.c.l.s4 1966171168
        %v1436 = vunpack.c.0.s8 %v1435
        %v1437 = vlaneseq
        %v1438 = vshrl.u32 %v1437, 7
        %v1439 = vsub.s32 %v1436, %v1438
        %v1440 = vrot.slane %v1426, %v1439
        %v1441 = vcombine.high %v1433, %v1433
        %v1442 = vcombine.high %v1440, %v1440
        %v1444 = vunpack.c.l.s4 1966171168
        %v1445 = vunpack.c.0.s8 %v1444
        %v1446 = vlaneseq
        %v1447 = vshrl.u32 %v1446, 7
        %v1448 = vsub.s32 %v1445, %v1447
        %v1449 = vrot.slane %v1433, %v1448
        %v1451 = vunpack.c.l.s4 1966171168
        %v1452 = vunpack.c.0.s8 %v1451
        %v1453 = vlaneseq
        %v1454 = vshrl.u32 %v1453, 7
        %v1455 = vsub.s32 %v1452, %v1454
        %v1456 = vrot.slane %v1440, %v1455
        %v1458 = vunpack.c.l.s4 1966171168
        %v1459 = vunpack.c.0.s8 %v1458
        %v1460 = vlaneseq
        %v1461 = vshrl.u32 %v1460, 7
        %v1462 = vsub.s32 %v1459, %v1461
        %v1463 = vrot.slane %v1441, %v1462
        %v1465 = vunpack.c.l.s4 1966171168
        %v1466 = vunpack.c.0.s8 %v1465
        %v1467 = vlaneseq
        %v1468 = vshrl.u32 %v1467, 7
        %v1469 = vsub.s32 %v1466, %v1468
        %v1470 = vrot.slane %v1442, %v1469
        %v1471 = vcombine.high %v1449, %v1449
        %v1472 = vcombine.high %v1456, %v1456
        %v1473 = vcombine.high %v1463, %v1463
        %v1474 = vcombine.high %v1470, %v1470
        %v1475 = vcombine.high %v243, %v243
        %v1477 = vunpack.c.l.s4 1966171168
        %v1478 = vunpack.c.0.s8 %v1477
        %v1479 = vlaneseq
        %v1480 = vshrl.u32 %v1479, 7
        %v1481 = vsub.s32 %v1478, %v1480
        %v1482 = vrot.slane %v243, %v1481
        %v1484 = vunpack.c.l.s4 1966171168
        %v1485 = vunpack.c.0.s8 %v1484
        %v1486 = vlaneseq
        %v1487 = vshrl.u32 %v1486, 7
        %v1488 = vsub.s32 %v1485, %v1487
        %v1489 = vrot.slane %v1475, %v1488
        %v1490 = vcombine.high %v1482, %v1482
        %v1491 = vcombine.high %v1489, %v1489
        %v1493 = vunpack.c.l.s4 1966171168
        %v1494 = vunpack.c.0.s8 %v1493
        %v1495 = vlaneseq
        %v1496 = vshrl.u32 %v1495, 7
        %v1497 = vsub.s32 %v1494, %v1496
        %v1498 = vrot.slane %v1482, %v1497
        %v1500 = vunpack.c.l.s4 1966171168
        %v1501 = vunpack.c.0.s8 %v1500
        %v1502 = vlaneseq
        %v1503 = vshrl.u32 %v1502, 7
        %v1504 = vsub.s32 %v1501, %v1503
        %v1505 = vrot.slane %v1489, %v1504
        %v1507 = vunpack.c.l.s4 1966171168
        %v1508 = vunpack.c.0.s8 %v1507
        %v1509 = vlaneseq
        %v1510 = vshrl.u32 %v1509, 7
        %v1511 = vsub.s32 %v1508, %v1510
        %v1512 = vrot.slane %v1490, %v1511
        %v1514 = vunpack.c.l.s4 1966171168
        %v1515 = vunpack.c.0.s8 %v1514
        %v1516 = vlaneseq
        %v1517 = vshrl.u32 %v1516, 7
        %v1518 = vsub.s32 %v1515, %v1517
        %v1519 = vrot.slane %v1491, %v1518
        %v1520 = vcombine.high %v1498, %v1498
        %v1521 = vcombine.high %v1505, %v1505
        %v1522 = vcombine.high %v1512, %v1512
        %v1523 = vcombine.high %v1519, %v1519
        %v1524 = vcombine.high %v244, %v244
        %v1526 = vunpack.c.l.s4 1966171168
        %v1527 = vunpack.c.0.s8 %v1526
        %v1528 = vlaneseq
        %v1529 = vshrl.u32 %v1528, 7
        %v1530 = vsub.s32 %v1527, %v1529
        %v1531 = vrot.slane %v244, %v1530
        %v1533 = vunpack.c.l.s4 1966171168
        %v1534 = vunpack.c.0.s8 %v1533
        %v1535 = vlaneseq
        %v1536 = vshrl.u32 %v1535, 7
        %v1537 = vsub.s32 %v1534, %v1536
        %v1538 = vrot.slane %v1524, %v1537
        %v1539 = vcombine.high %v1531, %v1531
        %v1540 = vcombine.high %v1538, %v1538
        %v1542 = vunpack.c.l.s4 1966171168
        %v1543 = vunpack.c.0.s8 %v1542
        %v1544 = vlaneseq
        %v1545 = vshrl.u32 %v1544, 7
        %v1546 = vsub.s32 %v1543, %v1545
        %v1547 = vrot.slane %v1531, %v1546
        %v1549 = vunpack.c.l.s4 1966171168
        %v1550 = vunpack.c.0.s8 %v1549
        %v1551 = vlaneseq
        %v1552 = vshrl.u32 %v1551, 7
        %v1553 = vsub.s32 %v1550, %v1552
        %v1554 = vrot.slane %v1538, %v1553
        %v1556 = vunpack.c.l.s4 1966171168
        %v1557 = vunpack.c.0.s8 %v1556
        %v1558 = vlaneseq
        %v1559 = vshrl.u32 %v1558, 7
        %v1560 = vsub.s32 %v1557, %v1559
        %v1561 = vrot.slane %v1539, %v1560
        %v1563 = vunpack.c.l.s4 1966171168
        %v1564 = vunpack.c.0.s8 %v1563
        %v1565 = vlaneseq
        %v1566 = vshrl.u32 %v1565, 7
        %v1567 = vsub.s32 %v1564, %v1566
        %v1568 = vrot.slane %v1540, %v1567
        %v1569 = vcombine.high %v1547, %v1547
        %v1570 = vcombine.high %v1554, %v1554
        %v1571 = vcombine.high %v1561, %v1561
        %v1572 = vcombine.high %v1568, %v1568
        %v1573 = vcombine.high %v245, %v245
        %v1575 = vunpack.c.l.s4 1966171168
        %v1576 = vunpack.c.0.s8 %v1575
        %v1577 = vlaneseq
        %v1578 = vshrl.u32 %v1577, 7
        %v1579 = vsub.s32 %v1576, %v1578
        %v1580 = vrot.slane %v245, %v1579
        %v1582 = vunpack.c.l.s4 1966171168
        %v1583 = vunpack.c.0.s8 %v1582
        %v1584 = vlaneseq
        %v1585 = vshrl.u32 %v1584, 7
        %v1586 = vsub.s32 %v1583, %v1585
        %v1587 = vrot.slane %v1573, %v1586
        %v1588 = vcombine.high %v1580, %v1580
        %v1589 = vcombine.high %v1587, %v1587
        %v1591 = vunpack.c.l.s4 1966171168
        %v1592 = vunpack.c.0.s8 %v1591
        %v1593 = vlaneseq
        %v1594 = vshrl.u32 %v1593, 7
        %v1595 = vsub.s32 %v1592, %v1594
        %v1596 = vrot.slane %v1580, %v1595
        %v1598 = vunpack.c.l.s4 1966171168
        %v1599 = vunpack.c.0.s8 %v1598
        %v1600 = vlaneseq
        %v1601 = vshrl.u32 %v1600, 7
        %v1602 = vsub.s32 %v1599, %v1601
        %v1603 = vrot.slane %v1587, %v1602
        %v1605 = vunpack.c.l.s4 1966171168
        %v1606 = vunpack.c.0.s8 %v1605
        %v1607 = vlaneseq
        %v1608 = vshrl.u32 %v1607, 7
        %v1609 = vsub.s32 %v1606, %v1608
        %v1610 = vrot.slane %v1588, %v1609
        %v1612 = vunpack.c.l.s4 1966171168
        %v1613 = vunpack.c.0.s8 %v1612
        %v1614 = vlaneseq
        %v1615 = vshrl.u32 %v1614, 7
        %v1616 = vsub.s32 %v1613, %v1615
        %v1617 = vrot.slane %v1589, %v1616
        %v1618 = vcombine.high %v1596, %v1596
        %v1619 = vcombine.high %v1603, %v1603
        %v1620 = vcombine.high %v1610, %v1610
        %v1621 = vcombine.high %v1617, %v1617
        %v1622 = vcombine.high %v246, %v246
        %v1624 = vunpack.c.l.s4 1966171168
        %v1625 = vunpack.c.0.s8 %v1624
        %v1626 = vlaneseq
        %v1627 = vshrl.u32 %v1626, 7
        %v1628 = vsub.s32 %v1625, %v1627
        %v1629 = vrot.slane %v246, %v1628
        %v1631 = vunpack.c.l.s4 1966171168
        %v1632 = vunpack.c.0.s8 %v1631
        %v1633 = vlaneseq
        %v1634 = vshrl.u32 %v1633, 7
        %v1635 = vsub.s32 %v1632, %v1634
        %v1636 = vrot.slane %v1622, %v1635
        %v1637 = vcombine.high %v1629, %v1629
        %v1638 = vcombine.high %v1636, %v1636
        %v1640 = vunpack.c.l.s4 1966171168
        %v1641 = vunpack.c.0.s8 %v1640
        %v1642 = vlaneseq
        %v1643 = vshrl.u32 %v1642, 7
        %v1644 = vsub.s32 %v1641, %v1643
        %v1645 = vrot.slane %v1629, %v1644
        %v1647 = vunpack.c.l.s4 1966171168
        %v1648 = vunpack.c.0.s8 %v1647
        %v1649 = vlaneseq
        %v1650 = vshrl.u32 %v1649, 7
        %v1651 = vsub.s32 %v1648, %v1650
        %v1652 = vrot.slane %v1636, %v1651
        %v1654 = vunpack.c.l.s4 1966171168
        %v1655 = vunpack.c.0.s8 %v1654
        %v1656 = vlaneseq
        %v1657 = vshrl.u32 %v1656, 7
        %v1658 = vsub.s32 %v1655, %v1657
        %v1659 = vrot.slane %v1637, %v1658
        %v1661 = vunpack.c.l.s4 1966171168
        %v1662 = vunpack.c.0.s8 %v1661
        %v1663 = vlaneseq
        %v1664 = vshrl.u32 %v1663, 7
        %v1665 = vsub.s32 %v1662, %v1664
        %v1666 = vrot.slane %v1638, %v1665
        %v1667 = vcombine.high %v1645, %v1645
        %v1668 = vcombine.high %v1652, %v1652
        %v1669 = vcombine.high %v1659, %v1659
        %v1670 = vcombine.high %v1666, %v1666
        %v2759 = vunpack.c.l.b16 %v247
        %v2760 = vunpack.c.l.b16 %v248
        %v2761 = vunpack.c.l.b16 %v249
        %v2762 = vunpack.c.l.b16 %v250
        %v2763 = vunpack.c.l.b16 %v251
        %v2764 = vunpack.c.l.b16 %v252
        %v2765 = vunpack.c.l.b16 %v253
        %v2766 = vunpack.c.l.b16 %v254
        %v2767 = vunpack.c.l.b16 %v255
        %v2768 = vunpack.c.l.b16 %v256
        %v2769 = vunpack.c.l.b16 %v257
        %v2770 = vunpack.c.l.b16 %v258
        %v2771 = vunpack.c.l.b16 %v259
        %v2772 = vunpack.c.l.b16 %v260
        %v2773 = vunpack.c.l.b16 %v261
        %v2774 = vunpack.c.l.b16 %v262
        %v2775 = vunpack.c.l.b16 %v263
        %v2776 = vunpack.c.l.b16 %v264
        %v2777 = vunpack.c.l.b16 %v265
        %v2778 = vunpack.c.l.b16 %v266
        %v2779 = vunpack.c.l.b16 %v267
        %v2780 = vunpack.c.l.b16 %v268
        %v2781 = vunpack.c.l.b16 %v269
        %v2782 = vunpack.c.l.b16 %v270
        %v2783 = vunpack.c.l.b16 %v271
        %v2784 = vunpack.c.l.b16 %v272
        %v2785 = vunpack.c.l.b16 %v273
        %v2786 = vunpack.c.l.b16 %v274
        %v2787 = vunpack.c.l.b16 %v275
        %v2788 = vunpack.c.l.b16 %v276
        %v2789 = vunpack.c.l.b16 %v277
        %v2790 = vunpack.c.l.b16 %v278
        %v2791 = vunpack.c.l.b16 %v279
        %v2792 = vunpack.c.l.b16 %v280
        %v2793 = vunpack.c.l.b16 %v281
        %v2794 = vunpack.c.l.b16 %v282
        %v2795 = vunpack.c.l.b16 %v283
        %v2796 = vunpack.c.l.b16 %v284
        %v2797 = vunpack.c.l.b16 %v285
        %v2798 = vunpack.c.l.b16 %v286
        %v2799 = vunpack.c.l.b16 %v287
        %v2800 = vunpack.c.l.b16 %v288
        %v2801 = vunpack.c.l.b16 %v289
        %v2802 = vunpack.c.l.b16 %v290
        %v2803 = vunpack.c.l.b16 %v291
        %v2804 = vunpack.c.l.b16 %v292
        %v2805 = vunpack.c.l.b16 %v293
        %v2806 = vunpack.c.l.b16 %v294
        %v2807 = vunpack.c.l.b16 %v295
        %v2808 = vunpack.c.l.b16 %v296
        %v2809 = vunpack.c.l.b16 %v297
        %v2810 = vunpack.c.l.b16 %v298
        %v2811 = vunpack.c.l.b16 %v299
        %v2812 = vunpack.c.l.b16 %v300
        %v2813 = vunpack.c.l.b16 %v301
        %v2814 = vunpack.c.l.b16 %v302
        %v2815 = vunpack.c.l.b16 %v303
        %v2816 = vunpack.c.l.b16 %v304
        %v2817 = vunpack.c.l.b16 %v305
        %v2818 = vunpack.c.l.b16 %v306
        %v2819 = vunpack.c.l.b16 %v307
        %v2820 = vunpack.c.l.b16 %v308
        %v2821 = vunpack.c.l.b16 %v309
        %v2822 = vunpack.c.l.b16 %v310
        %v2823 = vunpack.c.l.b16 %v311
        %v2824 = vunpack.c.l.b16 %v312
        %v2825 = vunpack.c.l.b16 %v313
        %v2826 = vunpack.c.l.b16 %v314
        %v2827 = vunpack.c.l.b16 %v315
        %v2828 = vunpack.c.l.b16 %v316
        %v2829 = vunpack.c.l.b16 %v317
        %v2830 = vunpack.c.l.b16 %v318
        %v2831 = vunpack.c.l.b16 %v319
        %v2832 = vunpack.c.l.b16 %v320
        %v2833 = vunpack.c.l.b16 %v321
        %v2834 = vunpack.c.l.b16 %v322
        %v2835 = vunpack.c.l.b16 %v323
        %v2836 = vunpack.c.l.b16 %v324
        %v2837 = vunpack.c.l.b16 %v325
        %v2838 = vunpack.c.l.b16 %v326
        %v2839 = vunpack.c.l.b16 %v327
        %v2840 = vunpack.c.l.b16 %v328
        %v2841 = vunpack.c.l.b16 %v329
        %v2842 = vunpack.c.l.b16 %v330
        %v2843 = vunpack.c.l.b16 %v331
        %v2844 = vunpack.c.l.b16 %v332
        %v2845 = vunpack.c.l.b16 %v333
        %v2846 = vunpack.c.l.b16 %v334
        %v2847 = vunpack.c.l.b16 %v335
        %v2848 = vunpack.c.l.b16 %v336
        %v2849 = vunpack.c.l.b16 %v337
        %v2850 = vunpack.c.l.b16 %v338
        %v2851 = vunpack.c.l.b16 %v339
        %v2852 = vunpack.c.l.b16 %v340
        %v2853 = vunpack.c.l.b16 %v341
        %v2854 = vunpack.c.l.b16 %v342
        %v2855 = vunpack.c.l.b16 %v343
        %v2856 = vunpack.c.l.b16 %v344
        %v2857 = vunpack.c.l.b16 %v345
        %v2858 = vunpack.c.l.b16 %v346
        %v2859 = vunpack.c.l.b16 %v347
        %v2860 = vunpack.c.l.b16 %v348
        %v2861 = vunpack.c.l.b16 %v349
        %v2862 = vunpack.c.l.b16 %v350
        %v2863 = vunpack.c.l.b16 %v351
        %v2864 = vunpack.c.l.b16 %v352
        %v2865 = vunpack.c.l.b16 %v353
        %v2866 = vunpack.c.l.b16 %v354
        %v2867 = vunpack.c.l.b16 %v355
        %v2868 = vunpack.c.l.b16 %v356
        %v2869 = vunpack.c.l.b16 %v357
        %v2870 = vunpack.c.l.b16 %v358
        %v2871 = vunpack.c.l.b16 %v359
        %v2872 = vunpack.c.l.b16 %v360
        %v2873 = vunpack.c.l.b16 %v361
        %v2874 = vunpack.c.l.b16 %v362
        %v2875 = vunpack.c.l.b16 %v363
        %v2876 = vunpack.c.l.b16 %v364
        %v2877 = vunpack.c.l.b16 %v365
        %v2878 = vunpack.c.l.b16 %v366
        %v2879 = vunpack.c.l.b16 %v367
        %v2880 = vunpack.c.l.b16 %v368
        %v2881 = vunpack.c.l.b16 %v369
        %v2882 = vunpack.c.l.b16 %v370
        %v2883 = vunpack.c.l.b16 %v371
        %v2884 = vunpack.c.l.b16 %v372
        %v2885 = vunpack.c.l.b16 %v373
        %v2886 = vunpack.c.l.b16 %v374
        %v2887 = vunpack.c.l.b16 %v375
        %v2888 = vunpack.c.l.b16 %v376
        %v2889 = vunpack.c.l.b16 %v377
        %v2890 = vunpack.c.l.b16 %v378
        %v2891 = vunpack.c.l.b16 %v379
        %v2892 = vunpack.c.l.b16 %v380
        %v2893 = vunpack.c.l.b16 %v381
        %v2894 = vunpack.c.l.b16 %v382
        %v2895 = vunpack.c.l.b16 %v383
        %v2896 = vunpack.c.l.b16 %v384
        %v2897 = vunpack.c.l.b16 %v385
        %v2898 = vunpack.c.l.b16 %v386
        %v2899 = vunpack.c.l.b16 %v387
        %v2900 = vunpack.c.l.b16 %v388
        %v2901 = vunpack.c.l.b16 %v389
        %v2902 = vunpack.c.l.b16 %v390
        %v2903 = vunpack.c.l.b16 %v391
        %v2904 = vunpack.c.l.b16 %v392
        %v2905 = vunpack.c.l.b16 %v393
        %v2906 = vunpack.c.l.b16 %v394
        %v2907 = vunpack.c.l.b16 %v395
        %v2908 = vunpack.c.l.b16 %v396
        %v2909 = vunpack.c.l.b16 %v397
        %v2910 = vunpack.c.l.b16 %v398
        %v2911 = vunpack.c.l.b16 %v399
        %v2912 = vunpack.c.l.b16 %v400
        %v2913 = vunpack.c.l.b16 %v401
        %v2914 = vunpack.c.l.b16 %v402
        %v2915 = vunpack.c.l.b16 %v403
        %v2916 = vunpack.c.l.b16 %v404
        %v2917 = vunpack.c.l.b16 %v405
        %v2918 = vunpack.c.l.b16 %v406
        %v2919 = vunpack.c.l.b16 %v407
        %v2920 = vunpack.c.l.b16 %v408
        %v2921 = vunpack.c.l.b16 %v409
        %v2922 = vunpack.c.l.b16 %v410
        %v2923 = vunpack.c.l.b16 %v411
        %v2924 = vunpack.c.l.b16 %v412
        %v2925 = vunpack.c.l.b16 %v413
        %v2926 = vunpack.c.l.b16 %v414
        %v2927 = vunpack.c.l.b16 %v415
        %v2928 = vunpack.c.l.b16 %v416
        %v2929 = vunpack.c.l.b16 %v417
        %v2930 = vunpack.c.l.b16 %v418
        %v2931 = vunpack.c.l.b16 %v419
        %v2932 = vunpack.c.l.b16 %v420
        %v2933 = vunpack.c.l.b16 %v421
        %v2934 = vunpack.c.l.b16 %v422
        %v2935 = vunpack.c.l.b16 %v423
        %v2936 = vunpack.c.l.b16 %v424
        %v2937 = vunpack.c.l.b16 %v425
        %v2938 = vunpack.c.l.b16 %v426
        %v2939 = vunpack.c.l.b16 %v427
        %v2940 = vunpack.c.l.b16 %v428
        %v2941 = vunpack.c.l.b16 %v429
        %v2942 = vunpack.c.l.b16 %v430
        %v2943 = vunpack.c.l.b16 %v431
        %v2944 = vunpack.c.l.b16 %v432
        %v2945 = vunpack.c.l.b16 %v433
        %v2946 = vunpack.c.l.b16 %v434
        %v2947 = vunpack.c.l.b16 %v435
        %v2948 = vunpack.c.l.b16 %v436
        %v2949 = vunpack.c.l.b16 %v437
        %v2950 = vunpack.c.l.b16 %v438
        %v2951 = vunpack.c.l.b16 %v439
        %v2952 = vunpack.c.l.b16 %v440
        %v2953 = vunpack.c.l.b16 %v441
        %v2954 = vunpack.c.l.b16 %v442
        %v2955 = vunpack.c.l.b16 %v443
        %v2956 = vunpack.c.l.b16 %v444
        %v2957 = vunpack.c.l.b16 %v445
        %v2958 = vunpack.c.l.b16 %v446
        %v2959 = vunpack.c.l.b16 %v447
        %v2960 = vunpack.c.l.b16 %v448
        %v2961 = vunpack.c.l.b16 %v449
        %v2962 = vunpack.c.l.b16 %v450
        %v2963 = vunpack.c.l.b16 %v451
        %v2964 = vunpack.c.l.b16 %v452
        %v2965 = vunpack.c.l.b16 %v453
        %v2966 = vunpack.c.l.b16 %v454
        %v2967 = vunpack.c.l.b16 %v455
        %v2968 = vunpack.c.l.b16 %v456
        %v2969 = vunpack.c.l.b16 %v457
        %v2970 = vunpack.c.l.b16 %v458
        %v2971 = vunpack.c.l.b16 %v459
        %v2972 = vunpack.c.l.b16 %v460
        %v2973 = vunpack.c.l.b16 %v461
        %v2974 = vunpack.c.l.b16 %v462
        %v2975 = vunpack.c.l.b16 %v463
        %v2976 = vunpack.c.l.b16 %v464
        %v2977 = vunpack.c.l.b16 %v465
        %v2978 = vunpack.c.l.b16 %v466
        %v2979 = vunpack.c.l.b16 %v467
        %v2980 = vunpack.c.l.b16 %v468
        %v2981 = vunpack.c.l.b16 %v469
        %v2982 = vunpack.c.l.b16 %v470
        %v2983 = vunpack.c.l.b16 %v471
        %v2984 = vunpack.c.l.b16 %v472
        %v2985 = vunpack.c.l.b16 %v473
        %v2986 = vunpack.c.l.b16 %v474
        %v2987 = vunpack.c.l.b16 %v475
        %v2988 = vunpack.c.l.b16 %v476
        %v2989 = vunpack.c.l.b16 %v477
        %v2990 = vunpack.c.l.b16 %v478
        %v2991 = vunpack.c.l.b16 %v479
        %v2992 = vunpack.c.l.b16 %v480
        %v2993 = vunpack.c.l.b16 %v481
        %v2994 = vunpack.c.l.b16 %v482
        %v2995 = vunpack.c.l.b16 %v483
        %v2996 = vunpack.c.l.b16 %v484
        %v2997 = vunpack.c.l.b16 %v485
        %v2998 = vunpack.c.l.b16 %v486
        %v2999 = vunpack.c.l.b16 %v487
        %v3000 = vunpack.c.l.b16 %v488
        %v3001 = vunpack.c.l.b16 %v489
        %v3002 = vunpack.c.l.b16 %v490
        %v3003 = vunpack.c.l.b16 %v491
        %v3004 = vunpack.c.l.b16 %v492
        %v3005 = vunpack.c.l.b16 %v493
        %v3006 = vunpack.c.l.b16 %v494
        %v3007 = vunpack.c.l.b16 %v495
        %v3008 = vunpack.c.l.b16 %v496
        %v3009 = vunpack.c.l.b16 %v497
        %v3010 = vunpack.c.l.b16 %v498
        %v3011 = vunpack.c.l.b16 %v499
        %v3012 = vunpack.c.l.b16 %v500
        %v3013 = vunpack.c.l.b16 %v501
        %v3014 = vunpack.c.l.b16 %v502
        %v3015 = vunpack.c.l.b16 %v503
        %v3016 = vunpack.c.l.b16 %v504
        %v3017 = vunpack.c.l.b16 %v505
        %v3018 = vunpack.c.l.b16 %v506
        %v3019 = vunpack.c.l.b16 %v507
        %v3020 = vunpack.c.l.b16 %v508
        %v3021 = vunpack.c.l.b16 %v509
        %v3022 = vunpack.c.l.b16 %v510
        %v3023 = vunpack.c.l.b16 %v511
        %v3024 = vunpack.c.l.b16 %v512
        %v3025 = vunpack.c.l.b16 %v513
        %v3026 = vunpack.c.l.b16 %v514
        %v3027 = vunpack.c.l.b16 %v515
        %v3028 = vunpack.c.l.b16 %v516
        %v3029 = vunpack.c.l.b16 %v517
        %v3030 = vunpack.c.l.b16 %v518
        %v3031 = vunpack.c.l.b16 %v519
        %v3032 = vunpack.c.l.b16 %v520
        %v3033 = vunpack.c.l.b16 %v521
        %v3034 = vunpack.c.l.b16 %v522
        %v3035 = vunpack.c.l.b16 %v523
        %v3036 = vunpack.c.l.b16 %v524
        %v3037 = vunpack.c.l.b16 %v525
        %v3038 = vunpack.c.l.b16 %v526
        %v3039 = vunpack.c.l.b16 %v527
        %v3040 = vunpack.c.l.b16 %v528
        %v3041 = vunpack.c.l.b16 %v529
        %v3042 = vunpack.c.l.b16 %v530
        %v3043 = vunpack.c.l.b16 %v531
        %v3044 = vunpack.c.l.b16 %v532
        %v3045 = vunpack.c.l.b16 %v533
        %v3046 = vunpack.c.l.b16 %v534
        %v3047 = vunpack.c.l.b16 %v535
        %v3048 = vunpack.c.l.b16 %v536
        %v3049 = vunpack.c.l.b16 %v537
        %v3050 = vunpack.c.l.b16 %v538
        %v3051 = vunpack.c.l.b16 %v539
        %v3052 = vunpack.c.l.b16 %v540
        %v3053 = vunpack.c.l.b16 %v541
        %v3054 = vunpack.c.l.b16 %v542
        %v3055 = vunpack.c.l.b16 %v543
        %v3056 = vunpack.c.l.b16 %v544
        %v3057 = vunpack.c.l.b16 %v545
        %v3058 = vunpack.c.l.b16 %v546
        %v3059 = vunpack.c.l.b16 %v547
        %v3060 = vunpack.c.l.b16 %v548
        %v3061 = vunpack.c.l.b16 %v549
        %v3062 = vunpack.c.l.b16 %v550
        %v3063 = vunpack.c.l.b16 %v551
        %v3064 = vunpack.c.l.b16 %v552
        %v3065 = vunpack.c.l.b16 %v553
        %v3066 = vunpack.c.l.b16 %v554
        %v3067 = vunpack.c.l.b16 %v555
        %v3068 = vunpack.c.l.b16 %v556
        %v3069 = vunpack.c.l.b16 %v557
        %v3070 = vunpack.c.l.b16 %v558
        %v3071 = vunpack.c.l.b16 %v559
        %v3072 = vunpack.c.l.b16 %v560
        %v3073 = vunpack.c.l.b16 %v561
        %v3074 = vunpack.c.l.b16 %v562
        %v3075 = vunpack.c.l.b16 %v563
        %v3076 = vunpack.c.l.b16 %v564
        %v3077 = vunpack.c.l.b16 %v565
        %v3078 = vunpack.c.l.b16 %v566
        %v3079 = vunpack.c.l.b16 %v567
        %v3080 = vunpack.c.l.b16 %v568
        %v3081 = vunpack.c.l.b16 %v569
        %v3082 = vunpack.c.l.b16 %v570
        %v3083 = vunpack.c.l.b16 %v571
        %v3084 = vunpack.c.l.b16 %v572
        %v3085 = vunpack.c.l.b16 %v573
        %v3086 = vunpack.c.l.b16 %v574
        %v3087 = vunpack.c.l.b16 %v575
        %v3088 = vunpack.c.l.b16 %v576
        %v3089 = vunpack.c.l.b16 %v577
        %v3090 = vunpack.c.l.b16 %v578
        %v3091 = vunpack.c.l.b16 %v579
        %v3092 = vunpack.c.l.b16 %v580
        %v3093 = vunpack.c.l.b16 %v581
        %v3094 = vunpack.c.l.b16 %v582
        %v3095 = vunpack.c.l.b16 %v583
        %v3096 = vunpack.c.l.b16 %v584
        %v3097 = vunpack.c.l.b16 %v585
        %v3098 = vunpack.c.l.b16 %v586
        %v3099 = vunpack.c.l.b16 %v587
        %v3100 = vunpack.c.l.b16 %v588
        %v3101 = vunpack.c.l.b16 %v589
        %v3102 = vunpack.c.l.b16 %v590
        %v3103 = vunpack.c.l.b16 %v591
        %v3104 = vunpack.c.l.b16 %v592
        %v3105 = vunpack.c.l.b16 %v593
        %v3106 = vunpack.c.l.b16 %v594
        %v3107 = vunpack.c.l.b16 %v595
        %v3108 = vunpack.c.l.b16 %v596
        %v3109 = vunpack.c.l.b16 %v597
        %v3110 = vunpack.c.l.b16 %v598
        %v3111 = vunpack.c.l.b16 %v599
        %v3112 = vunpack.c.l.b16 %v600
        %v3113 = vunpack.c.l.b16 %v601
        %v3114 = vunpack.c.l.b16 %v602
        %v3115 = vunpack.c.l.b16 %v603
        %v3116 = vunpack.c.l.b16 %v604
        %v3117 = vunpack.c.l.b16 %v605
        %v3118 = vunpack.c.l.b16 %v606
        %v3119 = vunpack.c.l.b16 %v607
        %v3120 = vunpack.c.l.b16 %v608
        %v3121 = vunpack.c.l.b16 %v609
        %v3122 = vunpack.c.l.b16 %v610
        %v3123 = vunpack.c.l.b16 %v611
        %v3124 = vunpack.c.l.b16 %v612
        %v3125 = vunpack.c.l.b16 %v613
        %v3126 = vunpack.c.l.b16 %v614
        %v3127 = vunpack.c.l.b16 %v615
        %v3128 = vunpack.c.l.b16 %v616
        %v3129 = vunpack.c.l.b16 %v617
        %v3130 = vunpack.c.l.b16 %v618
        %v3131 = vunpack.c.l.b16 %v619
        %v3132 = vunpack.c.l.b16 %v620
        %v3133 = vunpack.c.l.b16 %v621
        %v3134 = vunpack.c.l.b16 %v622
        %v3135 = vunpack.c.l.b16 %v623
        %v3136 = vunpack.c.l.b16 %v624
        %v3137 = vunpack.c.l.b16 %v625
        %v3138 = vunpack.c.l.b16 %v626
        %v3139 = vunpack.c.l.b16 %v627
        %v3140 = vunpack.c.l.b16 %v628
        %v3141 = vunpack.c.l.b16 %v629
        %v3142 = vunpack.c.l.b16 %v630
        %v3143 = vunpack.c.l.b16 %v631
        %v3144 = vunpack.c.l.b16 %v632
        %v3145 = vunpack.c.l.b16 %v633
        %v3146 = vunpack.c.l.b16 %v634
        %v3147 = vunpack.c.l.b16 %v635
        %v3148 = vunpack.c.l.b16 %v636
        %v3149 = vunpack.c.l.b16 %v637
        %v3150 = vunpack.c.l.b16 %v638
        %v3151 = vunpack.c.l.b16 %v639
        %v3152 = vunpack.c.l.b16 %v640
        %v3153 = vunpack.c.l.b16 %v641
        %v3154 = vunpack.c.l.b16 %v642
        %v3155 = vunpack.c.l.b16 %v643
        %v3156 = vunpack.c.l.b16 %v644
        %v3157 = vunpack.c.l.b16 %v645
        %v3158 = vunpack.c.l.b16 %v646
        %v3159 = vunpack.c.l.b16 %v647
        %v3160 = vunpack.c.l.b16 %v648
        %v3161 = vunpack.c.l.b16 %v649
        %v3162 = vunpack.c.l.b16 %v650
        %v3163 = vunpack.c.l.b16 %v651
        %v3164 = vunpack.c.l.b16 %v652
        %v3165 = vunpack.c.l.b16 %v653
        %v3166 = vunpack.c.l.b16 %v654
        %v3167 = vunpack.c.l.b16 %v655
        %v3168 = vunpack.c.l.b16 %v656
        %v3169 = vunpack.c.l.b16 %v657
        %v3170 = vunpack.c.l.b16 %v658
        %v3171 = vunpack.c.l.b16 %v659
        %v3172 = vunpack.c.l.b16 %v660
        %v3173 = vunpack.c.l.b16 %v661
        %v3174 = vunpack.c.l.b16 %v662
        %v3175 = vunpack.c.l.b16 %v663
        %v3176 = vunpack.c.l.b16 %v664
        %v3177 = vunpack.c.l.b16 %v665
        %v3178 = vunpack.c.l.b16 %v666
        %v3179 = vunpack.c.l.b16 %v667
        %v3180 = vunpack.c.l.b16 %v668
        %v3181 = vunpack.c.l.b16 %v669
        %v3182 = vunpack.c.l.b16 %v670
        %v3183 = vunpack.c.l.b16 %v671
        %v3184 = vunpack.c.l.b16 %v672
        %v3185 = vunpack.c.l.b16 %v673
        %v3186 = vunpack.c.l.b16 %v674
        %v3187 = vunpack.c.l.b16 %v675
        %v3188 = vunpack.c.l.b16 %v676
        %v3189 = vunpack.c.l.b16 %v677
        %v3190 = vunpack.c.l.b16 %v678
        %v3191 = vunpack.c.l.b16 %v679
        %v3192 = vunpack.c.l.b16 %v680
        %v3193 = vunpack.c.l.b16 %v681
        %v3194 = vunpack.c.l.b16 %v682
        %v3195 = vunpack.c.l.b16 %v683
        %v3196 = vunpack.c.l.b16 %v684
        %v3197 = vunpack.c.l.b16 %v685
        %v3198 = vunpack.c.l.b16 %v686
        %v3199 = vunpack.c.l.b16 %v687
        %v3200 = vunpack.c.l.b16 %v688
        %v3201 = vunpack.c.l.b16 %v689
        %v3202 = vunpack.c.l.b16 %v690
        %v3203 = vunpack.c.l.b16 %v691
        %v3204 = vunpack.c.l.b16 %v692
        %v3205 = vunpack.c.l.b16 %v693
        %v3206 = vunpack.c.l.b16 %v694
        %v3207 = vunpack.c.l.b16 %v695
        %v3208 = vunpack.c.l.b16 %v696
        %v3209 = vunpack.c.l.b16 %v697
        %v3210 = vunpack.c.l.b16 %v698
        %v3211 = vunpack.c.l.b16 %v699
        %v3212 = vunpack.c.l.b16 %v700
        %v3213 = vunpack.c.l.b16 %v701
        %v3214 = vunpack.c.l.b16 %v702
        %v3215 = vunpack.c.l.b16 %v703
        %v3216 = vunpack.c.l.b16 %v704
        %v3217 = vunpack.c.l.b16 %v705
        %v3218 = vunpack.c.l.b16 %v706
        %v3219 = vunpack.c.l.b16 %v707
        %v3220 = vunpack.c.l.b16 %v708
        %v3221 = vunpack.c.l.b16 %v709
        %v3222 = vunpack.c.l.b16 %v710
        %v3223 = vunpack.c.l.b16 %v711
        %v3224 = vunpack.c.l.b16 %v712
        %v3225 = vunpack.c.l.b16 %v713
        %v3226 = vunpack.c.l.b16 %v714
        %v3227 = vunpack.c.l.b16 %v715
        %v3228 = vunpack.c.l.b16 %v716
        %v3229 = vunpack.c.l.b16 %v717
        %v3230 = vunpack.c.l.b16 %v718
        %v3231 = vunpack.c.l.b16 %v719
        %v3232 = vunpack.c.l.b16 %v720
        %v3233 = vunpack.c.l.b16 %v721
        %v3234 = vunpack.c.l.b16 %v722
        %v3235 = vunpack.c.l.b16 %v723
        %v3236 = vunpack.c.l.b16 %v724
        %v3237 = vunpack.c.l.b16 %v725
        %v3238 = vunpack.c.l.b16 %v726
        %v3239 = vunpack.c.l.b16 %v727
        %v3240 = vunpack.c.l.b16 %v728
        %v3241 = vunpack.c.l.b16 %v729
        %v3242 = vunpack.c.l.b16 %v730
        %v3243 = vunpack.c.l.b16 %v731
        %v3244 = vunpack.c.l.b16 %v732
        %v3245 = vunpack.c.l.b16 %v733
        %v3246 = vunpack.c.l.b16 %v734
        %v3247 = vunpack.c.l.b16 %v735
        %v3248 = vunpack.c.l.b16 %v736
        %v3249 = vunpack.c.l.b16 %v737
        %v3250 = vunpack.c.l.b16 %v738
        %v3251 = vunpack.c.l.b16 %v739
        %v3252 = vunpack.c.l.b16 %v740
        %v3253 = vunpack.c.l.b16 %v741
        %v3254 = vunpack.c.l.b16 %v742
        %v3255 = vunpack.c.l.b16 %v743
        %v3256 = vunpack.c.l.b16 %v744
        %v3257 = vunpack.c.l.b16 %v745
        %v3258 = vunpack.c.l.b16 %v746
        %v3259 = vunpack.c.l.b16 %v747
        %v3260 = vunpack.c.l.b16 %v748
        %v3261 = vunpack.c.l.b16 %v749
        %v3262 = vunpack.c.l.b16 %v750
        %v3263 = vunpack.c.l.b16 %v751
        %v3264 = vunpack.c.l.b16 %v752
        %v3265 = vunpack.c.l.b16 %v753
        %v3266 = vunpack.c.l.b16 %v754
        %v3267 = vunpack.c.l.b16 %v755
        %v3268 = vunpack.c.l.b16 %v756
        %v3269 = vunpack.c.l.b16 %v757
        %v3270 = vunpack.c.l.b16 %v758
        %v3271 = vunpack.c.l.b16 %v759
        %v3272 = vunpack.c.l.b16 %v760
        %v3273 = vunpack.c.l.b16 %v761
        %v3274 = vunpack.c.l.b16 %v762
        %v3275 = vunpack.c.l.b16 %v763
        %v3276 = vunpack.c.l.b16 %v764
        %v3277 = vunpack.c.l.b16 %v765
        %v3278 = vunpack.c.l.b16 %v766
        %v3279 = vunpack.c.l.b16 %v767
        %v3280 = vunpack.c.l.b16 %v768
        %v3281 = vunpack.c.l.b16 %v769
        %v3282 = vunpack.c.l.b16 %v770
        %v3283 = vunpack.c.l.b16 %v771
        %v3284 = vunpack.c.l.b16 %v772
        %v3285 = vunpack.c.l.b16 %v773
        %v3286 = vunpack.c.l.b16 %v774
        %v3287 = vunpack.c.l.b16 %v775
        %v3288 = vunpack.c.l.b16 %v776
        %v3289 = vunpack.c.l.b16 %v777
        %v3290 = vunpack.c.l.b16 %v778
        %v3291 = vunpack.c.l.b16 %v779
        %v3292 = vunpack.c.l.b16 %v780
        %v3293 = vunpack.c.l.b16 %v781
        %v3294 = vunpack.c.l.b16 %v782
        %v3295 = vunpack.c.l.b16 %v783
        %v3296 = vunpack.c.l.b16 %v784
        %v3297 = vunpack.c.l.b16 %v785
        %v3298 = vunpack.c.l.b16 %v786
        %v3299 = vunpack.c.l.b16 %v787
        %v3300 = vunpack.c.l.b16 %v788
        %v3301 = vunpack.c.l.b16 %v789
        %v3302 = vunpack.c.l.b16 %v790
        %v3303 = vunpack.c.l.b16 %v791
        %v3304 = vunpack.c.l.b16 %v792
        %v3305 = vunpack.c.l.b16 %v793
        %v3306 = vunpack.c.l.b16 %v794
        %v3307 = vunpack.c.l.b16 %v795
        %v3308 = vunpack.c.l.b16 %v796
        %v3309 = vunpack.c.l.b16 %v797
        %v3310 = vunpack.c.l.b16 %v798
        %v3311 = vunpack.c.l.b16 %v799
        %v3312 = vunpack.c.l.b16 %v800
        %v3313 = vunpack.c.l.b16 %v801
        %v3314 = vunpack.c.l.b16 %v802
        %v3315 = vunpack.c.l.b16 %v803
        %v3316 = vunpack.c.l.b16 %v804
        %v3317 = vunpack.c.l.b16 %v805
        %v3318 = vunpack.c.l.b16 %v806
        %v3319 = vunpack.c.l.b16 %v807
        %v3320 = vunpack.c.l.b16 %v808
        %v3321 = vunpack.c.l.b16 %v809
        %v3322 = vunpack.c.l.b16 %v810
        %v3323 = vunpack.c.l.b16 %v811
        %v3324 = vunpack.c.l.b16 %v812
        %v3325 = vunpack.c.l.b16 %v813
        %v3326 = vunpack.c.l.b16 %v814
        %v3327 = vunpack.c.l.b16 %v815
        %v3328 = vunpack.c.l.b16 %v816
        %v3329 = vunpack.c.l.b16 %v817
        %v3330 = vunpack.c.l.b16 %v818
        %v3331 = vunpack.c.l.b16 %v819
        %v3332 = vunpack.c.l.b16 %v820
        %v3333 = vunpack.c.l.b16 %v821
        %v3334 = vunpack.c.l.b16 %v822
        %v3335 = vunpack.c.l.b16 %v823
        %v3336 = vunpack.c.l.b16 %v824
        %v3337 = vunpack.c.l.b16 %v825
        %v3338 = vunpack.c.l.b16 %v826
        %v3339 = vunpack.c.l.b16 %v827
        %v3340 = vunpack.c.l.b16 %v828
        %v3341 = vunpack.c.l.b16 %v829
        %v3342 = vunpack.c.l.b16 %v830
        %v3343 = vunpack.c.l.b16 %v831
        %v3344 = vunpack.c.l.b16 %v832
        %v3345 = vunpack.c.l.b16 %v833
        %v3346 = vunpack.c.l.b16 %v834
        %v3347 = vunpack.c.l.b16 %v835
        %v3348 = vunpack.c.l.b16 %v836
        %v3349 = vunpack.c.l.b16 %v837
        %v3350 = vunpack.c.l.b16 %v838
        %v3351 = vunpack.c.l.b16 %v839
        %v3352 = vunpack.c.l.b16 %v840
        %v3353 = vunpack.c.l.b16 %v841
        %v3354 = vunpack.c.l.b16 %v842
        %v3355 = vunpack.c.l.b16 %v843
        %v3356 = vunpack.c.l.b16 %v844
        %v3357 = vunpack.c.l.b16 %v845
        %v3358 = vunpack.c.l.b16 %v846
        %v3359 = vunpack.c.l.b16 %v847
        %v3360 = vunpack.c.l.b16 %v848
        %v3361 = vunpack.c.l.b16 %v849
        %v3362 = vunpack.c.l.b16 %v850
        %v3363 = vunpack.c.l.b16 %v851
        %v3364 = vunpack.c.l.b16 %v852
        %v3365 = vunpack.c.l.b16 %v853
        %v3366 = vunpack.c.l.b16 %v854
        %v3367 = vunpack.c.l.b16 %v855
        %v3368 = vunpack.c.l.b16 %v856
        %v3369 = vunpack.c.l.b16 %v857
        %v3370 = vunpack.c.l.b16 %v858
        %v3371 = vunpack.c.l.b16 %v859
        %v3372 = vunpack.c.l.b16 %v860
        %v3373 = vunpack.c.l.b16 %v861
        %v3374 = vunpack.c.l.b16 %v862
        %v3375 = vunpack.c.l.b16 %v863
        %v3376 = vunpack.c.l.b16 %v864
        %v3377 = vunpack.c.l.b16 %v865
        %v3378 = vunpack.c.l.b16 %v866
        %v3379 = vunpack.c.l.b16 %v867
        %v3380 = vunpack.c.l.b16 %v868
        %v3381 = vunpack.c.l.b16 %v869
        %v3382 = vunpack.c.l.b16 %v870
        %v3383 = vunpack.c.l.b16 %v871
        %v3384 = vunpack.c.l.b16 %v872
        %v3385 = vunpack.c.l.b16 %v873
        %v3386 = vunpack.c.l.b16 %v874
        %v3387 = vunpack.c.l.b16 %v875
        %v3388 = vunpack.c.l.b16 %v876
        %v3389 = vunpack.c.l.b16 %v877
        %v3390 = vunpack.c.l.b16 %v878
        %v3391 = vunpack.c.l.b16 %v879
        %v3392 = vunpack.c.l.b16 %v880
        %v3393 = vunpack.c.l.b16 %v881
        %v3394 = vunpack.c.l.b16 %v882
        %v3395 = vunpack.c.l.b16 %v883
        %v3396 = vunpack.c.l.b16 %v884
        %v3397 = vunpack.c.l.b16 %v885
        %v3398 = vunpack.c.l.b16 %v886
        %v3399 = vunpack.c.l.b16 %v887
        %v3400 = vunpack.c.l.b16 %v888
        %v3401 = vunpack.c.l.b16 %v889
        %v3402 = vunpack.c.l.b16 %v890
        %v3403 = vunpack.c.l.b16 %v891
        %v3404 = vunpack.c.l.b16 %v892
        %v3405 = vunpack.c.l.b16 %v893
        %v3406 = vunpack.c.l.b16 %v894
        %v3407 = vunpack.c.l.b16 %v895
        %v3408 = vunpack.c.l.b16 %v896
        %v3409 = vunpack.c.l.b16 %v897
        %v3410 = vunpack.c.l.b16 %v898
        %v3411 = vunpack.c.l.b16 %v899
        %v3412 = vunpack.c.l.b16 %v900
        %v3413 = vunpack.c.l.b16 %v901
        %v3414 = vunpack.c.l.b16 %v902
        %v3415 = vunpack.c.l.b16 %v903
        %v3416 = vunpack.c.l.b16 %v904
        %v3417 = vunpack.c.l.b16 %v905
        %v3418 = vunpack.c.l.b16 %v906
        %v3419 = vunpack.c.l.b16 %v907
        %v3420 = vunpack.c.l.b16 %v908
        %v3421 = vunpack.c.l.b16 %v909
        %v3422 = vunpack.c.l.b16 %v910
        %v3423 = vunpack.c.l.b16 %v911
        %v3424 = vunpack.c.l.b16 %v912
        %v3425 = vunpack.c.l.b16 %v913
        %v3426 = vunpack.c.l.b16 %v914
        %v3427 = vunpack.c.l.b16 %v915
        %v3428 = vunpack.c.l.b16 %v916
        %v3429 = vunpack.c.l.b16 %v917
        %v3430 = vunpack.c.l.b16 %v918
        %v3431 = vunpack.c.l.b16 %v919
        %v3432 = vunpack.c.l.b16 %v920
        %v3433 = vunpack.c.l.b16 %v921
        %v3434 = vunpack.c.l.b16 %v922
        %v3435 = vunpack.c.l.b16 %v923
        %v3436 = vunpack.c.l.b16 %v924
        %v3437 = vunpack.c.l.b16 %v925
        %v3438 = vunpack.c.l.b16 %v926
        %v3439 = vunpack.c.l.b16 %v927
        %v3440 = vunpack.c.l.b16 %v928
        %v3441 = vunpack.c.l.b16 %v929
        %v3442 = vunpack.c.l.b16 %v930
        %v3443 = vunpack.c.l.b16 %v931
        %v3444 = vunpack.c.l.b16 %v932
        %v3445 = vunpack.c.l.b16 %v933
        %v3446 = vunpack.c.l.b16 %v934
        %v3447 = vunpack.c.l.b16 %v935
        %v3448 = vunpack.c.l.b16 %v936
        %v3449 = vunpack.c.l.b16 %v937
        %v3450 = vunpack.c.l.b16 %v938
        %v3451 = vunpack.c.l.b16 %v939
        %v3452 = vunpack.c.l.b16 %v940
        %v3453 = vunpack.c.l.b16 %v941
        %v3454 = vunpack.c.l.b16 %v942
        %v3455 = vunpack.c.l.b16 %v943
        %v3456 = vunpack.c.l.b16 %v944
        %v3457 = vunpack.c.l.b16 %v945
        %v3458 = vunpack.c.l.b16 %v946
        %v3459 = vunpack.c.l.b16 %v947
        %v3460 = vunpack.c.l.b16 %v948
        %v3461 = vunpack.c.l.b16 %v949
        %v3462 = vunpack.c.l.b16 %v950
        %v3463 = vunpack.c.l.b16 %v951
        %v3464 = vunpack.c.l.b16 %v952
        %v3465 = vunpack.c.l.b16 %v953
        %v3466 = vunpack.c.l.b16 %v954
        %v3467 = vunpack.c.l.b16 %v955
        %v3468 = vunpack.c.l.b16 %v956
        %v3469 = vunpack.c.l.b16 %v957
        %v3470 = vunpack.c.l.b16 %v958
        %v3471 = vunpack.c.l.b16 %v959
        %v3472 = vunpack.c.l.b16 %v960
        %v3473 = vunpack.c.l.b16 %v961
        %v3474 = vunpack.c.l.b16 %v962
        %v3475 = vunpack.c.l.b16 %v963
        %v3476 = vunpack.c.l.b16 %v964
        %v3477 = vunpack.c.l.b16 %v965
        %v3478 = vunpack.c.l.b16 %v966
        %v3479 = vunpack.c.l.b16 %v967
        %v3480 = vunpack.c.l.b16 %v968
        %v3481 = vunpack.c.l.b16 %v969
        %v3482 = vunpack.c.l.b16 %v970
        %v3483 = vunpack.c.l.b16 %v971
        %v3484 = vunpack.c.l.b16 %v972
        %v3485 = vunpack.c.l.b16 %v973
        %v3486 = vunpack.c.l.b16 %v974
        %v3487 = vunpack.c.l.b16 %v975
        %v3488 = vunpack.c.l.b16 %v976
        %v3489 = vunpack.c.l.b16 %v977
        %v3490 = vunpack.c.l.b16 %v978
        %v3491 = vunpack.c.l.b16 %v979
        %v3492 = vunpack.c.l.b16 %v980
        %v3493 = vunpack.c.l.b16 %v981
        %v3494 = vunpack.c.l.b16 %v982
        %v3495 = vunpack.c.l.b16 %v983
        %v3496 = vunpack.c.l.b16 %v984
        %v3497 = vunpack.c.l.b16 %v985
        %v3498 = vunpack.c.l.b16 %v986
        %v3499 = vunpack.c.l.b16 %v987
        %v3500 = vunpack.c.l.b16 %v988
        %v3501 = vunpack.c.l.b16 %v989
        %v3502 = vunpack.c.l.b16 %v990
        %v3503 = vunpack.c.l.b16 %v991
        %v3504 = vunpack.c.l.b16 %v992
        %v3505 = vunpack.c.l.b16 %v993
        %v3506 = vunpack.c.l.b16 %v994
        %v3507 = vunpack.c.l.b16 %v995
        %v3508 = vunpack.c.l.b16 %v996
        %v3509 = vunpack.c.l.b16 %v997
        %v3510 = vunpack.c.l.b16 %v998
        %v3511 = vunpack.c.l.b16 %v999
        %v3512 = vunpack.c.l.b16 %v1000
        %v3513 = vunpack.c.l.b16 %v1001
        %v3514 = vunpack.c.l.b16 %v1002
        %v3515 = vunpack.c.l.b16 %v1003
        %v3516 = vunpack.c.l.b16 %v1004
        %v3517 = vunpack.c.l.b16 %v1005
        %v3518 = vunpack.c.l.b16 %v1006
        %v3519 = vunpack.c.l.b16 %v1007
        %v3520 = vunpack.c.l.b16 %v1008
        %v3521 = vunpack.c.l.b16 %v1009
        %v3522 = vunpack.c.l.b16 %v1010
        %v3523 = vunpack.c.l.b16 %v1011
        %v3524 = vunpack.c.l.b16 %v1012
        %v3525 = vunpack.c.l.b16 %v1013
        %v3526 = vunpack.c.l.b16 %v1014
        %v3527 = vunpack.c.l.b16 %v1015
        %v3528 = vunpack.c.l.b16 %v1016
        %v3529 = vunpack.c.l.b16 %v1017
        %v3530 = vunpack.c.l.b16 %v1018
        %v3531 = vunpack.c.l.b16 %v1019
        %v3532 = vunpack.c.l.b16 %v1020
        %v3533 = vunpack.c.l.b16 %v1021
        %v3534 = vunpack.c.l.b16 %v1022
        %v3535 = vunpack.c.l.b16 %v1023
        %v3536 = vunpack.c.l.b16 %v1024
        %v3537 = vunpack.c.l.b16 %v1025
        %v3538 = vunpack.c.l.b16 %v1026
        %v3539 = vunpack.c.l.b16 %v1027
        %v3540 = vunpack.c.l.b16 %v1028
        %v3541 = vunpack.c.l.b16 %v1029
        %v3542 = vunpack.c.l.b16 %v1030
        %v3543 = vunpack.c.l.b16 %v1031
        %v3544 = vunpack.c.l.b16 %v1032
        %v3545 = vunpack.c.l.b16 %v1033
        %v3546 = vunpack.c.l.b16 %v1034
        %v3547 = vunpack.c.l.b16 %v1035
        %v3548 = vunpack.c.l.b16 %v1036
        %v3549 = vunpack.c.l.b16 %v1037
        %v3550 = vunpack.c.l.b16 %v1038
        %v3551 = vunpack.c.l.b16 %v1039
        %v3552 = vunpack.c.l.b16 %v1040
        %v3553 = vunpack.c.l.b16 %v1041
        %v3554 = vunpack.c.l.b16 %v1042
        %v3555 = vunpack.c.l.b16 %v1043
        %v3556 = vunpack.c.l.b16 %v1044
        %v3557 = vunpack.c.l.b16 %v1045
        %v3558 = vunpack.c.l.b16 %v1046
        %v3559 = vunpack.c.l.b16 %v1047
        %v3560 = vunpack.c.l.b16 %v1048
        %v3561 = vunpack.c.l.b16 %v1049
        %v3562 = vunpack.c.l.b16 %v1050
        %v3563 = vunpack.c.l.b16 %v1051
        %v3564 = vunpack.c.l.b16 %v1052
        %v3565 = vunpack.c.l.b16 %v1053
        %v3566 = vunpack.c.l.b16 %v1054
        %v3567 = vunpack.c.l.b16 %v1055
        %v3568 = vunpack.c.l.b16 %v1056
        %v3569 = vunpack.c.l.b16 %v1057
        %v3570 = vunpack.c.l.b16 %v1058
        %v3571 = vunpack.c.l.b16 %v1059
        %v3572 = vunpack.c.l.b16 %v1060
        %v3573 = vunpack.c.l.b16 %v1061
        %v3574 = vunpack.c.l.b16 %v1062
        %v3575 = vunpack.c.l.b16 %v1063
        %v3576 = vunpack.c.l.b16 %v1064
        %v3577 = vunpack.c.l.b16 %v1065
        %v3578 = vunpack.c.l.b16 %v1066
        %v3579 = vunpack.c.l.b16 %v1067
        %v3580 = vunpack.c.l.b16 %v1068
        %v3581 = vunpack.c.l.b16 %v1069
        %v3582 = vunpack.c.l.b16 %v1070
        %v3583 = vunpack.c.l.b16 %v1071
        %v3584 = vunpack.c.l.b16 %v1072
        %v3585 = vunpack.c.l.b16 %v1073
        %v3586 = vunpack.c.l.b16 %v1074
        %v3587 = vunpack.c.l.b16 %v1075
        %v3588 = vunpack.c.l.b16 %v1076
        %v3589 = vunpack.c.l.b16 %v1077
        %v3590 = vunpack.c.l.b16 %v1078
        %v3591 = vunpack.c.l.b16 %v1079
        %v3592 = vunpack.c.l.b16 %v1080
        %v3593 = vunpack.c.l.b16 %v1081
        %v3594 = vunpack.c.l.b16 %v1082
        %v3595 = vunpack.c.l.b16 %v1083
        %v3596 = vunpack.c.l.b16 %v1084
        %v3597 = vunpack.c.l.b16 %v1085
        %v3598 = vunpack.c.l.b16 %v1086
        %v3599 = vunpack.c.l.b16 %v1087
        %v3600 = vunpack.c.l.b16 %v1088
        %v3601 = vunpack.c.l.b16 %v1089
        %v3602 = vunpack.c.l.b16 %v1090
        %v3603 = vunpack.c.l.b16 %v1091
        %v3604 = vunpack.c.l.b16 %v1092
        %v3605 = vunpack.c.l.b16 %v1093
        %v3606 = vunpack.c.l.b16 %v1094
        %v3607 = vunpack.c.l.b16 %v1095
        %v3608 = vunpack.c.l.b16 %v1096
        %v3609 = vunpack.c.l.b16 %v1097
        %v3610 = vunpack.c.l.b16 %v1098
        %v3611 = vunpack.c.l.b16 %v1099
        %v3612 = vunpack.c.l.b16 %v1100
        %v3613 = vunpack.c.l.b16 %v1101
        %v3614 = vunpack.c.l.b16 %v1102
        %v3615 = vunpack.c.l.b16 %v1103
        %v3616 = vunpack.c.l.b16 %v1104
        %v3617 = vunpack.c.l.b16 %v1105
        %v3618 = vunpack.c.l.b16 %v1106
        %v3619 = vunpack.c.l.b16 %v1107
        %v3620 = vunpack.c.l.b16 %v1108
        %v3621 = vunpack.c.l.b16 %v1109
        %v3622 = vunpack.c.l.b16 %v1110
        %v3623 = vunpack.c.l.b16 %v1111
        %v3624 = vunpack.c.l.b16 %v1112
        %v3625 = vunpack.c.l.b16 %v1113
        %v3626 = vunpack.c.l.b16 %v1114
        %v3627 = vunpack.c.l.b16 %v1115
        %v3628 = vunpack.c.l.b16 %v1116
        %v3629 = vunpack.c.l.b16 %v1117
        %v3630 = vunpack.c.l.b16 %v1118
        %v3631 = vunpack.c.l.b16 %v1119
        %v3632 = vunpack.c.l.b16 %v1120
        %v3633 = vunpack.c.l.b16 %v1121
        %v3634 = vunpack.c.l.b16 %v1122
        %v3635 = vunpack.c.l.b16 %v1123
        %v3636 = vunpack.c.l.b16 %v1124
        %v3637 = vunpack.c.l.b16 %v1125
        %v3638 = vunpack.c.l.b16 %v1126
        %v3639 = vunpack.c.l.b16 %v1127
        %v3640 = vunpack.c.l.b16 %v1128
        %v3641 = vunpack.c.l.b16 %v1129
        %v3642 = vunpack.c.l.b16 %v1130
        %v3643 = vunpack.c.l.b16 %v1131
        %v3644 = vunpack.c.l.b16 %v1132
        %v3645 = vunpack.c.l.b16 %v1133
        %v3646 = vunpack.c.l.b16 %v1134
        %v3647 = vunpack.c.l.b16 %v1135
        %v3648 = vunpack.c.l.b16 %v1136
        %v3649 = vunpack.c.l.b16 %v1137
        %v3650 = vunpack.c.l.b16 %v1138
        %v3651 = vunpack.c.l.b16 %v1139
        %v3652 = vunpack.c.l.b16 %v1140
        %v3653 = vunpack.c.l.b16 %v1141
        %v3654 = vunpack.c.l.b16 %v1142
        %v3655 = vunpack.c.l.b16 %v1143
        %v3656 = vunpack.c.l.b16 %v1144
        %v3657 = vunpack.c.l.b16 %v1145
        %v3658 = vunpack.c.l.b16 %v1146
        %v3659 = vunpack.c.l.b16 %v1147
        %v3660 = vunpack.c.l.b16 %v1148
        %v3661 = vunpack.c.l.b16 %v1149
        %v3662 = vunpack.c.l.b16 %v1150
        %v3663 = vunpack.c.l.b16 %v1151
        %v3664 = vunpack.c.l.b16 %v1152
        %v3665 = vunpack.c.l.b16 %v1153
        %v3666 = vunpack.c.l.b16 %v1154
        %v3667 = vunpack.c.l.b16 %v1155
        %v3668 = vunpack.c.l.b16 %v1156
        %v3669 = vunpack.c.l.b16 %v1157
        %v3670 = vunpack.c.l.b16 %v1158
        %v3671 = vunpack.c.l.b16 %v1159
        %v3672 = vunpack.c.l.b16 %v1160
        %v3673 = vunpack.c.l.b16 %v1161
        %v3674 = vunpack.c.l.b16 %v1162
        %v3675 = vunpack.c.l.b16 %v1163
        %v3676 = vunpack.c.l.b16 %v1164
        %v3677 = vunpack.c.l.b16 %v1165
        %v3678 = vunpack.c.l.b16 %v1166
        %v3679 = vunpack.c.l.b16 %v1167
        %v3680 = vunpack.c.l.b16 %v1168
        %v3681 = vunpack.c.l.b16 %v1169
        %v3682 = vunpack.c.l.b16 %v1170
        %v3683 = vunpack.c.l.b16 %v1171
        %v3684 = vunpack.c.l.b16 %v1172
        %v3685 = vunpack.c.l.b16 %v1173
        %v3686 = vunpack.c.l.b16 %v1174
        %v3687 = vunpack.c.l.b16 %v1175
        %v3688 = vunpack.c.l.b16 %v1176
        %v3689 = vunpack.c.l.b16 %v1177
        %v3690 = vunpack.c.l.b16 %v1178
        %v3691 = vunpack.c.l.b16 %v1179
        %v3692 = vunpack.c.l.b16 %v1180
        %v3693 = vunpack.c.l.b16 %v1181
        %v3694 = vunpack.c.l.b16 %v1182
        %v3695 = vunpack.c.l.b16 %v1183
        %v3696 = vunpack.c.l.b16 %v1184
        %v3697 = vunpack.c.l.b16 %v1185
        %v3698 = vunpack.c.l.b16 %v1186
        %v3699 = vunpack.c.l.b16 %v1187
        %v3700 = vunpack.c.l.b16 %v1188
        %v3701 = vunpack.c.l.b16 %v1189
        %v3702 = vunpack.c.l.b16 %v1190
        %v3703 = vunpack.c.l.b16 %v1191
        %v3704 = vunpack.c.l.b16 %v1192
        %v3705 = vunpack.c.l.b16 %v1193
        %v3706 = vunpack.c.l.b16 %v1194
        %v3707 = vunpack.c.l.b16 %v1195
        %v3708 = vunpack.c.l.b16 %v1196
        %v3709 = vunpack.c.l.b16 %v1197
        %v3710 = vunpack.c.l.b16 %v1198
        %v3711 = vunpack.c.l.b16 %v1199
        %v3712 = vunpack.c.l.b16 %v1200
        %v3713 = vunpack.c.l.b16 %v1201
        %v3714 = vunpack.c.l.b16 %v1202
        %v3715 = vunpack.c.l.b16 %v1203
        %v3716 = vunpack.c.l.b16 %v1204
        %v3717 = vunpack.c.l.b16 %v1205
        %v3718 = vunpack.c.l.b16 %v1206
        %v3719 = vunpack.c.l.b16 %v1207
        %v3720 = vunpack.c.l.b16 %v1208
        %v3721 = vunpack.c.l.b16 %v1209
        %v3722 = vunpack.c.l.b16 %v1210
        %v3723 = vunpack.c.l.b16 %v1211
        %v3724 = vunpack.c.l.b16 %v1212
        %v3725 = vunpack.c.l.b16 %v1213
        %v3726 = vunpack.c.l.b16 %v1214
        %v3727 = vunpack.c.l.b16 %v1215
        %v3728 = vunpack.c.l.b16 %v1216
        %v3729 = vunpack.c.l.b16 %v1217
        %v3730 = vunpack.c.l.b16 %v1218
        %v3731 = vunpack.c.l.b16 %v1219
        %v3732 = vunpack.c.l.b16 %v1220
        %v3733 = vunpack.c.l.b16 %v1221
        %v3734 = vunpack.c.l.b16 %v1222
        %v3735 = vunpack.c.l.b16 %v1223
        %v3736 = vunpack.c.l.b16 %v1224
        %v3737 = vunpack.c.l.b16 %v1225
        %v3738 = vunpack.c.l.b16 %v1226
        %v3739 = vunpack.c.l.b16 %v1227
        %v3740 = vunpack.c.l.b16 %v1228
        %v3741 = vunpack.c.l.b16 %v1229
        %v3742 = vunpack.c.l.b16 %v1230
        %v3743 = vunpack.c.l.b16 %v1231
        %v3744 = vunpack.c.l.b16 %v1232
        %v3745 = vunpack.c.l.b16 %v1233
        %v3746 = vunpack.c.l.b16 %v1234
        %v3747 = vunpack.c.l.b16 %v1235
        %v3748 = vunpack.c.l.b16 %v1236
        %v3749 = vunpack.c.l.b16 %v1237
        %v3750 = vunpack.c.l.b16 %v1238
        %v3751 = vunpack.c.l.b16 %v1239
        %v3752 = vunpack.c.l.b16 %v1240
        %v3753 = vunpack.c.l.b16 %v1241
        %v3754 = vunpack.c.l.b16 %v1242
        %v3755 = vunpack.c.l.b16 %v1243
        %v3756 = vunpack.c.l.b16 %v1244
        %v3757 = vunpack.c.l.b16 %v1245
        %v3758 = vunpack.c.l.b16 %v1246
        %v3759 = vunpack.c.l.b16 %v1247
        %v3760 = vunpack.c.l.b16 %v1248
        %v3761 = vunpack.c.l.b16 %v1249
        %v3762 = vunpack.c.l.b16 %v1250
        %v3763 = vunpack.c.l.b16 %v1251
        %v3764 = vunpack.c.l.b16 %v1252
        %v3765 = vunpack.c.l.b16 %v1253
        %v3766 = vunpack.c.l.b16 %v1254
        %v3767 = vunpack.c.l.b16 %v1255
        %v3768 = vunpack.c.l.b16 %v1256
        %v3769 = vunpack.c.l.b16 %v1257
        %v3770 = vunpack.c.l.b16 %v1258
        %v3771 = vunpack.c.l.b16 %v1259
        %v3772 = vunpack.c.l.b16 %v1260
        %v3773 = vunpack.c.l.b16 %v1261
        %v3774 = vunpack.c.l.b16 %v1262
        %v3775 = vunpack.c.l.b16 %v1263
        %v3776 = vunpack.c.l.b16 %v1264
        %v3777 = vunpack.c.l.b16 %v1265
        %v3778 = vunpack.c.l.b16 %v1266
        %v3779 = vunpack.c.l.b16 %v1267
        %v3780 = vunpack.c.l.b16 %v1268
        %v3781 = vunpack.c.l.b16 %v1269
        %v3782 = vunpack.c.l.b16 %v1270
        %v3783 = vpack.c.b16 %v2760, %v2759
        %v3784 = vpack.c.b16 %v2762, %v2761
        %v3785 = vpack.c.b16 %v2764, %v2763
        %v3786 = vpack.c.b16 %v2766, %v2765
        %v3787 = vpack.c.b16 %v2768, %v2767
        %v3788 = vpack.c.b16 %v2770, %v2769
        %v3789 = vpack.c.b16 %v2772, %v2771
        %v3790 = vpack.c.b16 %v2774, %v2773
        %v3791 = vpack.c.b16 %v2776, %v2775
        %v3792 = vpack.c.b16 %v2778, %v2777
        %v3793 = vpack.c.b16 %v2780, %v2779
        %v3794 = vpack.c.b16 %v2782, %v2781
        %v3795 = vpack.c.b16 %v2784, %v2783
        %v3796 = vpack.c.b16 %v2786, %v2785
        %v3797 = vpack.c.b16 %v2788, %v2787
        %v3798 = vpack.c.b16 %v2790, %v2789
        %v3799 = vpack.c.b16 %v2792, %v2791
        %v3800 = vpack.c.b16 %v2794, %v2793
        %v3801 = vpack.c.b16 %v2796, %v2795
        %v3802 = vpack.c.b16 %v2798, %v2797
        %v3803 = vpack.c.b16 %v2800, %v2799
        %v3804 = vpack.c.b16 %v2802, %v2801
        %v3805 = vpack.c.b16 %v2804, %v2803
        %v3806 = vpack.c.b16 %v2806, %v2805
        %v3807 = vpack.c.b16 %v2808, %v2807
        %v3808 = vpack.c.b16 %v2810, %v2809
        %v3809 = vpack.c.b16 %v2812, %v2811
        %v3810 = vpack.c.b16 %v2814, %v2813
        %v3811 = vpack.c.b16 %v2816, %v2815
        %v3812 = vpack.c.b16 %v2818, %v2817
        %v3813 = vpack.c.b16 %v2820, %v2819
        %v3814 = vpack.c.b16 %v2822, %v2821
        %v3815 = vpack.c.b16 %v2824, %v2823
        %v3816 = vpack.c.b16 %v2826, %v2825
        %v3817 = vpack.c.b16 %v2828, %v2827
        %v3818 = vpack.c.b16 %v2830, %v2829
        %v3819 = vpack.c.b16 %v2832, %v2831
        %v3820 = vpack.c.b16 %v2834, %v2833
        %v3821 = vpack.c.b16 %v2836, %v2835
        %v3822 = vpack.c.b16 %v2838, %v2837
        %v3823 = vpack.c.b16 %v2840, %v2839
        %v3824 = vpack.c.b16 %v2842, %v2841
        %v3825 = vpack.c.b16 %v2844, %v2843
        %v3826 = vpack.c.b16 %v2846, %v2845
        %v3827 = vpack.c.b16 %v2848, %v2847
        %v3828 = vpack.c.b16 %v2850, %v2849
        %v3829 = vpack.c.b16 %v2852, %v2851
        %v3830 = vpack.c.b16 %v2854, %v2853
        %v3831 = vpack.c.b16 %v2856, %v2855
        %v3832 = vpack.c.b16 %v2858, %v2857
        %v3833 = vpack.c.b16 %v2860, %v2859
        %v3834 = vpack.c.b16 %v2862, %v2861
        %v3835 = vpack.c.b16 %v2864, %v2863
        %v3836 = vpack.c.b16 %v2866, %v2865
        %v3837 = vpack.c.b16 %v2868, %v2867
        %v3838 = vpack.c.b16 %v2870, %v2869
        %v3839 = vpack.c.b16 %v2872, %v2871
        %v3840 = vpack.c.b16 %v2874, %v2873
        %v3841 = vpack.c.b16 %v2876, %v2875
        %v3842 = vpack.c.b16 %v2878, %v2877
        %v3843 = vpack.c.b16 %v2880, %v2879
        %v3844 = vpack.c.b16 %v2882, %v2881
        %v3845 = vpack.c.b16 %v2884, %v2883
        %v3846 = vpack.c.b16 %v2886, %v2885
        %v3847 = vpack.c.b16 %v2888, %v2887
        %v3848 = vpack.c.b16 %v2890, %v2889
        %v3849 = vpack.c.b16 %v2892, %v2891
        %v3850 = vpack.c.b16 %v2894, %v2893
        %v3851 = vpack.c.b16 %v2896, %v2895
        %v3852 = vpack.c.b16 %v2898, %v2897
        %v3853 = vpack.c.b16 %v2900, %v2899
        %v3854 = vpack.c.b16 %v2902, %v2901
        %v3855 = vpack.c.b16 %v2904, %v2903
        %v3856 = vpack.c.b16 %v2906, %v2905
        %v3857 = vpack.c.b16 %v2908, %v2907
        %v3858 = vpack.c.b16 %v2910, %v2909
        %v3859 = vpack.c.b16 %v2912, %v2911
        %v3860 = vpack.c.b16 %v2914, %v2913
        %v3861 = vpack.c.b16 %v2916, %v2915
        %v3862 = vpack.c.b16 %v2918, %v2917
        %v3863 = vpack.c.b16 %v2920, %v2919
        %v3864 = vpack.c.b16 %v2922, %v2921
        %v3865 = vpack.c.b16 %v2924, %v2923
        %v3866 = vpack.c.b16 %v2926, %v2925
        %v3867 = vpack.c.b16 %v2928, %v2927
        %v3868 = vpack.c.b16 %v2930, %v2929
        %v3869 = vpack.c.b16 %v2932, %v2931
        %v3870 = vpack.c.b16 %v2934, %v2933
        %v3871 = vpack.c.b16 %v2936, %v2935
        %v3872 = vpack.c.b16 %v2938, %v2937
        %v3873 = vpack.c.b16 %v2940, %v2939
        %v3874 = vpack.c.b16 %v2942, %v2941
        %v3875 = vpack.c.b16 %v2944, %v2943
        %v3876 = vpack.c.b16 %v2946, %v2945
        %v3877 = vpack.c.b16 %v2948, %v2947
        %v3878 = vpack.c.b16 %v2950, %v2949
        %v3879 = vpack.c.b16 %v2952, %v2951
        %v3880 = vpack.c.b16 %v2954, %v2953
        %v3881 = vpack.c.b16 %v2956, %v2955
        %v3882 = vpack.c.b16 %v2958, %v2957
        %v3883 = vpack.c.b16 %v2960, %v2959
        %v3884 = vpack.c.b16 %v2962, %v2961
        %v3885 = vpack.c.b16 %v2964, %v2963
        %v3886 = vpack.c.b16 %v2966, %v2965
        %v3887 = vpack.c.b16 %v2968, %v2967
        %v3888 = vpack.c.b16 %v2970, %v2969
        %v3889 = vpack.c.b16 %v2972, %v2971
        %v3890 = vpack.c.b16 %v2974, %v2973
        %v3891 = vpack.c.b16 %v2976, %v2975
        %v3892 = vpack.c.b16 %v2978, %v2977
        %v3893 = vpack.c.b16 %v2980, %v2979
        %v3894 = vpack.c.b16 %v2982, %v2981
        %v3895 = vpack.c.b16 %v2984, %v2983
        %v3896 = vpack.c.b16 %v2986, %v2985
        %v3897 = vpack.c.b16 %v2988, %v2987
        %v3898 = vpack.c.b16 %v2990, %v2989
        %v3899 = vpack.c.b16 %v2992, %v2991
        %v3900 = vpack.c.b16 %v2994, %v2993
        %v3901 = vpack.c.b16 %v2996, %v2995
        %v3902 = vpack.c.b16 %v2998, %v2997
        %v3903 = vpack.c.b16 %v3000, %v2999
        %v3904 = vpack.c.b16 %v3002, %v3001
        %v3905 = vpack.c.b16 %v3004, %v3003
        %v3906 = vpack.c.b16 %v3006, %v3005
        %v3907 = vpack.c.b16 %v3008, %v3007
        %v3908 = vpack.c.b16 %v3010, %v3009
        %v3909 = vpack.c.b16 %v3012, %v3011
        %v3910 = vpack.c.b16 %v3014, %v3013
        %v3911 = vpack.c.b16 %v3016, %v3015
        %v3912 = vpack.c.b16 %v3018, %v3017
        %v3913 = vpack.c.b16 %v3020, %v3019
        %v3914 = vpack.c.b16 %v3022, %v3021
        %v3915 = vpack.c.b16 %v3024, %v3023
        %v3916 = vpack.c.b16 %v3026, %v3025
        %v3917 = vpack.c.b16 %v3028, %v3027
        %v3918 = vpack.c.b16 %v3030, %v3029
        %v3919 = vpack.c.b16 %v3032, %v3031
        %v3920 = vpack.c.b16 %v3034, %v3033
        %v3921 = vpack.c.b16 %v3036, %v3035
        %v3922 = vpack.c.b16 %v3038, %v3037
        %v3923 = vpack.c.b16 %v3040, %v3039
        %v3924 = vpack.c.b16 %v3042, %v3041
        %v3925 = vpack.c.b16 %v3044, %v3043
        %v3926 = vpack.c.b16 %v3046, %v3045
        %v3927 = vpack.c.b16 %v3048, %v3047
        %v3928 = vpack.c.b16 %v3050, %v3049
        %v3929 = vpack.c.b16 %v3052, %v3051
        %v3930 = vpack.c.b16 %v3054, %v3053
        %v3931 = vpack.c.b16 %v3056, %v3055
        %v3932 = vpack.c.b16 %v3058, %v3057
        %v3933 = vpack.c.b16 %v3060, %v3059
        %v3934 = vpack.c.b16 %v3062, %v3061
        %v3935 = vpack.c.b16 %v3064, %v3063
        %v3936 = vpack.c.b16 %v3066, %v3065
        %v3937 = vpack.c.b16 %v3068, %v3067
        %v3938 = vpack.c.b16 %v3070, %v3069
        %v3939 = vpack.c.b16 %v3072, %v3071
        %v3940 = vpack.c.b16 %v3074, %v3073
        %v3941 = vpack.c.b16 %v3076, %v3075
        %v3942 = vpack.c.b16 %v3078, %v3077
        %v3943 = vpack.c.b16 %v3080, %v3079
        %v3944 = vpack.c.b16 %v3082, %v3081
        %v3945 = vpack.c.b16 %v3084, %v3083
        %v3946 = vpack.c.b16 %v3086, %v3085
        %v3947 = vpack.c.b16 %v3088, %v3087
        %v3948 = vpack.c.b16 %v3090, %v3089
        %v3949 = vpack.c.b16 %v3092, %v3091
        %v3950 = vpack.c.b16 %v3094, %v3093
        %v3951 = vpack.c.b16 %v3096, %v3095
        %v3952 = vpack.c.b16 %v3098, %v3097
        %v3953 = vpack.c.b16 %v3100, %v3099
        %v3954 = vpack.c.b16 %v3102, %v3101
        %v3955 = vpack.c.b16 %v3104, %v3103
        %v3956 = vpack.c.b16 %v3106, %v3105
        %v3957 = vpack.c.b16 %v3108, %v3107
        %v3958 = vpack.c.b16 %v3110, %v3109
        %v3959 = vpack.c.b16 %v3112, %v3111
        %v3960 = vpack.c.b16 %v3114, %v3113
        %v3961 = vpack.c.b16 %v3116, %v3115
        %v3962 = vpack.c.b16 %v3118, %v3117
        %v3963 = vpack.c.b16 %v3120, %v3119
        %v3964 = vpack.c.b16 %v3122, %v3121
        %v3965 = vpack.c.b16 %v3124, %v3123
        %v3966 = vpack.c.b16 %v3126, %v3125
        %v3967 = vpack.c.b16 %v3128, %v3127
        %v3968 = vpack.c.b16 %v3130, %v3129
        %v3969 = vpack.c.b16 %v3132, %v3131
        %v3970 = vpack.c.b16 %v3134, %v3133
        %v3971 = vpack.c.b16 %v3136, %v3135
        %v3972 = vpack.c.b16 %v3138, %v3137
        %v3973 = vpack.c.b16 %v3140, %v3139
        %v3974 = vpack.c.b16 %v3142, %v3141
        %v3975 = vpack.c.b16 %v3144, %v3143
        %v3976 = vpack.c.b16 %v3146, %v3145
        %v3977 = vpack.c.b16 %v3148, %v3147
        %v3978 = vpack.c.b16 %v3150, %v3149
        %v3979 = vpack.c.b16 %v3152, %v3151
        %v3980 = vpack.c.b16 %v3154, %v3153
        %v3981 = vpack.c.b16 %v3156, %v3155
        %v3982 = vpack.c.b16 %v3158, %v3157
        %v3983 = vpack.c.b16 %v3160, %v3159
        %v3984 = vpack.c.b16 %v3162, %v3161
        %v3985 = vpack.c.b16 %v3164, %v3163
        %v3986 = vpack.c.b16 %v3166, %v3165
        %v3987 = vpack.c.b16 %v3168, %v3167
        %v3988 = vpack.c.b16 %v3170, %v3169
        %v3989 = vpack.c.b16 %v3172, %v3171
        %v3990 = vpack.c.b16 %v3174, %v3173
        %v3991 = vpack.c.b16 %v3176, %v3175
        %v3992 = vpack.c.b16 %v3178, %v3177
        %v3993 = vpack.c.b16 %v3180, %v3179
        %v3994 = vpack.c.b16 %v3182, %v3181
        %v3995 = vpack.c.b16 %v3184, %v3183
        %v3996 = vpack.c.b16 %v3186, %v3185
        %v3997 = vpack.c.b16 %v3188, %v3187
        %v3998 = vpack.c.b16 %v3190, %v3189
        %v3999 = vpack.c.b16 %v3192, %v3191
        %v4000 = vpack.c.b16 %v3194, %v3193
        %v4001 = vpack.c.b16 %v3196, %v3195
        %v4002 = vpack.c.b16 %v3198, %v3197
        %v4003 = vpack.c.b16 %v3200, %v3199
        %v4004 = vpack.c.b16 %v3202, %v3201
        %v4005 = vpack.c.b16 %v3204, %v3203
        %v4006 = vpack.c.b16 %v3206, %v3205
        %v4007 = vpack.c.b16 %v3208, %v3207
        %v4008 = vpack.c.b16 %v3210, %v3209
        %v4009 = vpack.c.b16 %v3212, %v3211
        %v4010 = vpack.c.b16 %v3214, %v3213
        %v4011 = vpack.c.b16 %v3216, %v3215
        %v4012 = vpack.c.b16 %v3218, %v3217
        %v4013 = vpack.c.b16 %v3220, %v3219
        %v4014 = vpack.c.b16 %v3222, %v3221
        %v4015 = vpack.c.b16 %v3224, %v3223
        %v4016 = vpack.c.b16 %v3226, %v3225
        %v4017 = vpack.c.b16 %v3228, %v3227
        %v4018 = vpack.c.b16 %v3230, %v3229
        %v4019 = vpack.c.b16 %v3232, %v3231
        %v4020 = vpack.c.b16 %v3234, %v3233
        %v4021 = vpack.c.b16 %v3236, %v3235
        %v4022 = vpack.c.b16 %v3238, %v3237
        %v4023 = vpack.c.b16 %v3240, %v3239
        %v4024 = vpack.c.b16 %v3242, %v3241
        %v4025 = vpack.c.b16 %v3244, %v3243
        %v4026 = vpack.c.b16 %v3246, %v3245
        %v4027 = vpack.c.b16 %v3248, %v3247
        %v4028 = vpack.c.b16 %v3250, %v3249
        %v4029 = vpack.c.b16 %v3252, %v3251
        %v4030 = vpack.c.b16 %v3254, %v3253
        %v4031 = vpack.c.b16 %v3256, %v3255
        %v4032 = vpack.c.b16 %v3258, %v3257
        %v4033 = vpack.c.b16 %v3260, %v3259
        %v4034 = vpack.c.b16 %v3262, %v3261
        %v4035 = vpack.c.b16 %v3264, %v3263
        %v4036 = vpack.c.b16 %v3266, %v3265
        %v4037 = vpack.c.b16 %v3268, %v3267
        %v4038 = vpack.c.b16 %v3270, %v3269
        %v4039 = vpack.c.b16 %v3272, %v3271
        %v4040 = vpack.c.b16 %v3274, %v3273
        %v4041 = vpack.c.b16 %v3276, %v3275
        %v4042 = vpack.c.b16 %v3278, %v3277
        %v4043 = vpack.c.b16 %v3280, %v3279
        %v4044 = vpack.c.b16 %v3282, %v3281
        %v4045 = vpack.c.b16 %v3284, %v3283
        %v4046 = vpack.c.b16 %v3286, %v3285
        %v4047 = vpack.c.b16 %v3288, %v3287
        %v4048 = vpack.c.b16 %v3290, %v3289
        %v4049 = vpack.c.b16 %v3292, %v3291
        %v4050 = vpack.c.b16 %v3294, %v3293
        %v4051 = vpack.c.b16 %v3296, %v3295
        %v4052 = vpack.c.b16 %v3298, %v3297
        %v4053 = vpack.c.b16 %v3300, %v3299
        %v4054 = vpack.c.b16 %v3302, %v3301
        %v4055 = vpack.c.b16 %v3304, %v3303
        %v4056 = vpack.c.b16 %v3306, %v3305
        %v4057 = vpack.c.b16 %v3308, %v3307
        %v4058 = vpack.c.b16 %v3310, %v3309
        %v4059 = vpack.c.b16 %v3312, %v3311
        %v4060 = vpack.c.b16 %v3314, %v3313
        %v4061 = vpack.c.b16 %v3316, %v3315
        %v4062 = vpack.c.b16 %v3318, %v3317
        %v4063 = vpack.c.b16 %v3320, %v3319
        %v4064 = vpack.c.b16 %v3322, %v3321
        %v4065 = vpack.c.b16 %v3324, %v3323
        %v4066 = vpack.c.b16 %v3326, %v3325
        %v4067 = vpack.c.b16 %v3328, %v3327
        %v4068 = vpack.c.b16 %v3330, %v3329
        %v4069 = vpack.c.b16 %v3332, %v3331
        %v4070 = vpack.c.b16 %v3334, %v3333
        %v4071 = vpack.c.b16 %v3336, %v3335
        %v4072 = vpack.c.b16 %v3338, %v3337
        %v4073 = vpack.c.b16 %v3340, %v3339
        %v4074 = vpack.c.b16 %v3342, %v3341
        %v4075 = vpack.c.b16 %v3344, %v3343
        %v4076 = vpack.c.b16 %v3346, %v3345
        %v4077 = vpack.c.b16 %v3348, %v3347
        %v4078 = vpack.c.b16 %v3350, %v3349
        %v4079 = vpack.c.b16 %v3352, %v3351
        %v4080 = vpack.c.b16 %v3354, %v3353
        %v4081 = vpack.c.b16 %v3356, %v3355
        %v4082 = vpack.c.b16 %v3358, %v3357
        %v4083 = vpack.c.b16 %v3360, %v3359
        %v4084 = vpack.c.b16 %v3362, %v3361
        %v4085 = vpack.c.b16 %v3364, %v3363
        %v4086 = vpack.c.b16 %v3366, %v3365
        %v4087 = vpack.c.b16 %v3368, %v3367
        %v4088 = vpack.c.b16 %v3370, %v3369
        %v4089 = vpack.c.b16 %v3372, %v3371
        %v4090 = vpack.c.b16 %v3374, %v3373
        %v4091 = vpack.c.b16 %v3376, %v3375
        %v4092 = vpack.c.b16 %v3378, %v3377
        %v4093 = vpack.c.b16 %v3380, %v3379
        %v4094 = vpack.c.b16 %v3382, %v3381
        %v4095 = vpack.c.b16 %v3384, %v3383
        %v4096 = vpack.c.b16 %v3386, %v3385
        %v4097 = vpack.c.b16 %v3388, %v3387
        %v4098 = vpack.c.b16 %v3390, %v3389
        %v4099 = vpack.c.b16 %v3392, %v3391
        %v4100 = vpack.c.b16 %v3394, %v3393
        %v4101 = vpack.c.b16 %v3396, %v3395
        %v4102 = vpack.c.b16 %v3398, %v3397
        %v4103 = vpack.c.b16 %v3400, %v3399
        %v4104 = vpack.c.b16 %v3402, %v3401
        %v4105 = vpack.c.b16 %v3404, %v3403
        %v4106 = vpack.c.b16 %v3406, %v3405
        %v4107 = vpack.c.b16 %v3408, %v3407
        %v4108 = vpack.c.b16 %v3410, %v3409
        %v4109 = vpack.c.b16 %v3412, %v3411
        %v4110 = vpack.c.b16 %v3414, %v3413
        %v4111 = vpack.c.b16 %v3416, %v3415
        %v4112 = vpack.c.b16 %v3418, %v3417
        %v4113 = vpack.c.b16 %v3420, %v3419
        %v4114 = vpack.c.b16 %v3422, %v3421
        %v4115 = vpack.c.b16 %v3424, %v3423
        %v4116 = vpack.c.b16 %v3426, %v3425
        %v4117 = vpack.c.b16 %v3428, %v3427
        %v4118 = vpack.c.b16 %v3430, %v3429
        %v4119 = vpack.c.b16 %v3432, %v3431
        %v4120 = vpack.c.b16 %v3434, %v3433
        %v4121 = vpack.c.b16 %v3436, %v3435
        %v4122 = vpack.c.b16 %v3438, %v3437
        %v4123 = vpack.c.b16 %v3440, %v3439
        %v4124 = vpack.c.b16 %v3442, %v3441
        %v4125 = vpack.c.b16 %v3444, %v3443
        %v4126 = vpack.c.b16 %v3446, %v3445
        %v4127 = vpack.c.b16 %v3448, %v3447
        %v4128 = vpack.c.b16 %v3450, %v3449
        %v4129 = vpack.c.b16 %v3452, %v3451
        %v4130 = vpack.c.b16 %v3454, %v3453
        %v4131 = vpack.c.b16 %v3456, %v3455
        %v4132 = vpack.c.b16 %v3458, %v3457
        %v4133 = vpack.c.b16 %v3460, %v3459
        %v4134 = vpack.c.b16 %v3462, %v3461
        %v4135 = vpack.c.b16 %v3464, %v3463
        %v4136 = vpack.c.b16 %v3466, %v3465
        %v4137 = vpack.c.b16 %v3468, %v3467
        %v4138 = vpack.c.b16 %v3470, %v3469
        %v4139 = vpack.c.b16 %v3472, %v3471
        %v4140 = vpack.c.b16 %v3474, %v3473
        %v4141 = vpack.c.b16 %v3476, %v3475
        %v4142 = vpack.c.b16 %v3478, %v3477
        %v4143 = vpack.c.b16 %v3480, %v3479
        %v4144 = vpack.c.b16 %v3482, %v3481
        %v4145 = vpack.c.b16 %v3484, %v3483
        %v4146 = vpack.c.b16 %v3486, %v3485
        %v4147 = vpack.c.b16 %v3488, %v3487
        %v4148 = vpack.c.b16 %v3490, %v3489
        %v4149 = vpack.c.b16 %v3492, %v3491
        %v4150 = vpack.c.b16 %v3494, %v3493
        %v4151 = vpack.c.b16 %v3496, %v3495
        %v4152 = vpack.c.b16 %v3498, %v3497
        %v4153 = vpack.c.b16 %v3500, %v3499
        %v4154 = vpack.c.b16 %v3502, %v3501
        %v4155 = vpack.c.b16 %v3504, %v3503
        %v4156 = vpack.c.b16 %v3506, %v3505
        %v4157 = vpack.c.b16 %v3508, %v3507
        %v4158 = vpack.c.b16 %v3510, %v3509
        %v4159 = vpack.c.b16 %v3512, %v3511
        %v4160 = vpack.c.b16 %v3514, %v3513
        %v4161 = vpack.c.b16 %v3516, %v3515
        %v4162 = vpack.c.b16 %v3518, %v3517
        %v4163 = vpack.c.b16 %v3520, %v3519
        %v4164 = vpack.c.b16 %v3522, %v3521
        %v4165 = vpack.c.b16 %v3524, %v3523
        %v4166 = vpack.c.b16 %v3526, %v3525
        %v4167 = vpack.c.b16 %v3528, %v3527
        %v4168 = vpack.c.b16 %v3530, %v3529
        %v4169 = vpack.c.b16 %v3532, %v3531
        %v4170 = vpack.c.b16 %v3534, %v3533
        %v4171 = vpack.c.b16 %v3536, %v3535
        %v4172 = vpack.c.b16 %v3538, %v3537
        %v4173 = vpack.c.b16 %v3540, %v3539
        %v4174 = vpack.c.b16 %v3542, %v3541
        %v4175 = vpack.c.b16 %v3544, %v3543
        %v4176 = vpack.c.b16 %v3546, %v3545
        %v4177 = vpack.c.b16 %v3548, %v3547
        %v4178 = vpack.c.b16 %v3550, %v3549
        %v4179 = vpack.c.b16 %v3552, %v3551
        %v4180 = vpack.c.b16 %v3554, %v3553
        %v4181 = vpack.c.b16 %v3556, %v3555
        %v4182 = vpack.c.b16 %v3558, %v3557
        %v4183 = vpack.c.b16 %v3560, %v3559
        %v4184 = vpack.c.b16 %v3562, %v3561
        %v4185 = vpack.c.b16 %v3564, %v3563
        %v4186 = vpack.c.b16 %v3566, %v3565
        %v4187 = vpack.c.b16 %v3568, %v3567
        %v4188 = vpack.c.b16 %v3570, %v3569
        %v4189 = vpack.c.b16 %v3572, %v3571
        %v4190 = vpack.c.b16 %v3574, %v3573
        %v4191 = vpack.c.b16 %v3576, %v3575
        %v4192 = vpack.c.b16 %v3578, %v3577
        %v4193 = vpack.c.b16 %v3580, %v3579
        %v4194 = vpack.c.b16 %v3582, %v3581
        %v4195 = vpack.c.b16 %v3584, %v3583
        %v4196 = vpack.c.b16 %v3586, %v3585
        %v4197 = vpack.c.b16 %v3588, %v3587
        %v4198 = vpack.c.b16 %v3590, %v3589
        %v4199 = vpack.c.b16 %v3592, %v3591
        %v4200 = vpack.c.b16 %v3594, %v3593
        %v4201 = vpack.c.b16 %v3596, %v3595
        %v4202 = vpack.c.b16 %v3598, %v3597
        %v4203 = vpack.c.b16 %v3600, %v3599
        %v4204 = vpack.c.b16 %v3602, %v3601
        %v4205 = vpack.c.b16 %v3604, %v3603
        %v4206 = vpack.c.b16 %v3606, %v3605
        %v4207 = vpack.c.b16 %v3608, %v3607
        %v4208 = vpack.c.b16 %v3610, %v3609
        %v4209 = vpack.c.b16 %v3612, %v3611
        %v4210 = vpack.c.b16 %v3614, %v3613
        %v4211 = vpack.c.b16 %v3616, %v3615
        %v4212 = vpack.c.b16 %v3618, %v3617
        %v4213 = vpack.c.b16 %v3620, %v3619
        %v4214 = vpack.c.b16 %v3622, %v3621
        %v4215 = vpack.c.b16 %v3624, %v3623
        %v4216 = vpack.c.b16 %v3626, %v3625
        %v4217 = vpack.c.b16 %v3628, %v3627
        %v4218 = vpack.c.b16 %v3630, %v3629
        %v4219 = vpack.c.b16 %v3632, %v3631
        %v4220 = vpack.c.b16 %v3634, %v3633
        %v4221 = vpack.c.b16 %v3636, %v3635
        %v4222 = vpack.c.b16 %v3638, %v3637
        %v4223 = vpack.c.b16 %v3640, %v3639
        %v4224 = vpack.c.b16 %v3642, %v3641
        %v4225 = vpack.c.b16 %v3644, %v3643
        %v4226 = vpack.c.b16 %v3646, %v3645
        %v4227 = vpack.c.b16 %v3648, %v3647
        %v4228 = vpack.c.b16 %v3650, %v3649
        %v4229 = vpack.c.b16 %v3652, %v3651
        %v4230 = vpack.c.b16 %v3654, %v3653
        %v4231 = vpack.c.b16 %v3656, %v3655
        %v4232 = vpack.c.b16 %v3658, %v3657
        %v4233 = vpack.c.b16 %v3660, %v3659
        %v4234 = vpack.c.b16 %v3662, %v3661
        %v4235 = vpack.c.b16 %v3664, %v3663
        %v4236 = vpack.c.b16 %v3666, %v3665
        %v4237 = vpack.c.b16 %v3668, %v3667
        %v4238 = vpack.c.b16 %v3670, %v3669
        %v4239 = vpack.c.b16 %v3672, %v3671
        %v4240 = vpack.c.b16 %v3674, %v3673
        %v4241 = vpack.c.b16 %v3676, %v3675
        %v4242 = vpack.c.b16 %v3678, %v3677
        %v4243 = vpack.c.b16 %v3680, %v3679
        %v4244 = vpack.c.b16 %v3682, %v3681
        %v4245 = vpack.c.b16 %v3684, %v3683
        %v4246 = vpack.c.b16 %v3686, %v3685
        %v4247 = vpack.c.b16 %v3688, %v3687
        %v4248 = vpack.c.b16 %v3690, %v3689
        %v4249 = vpack.c.b16 %v3692, %v3691
        %v4250 = vpack.c.b16 %v3694, %v3693
        %v4251 = vpack.c.b16 %v3696, %v3695
        %v4252 = vpack.c.b16 %v3698, %v3697
        %v4253 = vpack.c.b16 %v3700, %v3699
        %v4254 = vpack.c.b16 %v3702, %v3701
        %v4255 = vpack.c.b16 %v3704, %v3703
        %v4256 = vpack.c.b16 %v3706, %v3705
        %v4257 = vpack.c.b16 %v3708, %v3707
        %v4258 = vpack.c.b16 %v3710, %v3709
        %v4259 = vpack.c.b16 %v3712, %v3711
        %v4260 = vpack.c.b16 %v3714, %v3713
        %v4261 = vpack.c.b16 %v3716, %v3715
        %v4262 = vpack.c.b16 %v3718, %v3717
        %v4263 = vpack.c.b16 %v3720, %v3719
        %v4264 = vpack.c.b16 %v3722, %v3721
        %v4265 = vpack.c.b16 %v3724, %v3723
        %v4266 = vpack.c.b16 %v3726, %v3725
        %v4267 = vpack.c.b16 %v3728, %v3727
        %v4268 = vpack.c.b16 %v3730, %v3729
        %v4269 = vpack.c.b16 %v3732, %v3731
        %v4270 = vpack.c.b16 %v3734, %v3733
        %v4271 = vpack.c.b16 %v3736, %v3735
        %v4272 = vpack.c.b16 %v3738, %v3737
        %v4273 = vpack.c.b16 %v3740, %v3739
        %v4274 = vpack.c.b16 %v3742, %v3741
        %v4275 = vpack.c.b16 %v3744, %v3743
        %v4276 = vpack.c.b16 %v3746, %v3745
        %v4277 = vpack.c.b16 %v3748, %v3747
        %v4278 = vpack.c.b16 %v3750, %v3749
        %v4279 = vpack.c.b16 %v3752, %v3751
        %v4280 = vpack.c.b16 %v3754, %v3753
        %v4281 = vpack.c.b16 %v3756, %v3755
        %v4282 = vpack.c.b16 %v3758, %v3757
        %v4283 = vpack.c.b16 %v3760, %v3759
        %v4284 = vpack.c.b16 %v3762, %v3761
        %v4285 = vpack.c.b16 %v3764, %v3763
        %v4286 = vpack.c.b16 %v3766, %v3765
        %v4287 = vpack.c.b16 %v3768, %v3767
        %v4288 = vpack.c.b16 %v3770, %v3769
        %v4289 = vpack.c.b16 %v3772, %v3771
        %v4290 = vpack.c.b16 %v3774, %v3773
        %v4291 = vpack.c.b16 %v3776, %v3775
        %v4292 = vpack.c.b16 %v3778, %v3777
        %v4293 = vpack.c.b16 %v3780, %v3779
        %v4294 = vpack.c.b16 %v3782, %v3781
        %4807 = vmatprep.subr.bf16.mxu0 0
        %4808 = vmatpush1.bf16.msra.mxu0 %v3790
        %4809 = vmatprep.subr.bf16.mxu0 0
        %4810 = vmatpush1.bf16.msra.mxu0 %v3789
        %4811 = vmatprep.subr.bf16.mxu0 0
        %4812 = vmatpush1.bf16.msra.mxu0 %v3788
        %4813 = vmatprep.subr.bf16.mxu0 0
        %4814 = vmatpush1.bf16.msra.mxu0 %v3787
        %4815 = vmatprep.subr.bf16.mxu0 0
        %4816 = vmatpush1.bf16.msra.mxu0 %v3786
        %4817 = vmatprep.subr.bf16.mxu0 0
        %4818 = vmatpush1.bf16.msra.mxu0 %v3785
        %4819 = vmatprep.subr.bf16.mxu0 0
        %4820 = vmatpush1.bf16.msra.mxu0 %v3784
        %4821 = vmatprep.subr.bf16.mxu0 0
        %4822 = vmatpush1.bf16.msra.mxu0 %v3783
        %4823 = vmatprep.subr.bf16.mxu0 0
        %4824 = vmatpush2.bf16.msra.mxu0 %v3798
        %4825 = vmatprep.subr.bf16.mxu0 0
        %4826 = vmatpush2.bf16.msra.mxu0 %v3797
        %4827 = vmatprep.subr.bf16.mxu0 0
        %4828 = vmatpush2.bf16.msra.mxu0 %v3796
        %4829 = vmatprep.subr.bf16.mxu0 0
        %4830 = vmatpush2.bf16.msra.mxu0 %v3795
        %4831 = vmatprep.subr.bf16.mxu0 0
        %4832 = vmatpush2.bf16.msra.mxu0 %v3794
        %4833 = vmatprep.subr.bf16.mxu0 0
        %4834 = vmatpush2.bf16.msra.mxu0 %v3793
        %4835 = vmatprep.subr.bf16.mxu0 0
        %4836 = vmatpush2.bf16.msra.mxu0 %v3792
        %4837 = vmatprep.subr.bf16.mxu0 0
        %4838 = vmatpush2.bf16.msra.mxu0 %v3791
        %4839 = vmatprep.mubr.bf16.mxu0 %v1316
        %4840 = vmatmul.mubr.bf16.gmra.mxu0 %v1302
        %v4841 = vpop.f32.mrf.mxu0
        %v4842 = vadd.f32 0.0, %v4841
        %v4843 = vpop.f32.mrf.mxu0
        %v4844 = vpop.f32.mrf.mxu0
        %v4845 = vpop.f32.mrf.mxu0
        %4846 = vdwg.mxu0
        %4847 = vmatprep.subr.bf16.mxu0 0
        %4848 = vmatpush1.bf16.msra.mxu0 %v3806
        %4849 = vmatprep.subr.bf16.mxu0 0
        %4850 = vmatpush1.bf16.msra.mxu0 %v3805
        %4851 = vmatprep.subr.bf16.mxu0 0
        %4852 = vmatpush1.bf16.msra.mxu0 %v3804
        %4853 = vmatprep.subr.bf16.mxu0 0
        %4854 = vmatpush1.bf16.msra.mxu0 %v3803
        %4855 = vmatprep.subr.bf16.mxu0 0
        %4856 = vmatpush1.bf16.msra.mxu0 %v3802
        %4857 = vmatprep.subr.bf16.mxu0 0
        %4858 = vmatpush1.bf16.msra.mxu0 %v3801
        %4859 = vmatprep.subr.bf16.mxu0 0
        %4860 = vmatpush1.bf16.msra.mxu0 %v3800
        %4861 = vmatprep.subr.bf16.mxu0 0
        %4862 = vmatpush1.bf16.msra.mxu0 %v3799
        %4863 = vmatprep.subr.bf16.mxu0 0
        %4864 = vmatpush2.bf16.msra.mxu0 %v3814
        %4865 = vmatprep.subr.bf16.mxu0 0
        %4866 = vmatpush2.bf16.msra.mxu0 %v3813
        %4867 = vmatprep.subr.bf16.mxu0 0
        %4868 = vmatpush2.bf16.msra.mxu0 %v3812
        %4869 = vmatprep.subr.bf16.mxu0 0
        %4870 = vmatpush2.bf16.msra.mxu0 %v3811
        %4871 = vmatprep.subr.bf16.mxu0 0
        %4872 = vmatpush2.bf16.msra.mxu0 %v3810
        %4873 = vmatprep.subr.bf16.mxu0 0
        %4874 = vmatpush2.bf16.msra.mxu0 %v3809
        %4875 = vmatprep.subr.bf16.mxu0 0
        %4876 = vmatpush2.bf16.msra.mxu0 %v3808
        %4877 = vmatprep.subr.bf16.mxu0 0
        %4878 = vmatpush2.bf16.msra.mxu0 %v3807
        %4879 = vmatprep.mubr.bf16.mxu0 %v1326
        %4880 = vmatmul.mubr.bf16.gmra.mxu0 %v1324
        %v4881 = vpop.f32.mrf.mxu0
        %v4882 = vadd.f32 %v4842, %v4881
        %v4883 = vpop.f32.mrf.mxu0
        %v4884 = vpop.f32.mrf.mxu0
        %v4885 = vpop.f32.mrf.mxu0
        %4886 = vdwg.mxu0
        %4887 = vmatprep.subr.bf16.mxu0 0
        %4888 = vmatpush1.bf16.msra.mxu0 %v3822
        %4889 = vmatprep.subr.bf16.mxu0 0
        %4890 = vmatpush1.bf16.msra.mxu0 %v3821
        %4891 = vmatprep.subr.bf16.mxu0 0
        %4892 = vmatpush1.bf16.msra.mxu0 %v3820
        %4893 = vmatprep.subr.bf16.mxu0 0
        %4894 = vmatpush1.bf16.msra.mxu0 %v3819
        %4895 = vmatprep.subr.bf16.mxu0 0
        %4896 = vmatpush1.bf16.msra.mxu0 %v3818
        %4897 = vmatprep.subr.bf16.mxu0 0
        %4898 = vmatpush1.bf16.msra.mxu0 %v3817
        %4899 = vmatprep.subr.bf16.mxu0 0
        %4900 = vmatpush1.bf16.msra.mxu0 %v3816
        %4901 = vmatprep.subr.bf16.mxu0 0
        %4902 = vmatpush1.bf16.msra.mxu0 %v3815
        %4903 = vmatprep.subr.bf16.mxu0 0
        %4904 = vmatpush2.bf16.msra.mxu0 %v3830
        %4905 = vmatprep.subr.bf16.mxu0 0
        %4906 = vmatpush2.bf16.msra.mxu0 %v3829
        %4907 = vmatprep.subr.bf16.mxu0 0
        %4908 = vmatpush2.bf16.msra.mxu0 %v3828
        %4909 = vmatprep.subr.bf16.mxu0 0
        %4910 = vmatpush2.bf16.msra.mxu0 %v3827
        %4911 = vmatprep.subr.bf16.mxu0 0
        %4912 = vmatpush2.bf16.msra.mxu0 %v3826
        %4913 = vmatprep.subr.bf16.mxu0 0
        %4914 = vmatpush2.bf16.msra.mxu0 %v3825
        %4915 = vmatprep.subr.bf16.mxu0 0
        %4916 = vmatpush2.bf16.msra.mxu0 %v3824
        %4917 = vmatprep.subr.bf16.mxu0 0
        %4918 = vmatpush2.bf16.msra.mxu0 %v3823
        %4919 = vmatprep.mubr.bf16.mxu0 %v1323
        %4920 = vmatmul.mubr.bf16.gmra.mxu0 %v1309
        %v4921 = vpop.f32.mrf.mxu0
        %v4922 = vadd.f32 %v4882, %v4921
        %v4923 = vpop.f32.mrf.mxu0
        %v4924 = vpop.f32.mrf.mxu0
        %v4925 = vpop.f32.mrf.mxu0
        %4926 = vdwg.mxu0
        %4927 = vmatprep.subr.bf16.mxu0 0
        %4928 = vmatpush1.bf16.msra.mxu0 %v3838
        %4929 = vmatprep.subr.bf16.mxu0 0
        %4930 = vmatpush1.bf16.msra.mxu0 %v3837
        %4931 = vmatprep.subr.bf16.mxu0 0
        %4932 = vmatpush1.bf16.msra.mxu0 %v3836
        %4933 = vmatprep.subr.bf16.mxu0 0
        %4934 = vmatpush1.bf16.msra.mxu0 %v3835
        %4935 = vmatprep.subr.bf16.mxu0 0
        %4936 = vmatpush1.bf16.msra.mxu0 %v3834
        %4937 = vmatprep.subr.bf16.mxu0 0
        %4938 = vmatpush1.bf16.msra.mxu0 %v3833
        %4939 = vmatprep.subr.bf16.mxu0 0
        %4940 = vmatpush1.bf16.msra.mxu0 %v3832
        %4941 = vmatprep.subr.bf16.mxu0 0
        %4942 = vmatpush1.bf16.msra.mxu0 %v3831
        %4943 = vmatprep.subr.bf16.mxu0 0
        %4944 = vmatpush2.bf16.msra.mxu0 %v3846
        %4945 = vmatprep.subr.bf16.mxu0 0
        %4946 = vmatpush2.bf16.msra.mxu0 %v3845
        %4947 = vmatprep.subr.bf16.mxu0 0
        %4948 = vmatpush2.bf16.msra.mxu0 %v3844
        %4949 = vmatprep.subr.bf16.mxu0 0
        %4950 = vmatpush2.bf16.msra.mxu0 %v3843
        %4951 = vmatprep.subr.bf16.mxu0 0
        %4952 = vmatpush2.bf16.msra.mxu0 %v3842
        %4953 = vmatprep.subr.bf16.mxu0 0
        %4954 = vmatpush2.bf16.msra.mxu0 %v3841
        %4955 = vmatprep.subr.bf16.mxu0 0
        %4956 = vmatpush2.bf16.msra.mxu0 %v3840
        %4957 = vmatprep.subr.bf16.mxu0 0
        %4958 = vmatpush2.bf16.msra.mxu0 %v3839
        %4959 = vmatprep.mubr.bf16.mxu0 %v1327
        %4960 = vmatmul.mubr.bf16.gmra.mxu0 %v1325
        %v4961 = vpop.f32.mrf.mxu0
        %v4962 = vadd.f32 %v4922, %v4961
        %v4963 = vpop.f32.mrf.mxu0
        %v4964 = vpop.f32.mrf.mxu0
        %v4965 = vpop.f32.mrf.mxu0
        %4966 = vdwg.mxu0
        %4967 = vmatprep.subr.bf16.mxu0 0
        %4968 = vmatpush1.bf16.msra.mxu0 %v3854
        %4969 = vmatprep.subr.bf16.mxu0 0
        %4970 = vmatpush1.bf16.msra.mxu0 %v3853
        %4971 = vmatprep.subr.bf16.mxu0 0
        %4972 = vmatpush1.bf16.msra.mxu0 %v3852
        %4973 = vmatprep.subr.bf16.mxu0 0
        %4974 = vmatpush1.bf16.msra.mxu0 %v3851
        %4975 = vmatprep.subr.bf16.mxu0 0
        %4976 = vmatpush1.bf16.msra.mxu0 %v3850
        %4977 = vmatprep.subr.bf16.mxu0 0
        %4978 = vmatpush1.bf16.msra.mxu0 %v3849
        %4979 = vmatprep.subr.bf16.mxu0 0
        %4980 = vmatpush1.bf16.msra.mxu0 %v3848
        %4981 = vmatprep.subr.bf16.mxu0 0
        %4982 = vmatpush1.bf16.msra.mxu0 %v3847
        %4983 = vmatprep.subr.bf16.mxu0 0
        %4984 = vmatpush2.bf16.msra.mxu0 %v3862
        %4985 = vmatprep.subr.bf16.mxu0 0
        %4986 = vmatpush2.bf16.msra.mxu0 %v3861
        %4987 = vmatprep.subr.bf16.mxu0 0
        %4988 = vmatpush2.bf16.msra.mxu0 %v3860
        %4989 = vmatprep.subr.bf16.mxu0 0
        %4990 = vmatpush2.bf16.msra.mxu0 %v3859
        %4991 = vmatprep.subr.bf16.mxu0 0
        %4992 = vmatpush2.bf16.msra.mxu0 %v3858
        %4993 = vmatprep.subr.bf16.mxu0 0
        %4994 = vmatpush2.bf16.msra.mxu0 %v3857
        %4995 = vmatprep.subr.bf16.mxu0 0
        %4996 = vmatpush2.bf16.msra.mxu0 %v3856
        %4997 = vmatprep.subr.bf16.mxu0 0
        %4998 = vmatpush2.bf16.msra.mxu0 %v3855
        %4999 = vmatprep.mubr.bf16.mxu0 %v1365
        %5000 = vmatmul.mubr.bf16.gmra.mxu0 %v1351
        %v5001 = vpop.f32.mrf.mxu0
        %v5002 = vadd.f32 %v4962, %v5001
        %v5003 = vpop.f32.mrf.mxu0
        %v5004 = vpop.f32.mrf.mxu0
        %v5005 = vpop.f32.mrf.mxu0
        %5006 = vdwg.mxu0
        %5007 = vmatprep.subr.bf16.mxu0 0
        %5008 = vmatpush1.bf16.msra.mxu0 %v3870
        %5009 = vmatprep.subr.bf16.mxu0 0
        %5010 = vmatpush1.bf16.msra.mxu0 %v3869
        %5011 = vmatprep.subr.bf16.mxu0 0
        %5012 = vmatpush1.bf16.msra.mxu0 %v3868
        %5013 = vmatprep.subr.bf16.mxu0 0
        %5014 = vmatpush1.bf16.msra.mxu0 %v3867
        %5015 = vmatprep.subr.bf16.mxu0 0
        %5016 = vmatpush1.bf16.msra.mxu0 %v3866
        %5017 = vmatprep.subr.bf16.mxu0 0
        %5018 = vmatpush1.bf16.msra.mxu0 %v3865
        %5019 = vmatprep.subr.bf16.mxu0 0
        %5020 = vmatpush1.bf16.msra.mxu0 %v3864
        %5021 = vmatprep.subr.bf16.mxu0 0
        %5022 = vmatpush1.bf16.msra.mxu0 %v3863
        %5023 = vmatprep.subr.bf16.mxu0 0
        %5024 = vmatpush2.bf16.msra.mxu0 %v3878
        %5025 = vmatprep.subr.bf16.mxu0 0
        %5026 = vmatpush2.bf16.msra.mxu0 %v3877
        %5027 = vmatprep.subr.bf16.mxu0 0
        %5028 = vmatpush2.bf16.msra.mxu0 %v3876
        %5029 = vmatprep.subr.bf16.mxu0 0
        %5030 = vmatpush2.bf16.msra.mxu0 %v3875
        %5031 = vmatprep.subr.bf16.mxu0 0
        %5032 = vmatpush2.bf16.msra.mxu0 %v3874
        %5033 = vmatprep.subr.bf16.mxu0 0
        %5034 = vmatpush2.bf16.msra.mxu0 %v3873
        %5035 = vmatprep.subr.bf16.mxu0 0
        %5036 = vmatpush2.bf16.msra.mxu0 %v3872
        %5037 = vmatprep.subr.bf16.mxu0 0
        %5038 = vmatpush2.bf16.msra.mxu0 %v3871
        %5039 = vmatprep.mubr.bf16.mxu0 %v1375
        %5040 = vmatmul.mubr.bf16.gmra.mxu0 %v1373
        %v5041 = vpop.f32.mrf.mxu0
        %v5042 = vadd.f32 %v5002, %v5041
        %v5043 = vpop.f32.mrf.mxu0
        %v5044 = vpop.f32.mrf.mxu0
        %v5045 = vpop.f32.mrf.mxu0
        %5046 = vdwg.mxu0
        %5047 = vmatprep.subr.bf16.mxu0 0
        %5048 = vmatpush1.bf16.msra.mxu0 %v3886
        %5049 = vmatprep.subr.bf16.mxu0 0
        %5050 = vmatpush1.bf16.msra.mxu0 %v3885
        %5051 = vmatprep.subr.bf16.mxu0 0
        %5052 = vmatpush1.bf16.msra.mxu0 %v3884
        %5053 = vmatprep.subr.bf16.mxu0 0
        %5054 = vmatpush1.bf16.msra.mxu0 %v3883
        %5055 = vmatprep.subr.bf16.mxu0 0
        %5056 = vmatpush1.bf16.msra.mxu0 %v3882
        %5057 = vmatprep.subr.bf16.mxu0 0
        %5058 = vmatpush1.bf16.msra.mxu0 %v3881
        %5059 = vmatprep.subr.bf16.mxu0 0
        %5060 = vmatpush1.bf16.msra.mxu0 %v3880
        %5061 = vmatprep.subr.bf16.mxu0 0
        %5062 = vmatpush1.bf16.msra.mxu0 %v3879
        %5063 = vmatprep.subr.bf16.mxu0 0
        %5064 = vmatpush2.bf16.msra.mxu0 %v3894
        %5065 = vmatprep.subr.bf16.mxu0 0
        %5066 = vmatpush2.bf16.msra.mxu0 %v3893
        %5067 = vmatprep.subr.bf16.mxu0 0
        %5068 = vmatpush2.bf16.msra.mxu0 %v3892
        %5069 = vmatprep.subr.bf16.mxu0 0
        %5070 = vmatpush2.bf16.msra.mxu0 %v3891
        %5071 = vmatprep.subr.bf16.mxu0 0
        %5072 = vmatpush2.bf16.msra.mxu0 %v3890
        %5073 = vmatprep.subr.bf16.mxu0 0
        %5074 = vmatpush2.bf16.msra.mxu0 %v3889
        %5075 = vmatprep.subr.bf16.mxu0 0
        %5076 = vmatpush2.bf16.msra.mxu0 %v3888
        %5077 = vmatprep.subr.bf16.mxu0 0
        %5078 = vmatpush2.bf16.msra.mxu0 %v3887
        %5079 = vmatprep.mubr.bf16.mxu0 %v1372
        %5080 = vmatmul.mubr.bf16.gmra.mxu0 %v1358
        %v5081 = vpop.f32.mrf.mxu0
        %v5082 = vadd.f32 %v5042, %v5081
        %v5083 = vpop.f32.mrf.mxu0
        %v5084 = vpop.f32.mrf.mxu0
        %v5085 = vpop.f32.mrf.mxu0
        %5086 = vdwg.mxu0
        %5087 = vmatprep.subr.bf16.mxu0 0
        %5088 = vmatpush1.bf16.msra.mxu0 %v3902
        %5089 = vmatprep.subr.bf16.mxu0 0
        %5090 = vmatpush1.bf16.msra.mxu0 %v3901
        %5091 = vmatprep.subr.bf16.mxu0 0
        %5092 = vmatpush1.bf16.msra.mxu0 %v3900
        %5093 = vmatprep.subr.bf16.mxu0 0
        %5094 = vmatpush1.bf16.msra.mxu0 %v3899
        %5095 = vmatprep.subr.bf16.mxu0 0
        %5096 = vmatpush1.bf16.msra.mxu0 %v3898
        %5097 = vmatprep.subr.bf16.mxu0 0
        %5098 = vmatpush1.bf16.msra.mxu0 %v3897
        %5099 = vmatprep.subr.bf16.mxu0 0
        %5100 = vmatpush1.bf16.msra.mxu0 %v3896
        %5101 = vmatprep.subr.bf16.mxu0 0
        %5102 = vmatpush1.bf16.msra.mxu0 %v3895
        %5103 = vmatprep.subr.bf16.mxu0 0
        %5104 = vmatpush2.bf16.msra.mxu0 %v3910
        %5105 = vmatprep.subr.bf16.mxu0 0
        %5106 = vmatpush2.bf16.msra.mxu0 %v3909
        %5107 = vmatprep.subr.bf16.mxu0 0
        %5108 = vmatpush2.bf16.msra.mxu0 %v3908
        %5109 = vmatprep.subr.bf16.mxu0 0
        %5110 = vmatpush2.bf16.msra.mxu0 %v3907
        %5111 = vmatprep.subr.bf16.mxu0 0
        %5112 = vmatpush2.bf16.msra.mxu0 %v3906
        %5113 = vmatprep.subr.bf16.mxu0 0
        %5114 = vmatpush2.bf16.msra.mxu0 %v3905
        %5115 = vmatprep.subr.bf16.mxu0 0
        %5116 = vmatpush2.bf16.msra.mxu0 %v3904
        %5117 = vmatprep.subr.bf16.mxu0 0
        %5118 = vmatpush2.bf16.msra.mxu0 %v3903
        %5119 = vmatprep.mubr.bf16.mxu0 %v1376
        %5120 = vmatmul.mubr.bf16.gmra.mxu0 %v1374
        %v5121 = vpop.f32.mrf.mxu0
        %v5122 = vadd.f32 %v5082, %v5121
        %v5123 = vpop.f32.mrf.mxu0
        %v5124 = vpop.f32.mrf.mxu0
        %v5125 = vpop.f32.mrf.mxu0
        %5126 = vdwg.mxu0
        %5127 = vmatprep.subr.bf16.mxu0 0
        %5128 = vmatpush1.bf16.msra.mxu0 %v3918
        %5129 = vmatprep.subr.bf16.mxu0 0
        %5130 = vmatpush1.bf16.msra.mxu0 %v3917
        %5131 = vmatprep.subr.bf16.mxu0 0
        %5132 = vmatpush1.bf16.msra.mxu0 %v3916
        %5133 = vmatprep.subr.bf16.mxu0 0
        %5134 = vmatpush1.bf16.msra.mxu0 %v3915
        %5135 = vmatprep.subr.bf16.mxu0 0
        %5136 = vmatpush1.bf16.msra.mxu0 %v3914
        %5137 = vmatprep.subr.bf16.mxu0 0
        %5138 = vmatpush1.bf16.msra.mxu0 %v3913
        %5139 = vmatprep.subr.bf16.mxu0 0
        %5140 = vmatpush1.bf16.msra.mxu0 %v3912
        %5141 = vmatprep.subr.bf16.mxu0 0
        %5142 = vmatpush1.bf16.msra.mxu0 %v3911
        %5143 = vmatprep.subr.bf16.mxu0 0
        %5144 = vmatpush2.bf16.msra.mxu0 %v3926
        %5145 = vmatprep.subr.bf16.mxu0 0
        %5146 = vmatpush2.bf16.msra.mxu0 %v3925
        %5147 = vmatprep.subr.bf16.mxu0 0
        %5148 = vmatpush2.bf16.msra.mxu0 %v3924
        %5149 = vmatprep.subr.bf16.mxu0 0
        %5150 = vmatpush2.bf16.msra.mxu0 %v3923
        %5151 = vmatprep.subr.bf16.mxu0 0
        %5152 = vmatpush2.bf16.msra.mxu0 %v3922
        %5153 = vmatprep.subr.bf16.mxu0 0
        %5154 = vmatpush2.bf16.msra.mxu0 %v3921
        %5155 = vmatprep.subr.bf16.mxu0 0
        %5156 = vmatpush2.bf16.msra.mxu0 %v3920
        %5157 = vmatprep.subr.bf16.mxu0 0
        %5158 = vmatpush2.bf16.msra.mxu0 %v3919
        %5159 = vmatprep.mubr.bf16.mxu0 %v1414
        %5160 = vmatmul.mubr.bf16.gmra.mxu0 %v1400
        %v5161 = vpop.f32.mrf.mxu0
        %v5162 = vadd.f32 %v5122, %v5161
        %v5163 = vpop.f32.mrf.mxu0
        %v5164 = vpop.f32.mrf.mxu0
        %v5165 = vpop.f32.mrf.mxu0
        %5166 = vdwg.mxu0
        %5167 = vmatprep.subr.bf16.mxu0 0
        %5168 = vmatpush1.bf16.msra.mxu0 %v3934
        %5169 = vmatprep.subr.bf16.mxu0 0
        %5170 = vmatpush1.bf16.msra.mxu0 %v3933
        %5171 = vmatprep.subr.bf16.mxu0 0
        %5172 = vmatpush1.bf16.msra.mxu0 %v3932
        %5173 = vmatprep.subr.bf16.mxu0 0
        %5174 = vmatpush1.bf16.msra.mxu0 %v3931
        %5175 = vmatprep.subr.bf16.mxu0 0
        %5176 = vmatpush1.bf16.msra.mxu0 %v3930
        %5177 = vmatprep.subr.bf16.mxu0 0
        %5178 = vmatpush1.bf16.msra.mxu0 %v3929
        %5179 = vmatprep.subr.bf16.mxu0 0
        %5180 = vmatpush1.bf16.msra.mxu0 %v3928
        %5181 = vmatprep.subr.bf16.mxu0 0
        %5182 = vmatpush1.bf16.msra.mxu0 %v3927
        %5183 = vmatprep.subr.bf16.mxu0 0
        %5184 = vmatpush2.bf16.msra.mxu0 %v3942
        %5185 = vmatprep.subr.bf16.mxu0 0
        %5186 = vmatpush2.bf16.msra.mxu0 %v3941
        %5187 = vmatprep.subr.bf16.mxu0 0
        %5188 = vmatpush2.bf16.msra.mxu0 %v3940
        %5189 = vmatprep.subr.bf16.mxu0 0
        %5190 = vmatpush2.bf16.msra.mxu0 %v3939
        %5191 = vmatprep.subr.bf16.mxu0 0
        %5192 = vmatpush2.bf16.msra.mxu0 %v3938
        %5193 = vmatprep.subr.bf16.mxu0 0
        %5194 = vmatpush2.bf16.msra.mxu0 %v3937
        %5195 = vmatprep.subr.bf16.mxu0 0
        %5196 = vmatpush2.bf16.msra.mxu0 %v3936
        %5197 = vmatprep.subr.bf16.mxu0 0
        %5198 = vmatpush2.bf16.msra.mxu0 %v3935
        %5199 = vmatprep.mubr.bf16.mxu0 %v1424
        %5200 = vmatmul.mubr.bf16.gmra.mxu0 %v1422
        %v5201 = vpop.f32.mrf.mxu0
        %v5202 = vadd.f32 %v5162, %v5201
        %v5203 = vpop.f32.mrf.mxu0
        %v5204 = vpop.f32.mrf.mxu0
        %v5205 = vpop.f32.mrf.mxu0
        %5206 = vdwg.mxu0
        %5207 = vmatprep.subr.bf16.mxu0 0
        %5208 = vmatpush1.bf16.msra.mxu0 %v3950
        %5209 = vmatprep.subr.bf16.mxu0 0
        %5210 = vmatpush1.bf16.msra.mxu0 %v3949
        %5211 = vmatprep.subr.bf16.mxu0 0
        %5212 = vmatpush1.bf16.msra.mxu0 %v3948
        %5213 = vmatprep.subr.bf16.mxu0 0
        %5214 = vmatpush1.bf16.msra.mxu0 %v3947
        %5215 = vmatprep.subr.bf16.mxu0 0
        %5216 = vmatpush1.bf16.msra.mxu0 %v3946
        %5217 = vmatprep.subr.bf16.mxu0 0
        %5218 = vmatpush1.bf16.msra.mxu0 %v3945
        %5219 = vmatprep.subr.bf16.mxu0 0
        %5220 = vmatpush1.bf16.msra.mxu0 %v3944
        %5221 = vmatprep.subr.bf16.mxu0 0
        %5222 = vmatpush1.bf16.msra.mxu0 %v3943
        %5223 = vmatprep.subr.bf16.mxu0 0
        %5224 = vmatpush2.bf16.msra.mxu0 %v3958
        %5225 = vmatprep.subr.bf16.mxu0 0
        %5226 = vmatpush2.bf16.msra.mxu0 %v3957
        %5227 = vmatprep.subr.bf16.mxu0 0
        %5228 = vmatpush2.bf16.msra.mxu0 %v3956
        %5229 = vmatprep.subr.bf16.mxu0 0
        %5230 = vmatpush2.bf16.msra.mxu0 %v3955
        %5231 = vmatprep.subr.bf16.mxu0 0
        %5232 = vmatpush2.bf16.msra.mxu0 %v3954
        %5233 = vmatprep.subr.bf16.mxu0 0
        %5234 = vmatpush2.bf16.msra.mxu0 %v3953
        %5235 = vmatprep.subr.bf16.mxu0 0
        %5236 = vmatpush2.bf16.msra.mxu0 %v3952
        %5237 = vmatprep.subr.bf16.mxu0 0
        %5238 = vmatpush2.bf16.msra.mxu0 %v3951
        %5239 = vmatprep.mubr.bf16.mxu0 %v1421
        %5240 = vmatmul.mubr.bf16.gmra.mxu0 %v1407
        %v5241 = vpop.f32.mrf.mxu0
        %v5242 = vadd.f32 %v5202, %v5241
        %v5243 = vpop.f32.mrf.mxu0
        %v5244 = vpop.f32.mrf.mxu0
        %v5245 = vpop.f32.mrf.mxu0
        %5246 = vdwg.mxu0
        %5247 = vmatprep.subr.bf16.mxu0 0
        %5248 = vmatpush1.bf16.msra.mxu0 %v3966
        %5249 = vmatprep.subr.bf16.mxu0 0
        %5250 = vmatpush1.bf16.msra.mxu0 %v3965
        %5251 = vmatprep.subr.bf16.mxu0 0
        %5252 = vmatpush1.bf16.msra.mxu0 %v3964
        %5253 = vmatprep.subr.bf16.mxu0 0
        %5254 = vmatpush1.bf16.msra.mxu0 %v3963
        %5255 = vmatprep.subr.bf16.mxu0 0
        %5256 = vmatpush1.bf16.msra.mxu0 %v3962
        %5257 = vmatprep.subr.bf16.mxu0 0
        %5258 = vmatpush1.bf16.msra.mxu0 %v3961
        %5259 = vmatprep.subr.bf16.mxu0 0
        %5260 = vmatpush1.bf16.msra.mxu0 %v3960
        %5261 = vmatprep.subr.bf16.mxu0 0
        %5262 = vmatpush1.bf16.msra.mxu0 %v3959
        %5263 = vmatprep.subr.bf16.mxu0 0
        %5264 = vmatpush2.bf16.msra.mxu0 %v3974
        %5265 = vmatprep.subr.bf16.mxu0 0
        %5266 = vmatpush2.bf16.msra.mxu0 %v3973
        %5267 = vmatprep.subr.bf16.mxu0 0
        %5268 = vmatpush2.bf16.msra.mxu0 %v3972
        %5269 = vmatprep.subr.bf16.mxu0 0
        %5270 = vmatpush2.bf16.msra.mxu0 %v3971
        %5271 = vmatprep.subr.bf16.mxu0 0
        %5272 = vmatpush2.bf16.msra.mxu0 %v3970
        %5273 = vmatprep.subr.bf16.mxu0 0
        %5274 = vmatpush2.bf16.msra.mxu0 %v3969
        %5275 = vmatprep.subr.bf16.mxu0 0
        %5276 = vmatpush2.bf16.msra.mxu0 %v3968
        %5277 = vmatprep.subr.bf16.mxu0 0
        %5278 = vmatpush2.bf16.msra.mxu0 %v3967
        %5279 = vmatprep.mubr.bf16.mxu0 %v1425
        %5280 = vmatmul.mubr.bf16.gmra.mxu0 %v1423
        %v5281 = vpop.f32.mrf.mxu0
        %v5282 = vadd.f32 %v5242, %v5281
        %v5283 = vpop.f32.mrf.mxu0
        %v5284 = vpop.f32.mrf.mxu0
        %v5285 = vpop.f32.mrf.mxu0
        %5286 = vdwg.mxu0
        %5287 = vmatprep.subr.bf16.mxu0 0
        %5288 = vmatpush1.bf16.msra.mxu0 %v3982
        %5289 = vmatprep.subr.bf16.mxu0 0
        %5290 = vmatpush1.bf16.msra.mxu0 %v3981
        %5291 = vmatprep.subr.bf16.mxu0 0
        %5292 = vmatpush1.bf16.msra.mxu0 %v3980
        %5293 = vmatprep.subr.bf16.mxu0 0
        %5294 = vmatpush1.bf16.msra.mxu0 %v3979
        %5295 = vmatprep.subr.bf16.mxu0 0
        %5296 = vmatpush1.bf16.msra.mxu0 %v3978
        %5297 = vmatprep.subr.bf16.mxu0 0
        %5298 = vmatpush1.bf16.msra.mxu0 %v3977
        %5299 = vmatprep.subr.bf16.mxu0 0
        %5300 = vmatpush1.bf16.msra.mxu0 %v3976
        %5301 = vmatprep.subr.bf16.mxu0 0
        %5302 = vmatpush1.bf16.msra.mxu0 %v3975
        %5303 = vmatprep.subr.bf16.mxu0 0
        %5304 = vmatpush2.bf16.msra.mxu0 %v3990
        %5305 = vmatprep.subr.bf16.mxu0 0
        %5306 = vmatpush2.bf16.msra.mxu0 %v3989
        %5307 = vmatprep.subr.bf16.mxu0 0
        %5308 = vmatpush2.bf16.msra.mxu0 %v3988
        %5309 = vmatprep.subr.bf16.mxu0 0
        %5310 = vmatpush2.bf16.msra.mxu0 %v3987
        %5311 = vmatprep.subr.bf16.mxu0 0
        %5312 = vmatpush2.bf16.msra.mxu0 %v3986
        %5313 = vmatprep.subr.bf16.mxu0 0
        %5314 = vmatpush2.bf16.msra.mxu0 %v3985
        %5315 = vmatprep.subr.bf16.mxu0 0
        %5316 = vmatpush2.bf16.msra.mxu0 %v3984
        %5317 = vmatprep.subr.bf16.mxu0 0
        %5318 = vmatpush2.bf16.msra.mxu0 %v3983
        %5319 = vmatprep.mubr.bf16.mxu0 %v1463
        %5320 = vmatmul.mubr.bf16.gmra.mxu0 %v1449
        %v5321 = vpop.f32.mrf.mxu0
        %v5322 = vadd.f32 %v5282, %v5321
        %v5323 = vpop.f32.mrf.mxu0
        %v5324 = vpop.f32.mrf.mxu0
        %v5325 = vpop.f32.mrf.mxu0
        %5326 = vdwg.mxu0
        %5327 = vmatprep.subr.bf16.mxu0 0
        %5328 = vmatpush1.bf16.msra.mxu0 %v3998
        %5329 = vmatprep.subr.bf16.mxu0 0
        %5330 = vmatpush1.bf16.msra.mxu0 %v3997
        %5331 = vmatprep.subr.bf16.mxu0 0
        %5332 = vmatpush1.bf16.msra.mxu0 %v3996
        %5333 = vmatprep.subr.bf16.mxu0 0
        %5334 = vmatpush1.bf16.msra.mxu0 %v3995
        %5335 = vmatprep.subr.bf16.mxu0 0
        %5336 = vmatpush1.bf16.msra.mxu0 %v3994
        %5337 = vmatprep.subr.bf16.mxu0 0
        %5338 = vmatpush1.bf16.msra.mxu0 %v3993
        %5339 = vmatprep.subr.bf16.mxu0 0
        %5340 = vmatpush1.bf16.msra.mxu0 %v3992
        %5341 = vmatprep.subr.bf16.mxu0 0
        %5342 = vmatpush1.bf16.msra.mxu0 %v3991
        %5343 = vmatprep.subr.bf16.mxu0 0
        %5344 = vmatpush2.bf16.msra.mxu0 %v4006
        %5345 = vmatprep.subr.bf16.mxu0 0
        %5346 = vmatpush2.bf16.msra.mxu0 %v4005
        %5347 = vmatprep.subr.bf16.mxu0 0
        %5348 = vmatpush2.bf16.msra.mxu0 %v4004
        %5349 = vmatprep.subr.bf16.mxu0 0
        %5350 = vmatpush2.bf16.msra.mxu0 %v4003
        %5351 = vmatprep.subr.bf16.mxu0 0
        %5352 = vmatpush2.bf16.msra.mxu0 %v4002
        %5353 = vmatprep.subr.bf16.mxu0 0
        %5354 = vmatpush2.bf16.msra.mxu0 %v4001
        %5355 = vmatprep.subr.bf16.mxu0 0
        %5356 = vmatpush2.bf16.msra.mxu0 %v4000
        %5357 = vmatprep.subr.bf16.mxu0 0
        %5358 = vmatpush2.bf16.msra.mxu0 %v3999
        %5359 = vmatprep.mubr.bf16.mxu0 %v1473
        %5360 = vmatmul.mubr.bf16.gmra.mxu0 %v1471
        %v5361 = vpop.f32.mrf.mxu0
        %v5362 = vadd.f32 %v5322, %v5361
        %v5363 = vpop.f32.mrf.mxu0
        %v5364 = vpop.f32.mrf.mxu0
        %v5365 = vpop.f32.mrf.mxu0
        %5366 = vdwg.mxu0
        %5367 = vmatprep.subr.bf16.mxu0 0
        %5368 = vmatpush1.bf16.msra.mxu0 %v4014
        %5369 = vmatprep.subr.bf16.mxu0 0
        %5370 = vmatpush1.bf16.msra.mxu0 %v4013
        %5371 = vmatprep.subr.bf16.mxu0 0
        %5372 = vmatpush1.bf16.msra.mxu0 %v4012
        %5373 = vmatprep.subr.bf16.mxu0 0
        %5374 = vmatpush1.bf16.msra.mxu0 %v4011
        %5375 = vmatprep.subr.bf16.mxu0 0
        %5376 = vmatpush1.bf16.msra.mxu0 %v4010
        %5377 = vmatprep.subr.bf16.mxu0 0
        %5378 = vmatpush1.bf16.msra.mxu0 %v4009
        %5379 = vmatprep.subr.bf16.mxu0 0
        %5380 = vmatpush1.bf16.msra.mxu0 %v4008
        %5381 = vmatprep.subr.bf16.mxu0 0
        %5382 = vmatpush1.bf16.msra.mxu0 %v4007
        %5383 = vmatprep.subr.bf16.mxu0 0
        %5384 = vmatpush2.bf16.msra.mxu0 %v4022
        %5385 = vmatprep.subr.bf16.mxu0 0
        %5386 = vmatpush2.bf16.msra.mxu0 %v4021
        %5387 = vmatprep.subr.bf16.mxu0 0
        %5388 = vmatpush2.bf16.msra.mxu0 %v4020
        %5389 = vmatprep.subr.bf16.mxu0 0
        %5390 = vmatpush2.bf16.msra.mxu0 %v4019
        %5391 = vmatprep.subr.bf16.mxu0 0
        %5392 = vmatpush2.bf16.msra.mxu0 %v4018
        %5393 = vmatprep.subr.bf16.mxu0 0
        %5394 = vmatpush2.bf16.msra.mxu0 %v4017
        %5395 = vmatprep.subr.bf16.mxu0 0
        %5396 = vmatpush2.bf16.msra.mxu0 %v4016
        %5397 = vmatprep.subr.bf16.mxu0 0
        %5398 = vmatpush2.bf16.msra.mxu0 %v4015
        %5399 = vmatprep.mubr.bf16.mxu0 %v1470
        %5400 = vmatmul.mubr.bf16.gmra.mxu0 %v1456
        %v5401 = vpop.f32.mrf.mxu0
        %v5402 = vadd.f32 %v5362, %v5401
        %v5403 = vpop.f32.mrf.mxu0
        %v5404 = vpop.f32.mrf.mxu0
        %v5405 = vpop.f32.mrf.mxu0
        %5406 = vdwg.mxu0
        %5407 = vmatprep.subr.bf16.mxu0 0
        %5408 = vmatpush1.bf16.msra.mxu0 %v4030
        %5409 = vmatprep.subr.bf16.mxu0 0
        %5410 = vmatpush1.bf16.msra.mxu0 %v4029
        %5411 = vmatprep.subr.bf16.mxu0 0
        %5412 = vmatpush1.bf16.msra.mxu0 %v4028
        %5413 = vmatprep.subr.bf16.mxu0 0
        %5414 = vmatpush1.bf16.msra.mxu0 %v4027
        %5415 = vmatprep.subr.bf16.mxu0 0
        %5416 = vmatpush1.bf16.msra.mxu0 %v4026
        %5417 = vmatprep.subr.bf16.mxu0 0
        %5418 = vmatpush1.bf16.msra.mxu0 %v4025
        %5419 = vmatprep.subr.bf16.mxu0 0
        %5420 = vmatpush1.bf16.msra.mxu0 %v4024
        %5421 = vmatprep.subr.bf16.mxu0 0
        %5422 = vmatpush1.bf16.msra.mxu0 %v4023
        %5423 = vmatprep.subr.bf16.mxu0 0
        %5424 = vmatpush2.bf16.msra.mxu0 %v4038
        %5425 = vmatprep.subr.bf16.mxu0 0
        %5426 = vmatpush2.bf16.msra.mxu0 %v4037
        %5427 = vmatprep.subr.bf16.mxu0 0
        %5428 = vmatpush2.bf16.msra.mxu0 %v4036
        %5429 = vmatprep.subr.bf16.mxu0 0
        %5430 = vmatpush2.bf16.msra.mxu0 %v4035
        %5431 = vmatprep.subr.bf16.mxu0 0
        %5432 = vmatpush2.bf16.msra.mxu0 %v4034
        %5433 = vmatprep.subr.bf16.mxu0 0
        %5434 = vmatpush2.bf16.msra.mxu0 %v4033
        %5435 = vmatprep.subr.bf16.mxu0 0
        %5436 = vmatpush2.bf16.msra.mxu0 %v4032
        %5437 = vmatprep.subr.bf16.mxu0 0
        %5438 = vmatpush2.bf16.msra.mxu0 %v4031
        %5439 = vmatprep.mubr.bf16.mxu0 %v1474
        %5440 = vmatmul.mubr.bf16.gmra.mxu0 %v1472
        %v5441 = vpop.f32.mrf.mxu0
        %v5442 = vadd.f32 %v5402, %v5441
        %v5443 = vpop.f32.mrf.mxu0
        %v5444 = vpop.f32.mrf.mxu0
        %v5445 = vpop.f32.mrf.mxu0
        %5446 = vdwg.mxu0
        %5447 = vmatprep.subr.bf16.mxu0 0
        %5448 = vmatpush1.bf16.msra.mxu0 %v4046
        %5449 = vmatprep.subr.bf16.mxu0 0
        %5450 = vmatpush1.bf16.msra.mxu0 %v4045
        %5451 = vmatprep.subr.bf16.mxu0 0
        %5452 = vmatpush1.bf16.msra.mxu0 %v4044
        %5453 = vmatprep.subr.bf16.mxu0 0
        %5454 = vmatpush1.bf16.msra.mxu0 %v4043
        %5455 = vmatprep.subr.bf16.mxu0 0
        %5456 = vmatpush1.bf16.msra.mxu0 %v4042
        %5457 = vmatprep.subr.bf16.mxu0 0
        %5458 = vmatpush1.bf16.msra.mxu0 %v4041
        %5459 = vmatprep.subr.bf16.mxu0 0
        %5460 = vmatpush1.bf16.msra.mxu0 %v4040
        %5461 = vmatprep.subr.bf16.mxu0 0
        %5462 = vmatpush1.bf16.msra.mxu0 %v4039
        %5463 = vmatprep.subr.bf16.mxu0 0
        %5464 = vmatpush2.bf16.msra.mxu0 %v4054
        %5465 = vmatprep.subr.bf16.mxu0 0
        %5466 = vmatpush2.bf16.msra.mxu0 %v4053
        %5467 = vmatprep.subr.bf16.mxu0 0
        %5468 = vmatpush2.bf16.msra.mxu0 %v4052
        %5469 = vmatprep.subr.bf16.mxu0 0
        %5470 = vmatpush2.bf16.msra.mxu0 %v4051
        %5471 = vmatprep.subr.bf16.mxu0 0
        %5472 = vmatpush2.bf16.msra.mxu0 %v4050
        %5473 = vmatprep.subr.bf16.mxu0 0
        %5474 = vmatpush2.bf16.msra.mxu0 %v4049
        %5475 = vmatprep.subr.bf16.mxu0 0
        %5476 = vmatpush2.bf16.msra.mxu0 %v4048
        %5477 = vmatprep.subr.bf16.mxu0 0
        %5478 = vmatpush2.bf16.msra.mxu0 %v4047
        %5479 = vmatprep.mubr.bf16.mxu0 %v1512
        %5480 = vmatmul.mubr.bf16.gmra.mxu0 %v1498
        %v5481 = vpop.f32.mrf.mxu0
        %v5482 = vadd.f32 %v5442, %v5481
        %v5483 = vpop.f32.mrf.mxu0
        %v5484 = vpop.f32.mrf.mxu0
        %v5485 = vpop.f32.mrf.mxu0
        %5486 = vdwg.mxu0
        %5487 = vmatprep.subr.bf16.mxu0 0
        %5488 = vmatpush1.bf16.msra.mxu0 %v4062
        %5489 = vmatprep.subr.bf16.mxu0 0
        %5490 = vmatpush1.bf16.msra.mxu0 %v4061
        %5491 = vmatprep.subr.bf16.mxu0 0
        %5492 = vmatpush1.bf16.msra.mxu0 %v4060
        %5493 = vmatprep.subr.bf16.mxu0 0
        %5494 = vmatpush1.bf16.msra.mxu0 %v4059
        %5495 = vmatprep.subr.bf16.mxu0 0
        %5496 = vmatpush1.bf16.msra.mxu0 %v4058
        %5497 = vmatprep.subr.bf16.mxu0 0
        %5498 = vmatpush1.bf16.msra.mxu0 %v4057
        %5499 = vmatprep.subr.bf16.mxu0 0
        %5500 = vmatpush1.bf16.msra.mxu0 %v4056
        %5501 = vmatprep.subr.bf16.mxu0 0
        %5502 = vmatpush1.bf16.msra.mxu0 %v4055
        %5503 = vmatprep.subr.bf16.mxu0 0
        %5504 = vmatpush2.bf16.msra.mxu0 %v4070
        %5505 = vmatprep.subr.bf16.mxu0 0
        %5506 = vmatpush2.bf16.msra.mxu0 %v4069
        %5507 = vmatprep.subr.bf16.mxu0 0
        %5508 = vmatpush2.bf16.msra.mxu0 %v4068
        %5509 = vmatprep.subr.bf16.mxu0 0
        %5510 = vmatpush2.bf16.msra.mxu0 %v4067
        %5511 = vmatprep.subr.bf16.mxu0 0
        %5512 = vmatpush2.bf16.msra.mxu0 %v4066
        %5513 = vmatprep.subr.bf16.mxu0 0
        %5514 = vmatpush2.bf16.msra.mxu0 %v4065
        %5515 = vmatprep.subr.bf16.mxu0 0
        %5516 = vmatpush2.bf16.msra.mxu0 %v4064
        %5517 = vmatprep.subr.bf16.mxu0 0
        %5518 = vmatpush2.bf16.msra.mxu0 %v4063
        %5519 = vmatprep.mubr.bf16.mxu0 %v1522
        %5520 = vmatmul.mubr.bf16.gmra.mxu0 %v1520
        %v5521 = vpop.f32.mrf.mxu0
        %v5522 = vadd.f32 %v5482, %v5521
        %v5523 = vpop.f32.mrf.mxu0
        %v5524 = vpop.f32.mrf.mxu0
        %v5525 = vpop.f32.mrf.mxu0
        %5526 = vdwg.mxu0
        %5527 = vmatprep.subr.bf16.mxu0 0
        %5528 = vmatpush1.bf16.msra.mxu0 %v4078
        %5529 = vmatprep.subr.bf16.mxu0 0
        %5530 = vmatpush1.bf16.msra.mxu0 %v4077
        %5531 = vmatprep.subr.bf16.mxu0 0
        %5532 = vmatpush1.bf16.msra.mxu0 %v4076
        %5533 = vmatprep.subr.bf16.mxu0 0
        %5534 = vmatpush1.bf16.msra.mxu0 %v4075
        %5535 = vmatprep.subr.bf16.mxu0 0
        %5536 = vmatpush1.bf16.msra.mxu0 %v4074
        %5537 = vmatprep.subr.bf16.mxu0 0
        %5538 = vmatpush1.bf16.msra.mxu0 %v4073
        %5539 = vmatprep.subr.bf16.mxu0 0
        %5540 = vmatpush1.bf16.msra.mxu0 %v4072
        %5541 = vmatprep.subr.bf16.mxu0 0
        %5542 = vmatpush1.bf16.msra.mxu0 %v4071
        %5543 = vmatprep.subr.bf16.mxu0 0
        %5544 = vmatpush2.bf16.msra.mxu0 %v4086
        %5545 = vmatprep.subr.bf16.mxu0 0
        %5546 = vmatpush2.bf16.msra.mxu0 %v4085
        %5547 = vmatprep.subr.bf16.mxu0 0
        %5548 = vmatpush2.bf16.msra.mxu0 %v4084
        %5549 = vmatprep.subr.bf16.mxu0 0
        %5550 = vmatpush2.bf16.msra.mxu0 %v4083
        %5551 = vmatprep.subr.bf16.mxu0 0
        %5552 = vmatpush2.bf16.msra.mxu0 %v4082
        %5553 = vmatprep.subr.bf16.mxu0 0
        %5554 = vmatpush2.bf16.msra.mxu0 %v4081
        %5555 = vmatprep.subr.bf16.mxu0 0
        %5556 = vmatpush2.bf16.msra.mxu0 %v4080
        %5557 = vmatprep.subr.bf16.mxu0 0
        %5558 = vmatpush2.bf16.msra.mxu0 %v4079
        %5559 = vmatprep.mubr.bf16.mxu0 %v1519
        %5560 = vmatmul.mubr.bf16.gmra.mxu0 %v1505
        %v5561 = vpop.f32.mrf.mxu0
        %v5562 = vadd.f32 %v5522, %v5561
        %v5563 = vpop.f32.mrf.mxu0
        %v5564 = vpop.f32.mrf.mxu0
        %v5565 = vpop.f32.mrf.mxu0
        %5566 = vdwg.mxu0
        %5567 = vmatprep.subr.bf16.mxu0 0
        %5568 = vmatpush1.bf16.msra.mxu0 %v4094
        %5569 = vmatprep.subr.bf16.mxu0 0
        %5570 = vmatpush1.bf16.msra.mxu0 %v4093
        %5571 = vmatprep.subr.bf16.mxu0 0
        %5572 = vmatpush1.bf16.msra.mxu0 %v4092
        %5573 = vmatprep.subr.bf16.mxu0 0
        %5574 = vmatpush1.bf16.msra.mxu0 %v4091
        %5575 = vmatprep.subr.bf16.mxu0 0
        %5576 = vmatpush1.bf16.msra.mxu0 %v4090
        %5577 = vmatprep.subr.bf16.mxu0 0
        %5578 = vmatpush1.bf16.msra.mxu0 %v4089
        %5579 = vmatprep.subr.bf16.mxu0 0
        %5580 = vmatpush1.bf16.msra.mxu0 %v4088
        %5581 = vmatprep.subr.bf16.mxu0 0
        %5582 = vmatpush1.bf16.msra.mxu0 %v4087
        %5583 = vmatprep.subr.bf16.mxu0 0
        %5584 = vmatpush2.bf16.msra.mxu0 %v4102
        %5585 = vmatprep.subr.bf16.mxu0 0
        %5586 = vmatpush2.bf16.msra.mxu0 %v4101
        %5587 = vmatprep.subr.bf16.mxu0 0
        %5588 = vmatpush2.bf16.msra.mxu0 %v4100
        %5589 = vmatprep.subr.bf16.mxu0 0
        %5590 = vmatpush2.bf16.msra.mxu0 %v4099
        %5591 = vmatprep.subr.bf16.mxu0 0
        %5592 = vmatpush2.bf16.msra.mxu0 %v4098
        %5593 = vmatprep.subr.bf16.mxu0 0
        %5594 = vmatpush2.bf16.msra.mxu0 %v4097
        %5595 = vmatprep.subr.bf16.mxu0 0
        %5596 = vmatpush2.bf16.msra.mxu0 %v4096
        %5597 = vmatprep.subr.bf16.mxu0 0
        %5598 = vmatpush2.bf16.msra.mxu0 %v4095
        %5599 = vmatprep.mubr.bf16.mxu0 %v1523
        %5600 = vmatmul.mubr.bf16.gmra.mxu0 %v1521
        %v5601 = vpop.f32.mrf.mxu0
        %v5602 = vadd.f32 %v5562, %v5601
        %v5603 = vpop.f32.mrf.mxu0
        %v5604 = vpop.f32.mrf.mxu0
        %v5605 = vpop.f32.mrf.mxu0
        %5606 = vdwg.mxu0
        %5607 = vmatprep.subr.bf16.mxu0 0
        %5608 = vmatpush1.bf16.msra.mxu0 %v4110
        %5609 = vmatprep.subr.bf16.mxu0 0
        %5610 = vmatpush1.bf16.msra.mxu0 %v4109
        %5611 = vmatprep.subr.bf16.mxu0 0
        %5612 = vmatpush1.bf16.msra.mxu0 %v4108
        %5613 = vmatprep.subr.bf16.mxu0 0
        %5614 = vmatpush1.bf16.msra.mxu0 %v4107
        %5615 = vmatprep.subr.bf16.mxu0 0
        %5616 = vmatpush1.bf16.msra.mxu0 %v4106
        %5617 = vmatprep.subr.bf16.mxu0 0
        %5618 = vmatpush1.bf16.msra.mxu0 %v4105
        %5619 = vmatprep.subr.bf16.mxu0 0
        %5620 = vmatpush1.bf16.msra.mxu0 %v4104
        %5621 = vmatprep.subr.bf16.mxu0 0
        %5622 = vmatpush1.bf16.msra.mxu0 %v4103
        %5623 = vmatprep.subr.bf16.mxu0 0
        %5624 = vmatpush2.bf16.msra.mxu0 %v4118
        %5625 = vmatprep.subr.bf16.mxu0 0
        %5626 = vmatpush2.bf16.msra.mxu0 %v4117
        %5627 = vmatprep.subr.bf16.mxu0 0
        %5628 = vmatpush2.bf16.msra.mxu0 %v4116
        %5629 = vmatprep.subr.bf16.mxu0 0
        %5630 = vmatpush2.bf16.msra.mxu0 %v4115
        %5631 = vmatprep.subr.bf16.mxu0 0
        %5632 = vmatpush2.bf16.msra.mxu0 %v4114
        %5633 = vmatprep.subr.bf16.mxu0 0
        %5634 = vmatpush2.bf16.msra.mxu0 %v4113
        %5635 = vmatprep.subr.bf16.mxu0 0
        %5636 = vmatpush2.bf16.msra.mxu0 %v4112
        %5637 = vmatprep.subr.bf16.mxu0 0
        %5638 = vmatpush2.bf16.msra.mxu0 %v4111
        %5639 = vmatprep.mubr.bf16.mxu0 %v1561
        %5640 = vmatmul.mubr.bf16.gmra.mxu0 %v1547
        %v5641 = vpop.f32.mrf.mxu0
        %v5642 = vadd.f32 %v5602, %v5641
        %v5643 = vpop.f32.mrf.mxu0
        %v5644 = vpop.f32.mrf.mxu0
        %v5645 = vpop.f32.mrf.mxu0
        %5646 = vdwg.mxu0
        %5647 = vmatprep.subr.bf16.mxu0 0
        %5648 = vmatpush1.bf16.msra.mxu0 %v4126
        %5649 = vmatprep.subr.bf16.mxu0 0
        %5650 = vmatpush1.bf16.msra.mxu0 %v4125
        %5651 = vmatprep.subr.bf16.mxu0 0
        %5652 = vmatpush1.bf16.msra.mxu0 %v4124
        %5653 = vmatprep.subr.bf16.mxu0 0
        %5654 = vmatpush1.bf16.msra.mxu0 %v4123
        %5655 = vmatprep.subr.bf16.mxu0 0
        %5656 = vmatpush1.bf16.msra.mxu0 %v4122
        %5657 = vmatprep.subr.bf16.mxu0 0
        %5658 = vmatpush1.bf16.msra.mxu0 %v4121
        %5659 = vmatprep.subr.bf16.mxu0 0
        %5660 = vmatpush1.bf16.msra.mxu0 %v4120
        %5661 = vmatprep.subr.bf16.mxu0 0
        %5662 = vmatpush1.bf16.msra.mxu0 %v4119
        %5663 = vmatprep.subr.bf16.mxu0 0
        %5664 = vmatpush2.bf16.msra.mxu0 %v4134
        %5665 = vmatprep.subr.bf16.mxu0 0
        %5666 = vmatpush2.bf16.msra.mxu0 %v4133
        %5667 = vmatprep.subr.bf16.mxu0 0
        %5668 = vmatpush2.bf16.msra.mxu0 %v4132
        %5669 = vmatprep.subr.bf16.mxu0 0
        %5670 = vmatpush2.bf16.msra.mxu0 %v4131
        %5671 = vmatprep.subr.bf16.mxu0 0
        %5672 = vmatpush2.bf16.msra.mxu0 %v4130
        %5673 = vmatprep.subr.bf16.mxu0 0
        %5674 = vmatpush2.bf16.msra.mxu0 %v4129
        %5675 = vmatprep.subr.bf16.mxu0 0
        %5676 = vmatpush2.bf16.msra.mxu0 %v4128
        %5677 = vmatprep.subr.bf16.mxu0 0
        %5678 = vmatpush2.bf16.msra.mxu0 %v4127
        %5679 = vmatprep.mubr.bf16.mxu0 %v1571
        %5680 = vmatmul.mubr.bf16.gmra.mxu0 %v1569
        %v5681 = vpop.f32.mrf.mxu0
        %v5682 = vadd.f32 %v5642, %v5681
        %v5683 = vpop.f32.mrf.mxu0
        %v5684 = vpop.f32.mrf.mxu0
        %v5685 = vpop.f32.mrf.mxu0
        %5686 = vdwg.mxu0
        %5687 = vmatprep.subr.bf16.mxu0 0
        %5688 = vmatpush1.bf16.msra.mxu0 %v4142
        %5689 = vmatprep.subr.bf16.mxu0 0
        %5690 = vmatpush1.bf16.msra.mxu0 %v4141
        %5691 = vmatprep.subr.bf16.mxu0 0
        %5692 = vmatpush1.bf16.msra.mxu0 %v4140
        %5693 = vmatprep.subr.bf16.mxu0 0
        %5694 = vmatpush1.bf16.msra.mxu0 %v4139
        %5695 = vmatprep.subr.bf16.mxu0 0
        %5696 = vmatpush1.bf16.msra.mxu0 %v4138
        %5697 = vmatprep.subr.bf16.mxu0 0
        %5698 = vmatpush1.bf16.msra.mxu0 %v4137
        %5699 = vmatprep.subr.bf16.mxu0 0
        %5700 = vmatpush1.bf16.msra.mxu0 %v4136
        %5701 = vmatprep.subr.bf16.mxu0 0
        %5702 = vmatpush1.bf16.msra.mxu0 %v4135
        %5703 = vmatprep.subr.bf16.mxu0 0
        %5704 = vmatpush2.bf16.msra.mxu0 %v4150
        %5705 = vmatprep.subr.bf16.mxu0 0
        %5706 = vmatpush2.bf16.msra.mxu0 %v4149
        %5707 = vmatprep.subr.bf16.mxu0 0
        %5708 = vmatpush2.bf16.msra.mxu0 %v4148
        %5709 = vmatprep.subr.bf16.mxu0 0
        %5710 = vmatpush2.bf16.msra.mxu0 %v4147
        %5711 = vmatprep.subr.bf16.mxu0 0
        %5712 = vmatpush2.bf16.msra.mxu0 %v4146
        %5713 = vmatprep.subr.bf16.mxu0 0
        %5714 = vmatpush2.bf16.msra.mxu0 %v4145
        %5715 = vmatprep.subr.bf16.mxu0 0
        %5716 = vmatpush2.bf16.msra.mxu0 %v4144
        %5717 = vmatprep.subr.bf16.mxu0 0
        %5718 = vmatpush2.bf16.msra.mxu0 %v4143
        %5719 = vmatprep.mubr.bf16.mxu0 %v1568
        %5720 = vmatmul.mubr.bf16.gmra.mxu0 %v1554
        %v5721 = vpop.f32.mrf.mxu0
        %v5722 = vadd.f32 %v5682, %v5721
        %v5723 = vpop.f32.mrf.mxu0
        %v5724 = vpop.f32.mrf.mxu0
        %v5725 = vpop.f32.mrf.mxu0
        %5726 = vdwg.mxu0
        %5727 = vmatprep.subr.bf16.mxu0 0
        %5728 = vmatpush1.bf16.msra.mxu0 %v4158
        %5729 = vmatprep.subr.bf16.mxu0 0
        %5730 = vmatpush1.bf16.msra.mxu0 %v4157
        %5731 = vmatprep.subr.bf16.mxu0 0
        %5732 = vmatpush1.bf16.msra.mxu0 %v4156
        %5733 = vmatprep.subr.bf16.mxu0 0
        %5734 = vmatpush1.bf16.msra.mxu0 %v4155
        %5735 = vmatprep.subr.bf16.mxu0 0
        %5736 = vmatpush1.bf16.msra.mxu0 %v4154
        %5737 = vmatprep.subr.bf16.mxu0 0
        %5738 = vmatpush1.bf16.msra.mxu0 %v4153
        %5739 = vmatprep.subr.bf16.mxu0 0
        %5740 = vmatpush1.bf16.msra.mxu0 %v4152
        %5741 = vmatprep.subr.bf16.mxu0 0
        %5742 = vmatpush1.bf16.msra.mxu0 %v4151
        %5743 = vmatprep.subr.bf16.mxu0 0
        %5744 = vmatpush2.bf16.msra.mxu0 %v4166
        %5745 = vmatprep.subr.bf16.mxu0 0
        %5746 = vmatpush2.bf16.msra.mxu0 %v4165
        %5747 = vmatprep.subr.bf16.mxu0 0
        %5748 = vmatpush2.bf16.msra.mxu0 %v4164
        %5749 = vmatprep.subr.bf16.mxu0 0
        %5750 = vmatpush2.bf16.msra.mxu0 %v4163
        %5751 = vmatprep.subr.bf16.mxu0 0
        %5752 = vmatpush2.bf16.msra.mxu0 %v4162
        %5753 = vmatprep.subr.bf16.mxu0 0
        %5754 = vmatpush2.bf16.msra.mxu0 %v4161
        %5755 = vmatprep.subr.bf16.mxu0 0
        %5756 = vmatpush2.bf16.msra.mxu0 %v4160
        %5757 = vmatprep.subr.bf16.mxu0 0
        %5758 = vmatpush2.bf16.msra.mxu0 %v4159
        %5759 = vmatprep.mubr.bf16.mxu0 %v1572
        %5760 = vmatmul.mubr.bf16.gmra.mxu0 %v1570
        %v5761 = vpop.f32.mrf.mxu0
        %v5762 = vadd.f32 %v5722, %v5761
        %v5763 = vpop.f32.mrf.mxu0
        %v5764 = vpop.f32.mrf.mxu0
        %v5765 = vpop.f32.mrf.mxu0
        %5766 = vdwg.mxu0
        %5767 = vmatprep.subr.bf16.mxu0 0
        %5768 = vmatpush1.bf16.msra.mxu0 %v4174
        %5769 = vmatprep.subr.bf16.mxu0 0
        %5770 = vmatpush1.bf16.msra.mxu0 %v4173
        %5771 = vmatprep.subr.bf16.mxu0 0
        %5772 = vmatpush1.bf16.msra.mxu0 %v4172
        %5773 = vmatprep.subr.bf16.mxu0 0
        %5774 = vmatpush1.bf16.msra.mxu0 %v4171
        %5775 = vmatprep.subr.bf16.mxu0 0
        %5776 = vmatpush1.bf16.msra.mxu0 %v4170
        %5777 = vmatprep.subr.bf16.mxu0 0
        %5778 = vmatpush1.bf16.msra.mxu0 %v4169
        %5779 = vmatprep.subr.bf16.mxu0 0
        %5780 = vmatpush1.bf16.msra.mxu0 %v4168
        %5781 = vmatprep.subr.bf16.mxu0 0
        %5782 = vmatpush1.bf16.msra.mxu0 %v4167
        %5783 = vmatprep.subr.bf16.mxu0 0
        %5784 = vmatpush2.bf16.msra.mxu0 %v4182
        %5785 = vmatprep.subr.bf16.mxu0 0
        %5786 = vmatpush2.bf16.msra.mxu0 %v4181
        %5787 = vmatprep.subr.bf16.mxu0 0
        %5788 = vmatpush2.bf16.msra.mxu0 %v4180
        %5789 = vmatprep.subr.bf16.mxu0 0
        %5790 = vmatpush2.bf16.msra.mxu0 %v4179
        %5791 = vmatprep.subr.bf16.mxu0 0
        %5792 = vmatpush2.bf16.msra.mxu0 %v4178
        %5793 = vmatprep.subr.bf16.mxu0 0
        %5794 = vmatpush2.bf16.msra.mxu0 %v4177
        %5795 = vmatprep.subr.bf16.mxu0 0
        %5796 = vmatpush2.bf16.msra.mxu0 %v4176
        %5797 = vmatprep.subr.bf16.mxu0 0
        %5798 = vmatpush2.bf16.msra.mxu0 %v4175
        %5799 = vmatprep.mubr.bf16.mxu0 %v1610
        %5800 = vmatmul.mubr.bf16.gmra.mxu0 %v1596
        %v5801 = vpop.f32.mrf.mxu0
        %v5802 = vadd.f32 %v5762, %v5801
        %v5803 = vpop.f32.mrf.mxu0
        %v5804 = vpop.f32.mrf.mxu0
        %v5805 = vpop.f32.mrf.mxu0
        %5806 = vdwg.mxu0
        %5807 = vmatprep.subr.bf16.mxu0 0
        %5808 = vmatpush1.bf16.msra.mxu0 %v4190
        %5809 = vmatprep.subr.bf16.mxu0 0
        %5810 = vmatpush1.bf16.msra.mxu0 %v4189
        %5811 = vmatprep.subr.bf16.mxu0 0
        %5812 = vmatpush1.bf16.msra.mxu0 %v4188
        %5813 = vmatprep.subr.bf16.mxu0 0
        %5814 = vmatpush1.bf16.msra.mxu0 %v4187
        %5815 = vmatprep.subr.bf16.mxu0 0
        %5816 = vmatpush1.bf16.msra.mxu0 %v4186
        %5817 = vmatprep.subr.bf16.mxu0 0
        %5818 = vmatpush1.bf16.msra.mxu0 %v4185
        %5819 = vmatprep.subr.bf16.mxu0 0
        %5820 = vmatpush1.bf16.msra.mxu0 %v4184
        %5821 = vmatprep.subr.bf16.mxu0 0
        %5822 = vmatpush1.bf16.msra.mxu0 %v4183
        %5823 = vmatprep.subr.bf16.mxu0 0
        %5824 = vmatpush2.bf16.msra.mxu0 %v4198
        %5825 = vmatprep.subr.bf16.mxu0 0
        %5826 = vmatpush2.bf16.msra.mxu0 %v4197
        %5827 = vmatprep.subr.bf16.mxu0 0
        %5828 = vmatpush2.bf16.msra.mxu0 %v4196
        %5829 = vmatprep.subr.bf16.mxu0 0
        %5830 = vmatpush2.bf16.msra.mxu0 %v4195
        %5831 = vmatprep.subr.bf16.mxu0 0
        %5832 = vmatpush2.bf16.msra.mxu0 %v4194
        %5833 = vmatprep.subr.bf16.mxu0 0
        %5834 = vmatpush2.bf16.msra.mxu0 %v4193
        %5835 = vmatprep.subr.bf16.mxu0 0
        %5836 = vmatpush2.bf16.msra.mxu0 %v4192
        %5837 = vmatprep.subr.bf16.mxu0 0
        %5838 = vmatpush2.bf16.msra.mxu0 %v4191
        %5839 = vmatprep.mubr.bf16.mxu0 %v1620
        %5840 = vmatmul.mubr.bf16.gmra.mxu0 %v1618
        %v5841 = vpop.f32.mrf.mxu0
        %v5842 = vadd.f32 %v5802, %v5841
        %v5843 = vpop.f32.mrf.mxu0
        %v5844 = vpop.f32.mrf.mxu0
        %v5845 = vpop.f32.mrf.mxu0
        %5846 = vdwg.mxu0
        %5847 = vmatprep.subr.bf16.mxu0 0
        %5848 = vmatpush1.bf16.msra.mxu0 %v4206
        %5849 = vmatprep.subr.bf16.mxu0 0
        %5850 = vmatpush1.bf16.msra.mxu0 %v4205
        %5851 = vmatprep.subr.bf16.mxu0 0
        %5852 = vmatpush1.bf16.msra.mxu0 %v4204
        %5853 = vmatprep.subr.bf16.mxu0 0
        %5854 = vmatpush1.bf16.msra.mxu0 %v4203
        %5855 = vmatprep.subr.bf16.mxu0 0
        %5856 = vmatpush1.bf16.msra.mxu0 %v4202
        %5857 = vmatprep.subr.bf16.mxu0 0
        %5858 = vmatpush1.bf16.msra.mxu0 %v4201
        %5859 = vmatprep.subr.bf16.mxu0 0
        %5860 = vmatpush1.bf16.msra.mxu0 %v4200
        %5861 = vmatprep.subr.bf16.mxu0 0
        %5862 = vmatpush1.bf16.msra.mxu0 %v4199
        %5863 = vmatprep.subr.bf16.mxu0 0
        %5864 = vmatpush2.bf16.msra.mxu0 %v4214
        %5865 = vmatprep.subr.bf16.mxu0 0
        %5866 = vmatpush2.bf16.msra.mxu0 %v4213
        %5867 = vmatprep.subr.bf16.mxu0 0
        %5868 = vmatpush2.bf16.msra.mxu0 %v4212
        %5869 = vmatprep.subr.bf16.mxu0 0
        %5870 = vmatpush2.bf16.msra.mxu0 %v4211
        %5871 = vmatprep.subr.bf16.mxu0 0
        %5872 = vmatpush2.bf16.msra.mxu0 %v4210
        %5873 = vmatprep.subr.bf16.mxu0 0
        %5874 = vmatpush2.bf16.msra.mxu0 %v4209
        %5875 = vmatprep.subr.bf16.mxu0 0
        %5876 = vmatpush2.bf16.msra.mxu0 %v4208
        %5877 = vmatprep.subr.bf16.mxu0 0
        %5878 = vmatpush2.bf16.msra.mxu0 %v4207
        %5879 = vmatprep.mubr.bf16.mxu0 %v1617
        %5880 = vmatmul.mubr.bf16.gmra.mxu0 %v1603
        %v5881 = vpop.f32.mrf.mxu0
        %v5882 = vadd.f32 %v5842, %v5881
        %v5883 = vpop.f32.mrf.mxu0
        %v5884 = vpop.f32.mrf.mxu0
        %v5885 = vpop.f32.mrf.mxu0
        %5886 = vdwg.mxu0
        %5887 = vmatprep.subr.bf16.mxu0 0
        %5888 = vmatpush1.bf16.msra.mxu0 %v4222
        %5889 = vmatprep.subr.bf16.mxu0 0
        %5890 = vmatpush1.bf16.msra.mxu0 %v4221
        %5891 = vmatprep.subr.bf16.mxu0 0
        %5892 = vmatpush1.bf16.msra.mxu0 %v4220
        %5893 = vmatprep.subr.bf16.mxu0 0
        %5894 = vmatpush1.bf16.msra.mxu0 %v4219
        %5895 = vmatprep.subr.bf16.mxu0 0
        %5896 = vmatpush1.bf16.msra.mxu0 %v4218
        %5897 = vmatprep.subr.bf16.mxu0 0
        %5898 = vmatpush1.bf16.msra.mxu0 %v4217
        %5899 = vmatprep.subr.bf16.mxu0 0
        %5900 = vmatpush1.bf16.msra.mxu0 %v4216
        %5901 = vmatprep.subr.bf16.mxu0 0
        %5902 = vmatpush1.bf16.msra.mxu0 %v4215
        %5903 = vmatprep.subr.bf16.mxu0 0
        %5904 = vmatpush2.bf16.msra.mxu0 %v4230
        %5905 = vmatprep.subr.bf16.mxu0 0
        %5906 = vmatpush2.bf16.msra.mxu0 %v4229
        %5907 = vmatprep.subr.bf16.mxu0 0
        %5908 = vmatpush2.bf16.msra.mxu0 %v4228
        %5909 = vmatprep.subr.bf16.mxu0 0
        %5910 = vmatpush2.bf16.msra.mxu0 %v4227
        %5911 = vmatprep.subr.bf16.mxu0 0
        %5912 = vmatpush2.bf16.msra.mxu0 %v4226
        %5913 = vmatprep.subr.bf16.mxu0 0
        %5914 = vmatpush2.bf16.msra.mxu0 %v4225
        %5915 = vmatprep.subr.bf16.mxu0 0
        %5916 = vmatpush2.bf16.msra.mxu0 %v4224
        %5917 = vmatprep.subr.bf16.mxu0 0
        %5918 = vmatpush2.bf16.msra.mxu0 %v4223
        %5919 = vmatprep.mubr.bf16.mxu0 %v1621
        %5920 = vmatmul.mubr.bf16.gmra.mxu0 %v1619
        %v5921 = vpop.f32.mrf.mxu0
        %v5922 = vadd.f32 %v5882, %v5921
        %v5923 = vpop.f32.mrf.mxu0
        %v5924 = vpop.f32.mrf.mxu0
        %v5925 = vpop.f32.mrf.mxu0
        %5926 = vdwg.mxu0
        %5927 = vmatprep.subr.bf16.mxu0 0
        %5928 = vmatpush1.bf16.msra.mxu0 %v4238
        %5929 = vmatprep.subr.bf16.mxu0 0
        %5930 = vmatpush1.bf16.msra.mxu0 %v4237
        %5931 = vmatprep.subr.bf16.mxu0 0
        %5932 = vmatpush1.bf16.msra.mxu0 %v4236
        %5933 = vmatprep.subr.bf16.mxu0 0
        %5934 = vmatpush1.bf16.msra.mxu0 %v4235
        %5935 = vmatprep.subr.bf16.mxu0 0
        %5936 = vmatpush1.bf16.msra.mxu0 %v4234
        %5937 = vmatprep.subr.bf16.mxu0 0
        %5938 = vmatpush1.bf16.msra.mxu0 %v4233
        %5939 = vmatprep.subr.bf16.mxu0 0
        %5940 = vmatpush1.bf16.msra.mxu0 %v4232
        %5941 = vmatprep.subr.bf16.mxu0 0
        %5942 = vmatpush1.bf16.msra.mxu0 %v4231
        %5943 = vmatprep.subr.bf16.mxu0 0
        %5944 = vmatpush2.bf16.msra.mxu0 %v4246
        %5945 = vmatprep.subr.bf16.mxu0 0
        %5946 = vmatpush2.bf16.msra.mxu0 %v4245
        %5947 = vmatprep.subr.bf16.mxu0 0
        %5948 = vmatpush2.bf16.msra.mxu0 %v4244
        %5949 = vmatprep.subr.bf16.mxu0 0
        %5950 = vmatpush2.bf16.msra.mxu0 %v4243
        %5951 = vmatprep.subr.bf16.mxu0 0
        %5952 = vmatpush2.bf16.msra.mxu0 %v4242
        %5953 = vmatprep.subr.bf16.mxu0 0
        %5954 = vmatpush2.bf16.msra.mxu0 %v4241
        %5955 = vmatprep.subr.bf16.mxu0 0
        %5956 = vmatpush2.bf16.msra.mxu0 %v4240
        %5957 = vmatprep.subr.bf16.mxu0 0
        %5958 = vmatpush2.bf16.msra.mxu0 %v4239
        %5959 = vmatprep.mubr.bf16.mxu0 %v1659
        %5960 = vmatmul.mubr.bf16.gmra.mxu0 %v1645
        %v5961 = vpop.f32.mrf.mxu0
        %v5962 = vadd.f32 %v5922, %v5961
        %v5963 = vpop.f32.mrf.mxu0
        %v5964 = vpop.f32.mrf.mxu0
        %v5965 = vpop.f32.mrf.mxu0
        %5966 = vdwg.mxu0
        %5967 = vmatprep.subr.bf16.mxu0 0
        %5968 = vmatpush1.bf16.msra.mxu0 %v4254
        %5969 = vmatprep.subr.bf16.mxu0 0
        %5970 = vmatpush1.bf16.msra.mxu0 %v4253
        %5971 = vmatprep.subr.bf16.mxu0 0
        %5972 = vmatpush1.bf16.msra.mxu0 %v4252
        %5973 = vmatprep.subr.bf16.mxu0 0
        %5974 = vmatpush1.bf16.msra.mxu0 %v4251
        %5975 = vmatprep.subr.bf16.mxu0 0
        %5976 = vmatpush1.bf16.msra.mxu0 %v4250
        %5977 = vmatprep.subr.bf16.mxu0 0
        %5978 = vmatpush1.bf16.msra.mxu0 %v4249
        %5979 = vmatprep.subr.bf16.mxu0 0
        %5980 = vmatpush1.bf16.msra.mxu0 %v4248
        %5981 = vmatprep.subr.bf16.mxu0 0
        %5982 = vmatpush1.bf16.msra.mxu0 %v4247
        %5983 = vmatprep.subr.bf16.mxu0 0
        %5984 = vmatpush2.bf16.msra.mxu0 %v4262
        %5985 = vmatprep.subr.bf16.mxu0 0
        %5986 = vmatpush2.bf16.msra.mxu0 %v4261
        %5987 = vmatprep.subr.bf16.mxu0 0
        %5988 = vmatpush2.bf16.msra.mxu0 %v4260
        %5989 = vmatprep.subr.bf16.mxu0 0
        %5990 = vmatpush2.bf16.msra.mxu0 %v4259
        %5991 = vmatprep.subr.bf16.mxu0 0
        %5992 = vmatpush2.bf16.msra.mxu0 %v4258
        %5993 = vmatprep.subr.bf16.mxu0 0
        %5994 = vmatpush2.bf16.msra.mxu0 %v4257
        %5995 = vmatprep.subr.bf16.mxu0 0
        %5996 = vmatpush2.bf16.msra.mxu0 %v4256
        %5997 = vmatprep.subr.bf16.mxu0 0
        %5998 = vmatpush2.bf16.msra.mxu0 %v4255
        %5999 = vmatprep.mubr.bf16.mxu0 %v1669
        %6000 = vmatmul.mubr.bf16.gmra.mxu0 %v1667
        %v6001 = vpop.f32.mrf.mxu0
        %v6002 = vadd.f32 %v5962, %v6001
        %v6003 = vpop.f32.mrf.mxu0
        %v6004 = vpop.f32.mrf.mxu0
        %v6005 = vpop.f32.mrf.mxu0
        %6006 = vdwg.mxu0
        %6007 = vmatprep.subr.bf16.mxu0 0
        %6008 = vmatpush1.bf16.msra.mxu0 %v4270
        %6009 = vmatprep.subr.bf16.mxu0 0
        %6010 = vmatpush1.bf16.msra.mxu0 %v4269
        %6011 = vmatprep.subr.bf16.mxu0 0
        %6012 = vmatpush1.bf16.msra.mxu0 %v4268
        %6013 = vmatprep.subr.bf16.mxu0 0
        %6014 = vmatpush1.bf16.msra.mxu0 %v4267
        %6015 = vmatprep.subr.bf16.mxu0 0
        %6016 = vmatpush1.bf16.msra.mxu0 %v4266
        %6017 = vmatprep.subr.bf16.mxu0 0
        %6018 = vmatpush1.bf16.msra.mxu0 %v4265
        %6019 = vmatprep.subr.bf16.mxu0 0
        %6020 = vmatpush1.bf16.msra.mxu0 %v4264
        %6021 = vmatprep.subr.bf16.mxu0 0
        %6022 = vmatpush1.bf16.msra.mxu0 %v4263
        %6023 = vmatprep.subr.bf16.mxu0 0
        %6024 = vmatpush2.bf16.msra.mxu0 %v4278
        %6025 = vmatprep.subr.bf16.mxu0 0
        %6026 = vmatpush2.bf16.msra.mxu0 %v4277
        %6027 = vmatprep.subr.bf16.mxu0 0
        %6028 = vmatpush2.bf16.msra.mxu0 %v4276
        %6029 = vmatprep.subr.bf16.mxu0 0
        %6030 = vmatpush2.bf16.msra.mxu0 %v4275
        %6031 = vmatprep.subr.bf16.mxu0 0
        %6032 = vmatpush2.bf16.msra.mxu0 %v4274
        %6033 = vmatprep.subr.bf16.mxu0 0
        %6034 = vmatpush2.bf16.msra.mxu0 %v4273
        %6035 = vmatprep.subr.bf16.mxu0 0
        %6036 = vmatpush2.bf16.msra.mxu0 %v4272
        %6037 = vmatprep.subr.bf16.mxu0 0
        %6038 = vmatpush2.bf16.msra.mxu0 %v4271
        %6039 = vmatprep.mubr.bf16.mxu0 %v1666
        %6040 = vmatmul.mubr.bf16.gmra.mxu0 %v1652
        %v6041 = vpop.f32.mrf.mxu0
        %v6042 = vadd.f32 %v6002, %v6041
        %v6043 = vpop.f32.mrf.mxu0
        %v6044 = vpop.f32.mrf.mxu0
        %v6045 = vpop.f32.mrf.mxu0
        %6046 = vdwg.mxu0
        %6047 = vmatprep.subr.bf16.mxu0 0
        %6048 = vmatpush1.bf16.msra.mxu0 %v4286
        %6049 = vmatprep.subr.bf16.mxu0 0
        %6050 = vmatpush1.bf16.msra.mxu0 %v4285
        %6051 = vmatprep.subr.bf16.mxu0 0
        %6052 = vmatpush1.bf16.msra.mxu0 %v4284
        %6053 = vmatprep.subr.bf16.mxu0 0
        %6054 = vmatpush1.bf16.msra.mxu0 %v4283
        %6055 = vmatprep.subr.bf16.mxu0 0
        %6056 = vmatpush1.bf16.msra.mxu0 %v4282
        %6057 = vmatprep.subr.bf16.mxu0 0
        %6058 = vmatpush1.bf16.msra.mxu0 %v4281
        %6059 = vmatprep.subr.bf16.mxu0 0
        %6060 = vmatpush1.bf16.msra.mxu0 %v4280
        %6061 = vmatprep.subr.bf16.mxu0 0
        %6062 = vmatpush1.bf16.msra.mxu0 %v4279
        %6063 = vmatprep.subr.bf16.mxu0 0
        %6064 = vmatpush2.bf16.msra.mxu0 %v4294
        %6065 = vmatprep.subr.bf16.mxu0 0
        %6066 = vmatpush2.bf16.msra.mxu0 %v4293
        %6067 = vmatprep.subr.bf16.mxu0 0
        %6068 = vmatpush2.bf16.msra.mxu0 %v4292
        %6069 = vmatprep.subr.bf16.mxu0 0
        %6070 = vmatpush2.bf16.msra.mxu0 %v4291
        %6071 = vmatprep.subr.bf16.mxu0 0
        %6072 = vmatpush2.bf16.msra.mxu0 %v4290
        %6073 = vmatprep.subr.bf16.mxu0 0
        %6074 = vmatpush2.bf16.msra.mxu0 %v4289
        %6075 = vmatprep.subr.bf16.mxu0 0
        %6076 = vmatpush2.bf16.msra.mxu0 %v4288
        %6077 = vmatprep.subr.bf16.mxu0 0
        %6078 = vmatpush2.bf16.msra.mxu0 %v4287
        %6079 = vmatprep.mubr.bf16.mxu0 %v1670
        %6080 = vmatmul.mubr.bf16.gmra.mxu0 %v1668
        %v6081 = vpop.f32.mrf.mxu0
        %v6082 = vadd.f32 %v6042, %v6081
        %v6083 = vpop.f32.mrf.mxu0
        %v6084 = vpop.f32.mrf.mxu0
        %v6085 = vpop.f32.mrf.mxu0
        %6086 = vdwg.mxu0
        %v6087 = vadd.f32 %v238, %v6082
        %6088 = vst [vmem:[#allocation2] sm:$0x3] %v6087
        %p6089 = scmp.eq.s32.totalorder %s17, 1
        // Predicated region
        $region45: #{simple_cnn_forward.3} parent=39 // pred_check
          %p6090 = pneg %p6089
        $region46: #{simple_cnn_forward.3} parent=39 // pred_check_branch
          %6092 = sbr.rel (%p6090) target = $region48
        $region47: #{simple_cnn_forward.3} parent=39 // pred_region
          %v6093 = vld [vmem:[#allocation2] sm:$0x3]
          %v6094 = vld [vmem:[%s2] sm:$0x1]
          %v6096 = vlaneseq
          %v6097 = vshrl.u32 %v6096, 7
          %v6098 = vsub.s32 0, %v6097
          %v6099 = vrot.slane %v6094, %v6098
          %v6101 = vadd.f32 %v6093, %v6099
          %v6102 = vmax.f32 %v6101, 0.0
          %v6103 = vld [vmem:[%s3] sm:$0xf]
          %v6104 = vld [vmem:[%s3 + $0x4] sm:$0xf]
          %v6105 = vld [vmem:[%s3 + $0x8] sm:$0xf]
          %v6106 = vld [vmem:[%s3 + $0xc] sm:$0xf]
          %v6107 = vld [vmem:[%s3 + $0x10] sm:$0xf]
          %v6108 = vld [vmem:[%s3 + $0x14] sm:$0xf]
          %v6109 = vld [vmem:[%s3 + $0x18] sm:$0xf]
          %v6110 = vld [vmem:[%s3 + $0x1c] sm:$0xf]
          %v6111 = vld [vmem:[%s3 + $0x20] sm:$0xf]
          %v6112 = vld [vmem:[%s3 + $0x24] sm:$0xf]
          %v6113 = vld [vmem:[%s3 + $0x28] sm:$0xf]
          %v6114 = vld [vmem:[%s3 + $0x2c] sm:$0xf]
          %v6115 = vld [vmem:[%s3 + $0x30] sm:$0xf]
          %v6116 = vld [vmem:[%s3 + $0x34] sm:$0xf]
          %v6117 = vld [vmem:[%s3 + $0x38] sm:$0xf]
          %v6118 = vld [vmem:[%s3 + $0x3c] sm:$0xf]
          %v6119 = vunpack.c.l.bf16 %v6103
          %v6120 = vunpack.c.l.bf16 %v6104
          %v6121 = vunpack.c.l.bf16 %v6105
          %v6122 = vunpack.c.l.bf16 %v6106
          %v6123 = vunpack.c.l.bf16 %v6107
          %v6124 = vunpack.c.l.bf16 %v6108
          %v6125 = vunpack.c.l.bf16 %v6109
          %v6126 = vunpack.c.l.bf16 %v6110
          %v6127 = vunpack.c.l.bf16 %v6111
          %v6128 = vunpack.c.l.bf16 %v6112
          %v6129 = vunpack.c.l.bf16 %v6113
          %v6130 = vunpack.c.l.bf16 %v6114
          %v6131 = vunpack.c.l.bf16 %v6115
          %v6132 = vunpack.c.l.bf16 %v6116
          %v6133 = vunpack.c.l.bf16 %v6117
          %v6134 = vunpack.c.l.bf16 %v6118
          %v6135 = vld [vmem:[%s4] sm:$0x1]
          %v6137 = vlaneseq
          %v6138 = vshrl.u32 %v6137, 7
          %v6139 = vsub.s32 0, %v6138
          %v6140 = vrot.slane %v6135, %v6139
          %6142 = vmatprep.subr.mxu0 0.0
          %6143 = vmatpush1.msra.mxu0 %v6134
          %6144 = vmatprep.subr.mxu0 0.0
          %6145 = vmatpush1.msra.mxu0 %v6133
          %6146 = vmatprep.subr.mxu0 0.0
          %6147 = vmatpush1.msra.mxu0 %v6132
          %6148 = vmatprep.subr.mxu0 0.0
          %6149 = vmatpush1.msra.mxu0 %v6131
          %6150 = vmatprep.subr.mxu0 0.0
          %6151 = vmatpush1.msra.mxu0 %v6130
          %6152 = vmatprep.subr.mxu0 0.0
          %6153 = vmatpush1.msra.mxu0 %v6129
          %6154 = vmatprep.subr.mxu0 0.0
          %6155 = vmatpush1.msra.mxu0 %v6128
          %6156 = vmatprep.subr.mxu0 0.0
          %6157 = vmatpush1.msra.mxu0 %v6127
          %6158 = vmatprep.subr.mxu0 0.0
          %6159 = vmatpush1.msra.mxu0 %v6126
          %6160 = vmatprep.subr.mxu0 0.0
          %6161 = vmatpush1.msra.mxu0 %v6125
          %6162 = vmatprep.subr.mxu0 0.0
          %6163 = vmatpush1.msra.mxu0 %v6124
          %6164 = vmatprep.subr.mxu0 0.0
          %6165 = vmatpush1.msra.mxu0 %v6123
          %6166 = vmatprep.subr.mxu0 0.0
          %6167 = vmatpush1.msra.mxu0 %v6122
          %6168 = vmatprep.subr.mxu0 0.0
          %6169 = vmatpush1.msra.mxu0 %v6121
          %6170 = vmatprep.subr.mxu0 0.0
          %6171 = vmatpush1.msra.mxu0 %v6120
          %6172 = vmatprep.subr.mxu0 0.0
          %6173 = vmatpush1.msra.mxu0 %v6119
          %6174 = vmatprep.subr.mxu0 0.0
          %6175 = vmatpush2.msra.mxu0 0.0
          %6176 = vmatprep.subr.mxu0 0.0
          %6177 = vmatpush2.msra.mxu0 0.0
          %6178 = vmatprep.subr.mxu0 0.0
          %6179 = vmatpush2.msra.mxu0 0.0
          %6180 = vmatprep.subr.mxu0 0.0
          %6181 = vmatpush2.msra.mxu0 0.0
          %6182 = vmatprep.subr.mxu0 0.0
          %6183 = vmatpush2.msra.mxu0 0.0
          %6184 = vmatprep.subr.mxu0 0.0
          %6185 = vmatpush2.msra.mxu0 0.0
          %6186 = vmatprep.subr.mxu0 0.0
          %6187 = vmatpush2.msra.mxu0 0.0
          %6188 = vmatprep.subr.mxu0 0.0
          %6189 = vmatpush2.msra.mxu0 0.0
          %6190 = vmatprep.subr.mxu0 0.0
          %6191 = vmatpush2.msra.mxu0 0.0
          %6192 = vmatprep.subr.mxu0 0.0
          %6193 = vmatpush2.msra.mxu0 0.0
          %6194 = vmatprep.subr.mxu0 0.0
          %6195 = vmatpush2.msra.mxu0 0.0
          %6196 = vmatprep.subr.mxu0 0.0
          %6197 = vmatpush2.msra.mxu0 0.0
          %6198 = vmatprep.subr.mxu0 0.0
          %6199 = vmatpush2.msra.mxu0 0.0
          %6200 = vmatprep.subr.mxu0 0.0
          %6201 = vmatpush2.msra.mxu0 0.0
          %6202 = vmatprep.subr.mxu0 0.0
          %6203 = vmatpush2.msra.mxu0 0.0
          %6204 = vmatprep.subr.mxu0 0.0
          %6205 = vmatpush2.msra.mxu0 0.0
          %6206 = vmatprep.mubr.f32.mxu0 0.0
          %6207 = vmatmul.mubr.f32.gmra.mxu0 %v6102
          %v6208 = vpop.f32.mrf.mxu0
          %v6209 = vadd.f32 %v6140, %v6208
          %v6210 = vpop.f32.mrf.mxu0
          %6211 = vdwg.mxu0
          %vm6212 = vcmask 9216
          %v6213 = vsel %vm6212, %v6209, -inf
          %6214 = vmax.xlane.f32.xlu0 %v6213
          %v6215 = vpop.xlane.xlu0 %6214
          %v6216 = vsub.f32 %v6209, %v6215
          %v6217 = vmul.f32 %v6216, 1.442695
          %v6218 = vpow.pop %v6217
          %v6219 = vsel %vm6212, %v6218, 0.0
          %6220 = vadd.xlane.f32.xlu0 %v6219
          %v6221 = vpop.xlane.xlu0 %6220
          %v6222 = vlog2.pop %v6221
          %v6223 = vmul.f32 %v6222, 0.6931472
          %v6224 = vsub.f32 %v6216, %v6223
          %6225 = vst.msk [vmem:[#allocation3] sm:$0x3] %vm6212, %v6224
        $region48: #{simple_cnn_forward.3} parent=39 // pred_fallthru
          _
        // Predicated region
        $region49: #{simple_cnn_forward.3} parent=39 // pred_check
          %p6226 = pneg %p145
        $region50: #{simple_cnn_forward.3} parent=39 // pred_check_branch
          %6228 = sbr.rel (%p6226) target = $region52
        $region51: #{simple_cnn_forward.3} parent=39 // pred_region
          %s6230 = ssub.s32 32, 32
          %6231 = vsyncadd [#allocation4], %s6230
          %s6233 = sshll.u32 [#allocation3], 4
          %s6234 = int_to_ptr.vmem [resolvable:$true] %s6233
          %6236 = dma.vmem_to_hbm [thread:$0]  %s6234, 32, %s5, [#allocation4]
        $region52: #{simple_cnn_forward.3} parent=39 // pred_fallthru
          _
        // Predicated region
        $region53: #{simple_cnn_forward.3} parent=39 // pred_check
          %p6237 = pneg %p145
        $region54: #{simple_cnn_forward.3} parent=39 // pred_check_branch
          %6239 = sbr.rel (%p6237) target = $region56
        $region55: #{simple_cnn_forward.3} parent=39 // pred_region
          %6240 = dma.done [#allocation4], 32
        $region56: #{simple_cnn_forward.3} parent=39 // pred_fallthru
          _
      $region40: #{simple_cnn_forward.3} parent=5 // pred_fallthru
        _
      %p6241 = scmp.le.s32.totalorder 2, %s12
      // Predicated region
      $region57: #{simple_cnn_forward.3} parent=5 // pred_check
        %p6242 = pneg %p6241
      $region58: #{simple_cnn_forward.3} parent=5 // pred_check_branch
        %6244 = sbr.rel (%p6242) target = $region60
      $region59: #{simple_cnn_forward.3} parent=5 // pred_region
        %s6245 = ssub.s32 %s12, 2
      $region60: #{simple_cnn_forward.3} parent=5 // pred_fallthru
        _
    $region6: #{simple_cnn_forward.3} parent=1 // loop_footer
      %s16 = sadd.s32 1, %s12
    $region7: #{simple_cnn_forward.3} parent=1 // loop_footer_branch
      %11 = sbr.rel target = $region3
    $region8: #{simple_cnn_forward.3} parent=1 // loop_exit
      _
    %6246 = vsyncpa [#allocation4], 1
    %s6247 = scalar_lea.sflag [#allocation4], 1
    %6248 = vsyncpa %s6247, 1

// kernel: simple_cnn_forward.2
$region0: #{simple_cnn_forward.2}
  #allocation0 [shape = 'u32[]', space=smem, size = 0x4, offset = 0x4, fixed_abs, tag = 'smem constant byte address 0x4 - core index']
  #allocation1 [shape = 'u32[144,128]{1,0:T(1,128)}', space=vmem, size = 0x12000, scoped, tag = 'internal scratch']
  #allocation2 [shape = 'bf16[34,48,32]{2,1,0:T(8,128)(2,1)}', space=vmem, size = 0x66000, scoped, tag = 'scratch operand']
  #allocation3 [shape = 'f32[4,64,32]{2,1,0:T(8,128)}', space=vmem, size = 0x20000, scoped, tag = 'scratch operand']
  #allocation4 [shape = 'f32[4,32,64]{2,1,0:T(8,128)}', space=vmem, size = 0x10000, scoped, tag = 'scratch operand']
  %s0 = inlined_call_operand.vmem [shape: bf16[2,64,64,27], index: 0, kind: input, shape index: {}]
  %s1 = inlined_call_operand.vmem [shape: bf16[27,32], index: 1, kind: input, shape index: {}]
  %s2 = inlined_call_operand.vmem [shape: f32[1,32], index: 2, kind: input, shape index: {}]
  %s3 = inlined_call_operand.vmem [shape: bf16[9,32,64], index: 3, kind: input, shape index: {}]
  %s4 = inlined_call_operand.vmem [shape: f32[1,64], index: 4, kind: input, shape index: {}]
  %s5 = inlined_call_operand.vmem [shape: bf16[2,16,16,64], index: 5, kind: output, shape index: {}]
  %s6 = sld [smem:[#allocation0]]
  $region67: #{simple_cnn_forward.2} parent=0
    _
  %s8 = ssub.s32 1, %s6
  %s9 = scalar_select 0, %s8, %s6
  loop: start=0, step=1, limit=4
  $region2: #{simple_cnn_forward.2} parent=0 // loop_pre_header
    _
  $region3: #{simple_cnn_forward.2} parent=0 // loop_header
    %s11 = sphi 0, %s15
    %p12 = scmp.ge.s32.totalorder %s11, 4
    %s21 = sphi 0, %s23
    %s24 = sphi 0, %s21
    %s25 = sphi 0, %s24
    %s41 = sphi 0, %s25
    %s45 = sphi 0, %s45
    %s47 = sphi 0, %s45
    %s48 = sphi 0, %s47
    %s62 = sphi 0, %s48
    %s66 = sphi 0, %s66
    %s68 = sphi 0, %s66
    %s69 = sphi 0, %s68
    %s83 = sphi 0, %s69
    %s87 = sphi 0, %s87
    %s89 = sphi 0, %s87
    %s90 = sphi 0, %s89
    %s104 = sphi 0, %s90
    %s108 = sphi 0, %s108
    %s110 = sphi 0, %s108
    %s111 = sphi 0, %s110
    %s125 = sphi 0, %s111
    %s131 = sphi 0, %s133
    %s134 = sphi 0, %s131
    %s135 = sphi 0, %s134
    %s151 = sphi 0, %s135
  $region4: #{simple_cnn_forward.2} parent=0 // loop_header_branch
    %14 = sbr.rel (%p12) target = $region8
  $region5: #{simple_cnn_forward.2} parent=0 // loop_body
    %s16 = ssub.s32 %s11, 1
    %s17 = ssub.s32 %s11, 2
    %s18 = sadd.s32 %s11, 1
    %s19 = ssub.s32 %s11, %s18
    %p20 = scmp.eq.s32.totalorder %s19, 0
    %s22 = sadd.s32 %s21, 1
    %s23 = scalar_select %p20, %s21, %s22
    %p26 = pneg %p20
    %p27 = scmp.eq.s32.totalorder %s11, 1
    %p28 = por %p26, %p27
    %p29 = scmp.ne.s32.totalorder %s21, %s24
    %p30 = scmp.eq.s32.totalorder %s11, 0
    %p31 = por %p29, %p30
    %p32 = scmp.ne.s32.totalorder %s21, %s24
    %p33 = scmp.eq.s32.totalorder %s16, 1
    %p34 = por %p32, %p33
    %p35 = scmp.ne.s32.totalorder %s24, %s25
    %p36 = scmp.eq.s32.totalorder %s16, 0
    %p37 = por %p35, %p36
    %p38 = scmp.ne.s32.totalorder %s24, %s25
    %p39 = scmp.eq.s32.totalorder %s17, 1
    %p40 = por %p38, %p39
    %p42 = scmp.ne.s32.totalorder %s25, %s41
    %p43 = scmp.eq.s32.totalorder %s17, 0
    %p44 = por %p42, %p43
    %s46 = sadd.s32 %s45, 1
    %p49 = scmp.eq.s32.totalorder %s11, 1
    %p50 = scmp.ne.s32.totalorder %s45, %s47
    %p51 = scmp.eq.s32.totalorder %s11, 0
    %p52 = por %p50, %p51
    %p53 = scmp.ne.s32.totalorder %s45, %s47
    %p54 = scmp.eq.s32.totalorder %s16, 1
    %p55 = por %p53, %p54
    %p56 = scmp.ne.s32.totalorder %s47, %s48
    %p57 = scmp.eq.s32.totalorder %s16, 0
    %p58 = por %p56, %p57
    %p59 = scmp.ne.s32.totalorder %s47, %s48
    %p60 = scmp.eq.s32.totalorder %s17, 1
    %p61 = por %p59, %p60
    %p63 = scmp.ne.s32.totalorder %s48, %s62
    %p64 = scmp.eq.s32.totalorder %s17, 0
    %p65 = por %p63, %p64
    %s67 = sadd.s32 %s66, 1
    %p70 = scmp.eq.s32.totalorder %s11, 1
    %p71 = scmp.ne.s32.totalorder %s66, %s68
    %p72 = scmp.eq.s32.totalorder %s11, 0
    %p73 = por %p71, %p72
    %p74 = scmp.ne.s32.totalorder %s66, %s68
    %p75 = scmp.eq.s32.totalorder %s16, 1
    %p76 = por %p74, %p75
    %p77 = scmp.ne.s32.totalorder %s68, %s69
    %p78 = scmp.eq.s32.totalorder %s16, 0
    %p79 = por %p77, %p78
    %p80 = scmp.ne.s32.totalorder %s68, %s69
    %p81 = scmp.eq.s32.totalorder %s17, 1
    %p82 = por %p80, %p81
    %p84 = scmp.ne.s32.totalorder %s69, %s83
    %p85 = scmp.eq.s32.totalorder %s17, 0
    %p86 = por %p84, %p85
    %s88 = sadd.s32 %s87, 1
    %p91 = scmp.eq.s32.totalorder %s11, 1
    %p92 = scmp.ne.s32.totalorder %s87, %s89
    %p93 = scmp.eq.s32.totalorder %s11, 0
    %p94 = por %p92, %p93
    %p95 = scmp.ne.s32.totalorder %s87, %s89
    %p96 = scmp.eq.s32.totalorder %s16, 1
    %p97 = por %p95, %p96
    %p98 = scmp.ne.s32.totalorder %s89, %s90
    %p99 = scmp.eq.s32.totalorder %s16, 0
    %p100 = por %p98, %p99
    %p101 = scmp.ne.s32.totalorder %s89, %s90
    %p102 = scmp.eq.s32.totalorder %s17, 1
    %p103 = por %p101, %p102
    %p105 = scmp.ne.s32.totalorder %s90, %s104
    %p106 = scmp.eq.s32.totalorder %s17, 0
    %p107 = por %p105, %p106
    %s109 = sadd.s32 %s108, 1
    %p112 = scmp.eq.s32.totalorder %s11, 1
    %p113 = scmp.ne.s32.totalorder %s108, %s110
    %p114 = scmp.eq.s32.totalorder %s11, 0
    %p115 = por %p113, %p114
    %p116 = scmp.ne.s32.totalorder %s108, %s110
    %p117 = scmp.eq.s32.totalorder %s16, 1
    %p118 = por %p116, %p117
    %p119 = scmp.ne.s32.totalorder %s110, %s111
    %p120 = scmp.eq.s32.totalorder %s16, 0
    %p121 = por %p119, %p120
    %p122 = scmp.ne.s32.totalorder %s110, %s111
    %p123 = scmp.eq.s32.totalorder %s17, 1
    %p124 = por %p122, %p123
    %p126 = scmp.ne.s32.totalorder %s111, %s125
    %p127 = scmp.eq.s32.totalorder %s17, 0
    %p128 = por %p126, %p127
    %s129 = ssub.s32 %s11, %s18
    %p130 = scmp.eq.s32.totalorder %s129, 0
    %s132 = sadd.s32 %s131, 1
    %s133 = scalar_select %p130, %s131, %s132
    %p136 = pneg %p130
    %p137 = scmp.eq.s32.totalorder %s11, 1
    %p138 = por %p136, %p137
    %p139 = scmp.ne.s32.totalorder %s131, %s134
    %p140 = scmp.eq.s32.totalorder %s11, 0
    %p141 = por %p139, %p140
    %p142 = scmp.ne.s32.totalorder %s131, %s134
    %p143 = scmp.eq.s32.totalorder %s16, 1
    %p144 = por %p142, %p143
    %p145 = scmp.ne.s32.totalorder %s134, %s135
    %p146 = scmp.eq.s32.totalorder %s16, 0
    %p147 = por %p145, %p146
    %p148 = scmp.ne.s32.totalorder %s134, %s135
    %p149 = scmp.eq.s32.totalorder %s17, 1
    %p150 = por %p148, %p149
    %p152 = scmp.ne.s32.totalorder %s135, %s151
    %p153 = scmp.eq.s32.totalorder %s17, 0
    %p154 = por %p152, %p153
    %p155 = scmp.le.s32.totalorder 1, %s11
    %p156 = scmp.lt.s32.totalorder %s11, 3
    %p157 = pnand %p155, %p156
    %p158 = pneg %p157
    // Predicated region
    $region9: #{simple_cnn_forward.2} parent=5 // pred_check
      _
    $region10: #{simple_cnn_forward.2} parent=5 // pred_check_branch
      %160 = sbr.rel (%p157) target = $region12
    $region11: #{simple_cnn_forward.2} parent=5 // pred_region
      %s161 = ssub.s32 %s11, 1
      // Predicated region
      $region13: #{simple_cnn_forward.2} parent=11 // pred_check
        %p162 = pneg %p58
      $region14: #{simple_cnn_forward.2} parent=11 // pred_check_branch
        %164 = sbr.rel (%p162) target = $region16
      $region15: #{simple_cnn_forward.2} parent=11 // pred_region
        _
      $region16: #{simple_cnn_forward.2} parent=11 // pred_fallthru
        _
      // Predicated region
      $region17: #{simple_cnn_forward.2} parent=11 // pred_check
        %p165 = pneg %p79
      $region18: #{simple_cnn_forward.2} parent=11 // pred_check_branch
        %167 = sbr.rel (%p165) target = $region20
      $region19: #{simple_cnn_forward.2} parent=11 // pred_region
        _
      $region20: #{simple_cnn_forward.2} parent=11 // pred_fallthru
        _
      // Predicated region
      $region21: #{simple_cnn_forward.2} parent=11 // pred_check
        %p168 = pneg %p100
      $region22: #{simple_cnn_forward.2} parent=11 // pred_check_branch
        %170 = sbr.rel (%p168) target = $region24
      $region23: #{simple_cnn_forward.2} parent=11 // pred_region
        _
      $region24: #{simple_cnn_forward.2} parent=11 // pred_fallthru
        _
      // Predicated region
      $region25: #{simple_cnn_forward.2} parent=11 // pred_check
        %p171 = pneg %p121
      $region26: #{simple_cnn_forward.2} parent=11 // pred_check_branch
        %173 = sbr.rel (%p171) target = $region28
      $region27: #{simple_cnn_forward.2} parent=11 // pred_region
        _
      $region28: #{simple_cnn_forward.2} parent=11 // pred_fallthru
        _
    $region12: #{simple_cnn_forward.2} parent=5 // pred_fallthru
      _
    %p174 = scmp.lt.s32.totalorder %s11, 2
    // Predicated region
    $region29: #{simple_cnn_forward.2} parent=5 // pred_check
      %p175 = pneg %p174
    $region30: #{simple_cnn_forward.2} parent=5 // pred_check_branch
      %177 = sbr.rel (%p175) target = $region32
    $region31: #{simple_cnn_forward.2} parent=5 // pred_region
      // Predicated region
      $region33: #{simple_cnn_forward.2} parent=31 // pred_check
        %p178 = pneg %p31
      $region34: #{simple_cnn_forward.2} parent=31 // pred_check_branch
        %180 = sbr.rel (%p178) target = $region36
      $region35: #{simple_cnn_forward.2} parent=31 // pred_region
        %p181 = scmp.lt.s32.totalorder %s11, 1
        %s182 = scalar_select %p181, %s11, 1
        %s183 = smul.addr %s182, 512
        %s184 = smul.addr %s183, 4
        %s185 = scalar_lea.vmem %s0, %s184
      $region36: #{simple_cnn_forward.2} parent=31 // pred_fallthru
        _
    $region32: #{simple_cnn_forward.2} parent=5 // pred_fallthru
      _
    %p186 = scmp.le.s32.totalorder 1, %s11
    %p187 = scmp.lt.s32.totalorder %s11, 3
    %p188 = pnand %p186, %p187
    %p189 = pneg %p188
    // Predicated region
    $region37: #{simple_cnn_forward.2} parent=5 // pred_check
      _
    $region38: #{simple_cnn_forward.2} parent=5 // pred_check_branch
      %191 = sbr.rel (%p188) target = $region40
    $region39: #{simple_cnn_forward.2} parent=5 // pred_region
      %s192 = ssub.s32 %s11, 1
      %p193 = scmp.lt.s32.totalorder %s16, 1
      %s194 = scalar_select %p193, %s16, 1
      %s195 = smul.addr %s194, 512
      %s196 = smul.addr %s195, 4
      %s197 = scalar_lea.vmem %s0, %s196
      %p198 = pneg %p37
      %p199 = pneg %p34
      %p200 = pneg %p58
      %p201 = pneg %p55
      %p202 = pneg %p79
      %p203 = pneg %p76
      %p204 = pneg %p100
      %p205 = pneg %p97
      %p206 = pneg %p121
      %p207 = pneg %p118
      %p208 = pneg %p147
      %p209 = pneg %p144
      %p210 = scmp.lt.s32.totalorder %s16, 1
      %s211 = scalar_select %p210, %s16, 1
      %s212 = smul.addr %s211, 32
      %s213 = smul.addr %s212, 4
      %s214 = scalar_lea.vmem %s5, %s213
      %p215 = scmp.lt.s32.totalorder %s16, 1
      %s216 = scalar_select %p215, %s16, 1
      %s217 = smul.addr %s216, 512
      %s218 = smul.addr %s217, 4
      %s219 = scalar_lea.vmem %s0, %s218
      %p220 = scmp.lt.s32.totalorder %s16, 1
      %s221 = scalar_select %p220, %s16, 1
      %s222 = smul.addr %s221, 32
      %s223 = smul.addr %s222, 4
      %s224 = scalar_lea.vmem %s5, %s223
      %vm226 = vcmask 257024
      %227 = vst.msk [vmem:[#allocation2] sm:$0xf] %vm226, 0
      %228 = vst.msk [vmem:[#allocation2 + $0x4] sm:$0xf] %vm226, 0
      %229 = vst.msk [vmem:[#allocation2 + $0x8] sm:$0xf] %vm226, 0
      %230 = vst.msk [vmem:[#allocation2 + $0xc] sm:$0xf] %vm226, 0
      %231 = vst.msk [vmem:[#allocation2 + $0x10] sm:$0xf] %vm226, 0
      %232 = vst.msk [vmem:[#allocation2 + $0x14] sm:$0xf] %vm226, 0
      %s233 = scalar_lea.vmem [#allocation2], 792
      %234 = vst.msk [vmem:[%s233] sm:$0xf] %vm226, 0
      %235 = vst.msk [vmem:[%s233 + $0x4] sm:$0xf] %vm226, 0
      %236 = vst.msk [vmem:[%s233 + $0x8] sm:$0xf] %vm226, 0
      %237 = vst.msk [vmem:[%s233 + $0xc] sm:$0xf] %vm226, 0
      %238 = vst.msk [vmem:[%s233 + $0x10] sm:$0xf] %vm226, 0
      %239 = vst.msk [vmem:[%s233 + $0x14] sm:$0xf] %vm226, 0
      %vm240 = vcmask 257027
      %vm241 = vsmask.f32 7950
      %vm242 = vmand %vm240, %vm241
      %v243 = vld [vmem:[#allocation2] sm:$0x8]
      %v244 = vsel %vm242, 0, %v243
      %245 = vst [vmem:[#allocation2] sm:$0x8] %v244
      %v246 = vld [vmem:[#allocation2 + $0x18] sm:$0x8]
      %v247 = vsel %vm242, 0, %v246
      %248 = vst [vmem:[#allocation2 + $0x18] sm:$0x8] %v247
      %v249 = vld [vmem:[#allocation2 + $0x30] sm:$0x8]
      %v250 = vsel %vm242, 0, %v249
      %251 = vst [vmem:[#allocation2 + $0x30] sm:$0x8] %v250
      %v252 = vld [vmem:[#allocation2 + $0x48] sm:$0x8]
      %v253 = vsel %vm242, 0, %v252
      %254 = vst [vmem:[#allocation2 + $0x48] sm:$0x8] %v253
      %v255 = vld [vmem:[#allocation2 + $0x60] sm:$0x8]
      %v256 = vsel %vm242, 0, %v255
      %257 = vst [vmem:[#allocation2 + $0x60] sm:$0x8] %v256
      %v258 = vld [vmem:[#allocation2 + $0x78] sm:$0x8]
      %v259 = vsel %vm242, 0, %v258
      %260 = vst [vmem:[#allocation2 + $0x78] sm:$0x8] %v259
      %v261 = vld [vmem:[#allocation2 + $0x90] sm:$0x8]
      %v262 = vsel %vm242, 0, %v261
      %263 = vst [vmem:[#allocation2 + $0x90] sm:$0x8] %v262
      %v264 = vld [vmem:[#allocation2 + $0xa8] sm:$0x8]
      %v265 = vsel %vm242, 0, %v264
      %266 = vst [vmem:[#allocation2 + $0xa8] sm:$0x8] %v265
      %v267 = vld [vmem:[#allocation2 + $0xc0] sm:$0x8]
      %v268 = vsel %vm242, 0, %v267
      %269 = vst [vmem:[#allocation2 + $0xc0] sm:$0x8] %v268
      %v270 = vld [vmem:[#allocation2 + $0xd8] sm:$0x8]
      %v271 = vsel %vm242, 0, %v270
      %272 = vst [vmem:[#allocation2 + $0xd8] sm:$0x8] %v271
      %v273 = vld [vmem:[#allocation2 + $0xf0] sm:$0x8]
      %v274 = vsel %vm242, 0, %v273
      %275 = vst [vmem:[#allocation2 + $0xf0] sm:$0x8] %v274
      %v276 = vld [vmem:[#allocation2 + $0x108] sm:$0x8]
      %v277 = vsel %vm242, 0, %v276
      %278 = vst [vmem:[#allocation2 + $0x108] sm:$0x8] %v277
      %v279 = vld [vmem:[#allocation2 + $0x120] sm:$0x8]
      %v280 = vsel %vm242, 0, %v279
      %281 = vst [vmem:[#allocation2 + $0x120] sm:$0x8] %v280
      %v282 = vld [vmem:[#allocation2 + $0x138] sm:$0x8]
      %v283 = vsel %vm242, 0, %v282
      %284 = vst [vmem:[#allocation2 + $0x138] sm:$0x8] %v283
      %v285 = vld [vmem:[#allocation2 + $0x150] sm:$0x8]
      %v286 = vsel %vm242, 0, %v285
      %287 = vst [vmem:[#allocation2 + $0x150] sm:$0x8] %v286
      %v288 = vld [vmem:[#allocation2 + $0x168] sm:$0x8]
      %v289 = vsel %vm242, 0, %v288
      %290 = vst [vmem:[#allocation2 + $0x168] sm:$0x8] %v289
      %v291 = vld [vmem:[#allocation2 + $0x180] sm:$0x8]
      %v292 = vsel %vm242, 0, %v291
      %293 = vst [vmem:[#allocation2 + $0x180] sm:$0x8] %v292
      %v294 = vld [vmem:[#allocation2 + $0x198] sm:$0x8]
      %v295 = vsel %vm242, 0, %v294
      %296 = vst [vmem:[#allocation2 + $0x198] sm:$0x8] %v295
      %v297 = vld [vmem:[#allocation2 + $0x1b0] sm:$0x8]
      %v298 = vsel %vm242, 0, %v297
      %299 = vst [vmem:[#allocation2 + $0x1b0] sm:$0x8] %v298
      %v300 = vld [vmem:[#allocation2 + $0x1c8] sm:$0x8]
      %v301 = vsel %vm242, 0, %v300
      %302 = vst [vmem:[#allocation2 + $0x1c8] sm:$0x8] %v301
      %v303 = vld [vmem:[#allocation2 + $0x1e0] sm:$0x8]
      %v304 = vsel %vm242, 0, %v303
      %305 = vst [vmem:[#allocation2 + $0x1e0] sm:$0x8] %v304
      %v306 = vld [vmem:[#allocation2 + $0x1f8] sm:$0x8]
      %v307 = vsel %vm242, 0, %v306
      %308 = vst [vmem:[#allocation2 + $0x1f8] sm:$0x8] %v307
      %v309 = vld [vmem:[#allocation2 + $0x210] sm:$0x8]
      %v310 = vsel %vm242, 0, %v309
      %311 = vst [vmem:[#allocation2 + $0x210] sm:$0x8] %v310
      %v312 = vld [vmem:[#allocation2 + $0x228] sm:$0x8]
      %v313 = vsel %vm242, 0, %v312
      %314 = vst [vmem:[#allocation2 + $0x228] sm:$0x8] %v313
      %v315 = vld [vmem:[#allocation2 + $0x240] sm:$0x8]
      %v316 = vsel %vm242, 0, %v315
      %317 = vst [vmem:[#allocation2 + $0x240] sm:$0x8] %v316
      %v318 = vld [vmem:[#allocation2 + $0x258] sm:$0x8]
      %v319 = vsel %vm242, 0, %v318
      %320 = vst [vmem:[#allocation2 + $0x258] sm:$0x8] %v319
      %v321 = vld [vmem:[#allocation2 + $0x270] sm:$0x8]
      %v322 = vsel %vm242, 0, %v321
      %323 = vst [vmem:[#allocation2 + $0x270] sm:$0x8] %v322
      %v324 = vld [vmem:[#allocation2 + $0x288] sm:$0x8]
      %v325 = vsel %vm242, 0, %v324
      %326 = vst [vmem:[#allocation2 + $0x288] sm:$0x8] %v325
      %v327 = vld [vmem:[#allocation2 + $0x2a0] sm:$0x8]
      %v328 = vsel %vm242, 0, %v327
      %329 = vst [vmem:[#allocation2 + $0x2a0] sm:$0x8] %v328
      %v330 = vld [vmem:[#allocation2 + $0x2b8] sm:$0x8]
      %v331 = vsel %vm242, 0, %v330
      %332 = vst [vmem:[#allocation2 + $0x2b8] sm:$0x8] %v331
      %v333 = vld [vmem:[#allocation2 + $0x2d0] sm:$0x8]
      %v334 = vsel %vm242, 0, %v333
      %335 = vst [vmem:[#allocation2 + $0x2d0] sm:$0x8] %v334
      %v336 = vld [vmem:[#allocation2 + $0x2e8] sm:$0x8]
      %v337 = vsel %vm242, 0, %v336
      %338 = vst [vmem:[#allocation2 + $0x2e8] sm:$0x8] %v337
      %v339 = vld [vmem:[#allocation2 + $0x300] sm:$0x8]
      %v340 = vsel %vm242, 0, %v339
      %341 = vst [vmem:[#allocation2 + $0x300] sm:$0x8] %v340
      %v342 = vld [vmem:[#allocation2 + $0x318] sm:$0x8]
      %v343 = vsel %vm242, 0, %v342
      %344 = vst [vmem:[#allocation2 + $0x318] sm:$0x8] %v343
      %vm345 = vcmask 253952
      %vm346 = vsmask.f32 256
      %vm347 = vmand %vm345, %vm346
      %v348 = vld [vmem:[#allocation2 + $0x14] sm:$0x1]
      %v349 = vsel %vm347, 0, %v348
      %350 = vst [vmem:[#allocation2 + $0x14] sm:$0x1] %v349
      %v351 = vld [vmem:[#allocation2 + $0x2c] sm:$0x1]
      %v352 = vsel %vm347, 0, %v351
      %353 = vst [vmem:[#allocation2 + $0x2c] sm:$0x1] %v352
      %v354 = vld [vmem:[#allocation2 + $0x44] sm:$0x1]
      %v355 = vsel %vm347, 0, %v354
      %356 = vst [vmem:[#allocation2 + $0x44] sm:$0x1] %v355
      %v357 = vld [vmem:[#allocation2 + $0x5c] sm:$0x1]
      %v358 = vsel %vm347, 0, %v357
      %359 = vst [vmem:[#allocation2 + $0x5c] sm:$0x1] %v358
      %v360 = vld [vmem:[#allocation2 + $0x74] sm:$0x1]
      %v361 = vsel %vm347, 0, %v360
      %362 = vst [vmem:[#allocation2 + $0x74] sm:$0x1] %v361
      %v363 = vld [vmem:[#allocation2 + $0x8c] sm:$0x1]
      %v364 = vsel %vm347, 0, %v363
      %365 = vst [vmem:[#allocation2 + $0x8c] sm:$0x1] %v364
      %v366 = vld [vmem:[#allocation2 + $0xa4] sm:$0x1]
      %v367 = vsel %vm347, 0, %v366
      %368 = vst [vmem:[#allocation2 + $0xa4] sm:$0x1] %v367
      %v369 = vld [vmem:[#allocation2 + $0xbc] sm:$0x1]
      %v370 = vsel %vm347, 0, %v369
      %371 = vst [vmem:[#allocation2 + $0xbc] sm:$0x1] %v370
      %v372 = vld [vmem:[#allocation2 + $0xd4] sm:$0x1]
      %v373 = vsel %vm347, 0, %v372
      %374 = vst [vmem:[#allocation2 + $0xd4] sm:$0x1] %v373
      %v375 = vld [vmem:[#allocation2 + $0xec] sm:$0x1]
      %v376 = vsel %vm347, 0, %v375
      %377 = vst [vmem:[#allocation2 + $0xec] sm:$0x1] %v376
      %v378 = vld [vmem:[#allocation2 + $0x104] sm:$0x1]
      %v379 = vsel %vm347, 0, %v378
      %380 = vst [vmem:[#allocation2 + $0x104] sm:$0x1] %v379
      %v381 = vld [vmem:[#allocation2 + $0x11c] sm:$0x1]
      %v382 = vsel %vm347, 0, %v381
      %383 = vst [vmem:[#allocation2 + $0x11c] sm:$0x1] %v382
      %v384 = vld [vmem:[#allocation2 + $0x134] sm:$0x1]
      %v385 = vsel %vm347, 0, %v384
      %386 = vst [vmem:[#allocation2 + $0x134] sm:$0x1] %v385
      %v387 = vld [vmem:[#allocation2 + $0x14c] sm:$0x1]
      %v388 = vsel %vm347, 0, %v387
      %389 = vst [vmem:[#allocation2 + $0x14c] sm:$0x1] %v388
      %v390 = vld [vmem:[#allocation2 + $0x164] sm:$0x1]
      %v391 = vsel %vm347, 0, %v390
      %392 = vst [vmem:[#allocation2 + $0x164] sm:$0x1] %v391
      %v393 = vld [vmem:[#allocation2 + $0x17c] sm:$0x1]
      %v394 = vsel %vm347, 0, %v393
      %395 = vst [vmem:[#allocation2 + $0x17c] sm:$0x1] %v394
      %v396 = vld [vmem:[#allocation2 + $0x194] sm:$0x1]
      %v397 = vsel %vm347, 0, %v396
      %398 = vst [vmem:[#allocation2 + $0x194] sm:$0x1] %v397
      %v399 = vld [vmem:[#allocation2 + $0x1ac] sm:$0x1]
      %v400 = vsel %vm347, 0, %v399
      %401 = vst [vmem:[#allocation2 + $0x1ac] sm:$0x1] %v400
      %v402 = vld [vmem:[#allocation2 + $0x1c4] sm:$0x1]
      %v403 = vsel %vm347, 0, %v402
      %404 = vst [vmem:[#allocation2 + $0x1c4] sm:$0x1] %v403
      %v405 = vld [vmem:[#allocation2 + $0x1dc] sm:$0x1]
      %v406 = vsel %vm347, 0, %v405
      %407 = vst [vmem:[#allocation2 + $0x1dc] sm:$0x1] %v406
      %v408 = vld [vmem:[#allocation2 + $0x1f4] sm:$0x1]
      %v409 = vsel %vm347, 0, %v408
      %410 = vst [vmem:[#allocation2 + $0x1f4] sm:$0x1] %v409
      %v411 = vld [vmem:[#allocation2 + $0x20c] sm:$0x1]
      %v412 = vsel %vm347, 0, %v411
      %413 = vst [vmem:[#allocation2 + $0x20c] sm:$0x1] %v412
      %v414 = vld [vmem:[#allocation2 + $0x224] sm:$0x1]
      %v415 = vsel %vm347, 0, %v414
      %416 = vst [vmem:[#allocation2 + $0x224] sm:$0x1] %v415
      %v417 = vld [vmem:[#allocation2 + $0x23c] sm:$0x1]
      %v418 = vsel %vm347, 0, %v417
      %419 = vst [vmem:[#allocation2 + $0x23c] sm:$0x1] %v418
      %v420 = vld [vmem:[#allocation2 + $0x254] sm:$0x1]
      %v421 = vsel %vm347, 0, %v420
      %422 = vst [vmem:[#allocation2 + $0x254] sm:$0x1] %v421
      %v423 = vld [vmem:[#allocation2 + $0x26c] sm:$0x1]
      %v424 = vsel %vm347, 0, %v423
      %425 = vst [vmem:[#allocation2 + $0x26c] sm:$0x1] %v424
      %v426 = vld [vmem:[#allocation2 + $0x284] sm:$0x1]
      %v427 = vsel %vm347, 0, %v426
      %428 = vst [vmem:[#allocation2 + $0x284] sm:$0x1] %v427
      %v429 = vld [vmem:[#allocation2 + $0x29c] sm:$0x1]
      %v430 = vsel %vm347, 0, %v429
      %431 = vst [vmem:[#allocation2 + $0x29c] sm:$0x1] %v430
      %v432 = vld [vmem:[#allocation2 + $0x2b4] sm:$0x1]
      %v433 = vsel %vm347, 0, %v432
      %434 = vst [vmem:[#allocation2 + $0x2b4] sm:$0x1] %v433
      %v435 = vld [vmem:[#allocation2 + $0x2cc] sm:$0x1]
      %v436 = vsel %vm347, 0, %v435
      %437 = vst [vmem:[#allocation2 + $0x2cc] sm:$0x1] %v436
      %v438 = vld [vmem:[#allocation2 + $0x2e4] sm:$0x1]
      %v439 = vsel %vm347, 0, %v438
      %440 = vst [vmem:[#allocation2 + $0x2e4] sm:$0x1] %v439
      %v441 = vld [vmem:[#allocation2 + $0x2fc] sm:$0x1]
      %v442 = vsel %vm347, 0, %v441
      %443 = vst [vmem:[#allocation2 + $0x2fc] sm:$0x1] %v442
      %v444 = vld [vmem:[#allocation2 + $0x314] sm:$0x1]
      %v445 = vsel %vm347, 0, %v444
      %446 = vst [vmem:[#allocation2 + $0x314] sm:$0x1] %v445
      %v447 = vld [vmem:[#allocation2 + $0x32c] sm:$0x1]
      %v448 = vsel %vm347, 0, %v447
      %449 = vst [vmem:[#allocation2 + $0x32c] sm:$0x1] %v448
      %v450 = vld [vmem:[%s1] sm:$0xf]
      %v451 = vld [vmem:[%s1 + $0x4] sm:$0xf]
      %v452 = vld [vmem:[%s1 + $0x8] sm:$0xf]
      %v453 = vld [vmem:[%s1 + $0xc] sm:$0x3]
      %v454 = vld [vmem:[%s2] sm:$0x1]
      %v455 = vld [vmem:[%s4] sm:$0x1]
      loop: start=0, step=1, limit=8
      $region41: #{simple_cnn_forward.2} parent=39 // loop_pre_header
        _
      $region42: #{simple_cnn_forward.2} parent=39 // loop_header
        %s457 = sphi 0, %s461
        %p458 = scmp.ge.s32.totalorder %s457, 8
      $region43: #{simple_cnn_forward.2} parent=39 // loop_header_branch
        %460 = sbr.rel (%p458) target = $region47
      $region44: #{simple_cnn_forward.2} parent=39 // loop_body
        %s462 = smul.u32 %s457, 8
        %s463 = smul.u32 %s462, 8
        %s464 = smul.addr %s463, 4
        %s465 = scalar_lea.vmem %s219, %s464
        %v466 = vld [vmem:[%s465] sm:$0xf]
        %v467 = vld [vmem:[%s465 + $0x4] sm:$0xf]
        %v468 = vld [vmem:[%s465 + $0x8] sm:$0xf]
        %v469 = vld [vmem:[%s465 + $0xc] sm:$0xf]
        %v470 = vld [vmem:[%s465 + $0x10] sm:$0xf]
        %v471 = vld [vmem:[%s465 + $0x14] sm:$0xf]
        %v472 = vld [vmem:[%s465 + $0x18] sm:$0xf]
        %v473 = vld [vmem:[%s465 + $0x1c] sm:$0xf]
        %v474 = vld [vmem:[%s465 + $0x20] sm:$0xf]
        %v475 = vld [vmem:[%s465 + $0x24] sm:$0xf]
        %v476 = vld [vmem:[%s465 + $0x28] sm:$0xf]
        %v477 = vld [vmem:[%s465 + $0x2c] sm:$0xf]
        %v478 = vld [vmem:[%s465 + $0x30] sm:$0xf]
        %v479 = vld [vmem:[%s465 + $0x34] sm:$0xf]
        %v480 = vld [vmem:[%s465 + $0x38] sm:$0xf]
        %v481 = vld [vmem:[%s465 + $0x3c] sm:$0xf]
        %v482 = vld [vmem:[%s465 + $0x40] sm:$0xf]
        %v483 = vld [vmem:[%s465 + $0x44] sm:$0xf]
        %v484 = vld [vmem:[%s465 + $0x48] sm:$0xf]
        %v485 = vld [vmem:[%s465 + $0x4c] sm:$0xf]
        %v486 = vld [vmem:[%s465 + $0x50] sm:$0xf]
        %v487 = vld [vmem:[%s465 + $0x54] sm:$0xf]
        %v488 = vld [vmem:[%s465 + $0x58] sm:$0xf]
        %v489 = vld [vmem:[%s465 + $0x5c] sm:$0xf]
        %v490 = vld [vmem:[%s465 + $0x60] sm:$0xf]
        %v491 = vld [vmem:[%s465 + $0x64] sm:$0xf]
        %v492 = vld [vmem:[%s465 + $0x68] sm:$0xf]
        %v493 = vld [vmem:[%s465 + $0x6c] sm:$0xf]
        %v494 = vld [vmem:[%s465 + $0x70] sm:$0xf]
        %v495 = vld [vmem:[%s465 + $0x74] sm:$0xf]
        %v496 = vld [vmem:[%s465 + $0x78] sm:$0xf]
        %v497 = vld [vmem:[%s465 + $0x7c] sm:$0xf]
        %v498 = vld [vmem:[%s465 + $0x80] sm:$0xf]
        %v499 = vld [vmem:[%s465 + $0x84] sm:$0xf]
        %v500 = vld [vmem:[%s465 + $0x88] sm:$0xf]
        %v501 = vld [vmem:[%s465 + $0x8c] sm:$0xf]
        %v502 = vld [vmem:[%s465 + $0x90] sm:$0xf]
        %v503 = vld [vmem:[%s465 + $0x94] sm:$0xf]
        %v504 = vld [vmem:[%s465 + $0x98] sm:$0xf]
        %v505 = vld [vmem:[%s465 + $0x9c] sm:$0xf]
        %v506 = vld [vmem:[%s465 + $0xa0] sm:$0xf]
        %v507 = vld [vmem:[%s465 + $0xa4] sm:$0xf]
        %v508 = vld [vmem:[%s465 + $0xa8] sm:$0xf]
        %v509 = vld [vmem:[%s465 + $0xac] sm:$0xf]
        %v510 = vld [vmem:[%s465 + $0xb0] sm:$0xf]
        %v511 = vld [vmem:[%s465 + $0xb4] sm:$0xf]
        %v512 = vld [vmem:[%s465 + $0xb8] sm:$0xf]
        %v513 = vld [vmem:[%s465 + $0xbc] sm:$0xf]
        %v514 = vld [vmem:[%s465 + $0xc0] sm:$0xf]
        %v515 = vld [vmem:[%s465 + $0xc4] sm:$0xf]
        %v516 = vld [vmem:[%s465 + $0xc8] sm:$0xf]
        %v517 = vld [vmem:[%s465 + $0xcc] sm:$0xf]
        %v518 = vld [vmem:[%s465 + $0xd0] sm:$0xf]
        %v519 = vld [vmem:[%s465 + $0xd4] sm:$0xf]
        %v520 = vld [vmem:[%s465 + $0xd8] sm:$0xf]
        %v521 = vld [vmem:[%s465 + $0xdc] sm:$0xf]
        %v522 = vld [vmem:[%s465 + $0xe0] sm:$0xf]
        %v523 = vld [vmem:[%s465 + $0xe4] sm:$0xf]
        %v524 = vld [vmem:[%s465 + $0xe8] sm:$0xf]
        %v525 = vld [vmem:[%s465 + $0xec] sm:$0xf]
        %v526 = vld [vmem:[%s465 + $0xf0] sm:$0xf]
        %v527 = vld [vmem:[%s465 + $0xf4] sm:$0xf]
        %v528 = vld [vmem:[%s465 + $0xf8] sm:$0xf]
        %v529 = vld [vmem:[%s465 + $0xfc] sm:$0xf]
        %v531 = vlaneseq
        %v532 = vshrl.u32 %v531, 7
        %v533 = vsub.s32 0, %v532
        %v534 = vrot.slane %v454, %v533
        %v600 = vunpack.c.l.b16 %v466
        %v601 = vunpack.c.l.b16 %v467
        %v602 = vunpack.c.l.b16 %v468
        %v603 = vunpack.c.l.b16 %v469
        %v604 = vunpack.c.l.b16 %v470
        %v605 = vunpack.c.l.b16 %v471
        %v606 = vunpack.c.l.b16 %v472
        %v607 = vunpack.c.l.b16 %v473
        %v608 = vunpack.c.l.b16 %v474
        %v609 = vunpack.c.l.b16 %v475
        %v610 = vunpack.c.l.b16 %v476
        %v611 = vunpack.c.l.b16 %v477
        %v612 = vunpack.c.l.b16 %v478
        %v613 = vunpack.c.l.b16 %v479
        %v614 = vunpack.c.l.b16 %v480
        %v615 = vunpack.c.l.b16 %v481
        %v616 = vunpack.c.l.b16 %v482
        %v617 = vunpack.c.l.b16 %v483
        %v618 = vunpack.c.l.b16 %v484
        %v619 = vunpack.c.l.b16 %v485
        %v620 = vunpack.c.l.b16 %v486
        %v621 = vunpack.c.l.b16 %v487
        %v622 = vunpack.c.l.b16 %v488
        %v623 = vunpack.c.l.b16 %v489
        %v624 = vunpack.c.l.b16 %v490
        %v625 = vunpack.c.l.b16 %v491
        %v626 = vunpack.c.l.b16 %v492
        %v627 = vunpack.c.l.b16 %v493
        %v628 = vunpack.c.l.b16 %v494
        %v629 = vunpack.c.l.b16 %v495
        %v630 = vunpack.c.l.b16 %v496
        %v631 = vunpack.c.l.b16 %v497
        %v632 = vunpack.c.l.b16 %v498
        %v633 = vunpack.c.l.b16 %v499
        %v634 = vunpack.c.l.b16 %v500
        %v635 = vunpack.c.l.b16 %v501
        %v636 = vunpack.c.l.b16 %v502
        %v637 = vunpack.c.l.b16 %v503
        %v638 = vunpack.c.l.b16 %v504
        %v639 = vunpack.c.l.b16 %v505
        %v640 = vunpack.c.l.b16 %v506
        %v641 = vunpack.c.l.b16 %v507
        %v642 = vunpack.c.l.b16 %v508
        %v643 = vunpack.c.l.b16 %v509
        %v644 = vunpack.c.l.b16 %v510
        %v645 = vunpack.c.l.b16 %v511
        %v646 = vunpack.c.l.b16 %v512
        %v647 = vunpack.c.l.b16 %v513
        %v648 = vunpack.c.l.b16 %v514
        %v649 = vunpack.c.l.b16 %v515
        %v650 = vunpack.c.l.b16 %v516
        %v651 = vunpack.c.l.b16 %v517
        %v652 = vunpack.c.l.b16 %v518
        %v653 = vunpack.c.l.b16 %v519
        %v654 = vunpack.c.l.b16 %v520
        %v655 = vunpack.c.l.b16 %v521
        %v656 = vunpack.c.l.b16 %v522
        %v657 = vunpack.c.l.b16 %v523
        %v658 = vunpack.c.l.b16 %v524
        %v659 = vunpack.c.l.b16 %v525
        %v660 = vunpack.c.l.b16 %v526
        %v661 = vunpack.c.l.b16 %v527
        %v662 = vunpack.c.l.b16 %v528
        %v663 = vunpack.c.l.b16 %v529
        %v664 = vpack.c.b16 %v601, %v600
        %v665 = vpack.c.b16 %v603, %v602
        %v666 = vpack.c.b16 %v605, %v604
        %v667 = vpack.c.b16 %v607, %v606
        %v668 = vpack.c.b16 %v609, %v608
        %v669 = vpack.c.b16 %v611, %v610
        %v670 = vpack.c.b16 %v613, %v612
        %v671 = vpack.c.b16 %v615, %v614
        %v672 = vpack.c.b16 %v617, %v616
        %v673 = vpack.c.b16 %v619, %v618
        %v674 = vpack.c.b16 %v621, %v620
        %v675 = vpack.c.b16 %v623, %v622
        %v676 = vpack.c.b16 %v625, %v624
        %v677 = vpack.c.b16 %v627, %v626
        %v678 = vpack.c.b16 %v629, %v628
        %v679 = vpack.c.b16 %v631, %v630
        %v680 = vpack.c.b16 %v633, %v632
        %v681 = vpack.c.b16 %v635, %v634
        %v682 = vpack.c.b16 %v637, %v636
        %v683 = vpack.c.b16 %v639, %v638
        %v684 = vpack.c.b16 %v641, %v640
        %v685 = vpack.c.b16 %v643, %v642
        %v686 = vpack.c.b16 %v645, %v644
        %v687 = vpack.c.b16 %v647, %v646
        %v688 = vpack.c.b16 %v649, %v648
        %v689 = vpack.c.b16 %v651, %v650
        %v690 = vpack.c.b16 %v653, %v652
        %v691 = vpack.c.b16 %v655, %v654
        %v692 = vpack.c.b16 %v657, %v656
        %v693 = vpack.c.b16 %v659, %v658
        %v694 = vpack.c.b16 %v661, %v660
        %v695 = vpack.c.b16 %v663, %v662
        %v700 = vunpack.c.l.b16 %v450
        %v701 = vunpack.c.l.b16 %v451
        %v702 = vunpack.c.l.b16 %v452
        %v703 = vunpack.c.l.b16 %v453
        %v704 = vpack.c.b16 %v701, %v700
        %v705 = vpack.c.b16 %v703, %v702
        %vm707 = vcmask 220160
        %v709 = vsel %vm707, %v664, 0
        %v712 = vsel %vm707, %v665, 0
        %v715 = vsel %vm707, %v666, 0
        %v718 = vsel %vm707, %v667, 0
        %v721 = vsel %vm707, %v668, 0
        %v724 = vsel %vm707, %v669, 0
        %v727 = vsel %vm707, %v670, 0
        %v730 = vsel %vm707, %v671, 0
        %v733 = vsel %vm707, %v672, 0
        %v736 = vsel %vm707, %v673, 0
        %v739 = vsel %vm707, %v674, 0
        %v742 = vsel %vm707, %v675, 0
        %v745 = vsel %vm707, %v676, 0
        %v748 = vsel %vm707, %v677, 0
        %v751 = vsel %vm707, %v678, 0
        %v754 = vsel %vm707, %v679, 0
        %v757 = vsel %vm707, %v680, 0
        %v760 = vsel %vm707, %v681, 0
        %v763 = vsel %vm707, %v682, 0
        %v766 = vsel %vm707, %v683, 0
        %v769 = vsel %vm707, %v684, 0
        %v772 = vsel %vm707, %v685, 0
        %v775 = vsel %vm707, %v686, 0
        %v778 = vsel %vm707, %v687, 0
        %v781 = vsel %vm707, %v688, 0
        %v784 = vsel %vm707, %v689, 0
        %v787 = vsel %vm707, %v690, 0
        %v790 = vsel %vm707, %v691, 0
        %v793 = vsel %vm707, %v692, 0
        %v796 = vsel %vm707, %v693, 0
        %v799 = vsel %vm707, %v694, 0
        %v802 = vsel %vm707, %v695, 0
        %vm804 = vcmask 1044480
        %vm805 = vcmask 1045504
        %v806 = vsel %vm804, 4294967295, 65535
        %v807 = vsel %vm805, %v806, 0
        %v809 = vand.u32 %v705, %v807
        %811 = vmatprep.subr.bf16.mxu0 0
        %812 = vmatpush1.bf16.msra.mxu0 0
        %813 = vmatprep.subr.bf16.mxu0 0
        %814 = vmatpush1.bf16.msra.mxu0 0
        %815 = vmatprep.subr.bf16.mxu0 0
        %816 = vmatpush1.bf16.msra.mxu0 0
        %817 = vmatprep.subr.bf16.mxu0 0
        %818 = vmatpush1.bf16.msra.mxu0 0
        %819 = vmatprep.subr.bf16.mxu0 0
        %820 = vmatpush1.bf16.msra.mxu0 0
        %821 = vmatprep.subr.bf16.mxu0 0
        %822 = vmatpush1.bf16.msra.mxu0 0
        %823 = vmatprep.subr.bf16.mxu0 0
        %824 = vmatpush1.bf16.msra.mxu0 %v809
        %825 = vmatprep.subr.bf16.mxu0 0
        %826 = vmatpush1.bf16.msra.mxu0 %v704
        %827 = vmatprep.subr.bf16.mxu0 0
        %828 = vmatpush2.bf16.msra.mxu0 0
        %829 = vmatprep.subr.bf16.mxu0 0
        %830 = vmatpush2.bf16.msra.mxu0 0
        %831 = vmatprep.subr.bf16.mxu0 0
        %832 = vmatpush2.bf16.msra.mxu0 0
        %833 = vmatprep.subr.bf16.mxu0 0
        %834 = vmatpush2.bf16.msra.mxu0 0
        %835 = vmatprep.subr.bf16.mxu0 0
        %836 = vmatpush2.bf16.msra.mxu0 0
        %837 = vmatprep.subr.bf16.mxu0 0
        %838 = vmatpush2.bf16.msra.mxu0 0
        %839 = vmatprep.subr.bf16.mxu0 0
        %840 = vmatpush2.bf16.msra.mxu0 0
        %841 = vmatprep.subr.bf16.mxu0 0
        %842 = vmatpush2.bf16.msra.mxu0 0
        %843 = vmatprep.mubr.bf16.mxu0 0
        %844 = vmatmul.mubr.bf16.gmra.mxu0 %v709
        %v845 = vpop.f32.mrf.mxu0
        %v846 = vadd.f32 %v534, %v845
        %v847 = vpop.f32.mrf.mxu0
        %v848 = vpop.f32.mrf.mxu0
        %v849 = vadd.f32 %v534, %v848
        %v850 = vpop.f32.mrf.mxu0
        %851 = vmatprep.mubr.bf16.mxu0 0
        %852 = vmatmul.mubr.bf16.gmra.mxu0 %v712
        %v853 = vpop.f32.mrf.mxu0
        %v854 = vadd.f32 %v534, %v853
        %v855 = vpop.f32.mrf.mxu0
        %v856 = vpop.f32.mrf.mxu0
        %v857 = vadd.f32 %v534, %v856
        %v858 = vpop.f32.mrf.mxu0
        %859 = vmatprep.mubr.bf16.mxu0 0
        %860 = vmatmul.mubr.bf16.gmra.mxu0 %v715
        %v861 = vpop.f32.mrf.mxu0
        %v862 = vadd.f32 %v534, %v861
        %v863 = vpop.f32.mrf.mxu0
        %v864 = vpop.f32.mrf.mxu0
        %v865 = vadd.f32 %v534, %v864
        %v866 = vpop.f32.mrf.mxu0
        %867 = vmatprep.mubr.bf16.mxu0 0
        %868 = vmatmul.mubr.bf16.gmra.mxu0 %v718
        %v869 = vpop.f32.mrf.mxu0
        %v870 = vadd.f32 %v534, %v869
        %v871 = vpop.f32.mrf.mxu0
        %v872 = vpop.f32.mrf.mxu0
        %v873 = vadd.f32 %v534, %v872
        %v874 = vpop.f32.mrf.mxu0
        %875 = vmatprep.mubr.bf16.mxu0 0
        %876 = vmatmul.mubr.bf16.gmra.mxu0 %v721
        %v877 = vpop.f32.mrf.mxu0
        %v878 = vadd.f32 %v534, %v877
        %v879 = vpop.f32.mrf.mxu0
        %v880 = vpop.f32.mrf.mxu0
        %v881 = vadd.f32 %v534, %v880
        %v882 = vpop.f32.mrf.mxu0
        %883 = vmatprep.mubr.bf16.mxu0 0
        %884 = vmatmul.mubr.bf16.gmra.mxu0 %v724
        %v885 = vpop.f32.mrf.mxu0
        %v886 = vadd.f32 %v534, %v885
        %v887 = vpop.f32.mrf.mxu0
        %v888 = vpop.f32.mrf.mxu0
        %v889 = vadd.f32 %v534, %v888
        %v890 = vpop.f32.mrf.mxu0
        %891 = vmatprep.mubr.bf16.mxu0 0
        %892 = vmatmul.mubr.bf16.gmra.mxu0 %v727
        %v893 = vpop.f32.mrf.mxu0
        %v894 = vadd.f32 %v534, %v893
        %v895 = vpop.f32.mrf.mxu0
        %v896 = vpop.f32.mrf.mxu0
        %v897 = vadd.f32 %v534, %v896
        %v898 = vpop.f32.mrf.mxu0
        %899 = vmatprep.mubr.bf16.mxu0 0
        %900 = vmatmul.mubr.bf16.gmra.mxu0 %v730
        %v901 = vpop.f32.mrf.mxu0
        %v902 = vadd.f32 %v534, %v901
        %v903 = vpop.f32.mrf.mxu0
        %v904 = vpop.f32.mrf.mxu0
        %v905 = vadd.f32 %v534, %v904
        %v906 = vpop.f32.mrf.mxu0
        %907 = vmatprep.mubr.bf16.mxu0 0
        %908 = vmatmul.mubr.bf16.gmra.mxu0 %v733
        %v909 = vpop.f32.mrf.mxu0
        %v910 = vadd.f32 %v534, %v909
        %v911 = vpop.f32.mrf.mxu0
        %v912 = vpop.f32.mrf.mxu0
        %v913 = vadd.f32 %v534, %v912
        %v914 = vpop.f32.mrf.mxu0
        %915 = vmatprep.mubr.bf16.mxu0 0
        %916 = vmatmul.mubr.bf16.gmra.mxu0 %v736
        %v917 = vpop.f32.mrf.mxu0
        %v918 = vadd.f32 %v534, %v917
        %v919 = vpop.f32.mrf.mxu0
        %v920 = vpop.f32.mrf.mxu0
        %v921 = vadd.f32 %v534, %v920
        %v922 = vpop.f32.mrf.mxu0
        %923 = vmatprep.mubr.bf16.mxu0 0
        %924 = vmatmul.mubr.bf16.gmra.mxu0 %v739
        %v925 = vpop.f32.mrf.mxu0
        %v926 = vadd.f32 %v534, %v925
        %v927 = vpop.f32.mrf.mxu0
        %v928 = vpop.f32.mrf.mxu0
        %v929 = vadd.f32 %v534, %v928
        %v930 = vpop.f32.mrf.mxu0
        %931 = vmatprep.mubr.bf16.mxu0 0
        %932 = vmatmul.mubr.bf16.gmra.mxu0 %v742
        %v933 = vpop.f32.mrf.mxu0
        %v934 = vadd.f32 %v534, %v933
        %v935 = vpop.f32.mrf.mxu0
        %v936 = vpop.f32.mrf.mxu0
        %v937 = vadd.f32 %v534, %v936
        %v938 = vpop.f32.mrf.mxu0
        %939 = vmatprep.mubr.bf16.mxu0 0
        %940 = vmatmul.mubr.bf16.gmra.mxu0 %v745
        %v941 = vpop.f32.mrf.mxu0
        %v942 = vadd.f32 %v534, %v941
        %v943 = vpop.f32.mrf.mxu0
        %v944 = vpop.f32.mrf.mxu0
        %v945 = vadd.f32 %v534, %v944
        %v946 = vpop.f32.mrf.mxu0
        %947 = vmatprep.mubr.bf16.mxu0 0
        %948 = vmatmul.mubr.bf16.gmra.mxu0 %v748
        %v949 = vpop.f32.mrf.mxu0
        %v950 = vadd.f32 %v534, %v949
        %v951 = vpop.f32.mrf.mxu0
        %v952 = vpop.f32.mrf.mxu0
        %v953 = vadd.f32 %v534, %v952
        %v954 = vpop.f32.mrf.mxu0
        %955 = vmatprep.mubr.bf16.mxu0 0
        %956 = vmatmul.mubr.bf16.gmra.mxu0 %v751
        %v957 = vpop.f32.mrf.mxu0
        %v958 = vadd.f32 %v534, %v957
        %v959 = vpop.f32.mrf.mxu0
        %v960 = vpop.f32.mrf.mxu0
        %v961 = vadd.f32 %v534, %v960
        %v962 = vpop.f32.mrf.mxu0
        %963 = vmatprep.mubr.bf16.mxu0 0
        %964 = vmatmul.mubr.bf16.gmra.mxu0 %v754
        %v965 = vpop.f32.mrf.mxu0
        %v966 = vadd.f32 %v534, %v965
        %v967 = vpop.f32.mrf.mxu0
        %v968 = vpop.f32.mrf.mxu0
        %v969 = vadd.f32 %v534, %v968
        %v970 = vpop.f32.mrf.mxu0
        %971 = vmatprep.mubr.bf16.mxu0 0
        %972 = vmatmul.mubr.bf16.gmra.mxu0 %v757
        %v973 = vpop.f32.mrf.mxu0
        %v974 = vadd.f32 %v534, %v973
        %v975 = vpop.f32.mrf.mxu0
        %v976 = vpop.f32.mrf.mxu0
        %v977 = vadd.f32 %v534, %v976
        %v978 = vpop.f32.mrf.mxu0
        %979 = vmatprep.mubr.bf16.mxu0 0
        %980 = vmatmul.mubr.bf16.gmra.mxu0 %v760
        %v981 = vpop.f32.mrf.mxu0
        %v982 = vadd.f32 %v534, %v981
        %v983 = vpop.f32.mrf.mxu0
        %v984 = vpop.f32.mrf.mxu0
        %v985 = vadd.f32 %v534, %v984
        %v986 = vpop.f32.mrf.mxu0
        %987 = vmatprep.mubr.bf16.mxu0 0
        %988 = vmatmul.mubr.bf16.gmra.mxu0 %v763
        %v989 = vpop.f32.mrf.mxu0
        %v990 = vadd.f32 %v534, %v989
        %v991 = vpop.f32.mrf.mxu0
        %v992 = vpop.f32.mrf.mxu0
        %v993 = vadd.f32 %v534, %v992
        %v994 = vpop.f32.mrf.mxu0
        %995 = vmatprep.mubr.bf16.mxu0 0
        %996 = vmatmul.mubr.bf16.gmra.mxu0 %v766
        %v997 = vpop.f32.mrf.mxu0
        %v998 = vadd.f32 %v534, %v997
        %v999 = vpop.f32.mrf.mxu0
        %v1000 = vpop.f32.mrf.mxu0
        %v1001 = vadd.f32 %v534, %v1000
        %v1002 = vpop.f32.mrf.mxu0
        %1003 = vmatprep.mubr.bf16.mxu0 0
        %1004 = vmatmul.mubr.bf16.gmra.mxu0 %v769
        %v1005 = vpop.f32.mrf.mxu0
        %v1006 = vadd.f32 %v534, %v1005
        %v1007 = vpop.f32.mrf.mxu0
        %v1008 = vpop.f32.mrf.mxu0
        %v1009 = vadd.f32 %v534, %v1008
        %v1010 = vpop.f32.mrf.mxu0
        %1011 = vmatprep.mubr.bf16.mxu0 0
        %1012 = vmatmul.mubr.bf16.gmra.mxu0 %v772
        %v1013 = vpop.f32.mrf.mxu0
        %v1014 = vadd.f32 %v534, %v1013
        %v1015 = vpop.f32.mrf.mxu0
        %v1016 = vpop.f32.mrf.mxu0
        %v1017 = vadd.f32 %v534, %v1016
        %v1018 = vpop.f32.mrf.mxu0
        %1019 = vmatprep.mubr.bf16.mxu0 0
        %1020 = vmatmul.mubr.bf16.gmra.mxu0 %v775
        %v1021 = vpop.f32.mrf.mxu0
        %v1022 = vadd.f32 %v534, %v1021
        %v1023 = vpop.f32.mrf.mxu0
        %v1024 = vpop.f32.mrf.mxu0
        %v1025 = vadd.f32 %v534, %v1024
        %v1026 = vpop.f32.mrf.mxu0
        %1027 = vmatprep.mubr.bf16.mxu0 0
        %1028 = vmatmul.mubr.bf16.gmra.mxu0 %v778
        %v1029 = vpop.f32.mrf.mxu0
        %v1030 = vadd.f32 %v534, %v1029
        %v1031 = vpop.f32.mrf.mxu0
        %v1032 = vpop.f32.mrf.mxu0
        %v1033 = vadd.f32 %v534, %v1032
        %v1034 = vpop.f32.mrf.mxu0
        %1035 = vmatprep.mubr.bf16.mxu0 0
        %1036 = vmatmul.mubr.bf16.gmra.mxu0 %v781
        %v1037 = vpop.f32.mrf.mxu0
        %v1038 = vadd.f32 %v534, %v1037
        %v1039 = vpop.f32.mrf.mxu0
        %v1040 = vpop.f32.mrf.mxu0
        %v1041 = vadd.f32 %v534, %v1040
        %v1042 = vpop.f32.mrf.mxu0
        %1043 = vmatprep.mubr.bf16.mxu0 0
        %1044 = vmatmul.mubr.bf16.gmra.mxu0 %v784
        %v1045 = vpop.f32.mrf.mxu0
        %v1046 = vadd.f32 %v534, %v1045
        %v1047 = vpop.f32.mrf.mxu0
        %v1048 = vpop.f32.mrf.mxu0
        %v1049 = vadd.f32 %v534, %v1048
        %v1050 = vpop.f32.mrf.mxu0
        %1051 = vmatprep.mubr.bf16.mxu0 0
        %1052 = vmatmul.mubr.bf16.gmra.mxu0 %v787
        %v1053 = vpop.f32.mrf.mxu0
        %v1054 = vadd.f32 %v534, %v1053
        %v1055 = vpop.f32.mrf.mxu0
        %v1056 = vpop.f32.mrf.mxu0
        %v1057 = vadd.f32 %v534, %v1056
        %v1058 = vpop.f32.mrf.mxu0
        %1059 = vmatprep.mubr.bf16.mxu0 0
        %1060 = vmatmul.mubr.bf16.gmra.mxu0 %v790
        %v1061 = vpop.f32.mrf.mxu0
        %v1062 = vadd.f32 %v534, %v1061
        %v1063 = vpop.f32.mrf.mxu0
        %v1064 = vpop.f32.mrf.mxu0
        %v1065 = vadd.f32 %v534, %v1064
        %v1066 = vpop.f32.mrf.mxu0
        %1067 = vmatprep.mubr.bf16.mxu0 0
        %1068 = vmatmul.mubr.bf16.gmra.mxu0 %v793
        %v1069 = vpop.f32.mrf.mxu0
        %v1070 = vadd.f32 %v534, %v1069
        %v1071 = vpop.f32.mrf.mxu0
        %v1072 = vpop.f32.mrf.mxu0
        %v1073 = vadd.f32 %v534, %v1072
        %v1074 = vpop.f32.mrf.mxu0
        %1075 = vmatprep.mubr.bf16.mxu0 0
        %1076 = vmatmul.mubr.bf16.gmra.mxu0 %v796
        %v1077 = vpop.f32.mrf.mxu0
        %v1078 = vadd.f32 %v534, %v1077
        %v1079 = vpop.f32.mrf.mxu0
        %v1080 = vpop.f32.mrf.mxu0
        %v1081 = vadd.f32 %v534, %v1080
        %v1082 = vpop.f32.mrf.mxu0
        %1083 = vmatprep.mubr.bf16.mxu0 0
        %1084 = vmatmul.mubr.bf16.gmra.mxu0 %v799
        %v1085 = vpop.f32.mrf.mxu0
        %v1086 = vadd.f32 %v534, %v1085
        %v1087 = vpop.f32.mrf.mxu0
        %v1088 = vpop.f32.mrf.mxu0
        %v1089 = vadd.f32 %v534, %v1088
        %v1090 = vpop.f32.mrf.mxu0
        %1091 = vmatprep.mubr.bf16.mxu0 0
        %1092 = vmatmul.mubr.bf16.gmra.mxu0 %v802
        %v1093 = vpop.f32.mrf.mxu0
        %v1094 = vadd.f32 %v534, %v1093
        %v1095 = vpop.f32.mrf.mxu0
        %v1096 = vpop.f32.mrf.mxu0
        %v1097 = vadd.f32 %v534, %v1096
        %v1098 = vpop.f32.mrf.mxu0
        %1099 = vdwg.mxu0
        %v1100 = vmax.f32 %v846, 0.0
        %v1101 = vmax.f32 %v849, 0.0
        %v1102 = vmax.f32 %v854, 0.0
        %v1103 = vmax.f32 %v857, 0.0
        %v1104 = vmax.f32 %v862, 0.0
        %v1105 = vmax.f32 %v865, 0.0
        %v1106 = vmax.f32 %v870, 0.0
        %v1107 = vmax.f32 %v873, 0.0
        %v1108 = vmax.f32 %v878, 0.0
        %v1109 = vmax.f32 %v881, 0.0
        %v1110 = vmax.f32 %v886, 0.0
        %v1111 = vmax.f32 %v889, 0.0
        %v1112 = vmax.f32 %v894, 0.0
        %v1113 = vmax.f32 %v897, 0.0
        %v1114 = vmax.f32 %v902, 0.0
        %v1115 = vmax.f32 %v905, 0.0
        %v1116 = vmax.f32 %v910, 0.0
        %v1117 = vmax.f32 %v913, 0.0
        %v1118 = vmax.f32 %v918, 0.0
        %v1119 = vmax.f32 %v921, 0.0
        %v1120 = vmax.f32 %v926, 0.0
        %v1121 = vmax.f32 %v929, 0.0
        %v1122 = vmax.f32 %v934, 0.0
        %v1123 = vmax.f32 %v937, 0.0
        %v1124 = vmax.f32 %v942, 0.0
        %v1125 = vmax.f32 %v945, 0.0
        %v1126 = vmax.f32 %v950, 0.0
        %v1127 = vmax.f32 %v953, 0.0
        %v1128 = vmax.f32 %v958, 0.0
        %v1129 = vmax.f32 %v961, 0.0
        %v1130 = vmax.f32 %v966, 0.0
        %v1131 = vmax.f32 %v969, 0.0
        %v1132 = vmax.f32 %v974, 0.0
        %v1133 = vmax.f32 %v977, 0.0
        %v1134 = vmax.f32 %v982, 0.0
        %v1135 = vmax.f32 %v985, 0.0
        %v1136 = vmax.f32 %v990, 0.0
        %v1137 = vmax.f32 %v993, 0.0
        %v1138 = vmax.f32 %v998, 0.0
        %v1139 = vmax.f32 %v1001, 0.0
        %v1140 = vmax.f32 %v1006, 0.0
        %v1141 = vmax.f32 %v1009, 0.0
        %v1142 = vmax.f32 %v1014, 0.0
        %v1143 = vmax.f32 %v1017, 0.0
        %v1144 = vmax.f32 %v1022, 0.0
        %v1145 = vmax.f32 %v1025, 0.0
        %v1146 = vmax.f32 %v1030, 0.0
        %v1147 = vmax.f32 %v1033, 0.0
        %v1148 = vmax.f32 %v1038, 0.0
        %v1149 = vmax.f32 %v1041, 0.0
        %v1150 = vmax.f32 %v1046, 0.0
        %v1151 = vmax.f32 %v1049, 0.0
        %v1152 = vmax.f32 %v1054, 0.0
        %v1153 = vmax.f32 %v1057, 0.0
        %v1154 = vmax.f32 %v1062, 0.0
        %v1155 = vmax.f32 %v1065, 0.0
        %v1156 = vmax.f32 %v1070, 0.0
        %v1157 = vmax.f32 %v1073, 0.0
        %v1158 = vmax.f32 %v1078, 0.0
        %v1159 = vmax.f32 %v1081, 0.0
        %v1160 = vmax.f32 %v1086, 0.0
        %v1161 = vmax.f32 %v1089, 0.0
        %v1162 = vmax.f32 %v1094, 0.0
        %v1163 = vmax.f32 %v1097, 0.0
        %v1164 = vmax.f32 %v1100, %v1108
        %v1165 = vmax.f32 %v1101, %v1109
        %v1166 = vmax.f32 %v1102, %v1110
        %v1167 = vmax.f32 %v1103, %v1111
        %v1168 = vmax.f32 %v1104, %v1112
        %v1169 = vmax.f32 %v1105, %v1113
        %v1170 = vmax.f32 %v1106, %v1114
        %v1171 = vmax.f32 %v1107, %v1115
        %v1172 = vmax.f32 %v1116, %v1124
        %v1173 = vmax.f32 %v1117, %v1125
        %v1174 = vmax.f32 %v1118, %v1126
        %v1175 = vmax.f32 %v1119, %v1127
        %v1176 = vmax.f32 %v1120, %v1128
        %v1177 = vmax.f32 %v1121, %v1129
        %v1178 = vmax.f32 %v1122, %v1130
        %v1179 = vmax.f32 %v1123, %v1131
        %v1180 = vmax.f32 %v1132, %v1140
        %v1181 = vmax.f32 %v1133, %v1141
        %v1182 = vmax.f32 %v1134, %v1142
        %v1183 = vmax.f32 %v1135, %v1143
        %v1184 = vmax.f32 %v1136, %v1144
        %v1185 = vmax.f32 %v1137, %v1145
        %v1186 = vmax.f32 %v1138, %v1146
        %v1187 = vmax.f32 %v1139, %v1147
        %v1188 = vmax.f32 %v1148, %v1156
        %v1189 = vmax.f32 %v1149, %v1157
        %v1190 = vmax.f32 %v1150, %v1158
        %v1191 = vmax.f32 %v1151, %v1159
        %v1192 = vmax.f32 %v1152, %v1160
        %v1193 = vmax.f32 %v1153, %v1161
        %v1194 = vmax.f32 %v1154, %v1162
        %v1195 = vmax.f32 %v1155, %v1163
        %vm1196 = vcmask 261120
        %1197 = vst.msk [vmem:[#allocation3] sm:$0xff] %vm1196, %v1164
        %1198 = vst.msk [vmem:[#allocation3 + $0x8] sm:$0xff] %vm1196, %v1165
        %1199 = vst.msk [vmem:[#allocation3 + $0x10] sm:$0xff] %vm1196, %v1166
        %1200 = vst.msk [vmem:[#allocation3 + $0x18] sm:$0xff] %vm1196, %v1167
        %1201 = vst.msk [vmem:[#allocation3 + $0x20] sm:$0xff] %vm1196, %v1168
        %1202 = vst.msk [vmem:[#allocation3 + $0x28] sm:$0xff] %vm1196, %v1169
        %1203 = vst.msk [vmem:[#allocation3 + $0x30] sm:$0xff] %vm1196, %v1170
        %1204 = vst.msk [vmem:[#allocation3 + $0x38] sm:$0xff] %vm1196, %v1171
        %1205 = vst.msk [vmem:[#allocation3 + $0x40] sm:$0xff] %vm1196, %v1172
        %1206 = vst.msk [vmem:[#allocation3 + $0x48] sm:$0xff] %vm1196, %v1173
        %1207 = vst.msk [vmem:[#allocation3 + $0x50] sm:$0xff] %vm1196, %v1174
        %1208 = vst.msk [vmem:[#allocation3 + $0x58] sm:$0xff] %vm1196, %v1175
        %1209 = vst.msk [vmem:[#allocation3 + $0x60] sm:$0xff] %vm1196, %v1176
        %1210 = vst.msk [vmem:[#allocation3 + $0x68] sm:$0xff] %vm1196, %v1177
        %1211 = vst.msk [vmem:[#allocation3 + $0x70] sm:$0xff] %vm1196, %v1178
        %1212 = vst.msk [vmem:[#allocation3 + $0x78] sm:$0xff] %vm1196, %v1179
        %1213 = vst.msk [vmem:[#allocation3 + $0x80] sm:$0xff] %vm1196, %v1180
        %1214 = vst.msk [vmem:[#allocation3 + $0x88] sm:$0xff] %vm1196, %v1181
        %1215 = vst.msk [vmem:[#allocation3 + $0x90] sm:$0xff] %vm1196, %v1182
        %1216 = vst.msk [vmem:[#allocation3 + $0x98] sm:$0xff] %vm1196, %v1183
        %1217 = vst.msk [vmem:[#allocation3 + $0xa0] sm:$0xff] %vm1196, %v1184
        %1218 = vst.msk [vmem:[#allocation3 + $0xa8] sm:$0xff] %vm1196, %v1185
        %1219 = vst.msk [vmem:[#allocation3 + $0xb0] sm:$0xff] %vm1196, %v1186
        %1220 = vst.msk [vmem:[#allocation3 + $0xb8] sm:$0xff] %vm1196, %v1187
        %1221 = vst.msk [vmem:[#allocation3 + $0xc0] sm:$0xff] %vm1196, %v1188
        %1222 = vst.msk [vmem:[#allocation3 + $0xc8] sm:$0xff] %vm1196, %v1189
        %1223 = vst.msk [vmem:[#allocation3 + $0xd0] sm:$0xff] %vm1196, %v1190
        %1224 = vst.msk [vmem:[#allocation3 + $0xd8] sm:$0xff] %vm1196, %v1191
        %1225 = vst.msk [vmem:[#allocation3 + $0xe0] sm:$0xff] %vm1196, %v1192
        %1226 = vst.msk [vmem:[#allocation3 + $0xe8] sm:$0xff] %vm1196, %v1193
        %1227 = vst.msk [vmem:[#allocation3 + $0xf0] sm:$0xff] %vm1196, %v1194
        %1228 = vst.msk [vmem:[#allocation3 + $0xf8] sm:$0xff] %vm1196, %v1195
        %v1229 = vld [vmem:[#allocation3] ss:$2 sm:$0xff]
        %s1230 = scalar_lea.vmem [#allocation3], 16
        %v1231 = vld [vmem:[%s1230] ss:$2 sm:$0xff]
        %s1232 = scalar_lea.vmem [#allocation3], 32
        %v1233 = vld [vmem:[%s1232] ss:$2 sm:$0xff]
        %s1234 = scalar_lea.vmem [#allocation3], 48
        %v1235 = vld [vmem:[%s1234] ss:$2 sm:$0xff]
        %s1236 = scalar_lea.vmem [#allocation3], 64
        %v1237 = vld [vmem:[%s1236] ss:$2 sm:$0xff]
        %s1238 = scalar_lea.vmem [#allocation3], 80
        %v1239 = vld [vmem:[%s1238] ss:$2 sm:$0xff]
        %s1240 = scalar_lea.vmem [#allocation3], 96
        %v1241 = vld [vmem:[%s1240] ss:$2 sm:$0xff]
        %s1242 = scalar_lea.vmem [#allocation3], 112
        %v1243 = vld [vmem:[%s1242] ss:$2 sm:$0xff]
        %s1244 = scalar_lea.vmem [#allocation3], 128
        %v1245 = vld [vmem:[%s1244] ss:$2 sm:$0xff]
        %s1246 = scalar_lea.vmem [#allocation3], 144
        %v1247 = vld [vmem:[%s1246] ss:$2 sm:$0xff]
        %s1248 = scalar_lea.vmem [#allocation3], 160
        %v1249 = vld [vmem:[%s1248] ss:$2 sm:$0xff]
        %s1250 = scalar_lea.vmem [#allocation3], 176
        %v1251 = vld [vmem:[%s1250] ss:$2 sm:$0xff]
        %s1252 = scalar_lea.vmem [#allocation3], 192
        %v1253 = vld [vmem:[%s1252] ss:$2 sm:$0xff]
        %s1254 = scalar_lea.vmem [#allocation3], 208
        %v1255 = vld [vmem:[%s1254] ss:$2 sm:$0xff]
        %s1256 = scalar_lea.vmem [#allocation3], 224
        %v1257 = vld [vmem:[%s1256] ss:$2 sm:$0xff]
        %s1258 = scalar_lea.vmem [#allocation3], 240
        %v1259 = vld [vmem:[%s1258] ss:$2 sm:$0xff]
        %s1260 = scalar_lea.vmem [#allocation3], 1
        %v1261 = vld [vmem:[%s1260] ss:$2 sm:$0xff]
        %s1262 = scalar_lea.vmem [#allocation3], 17
        %v1263 = vld [vmem:[%s1262] ss:$2 sm:$0xff]
        %s1264 = scalar_lea.vmem [#allocation3], 33
        %v1265 = vld [vmem:[%s1264] ss:$2 sm:$0xff]
        %s1266 = scalar_lea.vmem [#allocation3], 49
        %v1267 = vld [vmem:[%s1266] ss:$2 sm:$0xff]
        %s1268 = scalar_lea.vmem [#allocation3], 65
        %v1269 = vld [vmem:[%s1268] ss:$2 sm:$0xff]
        %s1270 = scalar_lea.vmem [#allocation3], 81
        %v1271 = vld [vmem:[%s1270] ss:$2 sm:$0xff]
        %s1272 = scalar_lea.vmem [#allocation3], 97
        %v1273 = vld [vmem:[%s1272] ss:$2 sm:$0xff]
        %s1274 = scalar_lea.vmem [#allocation3], 113
        %v1275 = vld [vmem:[%s1274] ss:$2 sm:$0xff]
        %s1276 = scalar_lea.vmem [#allocation3], 129
        %v1277 = vld [vmem:[%s1276] ss:$2 sm:$0xff]
        %s1278 = scalar_lea.vmem [#allocation3], 145
        %v1279 = vld [vmem:[%s1278] ss:$2 sm:$0xff]
        %s1280 = scalar_lea.vmem [#allocation3], 161
        %v1281 = vld [vmem:[%s1280] ss:$2 sm:$0xff]
        %s1282 = scalar_lea.vmem [#allocation3], 177
        %v1283 = vld [vmem:[%s1282] ss:$2 sm:$0xff]
        %s1284 = scalar_lea.vmem [#allocation3], 193
        %v1285 = vld [vmem:[%s1284] ss:$2 sm:$0xff]
        %s1286 = scalar_lea.vmem [#allocation3], 209
        %v1287 = vld [vmem:[%s1286] ss:$2 sm:$0xff]
        %s1288 = scalar_lea.vmem [#allocation3], 225
        %v1289 = vld [vmem:[%s1288] ss:$2 sm:$0xff]
        %s1290 = scalar_lea.vmem [#allocation3], 241
        %v1291 = vld [vmem:[%s1290] ss:$2 sm:$0xff]
        %v1292 = vmax.f32 %v1229, %v1261
        %v1293 = vmax.f32 %v1231, %v1263
        %v1294 = vmax.f32 %v1233, %v1265
        %v1295 = vmax.f32 %v1235, %v1267
        %v1296 = vmax.f32 %v1237, %v1269
        %v1297 = vmax.f32 %v1239, %v1271
        %v1298 = vmax.f32 %v1241, %v1273
        %v1299 = vmax.f32 %v1243, %v1275
        %v1300 = vmax.f32 %v1245, %v1277
        %v1301 = vmax.f32 %v1247, %v1279
        %v1302 = vmax.f32 %v1249, %v1281
        %v1303 = vmax.f32 %v1251, %v1283
        %v1304 = vmax.f32 %v1253, %v1285
        %v1305 = vmax.f32 %v1255, %v1287
        %v1306 = vmax.f32 %v1257, %v1289
        %v1307 = vmax.f32 %v1259, %v1291
        %v1308 = vpack.c.bf16 %v1293, %v1292
        %v1309 = vpack.c.bf16 %v1295, %v1294
        %v1310 = vpack.c.bf16 %v1297, %v1296
        %v1311 = vpack.c.bf16 %v1299, %v1298
        %v1312 = vpack.c.bf16 %v1301, %v1300
        %v1313 = vpack.c.bf16 %v1303, %v1302
        %v1314 = vpack.c.bf16 %v1305, %v1304
        %v1315 = vpack.c.bf16 %v1307, %v1306
        %s1316 = smul.u32 %s457, 4
        %s1317 = sadd.s32 %s1316, 1
        %v1326 = vunpack.c.l.b16 %v1308
        %v1327 = vunpack.c.h.b16 %v1308
        %v1328 = vunpack.c.l.b16 %v1309
        %v1329 = vunpack.c.h.b16 %v1309
        %v1330 = vunpack.c.l.b16 %v1310
        %v1331 = vunpack.c.h.b16 %v1310
        %v1332 = vunpack.c.l.b16 %v1311
        %v1333 = vunpack.c.h.b16 %v1311
        %v1334 = vunpack.c.l.b16 %v1312
        %v1335 = vunpack.c.h.b16 %v1312
        %v1336 = vunpack.c.l.b16 %v1313
        %v1337 = vunpack.c.h.b16 %v1313
        %v1338 = vunpack.c.l.b16 %v1314
        %v1339 = vunpack.c.h.b16 %v1314
        %v1340 = vunpack.c.l.b16 %v1315
        %v1341 = vunpack.c.h.b16 %v1315
        %v1342 = vpack.c.b16 %v1326, %v1326
        %v1343 = vpack.c.b16 %v1327, %v1327
        %v1344 = vpack.c.b16 %v1328, %v1328
        %v1345 = vpack.c.b16 %v1329, %v1329
        %v1346 = vpack.c.b16 %v1330, %v1330
        %v1347 = vpack.c.b16 %v1331, %v1331
        %v1348 = vpack.c.b16 %v1332, %v1332
        %v1349 = vpack.c.b16 %v1333, %v1333
        %v1350 = vpack.c.b16 %v1334, %v1334
        %v1351 = vpack.c.b16 %v1335, %v1335
        %v1352 = vpack.c.b16 %v1336, %v1336
        %v1353 = vpack.c.b16 %v1337, %v1337
        %v1354 = vpack.c.b16 %v1338, %v1338
        %v1355 = vpack.c.b16 %v1339, %v1339
        %v1356 = vpack.c.b16 %v1340, %v1340
        %v1357 = vpack.c.b16 %v1341, %v1341
        %s1374 = smul.u32 %s1317, 6
        %s1375 = smul.addr %s1374, 4
        %s1376 = scalar_lea.vmem [#allocation2], %s1375
        %1377 = vst.msk [vmem:[%s1376 + $0x4] sm:$0xf] %vm226, %v1342
        %1378 = vst.msk [vmem:[%s1376 + $0x8] sm:$0xf] %vm226, %v1343
        %1379 = vst.msk [vmem:[%s1376 + $0xc] sm:$0xf] %vm226, %v1344
        %1380 = vst.msk [vmem:[%s1376 + $0x10] sm:$0xf] %vm226, %v1345
        %1381 = vst.msk [vmem:[%s1376 + $0x1c] sm:$0xf] %vm226, %v1346
        %1382 = vst.msk [vmem:[%s1376 + $0x20] sm:$0xf] %vm226, %v1347
        %1383 = vst.msk [vmem:[%s1376 + $0x24] sm:$0xf] %vm226, %v1348
        %1384 = vst.msk [vmem:[%s1376 + $0x28] sm:$0xf] %vm226, %v1349
        %1385 = vst.msk [vmem:[%s1376 + $0x34] sm:$0xf] %vm226, %v1350
        %1386 = vst.msk [vmem:[%s1376 + $0x38] sm:$0xf] %vm226, %v1351
        %1387 = vst.msk [vmem:[%s1376 + $0x3c] sm:$0xf] %vm226, %v1352
        %1388 = vst.msk [vmem:[%s1376 + $0x40] sm:$0xf] %vm226, %v1353
        %1389 = vst.msk [vmem:[%s1376 + $0x4c] sm:$0xf] %vm226, %v1354
        %1390 = vst.msk [vmem:[%s1376 + $0x50] sm:$0xf] %vm226, %v1355
        %1391 = vst.msk [vmem:[%s1376 + $0x54] sm:$0xf] %vm226, %v1356
        %1392 = vst.msk [vmem:[%s1376 + $0x58] sm:$0xf] %vm226, %v1357
      $region45: #{simple_cnn_forward.2} parent=39 // loop_footer
        %s461 = sadd.s32 1, %s457
      $region46: #{simple_cnn_forward.2} parent=39 // loop_footer_branch
        %456 = sbr.rel target = $region42
      $region47: #{simple_cnn_forward.2} parent=39 // loop_exit
        _
      loop: start=0, step=1, limit=4
      $region48: #{simple_cnn_forward.2} parent=39 // loop_pre_header
        _
      $region49: #{simple_cnn_forward.2} parent=39 // loop_header
        %s1394 = sphi 0, %s1398
        %p1395 = scmp.ge.s32.totalorder %s1394, 4
      $region50: #{simple_cnn_forward.2} parent=39 // loop_header_branch
        %1397 = sbr.rel (%p1395) target = $region54
      $region51: #{simple_cnn_forward.2} parent=39 // loop_body
        %s1399 = smul.u32 %s1394, 8
        %s1400 = smul.u32 %s1399, 6
        %s1401 = smul.addr %s1400, 4
        %s1402 = scalar_lea.vmem [#allocation2], %s1401
        %v1403 = vld [vmem:[%s1402] sm:$0x8]
        %v1404 = vld [vmem:[%s1402 + $0x4] sm:$0xf]
        %v1405 = vld [vmem:[%s1402 + $0x8] sm:$0xf]
        %v1406 = vld [vmem:[%s1402 + $0xc] sm:$0xf]
        %v1407 = vld [vmem:[%s1402 + $0x10] sm:$0xf]
        %v1408 = vld [vmem:[%s1402 + $0x18] sm:$0x8]
        %v1409 = vld [vmem:[%s1402 + $0x1c] sm:$0xf]
        %v1410 = vld [vmem:[%s1402 + $0x20] sm:$0xf]
        %v1411 = vld [vmem:[%s1402 + $0x24] sm:$0xf]
        %v1412 = vld [vmem:[%s1402 + $0x28] sm:$0xf]
        %v1413 = vld [vmem:[%s1402 + $0x30] sm:$0x8]
        %v1414 = vld [vmem:[%s1402 + $0x34] sm:$0xf]
        %v1415 = vld [vmem:[%s1402 + $0x38] sm:$0xf]
        %v1416 = vld [vmem:[%s1402 + $0x3c] sm:$0xf]
        %v1417 = vld [vmem:[%s1402 + $0x40] sm:$0xf]
        %v1418 = vld [vmem:[%s1402 + $0x48] sm:$0x8]
        %v1419 = vld [vmem:[%s1402 + $0x4c] sm:$0xf]
        %v1420 = vld [vmem:[%s1402 + $0x50] sm:$0xf]
        %v1421 = vld [vmem:[%s1402 + $0x54] sm:$0xf]
        %v1422 = vld [vmem:[%s1402 + $0x58] sm:$0xf]
        %v1423 = vld [vmem:[%s1402 + $0x60] sm:$0x8]
        %v1424 = vld [vmem:[%s1402 + $0x64] sm:$0xf]
        %v1425 = vld [vmem:[%s1402 + $0x68] sm:$0xf]
        %v1426 = vld [vmem:[%s1402 + $0x6c] sm:$0xf]
        %v1427 = vld [vmem:[%s1402 + $0x70] sm:$0xf]
        %v1428 = vld [vmem:[%s1402 + $0x78] sm:$0x8]
        %v1429 = vld [vmem:[%s1402 + $0x7c] sm:$0xf]
        %v1430 = vld [vmem:[%s1402 + $0x80] sm:$0xf]
        %v1431 = vld [vmem:[%s1402 + $0x84] sm:$0xf]
        %v1432 = vld [vmem:[%s1402 + $0x88] sm:$0xf]
        %v1433 = vld [vmem:[%s1402 + $0x90] sm:$0x8]
        %v1434 = vld [vmem:[%s1402 + $0x94] sm:$0xf]
        %v1435 = vld [vmem:[%s1402 + $0x98] sm:$0xf]
        %v1436 = vld [vmem:[%s1402 + $0x9c] sm:$0xf]
        %v1437 = vld [vmem:[%s1402 + $0xa0] sm:$0xf]
        %v1438 = vld [vmem:[%s1402 + $0xa8] sm:$0x8]
        %v1439 = vld [vmem:[%s1402 + $0xac] sm:$0xf]
        %v1440 = vld [vmem:[%s1402 + $0xb0] sm:$0xf]
        %v1441 = vld [vmem:[%s1402 + $0xb4] sm:$0xf]
        %v1442 = vld [vmem:[%s1402 + $0xb8] sm:$0xf]
        %vm1443 = vsmask.f32 4368
        %vm1444 = vmor %vm346, %vm1443
        %v1446 = vshrl.u32 %v1403, 16
        %v1448 = vrot.slane %v1446, 7
        %v1449 = vrot.slane %v1448, 4
        %v1451 = vshrl.u32 %v1404, 16
        %v1453 = vrot.slane %v1451, 7
        %v1454 = vshll.u32 %v1404, 16
        %v1456 = vor.u32 %v1453, %v1454
        %v1457 = vsel %vm1444, %v1449, %v1456
        %v1458 = vrot.slane %v1453, 4
        %v1460 = vshrl.u32 %v1405, 16
        %v1462 = vrot.slane %v1460, 7
        %v1463 = vshll.u32 %v1405, 16
        %v1465 = vor.u32 %v1462, %v1463
        %v1466 = vsel %vm1444, %v1458, %v1465
        %v1467 = vrot.slane %v1462, 4
        %v1469 = vshrl.u32 %v1406, 16
        %v1471 = vrot.slane %v1469, 7
        %v1472 = vshll.u32 %v1406, 16
        %v1474 = vor.u32 %v1471, %v1472
        %v1475 = vsel %vm1444, %v1467, %v1474
        %v1476 = vrot.slane %v1471, 4
        %v1478 = vshrl.u32 %v1407, 16
        %v1480 = vrot.slane %v1478, 7
        %v1481 = vshll.u32 %v1407, 16
        %v1483 = vor.u32 %v1480, %v1481
        %v1484 = vsel %vm1444, %v1476, %v1483
        %v1486 = vshrl.u32 %v1408, 16
        %v1488 = vrot.slane %v1486, 7
        %v1489 = vrot.slane %v1488, 4
        %v1491 = vshrl.u32 %v1409, 16
        %v1493 = vrot.slane %v1491, 7
        %v1494 = vshll.u32 %v1409, 16
        %v1496 = vor.u32 %v1493, %v1494
        %v1497 = vsel %vm1444, %v1489, %v1496
        %v1498 = vrot.slane %v1493, 4
        %v1500 = vshrl.u32 %v1410, 16
        %v1502 = vrot.slane %v1500, 7
        %v1503 = vshll.u32 %v1410, 16
        %v1505 = vor.u32 %v1502, %v1503
        %v1506 = vsel %vm1444, %v1498, %v1505
        %v1507 = vrot.slane %v1502, 4
        %v1509 = vshrl.u32 %v1411, 16
        %v1511 = vrot.slane %v1509, 7
        %v1512 = vshll.u32 %v1411, 16
        %v1514 = vor.u32 %v1511, %v1512
        %v1515 = vsel %vm1444, %v1507, %v1514
        %v1516 = vrot.slane %v1511, 4
        %v1518 = vshrl.u32 %v1412, 16
        %v1520 = vrot.slane %v1518, 7
        %v1521 = vshll.u32 %v1412, 16
        %v1523 = vor.u32 %v1520, %v1521
        %v1524 = vsel %vm1444, %v1516, %v1523
        %v1526 = vshrl.u32 %v1413, 16
        %v1528 = vrot.slane %v1526, 7
        %v1529 = vrot.slane %v1528, 4
        %v1531 = vshrl.u32 %v1414, 16
        %v1533 = vrot.slane %v1531, 7
        %v1534 = vshll.u32 %v1414, 16
        %v1536 = vor.u32 %v1533, %v1534
        %v1537 = vsel %vm1444, %v1529, %v1536
        %v1538 = vrot.slane %v1533, 4
        %v1540 = vshrl.u32 %v1415, 16
        %v1542 = vrot.slane %v1540, 7
        %v1543 = vshll.u32 %v1415, 16
        %v1545 = vor.u32 %v1542, %v1543
        %v1546 = vsel %vm1444, %v1538, %v1545
        %v1547 = vrot.slane %v1542, 4
        %v1549 = vshrl.u32 %v1416, 16
        %v1551 = vrot.slane %v1549, 7
        %v1552 = vshll.u32 %v1416, 16
        %v1554 = vor.u32 %v1551, %v1552
        %v1555 = vsel %vm1444, %v1547, %v1554
        %v1556 = vrot.slane %v1551, 4
        %v1558 = vshrl.u32 %v1417, 16
        %v1560 = vrot.slane %v1558, 7
        %v1561 = vshll.u32 %v1417, 16
        %v1563 = vor.u32 %v1560, %v1561
        %v1564 = vsel %vm1444, %v1556, %v1563
        %v1566 = vshrl.u32 %v1418, 16
        %v1568 = vrot.slane %v1566, 7
        %v1569 = vrot.slane %v1568, 4
        %v1571 = vshrl.u32 %v1419, 16
        %v1573 = vrot.slane %v1571, 7
        %v1574 = vshll.u32 %v1419, 16
        %v1576 = vor.u32 %v1573, %v1574
        %v1577 = vsel %vm1444, %v1569, %v1576
        %v1578 = vrot.slane %v1573, 4
        %v1580 = vshrl.u32 %v1420, 16
        %v1582 = vrot.slane %v1580, 7
        %v1583 = vshll.u32 %v1420, 16
        %v1585 = vor.u32 %v1582, %v1583
        %v1586 = vsel %vm1444, %v1578, %v1585
        %v1587 = vrot.slane %v1582, 4
        %v1589 = vshrl.u32 %v1421, 16
        %v1591 = vrot.slane %v1589, 7
        %v1592 = vshll.u32 %v1421, 16
        %v1594 = vor.u32 %v1591, %v1592
        %v1595 = vsel %vm1444, %v1587, %v1594
        %v1596 = vrot.slane %v1591, 4
        %v1598 = vshrl.u32 %v1422, 16
        %v1600 = vrot.slane %v1598, 7
        %v1601 = vshll.u32 %v1422, 16
        %v1603 = vor.u32 %v1600, %v1601
        %v1604 = vsel %vm1444, %v1596, %v1603
        %v1606 = vshrl.u32 %v1423, 16
        %v1608 = vrot.slane %v1606, 7
        %v1609 = vrot.slane %v1608, 4
        %v1611 = vshrl.u32 %v1424, 16
        %v1613 = vrot.slane %v1611, 7
        %v1614 = vshll.u32 %v1424, 16
        %v1616 = vor.u32 %v1613, %v1614
        %v1617 = vsel %vm1444, %v1609, %v1616
        %v1618 = vrot.slane %v1613, 4
        %v1620 = vshrl.u32 %v1425, 16
        %v1622 = vrot.slane %v1620, 7
        %v1623 = vshll.u32 %v1425, 16
        %v1625 = vor.u32 %v1622, %v1623
        %v1626 = vsel %vm1444, %v1618, %v1625
        %v1627 = vrot.slane %v1622, 4
        %v1629 = vshrl.u32 %v1426, 16
        %v1631 = vrot.slane %v1629, 7
        %v1632 = vshll.u32 %v1426, 16
        %v1634 = vor.u32 %v1631, %v1632
        %v1635 = vsel %vm1444, %v1627, %v1634
        %v1636 = vrot.slane %v1631, 4
        %v1638 = vshrl.u32 %v1427, 16
        %v1640 = vrot.slane %v1638, 7
        %v1641 = vshll.u32 %v1427, 16
        %v1643 = vor.u32 %v1640, %v1641
        %v1644 = vsel %vm1444, %v1636, %v1643
        %v1646 = vshrl.u32 %v1428, 16
        %v1648 = vrot.slane %v1646, 7
        %v1649 = vrot.slane %v1648, 4
        %v1651 = vshrl.u32 %v1429, 16
        %v1653 = vrot.slane %v1651, 7
        %v1654 = vshll.u32 %v1429, 16
        %v1656 = vor.u32 %v1653, %v1654
        %v1657 = vsel %vm1444, %v1649, %v1656
        %v1658 = vrot.slane %v1653, 4
        %v1660 = vshrl.u32 %v1430, 16
        %v1662 = vrot.slane %v1660, 7
        %v1663 = vshll.u32 %v1430, 16
        %v1665 = vor.u32 %v1662, %v1663
        %v1666 = vsel %vm1444, %v1658, %v1665
        %v1667 = vrot.slane %v1662, 4
        %v1669 = vshrl.u32 %v1431, 16
        %v1671 = vrot.slane %v1669, 7
        %v1672 = vshll.u32 %v1431, 16
        %v1674 = vor.u32 %v1671, %v1672
        %v1675 = vsel %vm1444, %v1667, %v1674
        %v1676 = vrot.slane %v1671, 4
        %v1678 = vshrl.u32 %v1432, 16
        %v1680 = vrot.slane %v1678, 7
        %v1681 = vshll.u32 %v1432, 16
        %v1683 = vor.u32 %v1680, %v1681
        %v1684 = vsel %vm1444, %v1676, %v1683
        %v1686 = vshrl.u32 %v1433, 16
        %v1688 = vrot.slane %v1686, 7
        %v1689 = vrot.slane %v1688, 4
        %v1691 = vshrl.u32 %v1434, 16
        %v1693 = vrot.slane %v1691, 7
        %v1694 = vshll.u32 %v1434, 16
        %v1696 = vor.u32 %v1693, %v1694
        %v1697 = vsel %vm1444, %v1689, %v1696
        %v1698 = vrot.slane %v1693, 4
        %v1700 = vshrl.u32 %v1435, 16
        %v1702 = vrot.slane %v1700, 7
        %v1703 = vshll.u32 %v1435, 16
        %v1705 = vor.u32 %v1702, %v1703
        %v1706 = vsel %vm1444, %v1698, %v1705
        %v1707 = vrot.slane %v1702, 4
        %v1709 = vshrl.u32 %v1436, 16
        %v1711 = vrot.slane %v1709, 7
        %v1712 = vshll.u32 %v1436, 16
        %v1714 = vor.u32 %v1711, %v1712
        %v1715 = vsel %vm1444, %v1707, %v1714
        %v1716 = vrot.slane %v1711, 4
        %v1718 = vshrl.u32 %v1437, 16
        %v1720 = vrot.slane %v1718, 7
        %v1721 = vshll.u32 %v1437, 16
        %v1723 = vor.u32 %v1720, %v1721
        %v1724 = vsel %vm1444, %v1716, %v1723
        %v1726 = vshrl.u32 %v1438, 16
        %v1728 = vrot.slane %v1726, 7
        %v1729 = vrot.slane %v1728, 4
        %v1731 = vshrl.u32 %v1439, 16
        %v1733 = vrot.slane %v1731, 7
        %v1734 = vshll.u32 %v1439, 16
        %v1736 = vor.u32 %v1733, %v1734
        %v1737 = vsel %vm1444, %v1729, %v1736
        %v1738 = vrot.slane %v1733, 4
        %v1740 = vshrl.u32 %v1440, 16
        %v1742 = vrot.slane %v1740, 7
        %v1743 = vshll.u32 %v1440, 16
        %v1745 = vor.u32 %v1742, %v1743
        %v1746 = vsel %vm1444, %v1738, %v1745
        %v1747 = vrot.slane %v1742, 4
        %v1749 = vshrl.u32 %v1441, 16
        %v1751 = vrot.slane %v1749, 7
        %v1752 = vshll.u32 %v1441, 16
        %v1754 = vor.u32 %v1751, %v1752
        %v1755 = vsel %vm1444, %v1747, %v1754
        %v1756 = vrot.slane %v1751, 4
        %v1758 = vshrl.u32 %v1442, 16
        %v1760 = vrot.slane %v1758, 7
        %v1761 = vshll.u32 %v1442, 16
        %v1763 = vor.u32 %v1760, %v1761
        %v1764 = vsel %vm1444, %v1756, %v1763
        %v1765 = vld [vmem:[%s3] sm:$0xf]
        %v1766 = vld [vmem:[%s3 + $0x4] sm:$0xf]
        %v1767 = vld [vmem:[%s3 + $0x8] sm:$0xf]
        %v1768 = vld [vmem:[%s3 + $0xc] sm:$0xf]
        %s1769 = scalar_lea.vmem %s3, 16
        %v1770 = vld [vmem:[%s1769] sm:$0xf]
        %v1771 = vld [vmem:[%s1769 + $0x4] sm:$0xf]
        %v1772 = vld [vmem:[%s1769 + $0x8] sm:$0xf]
        %v1773 = vld [vmem:[%s1769 + $0xc] sm:$0xf]
        %v1806 = vunpack.c.l.b16 %v1404
        %v1807 = vunpack.c.l.b16 %v1405
        %v1808 = vunpack.c.l.b16 %v1406
        %v1809 = vunpack.c.l.b16 %v1407
        %v1810 = vunpack.c.l.b16 %v1409
        %v1811 = vunpack.c.l.b16 %v1410
        %v1812 = vunpack.c.l.b16 %v1411
        %v1813 = vunpack.c.l.b16 %v1412
        %v1814 = vunpack.c.l.b16 %v1414
        %v1815 = vunpack.c.l.b16 %v1415
        %v1816 = vunpack.c.l.b16 %v1416
        %v1817 = vunpack.c.l.b16 %v1417
        %v1818 = vunpack.c.l.b16 %v1419
        %v1819 = vunpack.c.l.b16 %v1420
        %v1820 = vunpack.c.l.b16 %v1421
        %v1821 = vunpack.c.l.b16 %v1422
        %v1822 = vunpack.c.l.b16 %v1424
        %v1823 = vunpack.c.l.b16 %v1425
        %v1824 = vunpack.c.l.b16 %v1426
        %v1825 = vunpack.c.l.b16 %v1427
        %v1826 = vunpack.c.l.b16 %v1429
        %v1827 = vunpack.c.l.b16 %v1430
        %v1828 = vunpack.c.l.b16 %v1431
        %v1829 = vunpack.c.l.b16 %v1432
        %v1830 = vunpack.c.l.b16 %v1434
        %v1831 = vunpack.c.l.b16 %v1435
        %v1832 = vunpack.c.l.b16 %v1436
        %v1833 = vunpack.c.l.b16 %v1437
        %v1834 = vunpack.c.l.b16 %v1439
        %v1835 = vunpack.c.l.b16 %v1440
        %v1836 = vunpack.c.l.b16 %v1441
        %v1837 = vunpack.c.l.b16 %v1442
        %v1838 = vpack.c.b16 %v1807, %v1806
        %v1839 = vpack.c.b16 %v1809, %v1808
        %v1840 = vpack.c.b16 %v1811, %v1810
        %v1841 = vpack.c.b16 %v1813, %v1812
        %v1842 = vpack.c.b16 %v1815, %v1814
        %v1843 = vpack.c.b16 %v1817, %v1816
        %v1844 = vpack.c.b16 %v1819, %v1818
        %v1845 = vpack.c.b16 %v1821, %v1820
        %v1846 = vpack.c.b16 %v1823, %v1822
        %v1847 = vpack.c.b16 %v1825, %v1824
        %v1848 = vpack.c.b16 %v1827, %v1826
        %v1849 = vpack.c.b16 %v1829, %v1828
        %v1850 = vpack.c.b16 %v1831, %v1830
        %v1851 = vpack.c.b16 %v1833, %v1832
        %v1852 = vpack.c.b16 %v1835, %v1834
        %v1853 = vpack.c.b16 %v1837, %v1836
        %v1858 = vunpack.c.l.b16 %v1770
        %v1859 = vunpack.c.l.b16 %v1771
        %v1860 = vunpack.c.l.b16 %v1772
        %v1861 = vunpack.c.l.b16 %v1773
        %v1862 = vpack.c.b16 %v1859, %v1858
        %v1863 = vpack.c.b16 %v1861, %v1860
        %vm1866 = vcmask 261120
        %v1868 = vsel %vm1866, %v1838, 0
        %v1871 = vsel %vm1866, %v1839, 0
        %v1874 = vsel %vm1866, %v1840, 0
        %v1877 = vsel %vm1866, %v1841, 0
        %v1880 = vsel %vm1866, %v1842, 0
        %v1883 = vsel %vm1866, %v1843, 0
        %v1886 = vsel %vm1866, %v1844, 0
        %v1889 = vsel %vm1866, %v1845, 0
        %v1892 = vsel %vm1866, %v1846, 0
        %v1895 = vsel %vm1866, %v1847, 0
        %v1898 = vsel %vm1866, %v1848, 0
        %v1901 = vsel %vm1866, %v1849, 0
        %v1904 = vsel %vm1866, %v1850, 0
        %v1907 = vsel %vm1866, %v1851, 0
        %v1910 = vsel %vm1866, %v1852, 0
        %v1913 = vsel %vm1866, %v1853, 0
        %1915 = vmatprep.subr.bf16.mxu0 0
        %1916 = vmatpush1.bf16.msra.mxu0 0
        %1917 = vmatprep.subr.bf16.mxu0 0
        %1918 = vmatpush1.bf16.msra.mxu0 0
        %1919 = vmatprep.subr.bf16.mxu0 0
        %1920 = vmatpush1.bf16.msra.mxu0 0
        %1921 = vmatprep.subr.bf16.mxu0 0
        %1922 = vmatpush1.bf16.msra.mxu0 0
        %1923 = vmatprep.subr.bf16.mxu0 0
        %1924 = vmatpush1.bf16.msra.mxu0 0
        %1925 = vmatprep.subr.bf16.mxu0 0
        %1926 = vmatpush1.bf16.msra.mxu0 0
        %1927 = vmatprep.subr.bf16.mxu0 0
        %1928 = vmatpush1.bf16.msra.mxu0 %v1863
        %1929 = vmatprep.subr.bf16.mxu0 0
        %1930 = vmatpush1.bf16.msra.mxu0 %v1862
        %1931 = vmatprep.subr.bf16.mxu0 0
        %1932 = vmatpush2.bf16.msra.mxu0 0
        %1933 = vmatprep.subr.bf16.mxu0 0
        %1934 = vmatpush2.bf16.msra.mxu0 0
        %1935 = vmatprep.subr.bf16.mxu0 0
        %1936 = vmatpush2.bf16.msra.mxu0 0
        %1937 = vmatprep.subr.bf16.mxu0 0
        %1938 = vmatpush2.bf16.msra.mxu0 0
        %1939 = vmatprep.subr.bf16.mxu0 0
        %1940 = vmatpush2.bf16.msra.mxu0 0
        %1941 = vmatprep.subr.bf16.mxu0 0
        %1942 = vmatpush2.bf16.msra.mxu0 0
        %1943 = vmatprep.subr.bf16.mxu0 0
        %1944 = vmatpush2.bf16.msra.mxu0 0
        %1945 = vmatprep.subr.bf16.mxu0 0
        %1946 = vmatpush2.bf16.msra.mxu0 0
        %1947 = vmatprep.mubr.bf16.mxu0 0
        %1948 = vmatmul.mubr.bf16.gmra.mxu0 %v1868
        %v1949 = vpop.f32.mrf.mxu0
        %v1950 = vadd.f32 0.0, %v1949
        %v1951 = vpop.f32.mrf.mxu0
        %v1952 = vpop.f32.mrf.mxu0
        %v1953 = vadd.f32 0.0, %v1952
        %v1954 = vpop.f32.mrf.mxu0
        %1955 = vmatprep.mubr.bf16.mxu0 0
        %1956 = vmatmul.mubr.bf16.gmra.mxu0 %v1871
        %v1957 = vpop.f32.mrf.mxu0
        %v1958 = vadd.f32 0.0, %v1957
        %v1959 = vpop.f32.mrf.mxu0
        %v1960 = vpop.f32.mrf.mxu0
        %v1961 = vadd.f32 0.0, %v1960
        %v1962 = vpop.f32.mrf.mxu0
        %1963 = vmatprep.mubr.bf16.mxu0 0
        %1964 = vmatmul.mubr.bf16.gmra.mxu0 %v1874
        %v1965 = vpop.f32.mrf.mxu0
        %v1966 = vadd.f32 0.0, %v1965
        %v1967 = vpop.f32.mrf.mxu0
        %v1968 = vpop.f32.mrf.mxu0
        %v1969 = vadd.f32 0.0, %v1968
        %v1970 = vpop.f32.mrf.mxu0
        %1971 = vmatprep.mubr.bf16.mxu0 0
        %1972 = vmatmul.mubr.bf16.gmra.mxu0 %v1877
        %v1973 = vpop.f32.mrf.mxu0
        %v1974 = vadd.f32 0.0, %v1973
        %v1975 = vpop.f32.mrf.mxu0
        %v1976 = vpop.f32.mrf.mxu0
        %v1977 = vadd.f32 0.0, %v1976
        %v1978 = vpop.f32.mrf.mxu0
        %1979 = vmatprep.mubr.bf16.mxu0 0
        %1980 = vmatmul.mubr.bf16.gmra.mxu0 %v1880
        %v1981 = vpop.f32.mrf.mxu0
        %v1982 = vadd.f32 0.0, %v1981
        %v1983 = vpop.f32.mrf.mxu0
        %v1984 = vpop.f32.mrf.mxu0
        %v1985 = vadd.f32 0.0, %v1984
        %v1986 = vpop.f32.mrf.mxu0
        %1987 = vmatprep.mubr.bf16.mxu0 0
        %1988 = vmatmul.mubr.bf16.gmra.mxu0 %v1883
        %v1989 = vpop.f32.mrf.mxu0
        %v1990 = vadd.f32 0.0, %v1989
        %v1991 = vpop.f32.mrf.mxu0
        %v1992 = vpop.f32.mrf.mxu0
        %v1993 = vadd.f32 0.0, %v1992
        %v1994 = vpop.f32.mrf.mxu0
        %1995 = vmatprep.mubr.bf16.mxu0 0
        %1996 = vmatmul.mubr.bf16.gmra.mxu0 %v1886
        %v1997 = vpop.f32.mrf.mxu0
        %v1998 = vadd.f32 0.0, %v1997
        %v1999 = vpop.f32.mrf.mxu0
        %v2000 = vpop.f32.mrf.mxu0
        %v2001 = vadd.f32 0.0, %v2000
        %v2002 = vpop.f32.mrf.mxu0
        %2003 = vmatprep.mubr.bf16.mxu0 0
        %2004 = vmatmul.mubr.bf16.gmra.mxu0 %v1889
        %v2005 = vpop.f32.mrf.mxu0
        %v2006 = vadd.f32 0.0, %v2005
        %v2007 = vpop.f32.mrf.mxu0
        %v2008 = vpop.f32.mrf.mxu0
        %v2009 = vadd.f32 0.0, %v2008
        %v2010 = vpop.f32.mrf.mxu0
        %2011 = vmatprep.mubr.bf16.mxu0 0
        %2012 = vmatmul.mubr.bf16.gmra.mxu0 %v1892
        %v2013 = vpop.f32.mrf.mxu0
        %v2014 = vadd.f32 0.0, %v2013
        %v2015 = vpop.f32.mrf.mxu0
        %v2016 = vpop.f32.mrf.mxu0
        %v2017 = vadd.f32 0.0, %v2016
        %v2018 = vpop.f32.mrf.mxu0
        %2019 = vmatprep.mubr.bf16.mxu0 0
        %2020 = vmatmul.mubr.bf16.gmra.mxu0 %v1895
        %v2021 = vpop.f32.mrf.mxu0
        %v2022 = vadd.f32 0.0, %v2021
        %v2023 = vpop.f32.mrf.mxu0
        %v2024 = vpop.f32.mrf.mxu0
        %v2025 = vadd.f32 0.0, %v2024
        %v2026 = vpop.f32.mrf.mxu0
        %2027 = vmatprep.mubr.bf16.mxu0 0
        %2028 = vmatmul.mubr.bf16.gmra.mxu0 %v1898
        %v2029 = vpop.f32.mrf.mxu0
        %v2030 = vadd.f32 0.0, %v2029
        %v2031 = vpop.f32.mrf.mxu0
        %v2032 = vpop.f32.mrf.mxu0
        %v2033 = vadd.f32 0.0, %v2032
        %v2034 = vpop.f32.mrf.mxu0
        %2035 = vmatprep.mubr.bf16.mxu0 0
        %2036 = vmatmul.mubr.bf16.gmra.mxu0 %v1901
        %v2037 = vpop.f32.mrf.mxu0
        %v2038 = vadd.f32 0.0, %v2037
        %v2039 = vpop.f32.mrf.mxu0
        %v2040 = vpop.f32.mrf.mxu0
        %v2041 = vadd.f32 0.0, %v2040
        %v2042 = vpop.f32.mrf.mxu0
        %2043 = vmatprep.mubr.bf16.mxu0 0
        %2044 = vmatmul.mubr.bf16.gmra.mxu0 %v1904
        %v2045 = vpop.f32.mrf.mxu0
        %v2046 = vadd.f32 0.0, %v2045
        %v2047 = vpop.f32.mrf.mxu0
        %v2048 = vpop.f32.mrf.mxu0
        %v2049 = vadd.f32 0.0, %v2048
        %v2050 = vpop.f32.mrf.mxu0
        %2051 = vmatprep.mubr.bf16.mxu0 0
        %2052 = vmatmul.mubr.bf16.gmra.mxu0 %v1907
        %v2053 = vpop.f32.mrf.mxu0
        %v2054 = vadd.f32 0.0, %v2053
        %v2055 = vpop.f32.mrf.mxu0
        %v2056 = vpop.f32.mrf.mxu0
        %v2057 = vadd.f32 0.0, %v2056
        %v2058 = vpop.f32.mrf.mxu0
        %2059 = vmatprep.mubr.bf16.mxu0 0
        %2060 = vmatmul.mubr.bf16.gmra.mxu0 %v1910
        %v2061 = vpop.f32.mrf.mxu0
        %v2062 = vadd.f32 0.0, %v2061
        %v2063 = vpop.f32.mrf.mxu0
        %v2064 = vpop.f32.mrf.mxu0
        %v2065 = vadd.f32 0.0, %v2064
        %v2066 = vpop.f32.mrf.mxu0
        %2067 = vmatprep.mubr.bf16.mxu0 0
        %2068 = vmatmul.mubr.bf16.gmra.mxu0 %v1913
        %v2069 = vpop.f32.mrf.mxu0
        %v2070 = vadd.f32 0.0, %v2069
        %v2071 = vpop.f32.mrf.mxu0
        %v2072 = vpop.f32.mrf.mxu0
        %v2073 = vadd.f32 0.0, %v2072
        %v2074 = vpop.f32.mrf.mxu0
        %2075 = vdwg.mxu0
        %v2076 = vunpack.c.l.b16 %v1457
        %v2077 = vunpack.c.l.b16 %v1466
        %v2078 = vunpack.c.l.b16 %v1475
        %v2079 = vunpack.c.l.b16 %v1484
        %v2080 = vunpack.c.l.b16 %v1497
        %v2081 = vunpack.c.l.b16 %v1506
        %v2082 = vunpack.c.l.b16 %v1515
        %v2083 = vunpack.c.l.b16 %v1524
        %v2084 = vunpack.c.l.b16 %v1537
        %v2085 = vunpack.c.l.b16 %v1546
        %v2086 = vunpack.c.l.b16 %v1555
        %v2087 = vunpack.c.l.b16 %v1564
        %v2088 = vunpack.c.l.b16 %v1577
        %v2089 = vunpack.c.l.b16 %v1586
        %v2090 = vunpack.c.l.b16 %v1595
        %v2091 = vunpack.c.l.b16 %v1604
        %v2092 = vunpack.c.l.b16 %v1617
        %v2093 = vunpack.c.l.b16 %v1626
        %v2094 = vunpack.c.l.b16 %v1635
        %v2095 = vunpack.c.l.b16 %v1644
        %v2096 = vunpack.c.l.b16 %v1657
        %v2097 = vunpack.c.l.b16 %v1666
        %v2098 = vunpack.c.l.b16 %v1675
        %v2099 = vunpack.c.l.b16 %v1684
        %v2100 = vunpack.c.l.b16 %v1697
        %v2101 = vunpack.c.l.b16 %v1706
        %v2102 = vunpack.c.l.b16 %v1715
        %v2103 = vunpack.c.l.b16 %v1724
        %v2104 = vunpack.c.l.b16 %v1737
        %v2105 = vunpack.c.l.b16 %v1746
        %v2106 = vunpack.c.l.b16 %v1755
        %v2107 = vunpack.c.l.b16 %v1764
        %v2108 = vpack.c.b16 %v2077, %v2076
        %v2109 = vpack.c.b16 %v2079, %v2078
        %v2110 = vpack.c.b16 %v2081, %v2080
        %v2111 = vpack.c.b16 %v2083, %v2082
        %v2112 = vpack.c.b16 %v2085, %v2084
        %v2113 = vpack.c.b16 %v2087, %v2086
        %v2114 = vpack.c.b16 %v2089, %v2088
        %v2115 = vpack.c.b16 %v2091, %v2090
        %v2116 = vpack.c.b16 %v2093, %v2092
        %v2117 = vpack.c.b16 %v2095, %v2094
        %v2118 = vpack.c.b16 %v2097, %v2096
        %v2119 = vpack.c.b16 %v2099, %v2098
        %v2120 = vpack.c.b16 %v2101, %v2100
        %v2121 = vpack.c.b16 %v2103, %v2102
        %v2122 = vpack.c.b16 %v2105, %v2104
        %v2123 = vpack.c.b16 %v2107, %v2106
        %v2128 = vunpack.c.l.b16 %v1765
        %v2129 = vunpack.c.l.b16 %v1766
        %v2130 = vunpack.c.l.b16 %v1767
        %v2131 = vunpack.c.l.b16 %v1768
        %v2132 = vpack.c.b16 %v2129, %v2128
        %v2133 = vpack.c.b16 %v2131, %v2130
        %v2137 = vsel %vm1866, %v2108, 0
        %v2140 = vsel %vm1866, %v2109, 0
        %v2143 = vsel %vm1866, %v2110, 0
        %v2146 = vsel %vm1866, %v2111, 0
        %v2149 = vsel %vm1866, %v2112, 0
        %v2152 = vsel %vm1866, %v2113, 0
        %v2155 = vsel %vm1866, %v2114, 0
        %v2158 = vsel %vm1866, %v2115, 0
        %v2161 = vsel %vm1866, %v2116, 0
        %v2164 = vsel %vm1866, %v2117, 0
        %v2167 = vsel %vm1866, %v2118, 0
        %v2170 = vsel %vm1866, %v2119, 0
        %v2173 = vsel %vm1866, %v2120, 0
        %v2176 = vsel %vm1866, %v2121, 0
        %v2179 = vsel %vm1866, %v2122, 0
        %v2182 = vsel %vm1866, %v2123, 0
        %2184 = vmatprep.subr.bf16.mxu0 0
        %2185 = vmatpush1.bf16.msra.mxu0 0
        %2186 = vmatprep.subr.bf16.mxu0 0
        %2187 = vmatpush1.bf16.msra.mxu0 0
        %2188 = vmatprep.subr.bf16.mxu0 0
        %2189 = vmatpush1.bf16.msra.mxu0 0
        %2190 = vmatprep.subr.bf16.mxu0 0
        %2191 = vmatpush1.bf16.msra.mxu0 0
        %2192 = vmatprep.subr.bf16.mxu0 0
        %2193 = vmatpush1.bf16.msra.mxu0 0
        %2194 = vmatprep.subr.bf16.mxu0 0
        %2195 = vmatpush1.bf16.msra.mxu0 0
        %2196 = vmatprep.subr.bf16.mxu0 0
        %2197 = vmatpush1.bf16.msra.mxu0 %v2133
        %2198 = vmatprep.subr.bf16.mxu0 0
        %2199 = vmatpush1.bf16.msra.mxu0 %v2132
        %2200 = vmatprep.subr.bf16.mxu0 0
        %2201 = vmatpush2.bf16.msra.mxu0 0
        %2202 = vmatprep.subr.bf16.mxu0 0
        %2203 = vmatpush2.bf16.msra.mxu0 0
        %2204 = vmatprep.subr.bf16.mxu0 0
        %2205 = vmatpush2.bf16.msra.mxu0 0
        %2206 = vmatprep.subr.bf16.mxu0 0
        %2207 = vmatpush2.bf16.msra.mxu0 0
        %2208 = vmatprep.subr.bf16.mxu0 0
        %2209 = vmatpush2.bf16.msra.mxu0 0
        %2210 = vmatprep.subr.bf16.mxu0 0
        %2211 = vmatpush2.bf16.msra.mxu0 0
        %2212 = vmatprep.subr.bf16.mxu0 0
        %2213 = vmatpush2.bf16.msra.mxu0 0
        %2214 = vmatprep.subr.bf16.mxu0 0
        %2215 = vmatpush2.bf16.msra.mxu0 0
        %2216 = vmatprep.mubr.bf16.mxu0 0
        %2217 = vmatmul.mubr.bf16.gmra.mxu0 %v2137
        %v2218 = vpop.f32.mrf.mxu0
        %v2219 = vadd.f32 %v1950, %v2218
        %v2220 = vpop.f32.mrf.mxu0
        %v2221 = vpop.f32.mrf.mxu0
        %v2222 = vadd.f32 %v1953, %v2221
        %v2223 = vpop.f32.mrf.mxu0
        %2224 = vmatprep.mubr.bf16.mxu0 0
        %2225 = vmatmul.mubr.bf16.gmra.mxu0 %v2140
        %v2226 = vpop.f32.mrf.mxu0
        %v2227 = vadd.f32 %v1958, %v2226
        %v2228 = vpop.f32.mrf.mxu0
        %v2229 = vpop.f32.mrf.mxu0
        %v2230 = vadd.f32 %v1961, %v2229
        %v2231 = vpop.f32.mrf.mxu0
        %2232 = vmatprep.mubr.bf16.mxu0 0
        %2233 = vmatmul.mubr.bf16.gmra.mxu0 %v2143
        %v2234 = vpop.f32.mrf.mxu0
        %v2235 = vadd.f32 %v1966, %v2234
        %v2236 = vpop.f32.mrf.mxu0
        %v2237 = vpop.f32.mrf.mxu0
        %v2238 = vadd.f32 %v1969, %v2237
        %v2239 = vpop.f32.mrf.mxu0
        %2240 = vmatprep.mubr.bf16.mxu0 0
        %2241 = vmatmul.mubr.bf16.gmra.mxu0 %v2146
        %v2242 = vpop.f32.mrf.mxu0
        %v2243 = vadd.f32 %v1974, %v2242
        %v2244 = vpop.f32.mrf.mxu0
        %v2245 = vpop.f32.mrf.mxu0
        %v2246 = vadd.f32 %v1977, %v2245
        %v2247 = vpop.f32.mrf.mxu0
        %2248 = vmatprep.mubr.bf16.mxu0 0
        %2249 = vmatmul.mubr.bf16.gmra.mxu0 %v2149
        %v2250 = vpop.f32.mrf.mxu0
        %v2251 = vadd.f32 %v1982, %v2250
        %v2252 = vpop.f32.mrf.mxu0
        %v2253 = vpop.f32.mrf.mxu0
        %v2254 = vadd.f32 %v1985, %v2253
        %v2255 = vpop.f32.mrf.mxu0
        %2256 = vmatprep.mubr.bf16.mxu0 0
        %2257 = vmatmul.mubr.bf16.gmra.mxu0 %v2152
        %v2258 = vpop.f32.mrf.mxu0
        %v2259 = vadd.f32 %v1990, %v2258
        %v2260 = vpop.f32.mrf.mxu0
        %v2261 = vpop.f32.mrf.mxu0
        %v2262 = vadd.f32 %v1993, %v2261
        %v2263 = vpop.f32.mrf.mxu0
        %2264 = vmatprep.mubr.bf16.mxu0 0
        %2265 = vmatmul.mubr.bf16.gmra.mxu0 %v2155
        %v2266 = vpop.f32.mrf.mxu0
        %v2267 = vadd.f32 %v1998, %v2266
        %v2268 = vpop.f32.mrf.mxu0
        %v2269 = vpop.f32.mrf.mxu0
        %v2270 = vadd.f32 %v2001, %v2269
        %v2271 = vpop.f32.mrf.mxu0
        %2272 = vmatprep.mubr.bf16.mxu0 0
        %2273 = vmatmul.mubr.bf16.gmra.mxu0 %v2158
        %v2274 = vpop.f32.mrf.mxu0
        %v2275 = vadd.f32 %v2006, %v2274
        %v2276 = vpop.f32.mrf.mxu0
        %v2277 = vpop.f32.mrf.mxu0
        %v2278 = vadd.f32 %v2009, %v2277
        %v2279 = vpop.f32.mrf.mxu0
        %2280 = vmatprep.mubr.bf16.mxu0 0
        %2281 = vmatmul.mubr.bf16.gmra.mxu0 %v2161
        %v2282 = vpop.f32.mrf.mxu0
        %v2283 = vadd.f32 %v2014, %v2282
        %v2284 = vpop.f32.mrf.mxu0
        %v2285 = vpop.f32.mrf.mxu0
        %v2286 = vadd.f32 %v2017, %v2285
        %v2287 = vpop.f32.mrf.mxu0
        %2288 = vmatprep.mubr.bf16.mxu0 0
        %2289 = vmatmul.mubr.bf16.gmra.mxu0 %v2164
        %v2290 = vpop.f32.mrf.mxu0
        %v2291 = vadd.f32 %v2022, %v2290
        %v2292 = vpop.f32.mrf.mxu0
        %v2293 = vpop.f32.mrf.mxu0
        %v2294 = vadd.f32 %v2025, %v2293
        %v2295 = vpop.f32.mrf.mxu0
        %2296 = vmatprep.mubr.bf16.mxu0 0
        %2297 = vmatmul.mubr.bf16.gmra.mxu0 %v2167
        %v2298 = vpop.f32.mrf.mxu0
        %v2299 = vadd.f32 %v2030, %v2298
        %v2300 = vpop.f32.mrf.mxu0
        %v2301 = vpop.f32.mrf.mxu0
        %v2302 = vadd.f32 %v2033, %v2301
        %v2303 = vpop.f32.mrf.mxu0
        %2304 = vmatprep.mubr.bf16.mxu0 0
        %2305 = vmatmul.mubr.bf16.gmra.mxu0 %v2170
        %v2306 = vpop.f32.mrf.mxu0
        %v2307 = vadd.f32 %v2038, %v2306
        %v2308 = vpop.f32.mrf.mxu0
        %v2309 = vpop.f32.mrf.mxu0
        %v2310 = vadd.f32 %v2041, %v2309
        %v2311 = vpop.f32.mrf.mxu0
        %2312 = vmatprep.mubr.bf16.mxu0 0
        %2313 = vmatmul.mubr.bf16.gmra.mxu0 %v2173
        %v2314 = vpop.f32.mrf.mxu0
        %v2315 = vadd.f32 %v2046, %v2314
        %v2316 = vpop.f32.mrf.mxu0
        %v2317 = vpop.f32.mrf.mxu0
        %v2318 = vadd.f32 %v2049, %v2317
        %v2319 = vpop.f32.mrf.mxu0
        %2320 = vmatprep.mubr.bf16.mxu0 0
        %2321 = vmatmul.mubr.bf16.gmra.mxu0 %v2176
        %v2322 = vpop.f32.mrf.mxu0
        %v2323 = vadd.f32 %v2054, %v2322
        %v2324 = vpop.f32.mrf.mxu0
        %v2325 = vpop.f32.mrf.mxu0
        %v2326 = vadd.f32 %v2057, %v2325
        %v2327 = vpop.f32.mrf.mxu0
        %2328 = vmatprep.mubr.bf16.mxu0 0
        %2329 = vmatmul.mubr.bf16.gmra.mxu0 %v2179
        %v2330 = vpop.f32.mrf.mxu0
        %v2331 = vadd.f32 %v2062, %v2330
        %v2332 = vpop.f32.mrf.mxu0
        %v2333 = vpop.f32.mrf.mxu0
        %v2334 = vadd.f32 %v2065, %v2333
        %v2335 = vpop.f32.mrf.mxu0
        %2336 = vmatprep.mubr.bf16.mxu0 0
        %2337 = vmatmul.mubr.bf16.gmra.mxu0 %v2182
        %v2338 = vpop.f32.mrf.mxu0
        %v2339 = vadd.f32 %v2070, %v2338
        %v2340 = vpop.f32.mrf.mxu0
        %v2341 = vpop.f32.mrf.mxu0
        %v2342 = vadd.f32 %v2073, %v2341
        %v2343 = vpop.f32.mrf.mxu0
        %2344 = vdwg.mxu0
        %v2345 = vld [vmem:[%s1402 + $0x4] sm:$0xf]
        %v2346 = vld [vmem:[%s1402 + $0x8] sm:$0xf]
        %v2347 = vld [vmem:[%s1402 + $0xc] sm:$0xf]
        %v2348 = vld [vmem:[%s1402 + $0x10] sm:$0xf]
        %v2349 = vld [vmem:[%s1402 + $0x14] sm:$0x1]
        %v2350 = vld [vmem:[%s1402 + $0x1c] sm:$0xf]
        %v2351 = vld [vmem:[%s1402 + $0x20] sm:$0xf]
        %v2352 = vld [vmem:[%s1402 + $0x24] sm:$0xf]
        %v2353 = vld [vmem:[%s1402 + $0x28] sm:$0xf]
        %v2354 = vld [vmem:[%s1402 + $0x2c] sm:$0x1]
        %v2355 = vld [vmem:[%s1402 + $0x34] sm:$0xf]
        %v2356 = vld [vmem:[%s1402 + $0x38] sm:$0xf]
        %v2357 = vld [vmem:[%s1402 + $0x3c] sm:$0xf]
        %v2358 = vld [vmem:[%s1402 + $0x40] sm:$0xf]
        %v2359 = vld [vmem:[%s1402 + $0x44] sm:$0x1]
        %v2360 = vld [vmem:[%s1402 + $0x4c] sm:$0xf]
        %v2361 = vld [vmem:[%s1402 + $0x50] sm:$0xf]
        %v2362 = vld [vmem:[%s1402 + $0x54] sm:$0xf]
        %v2363 = vld [vmem:[%s1402 + $0x58] sm:$0xf]
        %v2364 = vld [vmem:[%s1402 + $0x5c] sm:$0x1]
        %v2365 = vld [vmem:[%s1402 + $0x64] sm:$0xf]
        %v2366 = vld [vmem:[%s1402 + $0x68] sm:$0xf]
        %v2367 = vld [vmem:[%s1402 + $0x6c] sm:$0xf]
        %v2368 = vld [vmem:[%s1402 + $0x70] sm:$0xf]
        %v2369 = vld [vmem:[%s1402 + $0x74] sm:$0x1]
        %v2370 = vld [vmem:[%s1402 + $0x7c] sm:$0xf]
        %v2371 = vld [vmem:[%s1402 + $0x80] sm:$0xf]
        %v2372 = vld [vmem:[%s1402 + $0x84] sm:$0xf]
        %v2373 = vld [vmem:[%s1402 + $0x88] sm:$0xf]
        %v2374 = vld [vmem:[%s1402 + $0x8c] sm:$0x1]
        %v2375 = vld [vmem:[%s1402 + $0x94] sm:$0xf]
        %v2376 = vld [vmem:[%s1402 + $0x98] sm:$0xf]
        %v2377 = vld [vmem:[%s1402 + $0x9c] sm:$0xf]
        %v2378 = vld [vmem:[%s1402 + $0xa0] sm:$0xf]
        %v2379 = vld [vmem:[%s1402 + $0xa4] sm:$0x1]
        %v2380 = vld [vmem:[%s1402 + $0xac] sm:$0xf]
        %v2381 = vld [vmem:[%s1402 + $0xb0] sm:$0xf]
        %v2382 = vld [vmem:[%s1402 + $0xb4] sm:$0xf]
        %v2383 = vld [vmem:[%s1402 + $0xb8] sm:$0xf]
        %v2384 = vld [vmem:[%s1402 + $0xbc] sm:$0x1]
        %vm2385 = vsmask.f32 3328
        %vm2386 = vsmask.f32 7440
        %vm2387 = vmor %vm2385, %vm2386
        %v2389 = vshrl.u32 %v2345, 16
        %v2391 = vrot.slane %v2389, 4
        %v2392 = vshll.u32 %v2345, 16
        %v2394 = vrot.slane %v2392, 5
        %v2395 = vor.u32 %v2391, %v2394
        %v2396 = vrot.slane %v2395, 4
        %v2398 = vshll.u32 %v2346, 16
        %v2400 = vrot.slane %v2398, 5
        %v2401 = vsel %vm2387, %v2396, %v2400
        %v2402 = vshrl.u32 %v2346, 16
        %v2404 = vrot.slane %v2402, 4
        %v2405 = vor.u32 %v2404, %v2400
        %v2406 = vrot.slane %v2405, 4
        %v2408 = vshll.u32 %v2347, 16
        %v2410 = vrot.slane %v2408, 5
        %v2411 = vsel %vm2387, %v2406, %v2410
        %v2412 = vshrl.u32 %v2347, 16
        %v2414 = vrot.slane %v2412, 4
        %v2415 = vor.u32 %v2414, %v2410
        %v2416 = vrot.slane %v2415, 4
        %v2418 = vshll.u32 %v2348, 16
        %v2420 = vrot.slane %v2418, 5
        %v2421 = vsel %vm2387, %v2416, %v2420
        %v2422 = vshrl.u32 %v2348, 16
        %v2424 = vrot.slane %v2422, 4
        %v2425 = vor.u32 %v2424, %v2420
        %v2426 = vrot.slane %v2425, 4
        %v2428 = vshll.u32 %v2349, 16
        %v2430 = vrot.slane %v2428, 5
        %v2431 = vsel %vm2387, %v2426, %v2430
        %v2433 = vshrl.u32 %v2350, 16
        %v2435 = vrot.slane %v2433, 4
        %v2436 = vshll.u32 %v2350, 16
        %v2438 = vrot.slane %v2436, 5
        %v2439 = vor.u32 %v2435, %v2438
        %v2440 = vrot.slane %v2439, 4
        %v2442 = vshll.u32 %v2351, 16
        %v2444 = vrot.slane %v2442, 5
        %v2445 = vsel %vm2387, %v2440, %v2444
        %v2446 = vshrl.u32 %v2351, 16
        %v2448 = vrot.slane %v2446, 4
        %v2449 = vor.u32 %v2448, %v2444
        %v2450 = vrot.slane %v2449, 4
        %v2452 = vshll.u32 %v2352, 16
        %v2454 = vrot.slane %v2452, 5
        %v2455 = vsel %vm2387, %v2450, %v2454
        %v2456 = vshrl.u32 %v2352, 16
        %v2458 = vrot.slane %v2456, 4
        %v2459 = vor.u32 %v2458, %v2454
        %v2460 = vrot.slane %v2459, 4
        %v2462 = vshll.u32 %v2353, 16
        %v2464 = vrot.slane %v2462, 5
        %v2465 = vsel %vm2387, %v2460, %v2464
        %v2466 = vshrl.u32 %v2353, 16
        %v2468 = vrot.slane %v2466, 4
        %v2469 = vor.u32 %v2468, %v2464
        %v2470 = vrot.slane %v2469, 4
        %v2472 = vshll.u32 %v2354, 16
        %v2474 = vrot.slane %v2472, 5
        %v2475 = vsel %vm2387, %v2470, %v2474
        %v2477 = vshrl.u32 %v2355, 16
        %v2479 = vrot.slane %v2477, 4
        %v2480 = vshll.u32 %v2355, 16
        %v2482 = vrot.slane %v2480, 5
        %v2483 = vor.u32 %v2479, %v2482
        %v2484 = vrot.slane %v2483, 4
        %v2486 = vshll.u32 %v2356, 16
        %v2488 = vrot.slane %v2486, 5
        %v2489 = vsel %vm2387, %v2484, %v2488
        %v2490 = vshrl.u32 %v2356, 16
        %v2492 = vrot.slane %v2490, 4
        %v2493 = vor.u32 %v2492, %v2488
        %v2494 = vrot.slane %v2493, 4
        %v2496 = vshll.u32 %v2357, 16
        %v2498 = vrot.slane %v2496, 5
        %v2499 = vsel %vm2387, %v2494, %v2498
        %v2500 = vshrl.u32 %v2357, 16
        %v2502 = vrot.slane %v2500, 4
        %v2503 = vor.u32 %v2502, %v2498
        %v2504 = vrot.slane %v2503, 4
        %v2506 = vshll.u32 %v2358, 16
        %v2508 = vrot.slane %v2506, 5
        %v2509 = vsel %vm2387, %v2504, %v2508
        %v2510 = vshrl.u32 %v2358, 16
        %v2512 = vrot.slane %v2510, 4
        %v2513 = vor.u32 %v2512, %v2508
        %v2514 = vrot.slane %v2513, 4
        %v2516 = vshll.u32 %v2359, 16
        %v2518 = vrot.slane %v2516, 5
        %v2519 = vsel %vm2387, %v2514, %v2518
        %v2521 = vshrl.u32 %v2360, 16
        %v2523 = vrot.slane %v2521, 4
        %v2524 = vshll.u32 %v2360, 16
        %v2526 = vrot.slane %v2524, 5
        %v2527 = vor.u32 %v2523, %v2526
        %v2528 = vrot.slane %v2527, 4
        %v2530 = vshll.u32 %v2361, 16
        %v2532 = vrot.slane %v2530, 5
        %v2533 = vsel %vm2387, %v2528, %v2532
        %v2534 = vshrl.u32 %v2361, 16
        %v2536 = vrot.slane %v2534, 4
        %v2537 = vor.u32 %v2536, %v2532
        %v2538 = vrot.slane %v2537, 4
        %v2540 = vshll.u32 %v2362, 16
        %v2542 = vrot.slane %v2540, 5
        %v2543 = vsel %vm2387, %v2538, %v2542
        %v2544 = vshrl.u32 %v2362, 16
        %v2546 = vrot.slane %v2544, 4
        %v2547 = vor.u32 %v2546, %v2542
        %v2548 = vrot.slane %v2547, 4
        %v2550 = vshll.u32 %v2363, 16
        %v2552 = vrot.slane %v2550, 5
        %v2553 = vsel %vm2387, %v2548, %v2552
        %v2554 = vshrl.u32 %v2363, 16
        %v2556 = vrot.slane %v2554, 4
        %v2557 = vor.u32 %v2556, %v2552
        %v2558 = vrot.slane %v2557, 4
        %v2560 = vshll.u32 %v2364, 16
        %v2562 = vrot.slane %v2560, 5
        %v2563 = vsel %vm2387, %v2558, %v2562
        %v2565 = vshrl.u32 %v2365, 16
        %v2567 = vrot.slane %v2565, 4
        %v2568 = vshll.u32 %v2365, 16
        %v2570 = vrot.slane %v2568, 5
        %v2571 = vor.u32 %v2567, %v2570
        %v2572 = vrot.slane %v2571, 4
        %v2574 = vshll.u32 %v2366, 16
        %v2576 = vrot.slane %v2574, 5
        %v2577 = vsel %vm2387, %v2572, %v2576
        %v2578 = vshrl.u32 %v2366, 16
        %v2580 = vrot.slane %v2578, 4
        %v2581 = vor.u32 %v2580, %v2576
        %v2582 = vrot.slane %v2581, 4
        %v2584 = vshll.u32 %v2367, 16
        %v2586 = vrot.slane %v2584, 5
        %v2587 = vsel %vm2387, %v2582, %v2586
        %v2588 = vshrl.u32 %v2367, 16
        %v2590 = vrot.slane %v2588, 4
        %v2591 = vor.u32 %v2590, %v2586
        %v2592 = vrot.slane %v2591, 4
        %v2594 = vshll.u32 %v2368, 16
        %v2596 = vrot.slane %v2594, 5
        %v2597 = vsel %vm2387, %v2592, %v2596
        %v2598 = vshrl.u32 %v2368, 16
        %v2600 = vrot.slane %v2598, 4
        %v2601 = vor.u32 %v2600, %v2596
        %v2602 = vrot.slane %v2601, 4
        %v2604 = vshll.u32 %v2369, 16
        %v2606 = vrot.slane %v2604, 5
        %v2607 = vsel %vm2387, %v2602, %v2606
        %v2609 = vshrl.u32 %v2370, 16
        %v2611 = vrot.slane %v2609, 4
        %v2612 = vshll.u32 %v2370, 16
        %v2614 = vrot.slane %v2612, 5
        %v2615 = vor.u32 %v2611, %v2614
        %v2616 = vrot.slane %v2615, 4
        %v2618 = vshll.u32 %v2371, 16
        %v2620 = vrot.slane %v2618, 5
        %v2621 = vsel %vm2387, %v2616, %v2620
        %v2622 = vshrl.u32 %v2371, 16
        %v2624 = vrot.slane %v2622, 4
        %v2625 = vor.u32 %v2624, %v2620
        %v2626 = vrot.slane %v2625, 4
        %v2628 = vshll.u32 %v2372, 16
        %v2630 = vrot.slane %v2628, 5
        %v2631 = vsel %vm2387, %v2626, %v2630
        %v2632 = vshrl.u32 %v2372, 16
        %v2634 = vrot.slane %v2632, 4
        %v2635 = vor.u32 %v2634, %v2630
        %v2636 = vrot.slane %v2635, 4
        %v2638 = vshll.u32 %v2373, 16
        %v2640 = vrot.slane %v2638, 5
        %v2641 = vsel %vm2387, %v2636, %v2640
        %v2642 = vshrl.u32 %v2373, 16
        %v2644 = vrot.slane %v2642, 4
        %v2645 = vor.u32 %v2644, %v2640
        %v2646 = vrot.slane %v2645, 4
        %v2648 = vshll.u32 %v2374, 16
        %v2650 = vrot.slane %v2648, 5
        %v2651 = vsel %vm2387, %v2646, %v2650
        %v2653 = vshrl.u32 %v2375, 16
        %v2655 = vrot.slane %v2653, 4
        %v2656 = vshll.u32 %v2375, 16
        %v2658 = vrot.slane %v2656, 5
        %v2659 = vor.u32 %v2655, %v2658
        %v2660 = vrot.slane %v2659, 4
        %v2662 = vshll.u32 %v2376, 16
        %v2664 = vrot.slane %v2662, 5
        %v2665 = vsel %vm2387, %v2660, %v2664
        %v2666 = vshrl.u32 %v2376, 16
        %v2668 = vrot.slane %v2666, 4
        %v2669 = vor.u32 %v2668, %v2664
        %v2670 = vrot.slane %v2669, 4
        %v2672 = vshll.u32 %v2377, 16
        %v2674 = vrot.slane %v2672, 5
        %v2675 = vsel %vm2387, %v2670, %v2674
        %v2676 = vshrl.u32 %v2377, 16
        %v2678 = vrot.slane %v2676, 4
        %v2679 = vor.u32 %v2678, %v2674
        %v2680 = vrot.slane %v2679, 4
        %v2682 = vshll.u32 %v2378, 16
        %v2684 = vrot.slane %v2682, 5
        %v2685 = vsel %vm2387, %v2680, %v2684
        %v2686 = vshrl.u32 %v2378, 16
        %v2688 = vrot.slane %v2686, 4
        %v2689 = vor.u32 %v2688, %v2684
        %v2690 = vrot.slane %v2689, 4
        %v2692 = vshll.u32 %v2379, 16
        %v2694 = vrot.slane %v2692, 5
        %v2695 = vsel %vm2387, %v2690, %v2694
        %v2697 = vshrl.u32 %v2380, 16
        %v2699 = vrot.slane %v2697, 4
        %v2700 = vshll.u32 %v2380, 16
        %v2702 = vrot.slane %v2700, 5
        %v2703 = vor.u32 %v2699, %v2702
        %v2704 = vrot.slane %v2703, 4
        %v2706 = vshll.u32 %v2381, 16
        %v2708 = vrot.slane %v2706, 5
        %v2709 = vsel %vm2387, %v2704, %v2708
        %v2710 = vshrl.u32 %v2381, 16
        %v2712 = vrot.slane %v2710, 4
        %v2713 = vor.u32 %v2712, %v2708
        %v2714 = vrot.slane %v2713, 4
        %v2716 = vshll.u32 %v2382, 16
        %v2718 = vrot.slane %v2716, 5
        %v2719 = vsel %vm2387, %v2714, %v2718
        %v2720 = vshrl.u32 %v2382, 16
        %v2722 = vrot.slane %v2720, 4
        %v2723 = vor.u32 %v2722, %v2718
        %v2724 = vrot.slane %v2723, 4
        %v2726 = vshll.u32 %v2383, 16
        %v2728 = vrot.slane %v2726, 5
        %v2729 = vsel %vm2387, %v2724, %v2728
        %v2730 = vshrl.u32 %v2383, 16
        %v2732 = vrot.slane %v2730, 4
        %v2733 = vor.u32 %v2732, %v2728
        %v2734 = vrot.slane %v2733, 4
        %v2736 = vshll.u32 %v2384, 16
        %v2738 = vrot.slane %v2736, 5
        %v2739 = vsel %vm2387, %v2734, %v2738
        %s2740 = scalar_lea.vmem %s3, 32
        %v2741 = vld [vmem:[%s2740] sm:$0xf]
        %v2742 = vld [vmem:[%s2740 + $0x4] sm:$0xf]
        %v2743 = vld [vmem:[%s2740 + $0x8] sm:$0xf]
        %v2744 = vld [vmem:[%s2740 + $0xc] sm:$0xf]
        %v2745 = vunpack.c.l.b16 %v2401
        %v2746 = vunpack.c.l.b16 %v2411
        %v2747 = vunpack.c.l.b16 %v2421
        %v2748 = vunpack.c.l.b16 %v2431
        %v2749 = vunpack.c.l.b16 %v2445
        %v2750 = vunpack.c.l.b16 %v2455
        %v2751 = vunpack.c.l.b16 %v2465
        %v2752 = vunpack.c.l.b16 %v2475
        %v2753 = vunpack.c.l.b16 %v2489
        %v2754 = vunpack.c.l.b16 %v2499
        %v2755 = vunpack.c.l.b16 %v2509
        %v2756 = vunpack.c.l.b16 %v2519
        %v2757 = vunpack.c.l.b16 %v2533
        %v2758 = vunpack.c.l.b16 %v2543
        %v2759 = vunpack.c.l.b16 %v2553
        %v2760 = vunpack.c.l.b16 %v2563
        %v2761 = vunpack.c.l.b16 %v2577
        %v2762 = vunpack.c.l.b16 %v2587
        %v2763 = vunpack.c.l.b16 %v2597
        %v2764 = vunpack.c.l.b16 %v2607
        %v2765 = vunpack.c.l.b16 %v2621
        %v2766 = vunpack.c.l.b16 %v2631
        %v2767 = vunpack.c.l.b16 %v2641
        %v2768 = vunpack.c.l.b16 %v2651
        %v2769 = vunpack.c.l.b16 %v2665
        %v2770 = vunpack.c.l.b16 %v2675
        %v2771 = vunpack.c.l.b16 %v2685
        %v2772 = vunpack.c.l.b16 %v2695
        %v2773 = vunpack.c.l.b16 %v2709
        %v2774 = vunpack.c.l.b16 %v2719
        %v2775 = vunpack.c.l.b16 %v2729
        %v2776 = vunpack.c.l.b16 %v2739
        %v2777 = vpack.c.b16 %v2746, %v2745
        %v2778 = vpack.c.b16 %v2748, %v2747
        %v2779 = vpack.c.b16 %v2750, %v2749
        %v2780 = vpack.c.b16 %v2752, %v2751
        %v2781 = vpack.c.b16 %v2754, %v2753
        %v2782 = vpack.c.b16 %v2756, %v2755
        %v2783 = vpack.c.b16 %v2758, %v2757
        %v2784 = vpack.c.b16 %v2760, %v2759
        %v2785 = vpack.c.b16 %v2762, %v2761
        %v2786 = vpack.c.b16 %v2764, %v2763
        %v2787 = vpack.c.b16 %v2766, %v2765
        %v2788 = vpack.c.b16 %v2768, %v2767
        %v2789 = vpack.c.b16 %v2770, %v2769
        %v2790 = vpack.c.b16 %v2772, %v2771
        %v2791 = vpack.c.b16 %v2774, %v2773
        %v2792 = vpack.c.b16 %v2776, %v2775
        %v2797 = vunpack.c.l.b16 %v2741
        %v2798 = vunpack.c.l.b16 %v2742
        %v2799 = vunpack.c.l.b16 %v2743
        %v2800 = vunpack.c.l.b16 %v2744
        %v2801 = vpack.c.b16 %v2798, %v2797
        %v2802 = vpack.c.b16 %v2800, %v2799
        %v2806 = vsel %vm1866, %v2777, 0
        %v2809 = vsel %vm1866, %v2778, 0
        %v2812 = vsel %vm1866, %v2779, 0
        %v2815 = vsel %vm1866, %v2780, 0
        %v2818 = vsel %vm1866, %v2781, 0
        %v2821 = vsel %vm1866, %v2782, 0
        %v2824 = vsel %vm1866, %v2783, 0
        %v2827 = vsel %vm1866, %v2784, 0
        %v2830 = vsel %vm1866, %v2785, 0
        %v2833 = vsel %vm1866, %v2786, 0
        %v2836 = vsel %vm1866, %v2787, 0
        %v2839 = vsel %vm1866, %v2788, 0
        %v2842 = vsel %vm1866, %v2789, 0
        %v2845 = vsel %vm1866, %v2790, 0
        %v2848 = vsel %vm1866, %v2791, 0
        %v2851 = vsel %vm1866, %v2792, 0
        %2853 = vmatprep.subr.bf16.mxu0 0
        %2854 = vmatpush1.bf16.msra.mxu0 0
        %2855 = vmatprep.subr.bf16.mxu0 0
        %2856 = vmatpush1.bf16.msra.mxu0 0
        %2857 = vmatprep.subr.bf16.mxu0 0
        %2858 = vmatpush1.bf16.msra.mxu0 0
        %2859 = vmatprep.subr.bf16.mxu0 0
        %2860 = vmatpush1.bf16.msra.mxu0 0
        %2861 = vmatprep.subr.bf16.mxu0 0
        %2862 = vmatpush1.bf16.msra.mxu0 0
        %2863 = vmatprep.subr.bf16.mxu0 0
        %2864 = vmatpush1.bf16.msra.mxu0 0
        %2865 = vmatprep.subr.bf16.mxu0 0
        %2866 = vmatpush1.bf16.msra.mxu0 %v2802
        %2867 = vmatprep.subr.bf16.mxu0 0
        %2868 = vmatpush1.bf16.msra.mxu0 %v2801
        %2869 = vmatprep.subr.bf16.mxu0 0
        %2870 = vmatpush2.bf16.msra.mxu0 0
        %2871 = vmatprep.subr.bf16.mxu0 0
        %2872 = vmatpush2.bf16.msra.mxu0 0
        %2873 = vmatprep.subr.bf16.mxu0 0
        %2874 = vmatpush2.bf16.msra.mxu0 0
        %2875 = vmatprep.subr.bf16.mxu0 0
        %2876 = vmatpush2.bf16.msra.mxu0 0
        %2877 = vmatprep.subr.bf16.mxu0 0
        %2878 = vmatpush2.bf16.msra.mxu0 0
        %2879 = vmatprep.subr.bf16.mxu0 0
        %2880 = vmatpush2.bf16.msra.mxu0 0
        %2881 = vmatprep.subr.bf16.mxu0 0
        %2882 = vmatpush2.bf16.msra.mxu0 0
        %2883 = vmatprep.subr.bf16.mxu0 0
        %2884 = vmatpush2.bf16.msra.mxu0 0
        %2885 = vmatprep.mubr.bf16.mxu0 0
        %2886 = vmatmul.mubr.bf16.gmra.mxu0 %v2806
        %v2887 = vpop.f32.mrf.mxu0
        %v2888 = vadd.f32 0.0, %v2887
        %v2889 = vpop.f32.mrf.mxu0
        %v2890 = vpop.f32.mrf.mxu0
        %v2891 = vadd.f32 0.0, %v2890
        %v2892 = vpop.f32.mrf.mxu0
        %2893 = vmatprep.mubr.bf16.mxu0 0
        %2894 = vmatmul.mubr.bf16.gmra.mxu0 %v2809
        %v2895 = vpop.f32.mrf.mxu0
        %v2896 = vadd.f32 0.0, %v2895
        %v2897 = vpop.f32.mrf.mxu0
        %v2898 = vpop.f32.mrf.mxu0
        %v2899 = vadd.f32 0.0, %v2898
        %v2900 = vpop.f32.mrf.mxu0
        %2901 = vmatprep.mubr.bf16.mxu0 0
        %2902 = vmatmul.mubr.bf16.gmra.mxu0 %v2812
        %v2903 = vpop.f32.mrf.mxu0
        %v2904 = vadd.f32 0.0, %v2903
        %v2905 = vpop.f32.mrf.mxu0
        %v2906 = vpop.f32.mrf.mxu0
        %v2907 = vadd.f32 0.0, %v2906
        %v2908 = vpop.f32.mrf.mxu0
        %2909 = vmatprep.mubr.bf16.mxu0 0
        %2910 = vmatmul.mubr.bf16.gmra.mxu0 %v2815
        %v2911 = vpop.f32.mrf.mxu0
        %v2912 = vadd.f32 0.0, %v2911
        %v2913 = vpop.f32.mrf.mxu0
        %v2914 = vpop.f32.mrf.mxu0
        %v2915 = vadd.f32 0.0, %v2914
        %v2916 = vpop.f32.mrf.mxu0
        %2917 = vmatprep.mubr.bf16.mxu0 0
        %2918 = vmatmul.mubr.bf16.gmra.mxu0 %v2818
        %v2919 = vpop.f32.mrf.mxu0
        %v2920 = vadd.f32 0.0, %v2919
        %v2921 = vpop.f32.mrf.mxu0
        %v2922 = vpop.f32.mrf.mxu0
        %v2923 = vadd.f32 0.0, %v2922
        %v2924 = vpop.f32.mrf.mxu0
        %2925 = vmatprep.mubr.bf16.mxu0 0
        %2926 = vmatmul.mubr.bf16.gmra.mxu0 %v2821
        %v2927 = vpop.f32.mrf.mxu0
        %v2928 = vadd.f32 0.0, %v2927
        %v2929 = vpop.f32.mrf.mxu0
        %v2930 = vpop.f32.mrf.mxu0
        %v2931 = vadd.f32 0.0, %v2930
        %v2932 = vpop.f32.mrf.mxu0
        %2933 = vmatprep.mubr.bf16.mxu0 0
        %2934 = vmatmul.mubr.bf16.gmra.mxu0 %v2824
        %v2935 = vpop.f32.mrf.mxu0
        %v2936 = vadd.f32 0.0, %v2935
        %v2937 = vpop.f32.mrf.mxu0
        %v2938 = vpop.f32.mrf.mxu0
        %v2939 = vadd.f32 0.0, %v2938
        %v2940 = vpop.f32.mrf.mxu0
        %2941 = vmatprep.mubr.bf16.mxu0 0
        %2942 = vmatmul.mubr.bf16.gmra.mxu0 %v2827
        %v2943 = vpop.f32.mrf.mxu0
        %v2944 = vadd.f32 0.0, %v2943
        %v2945 = vpop.f32.mrf.mxu0
        %v2946 = vpop.f32.mrf.mxu0
        %v2947 = vadd.f32 0.0, %v2946
        %v2948 = vpop.f32.mrf.mxu0
        %2949 = vmatprep.mubr.bf16.mxu0 0
        %2950 = vmatmul.mubr.bf16.gmra.mxu0 %v2830
        %v2951 = vpop.f32.mrf.mxu0
        %v2952 = vadd.f32 0.0, %v2951
        %v2953 = vpop.f32.mrf.mxu0
        %v2954 = vpop.f32.mrf.mxu0
        %v2955 = vadd.f32 0.0, %v2954
        %v2956 = vpop.f32.mrf.mxu0
        %2957 = vmatprep.mubr.bf16.mxu0 0
        %2958 = vmatmul.mubr.bf16.gmra.mxu0 %v2833
        %v2959 = vpop.f32.mrf.mxu0
        %v2960 = vadd.f32 0.0, %v2959
        %v2961 = vpop.f32.mrf.mxu0
        %v2962 = vpop.f32.mrf.mxu0
        %v2963 = vadd.f32 0.0, %v2962
        %v2964 = vpop.f32.mrf.mxu0
        %2965 = vmatprep.mubr.bf16.mxu0 0
        %2966 = vmatmul.mubr.bf16.gmra.mxu0 %v2836
        %v2967 = vpop.f32.mrf.mxu0
        %v2968 = vadd.f32 0.0, %v2967
        %v2969 = vpop.f32.mrf.mxu0
        %v2970 = vpop.f32.mrf.mxu0
        %v2971 = vadd.f32 0.0, %v2970
        %v2972 = vpop.f32.mrf.mxu0
        %2973 = vmatprep.mubr.bf16.mxu0 0
        %2974 = vmatmul.mubr.bf16.gmra.mxu0 %v2839
        %v2975 = vpop.f32.mrf.mxu0
        %v2976 = vadd.f32 0.0, %v2975
        %v2977 = vpop.f32.mrf.mxu0
        %v2978 = vpop.f32.mrf.mxu0
        %v2979 = vadd.f32 0.0, %v2978
        %v2980 = vpop.f32.mrf.mxu0
        %2981 = vmatprep.mubr.bf16.mxu0 0
        %2982 = vmatmul.mubr.bf16.gmra.mxu0 %v2842
        %v2983 = vpop.f32.mrf.mxu0
        %v2984 = vadd.f32 0.0, %v2983
        %v2985 = vpop.f32.mrf.mxu0
        %v2986 = vpop.f32.mrf.mxu0
        %v2987 = vadd.f32 0.0, %v2986
        %v2988 = vpop.f32.mrf.mxu0
        %2989 = vmatprep.mubr.bf16.mxu0 0
        %2990 = vmatmul.mubr.bf16.gmra.mxu0 %v2845
        %v2991 = vpop.f32.mrf.mxu0
        %v2992 = vadd.f32 0.0, %v2991
        %v2993 = vpop.f32.mrf.mxu0
        %v2994 = vpop.f32.mrf.mxu0
        %v2995 = vadd.f32 0.0, %v2994
        %v2996 = vpop.f32.mrf.mxu0
        %2997 = vmatprep.mubr.bf16.mxu0 0
        %2998 = vmatmul.mubr.bf16.gmra.mxu0 %v2848
        %v2999 = vpop.f32.mrf.mxu0
        %v3000 = vadd.f32 0.0, %v2999
        %v3001 = vpop.f32.mrf.mxu0
        %v3002 = vpop.f32.mrf.mxu0
        %v3003 = vadd.f32 0.0, %v3002
        %v3004 = vpop.f32.mrf.mxu0
        %3005 = vmatprep.mubr.bf16.mxu0 0
        %3006 = vmatmul.mubr.bf16.gmra.mxu0 %v2851
        %v3007 = vpop.f32.mrf.mxu0
        %v3008 = vadd.f32 0.0, %v3007
        %v3009 = vpop.f32.mrf.mxu0
        %v3010 = vpop.f32.mrf.mxu0
        %v3011 = vadd.f32 0.0, %v3010
        %v3012 = vpop.f32.mrf.mxu0
        %3013 = vdwg.mxu0
        %v3014 = vadd.f32 %v2219, %v2888
        %v3015 = vadd.f32 %v2222, %v2891
        %v3016 = vadd.f32 %v2227, %v2896
        %v3017 = vadd.f32 %v2230, %v2899
        %v3018 = vadd.f32 %v2235, %v2904
        %v3019 = vadd.f32 %v2238, %v2907
        %v3020 = vadd.f32 %v2243, %v2912
        %v3021 = vadd.f32 %v2246, %v2915
        %v3022 = vadd.f32 %v2251, %v2920
        %v3023 = vadd.f32 %v2254, %v2923
        %v3024 = vadd.f32 %v2259, %v2928
        %v3025 = vadd.f32 %v2262, %v2931
        %v3026 = vadd.f32 %v2267, %v2936
        %v3027 = vadd.f32 %v2270, %v2939
        %v3028 = vadd.f32 %v2275, %v2944
        %v3029 = vadd.f32 %v2278, %v2947
        %v3030 = vadd.f32 %v2283, %v2952
        %v3031 = vadd.f32 %v2286, %v2955
        %v3032 = vadd.f32 %v2291, %v2960
        %v3033 = vadd.f32 %v2294, %v2963
        %v3034 = vadd.f32 %v2299, %v2968
        %v3035 = vadd.f32 %v2302, %v2971
        %v3036 = vadd.f32 %v2307, %v2976
        %v3037 = vadd.f32 %v2310, %v2979
        %v3038 = vadd.f32 %v2315, %v2984
        %v3039 = vadd.f32 %v2318, %v2987
        %v3040 = vadd.f32 %v2323, %v2992
        %v3041 = vadd.f32 %v2326, %v2995
        %v3042 = vadd.f32 %v2331, %v3000
        %v3043 = vadd.f32 %v2334, %v3003
        %v3044 = vadd.f32 %v2339, %v3008
        %v3045 = vadd.f32 %v2342, %v3011
        %s3046 = sadd.s32 %s1399, 1
        %s3047 = smul.u32 %s3046, 6
        %s3048 = smul.addr %s3047, 4
        %s3049 = scalar_lea.vmem [#allocation2], %s3048
        %v3050 = vld [vmem:[%s3049] sm:$0x8]
        %v3051 = vld [vmem:[%s3049 + $0x4] sm:$0xf]
        %v3052 = vld [vmem:[%s3049 + $0x8] sm:$0xf]
        %v3053 = vld [vmem:[%s3049 + $0xc] sm:$0xf]
        %v3054 = vld [vmem:[%s3049 + $0x10] sm:$0xf]
        %v3055 = vld [vmem:[%s3049 + $0x18] sm:$0x8]
        %v3056 = vld [vmem:[%s3049 + $0x1c] sm:$0xf]
        %v3057 = vld [vmem:[%s3049 + $0x20] sm:$0xf]
        %v3058 = vld [vmem:[%s3049 + $0x24] sm:$0xf]
        %v3059 = vld [vmem:[%s3049 + $0x28] sm:$0xf]
        %v3060 = vld [vmem:[%s3049 + $0x30] sm:$0x8]
        %v3061 = vld [vmem:[%s3049 + $0x34] sm:$0xf]
        %v3062 = vld [vmem:[%s3049 + $0x38] sm:$0xf]
        %v3063 = vld [vmem:[%s3049 + $0x3c] sm:$0xf]
        %v3064 = vld [vmem:[%s3049 + $0x40] sm:$0xf]
        %v3065 = vld [vmem:[%s3049 + $0x48] sm:$0x8]
        %v3066 = vld [vmem:[%s3049 + $0x4c] sm:$0xf]
        %v3067 = vld [vmem:[%s3049 + $0x50] sm:$0xf]
        %v3068 = vld [vmem:[%s3049 + $0x54] sm:$0xf]
        %v3069 = vld [vmem:[%s3049 + $0x58] sm:$0xf]
        %v3070 = vld [vmem:[%s3049 + $0x60] sm:$0x8]
        %v3071 = vld [vmem:[%s3049 + $0x64] sm:$0xf]
        %v3072 = vld [vmem:[%s3049 + $0x68] sm:$0xf]
        %v3073 = vld [vmem:[%s3049 + $0x6c] sm:$0xf]
        %v3074 = vld [vmem:[%s3049 + $0x70] sm:$0xf]
        %v3075 = vld [vmem:[%s3049 + $0x78] sm:$0x8]
        %v3076 = vld [vmem:[%s3049 + $0x7c] sm:$0xf]
        %v3077 = vld [vmem:[%s3049 + $0x80] sm:$0xf]
        %v3078 = vld [vmem:[%s3049 + $0x84] sm:$0xf]
        %v3079 = vld [vmem:[%s3049 + $0x88] sm:$0xf]
        %v3080 = vld [vmem:[%s3049 + $0x90] sm:$0x8]
        %v3081 = vld [vmem:[%s3049 + $0x94] sm:$0xf]
        %v3082 = vld [vmem:[%s3049 + $0x98] sm:$0xf]
        %v3083 = vld [vmem:[%s3049 + $0x9c] sm:$0xf]
        %v3084 = vld [vmem:[%s3049 + $0xa0] sm:$0xf]
        %v3085 = vld [vmem:[%s3049 + $0xa8] sm:$0x8]
        %v3086 = vld [vmem:[%s3049 + $0xac] sm:$0xf]
        %v3087 = vld [vmem:[%s3049 + $0xb0] sm:$0xf]
        %v3088 = vld [vmem:[%s3049 + $0xb4] sm:$0xf]
        %v3089 = vld [vmem:[%s3049 + $0xb8] sm:$0xf]
        %v3091 = vshrl.u32 %v3050, 16
        %v3093 = vrot.slane %v3091, 7
        %v3094 = vrot.slane %v3093, 4
        %v3096 = vshrl.u32 %v3051, 16
        %v3098 = vrot.slane %v3096, 7
        %v3099 = vshll.u32 %v3051, 16
        %v3101 = vor.u32 %v3098, %v3099
        %v3102 = vsel %vm1444, %v3094, %v3101
        %v3103 = vrot.slane %v3098, 4
        %v3105 = vshrl.u32 %v3052, 16
        %v3107 = vrot.slane %v3105, 7
        %v3108 = vshll.u32 %v3052, 16
        %v3110 = vor.u32 %v3107, %v3108
        %v3111 = vsel %vm1444, %v3103, %v3110
        %v3112 = vrot.slane %v3107, 4
        %v3114 = vshrl.u32 %v3053, 16
        %v3116 = vrot.slane %v3114, 7
        %v3117 = vshll.u32 %v3053, 16
        %v3119 = vor.u32 %v3116, %v3117
        %v3120 = vsel %vm1444, %v3112, %v3119
        %v3121 = vrot.slane %v3116, 4
        %v3123 = vshrl.u32 %v3054, 16
        %v3125 = vrot.slane %v3123, 7
        %v3126 = vshll.u32 %v3054, 16
        %v3128 = vor.u32 %v3125, %v3126
        %v3129 = vsel %vm1444, %v3121, %v3128
        %v3131 = vshrl.u32 %v3055, 16
        %v3133 = vrot.slane %v3131, 7
        %v3134 = vrot.slane %v3133, 4
        %v3136 = vshrl.u32 %v3056, 16
        %v3138 = vrot.slane %v3136, 7
        %v3139 = vshll.u32 %v3056, 16
        %v3141 = vor.u32 %v3138, %v3139
        %v3142 = vsel %vm1444, %v3134, %v3141
        %v3143 = vrot.slane %v3138, 4
        %v3145 = vshrl.u32 %v3057, 16
        %v3147 = vrot.slane %v3145, 7
        %v3148 = vshll.u32 %v3057, 16
        %v3150 = vor.u32 %v3147, %v3148
        %v3151 = vsel %vm1444, %v3143, %v3150
        %v3152 = vrot.slane %v3147, 4
        %v3154 = vshrl.u32 %v3058, 16
        %v3156 = vrot.slane %v3154, 7
        %v3157 = vshll.u32 %v3058, 16
        %v3159 = vor.u32 %v3156, %v3157
        %v3160 = vsel %vm1444, %v3152, %v3159
        %v3161 = vrot.slane %v3156, 4
        %v3163 = vshrl.u32 %v3059, 16
        %v3165 = vrot.slane %v3163, 7
        %v3166 = vshll.u32 %v3059, 16
        %v3168 = vor.u32 %v3165, %v3166
        %v3169 = vsel %vm1444, %v3161, %v3168
        %v3171 = vshrl.u32 %v3060, 16
        %v3173 = vrot.slane %v3171, 7
        %v3174 = vrot.slane %v3173, 4
        %v3176 = vshrl.u32 %v3061, 16
        %v3178 = vrot.slane %v3176, 7
        %v3179 = vshll.u32 %v3061, 16
        %v3181 = vor.u32 %v3178, %v3179
        %v3182 = vsel %vm1444, %v3174, %v3181
        %v3183 = vrot.slane %v3178, 4
        %v3185 = vshrl.u32 %v3062, 16
        %v3187 = vrot.slane %v3185, 7
        %v3188 = vshll.u32 %v3062, 16
        %v3190 = vor.u32 %v3187, %v3188
        %v3191 = vsel %vm1444, %v3183, %v3190
        %v3192 = vrot.slane %v3187, 4
        %v3194 = vshrl.u32 %v3063, 16
        %v3196 = vrot.slane %v3194, 7
        %v3197 = vshll.u32 %v3063, 16
        %v3199 = vor.u32 %v3196, %v3197
        %v3200 = vsel %vm1444, %v3192, %v3199
        %v3201 = vrot.slane %v3196, 4
        %v3203 = vshrl.u32 %v3064, 16
        %v3205 = vrot.slane %v3203, 7
        %v3206 = vshll.u32 %v3064, 16
        %v3208 = vor.u32 %v3205, %v3206
        %v3209 = vsel %vm1444, %v3201, %v3208
        %v3211 = vshrl.u32 %v3065, 16
        %v3213 = vrot.slane %v3211, 7
        %v3214 = vrot.slane %v3213, 4
        %v3216 = vshrl.u32 %v3066, 16
        %v3218 = vrot.slane %v3216, 7
        %v3219 = vshll.u32 %v3066, 16
        %v3221 = vor.u32 %v3218, %v3219
        %v3222 = vsel %vm1444, %v3214, %v3221
        %v3223 = vrot.slane %v3218, 4
        %v3225 = vshrl.u32 %v3067, 16
        %v3227 = vrot.slane %v3225, 7
        %v3228 = vshll.u32 %v3067, 16
        %v3230 = vor.u32 %v3227, %v3228
        %v3231 = vsel %vm1444, %v3223, %v3230
        %v3232 = vrot.slane %v3227, 4
        %v3234 = vshrl.u32 %v3068, 16
        %v3236 = vrot.slane %v3234, 7
        %v3237 = vshll.u32 %v3068, 16
        %v3239 = vor.u32 %v3236, %v3237
        %v3240 = vsel %vm1444, %v3232, %v3239
        %v3241 = vrot.slane %v3236, 4
        %v3243 = vshrl.u32 %v3069, 16
        %v3245 = vrot.slane %v3243, 7
        %v3246 = vshll.u32 %v3069, 16
        %v3248 = vor.u32 %v3245, %v3246
        %v3249 = vsel %vm1444, %v3241, %v3248
        %v3251 = vshrl.u32 %v3070, 16
        %v3253 = vrot.slane %v3251, 7
        %v3254 = vrot.slane %v3253, 4
        %v3256 = vshrl.u32 %v3071, 16
        %v3258 = vrot.slane %v3256, 7
        %v3259 = vshll.u32 %v3071, 16
        %v3261 = vor.u32 %v3258, %v3259
        %v3262 = vsel %vm1444, %v3254, %v3261
        %v3263 = vrot.slane %v3258, 4
        %v3265 = vshrl.u32 %v3072, 16
        %v3267 = vrot.slane %v3265, 7
        %v3268 = vshll.u32 %v3072, 16
        %v3270 = vor.u32 %v3267, %v3268
        %v3271 = vsel %vm1444, %v3263, %v3270
        %v3272 = vrot.slane %v3267, 4
        %v3274 = vshrl.u32 %v3073, 16
        %v3276 = vrot.slane %v3274, 7
        %v3277 = vshll.u32 %v3073, 16
        %v3279 = vor.u32 %v3276, %v3277
        %v3280 = vsel %vm1444, %v3272, %v3279
        %v3281 = vrot.slane %v3276, 4
        %v3283 = vshrl.u32 %v3074, 16
        %v3285 = vrot.slane %v3283, 7
        %v3286 = vshll.u32 %v3074, 16
        %v3288 = vor.u32 %v3285, %v3286
        %v3289 = vsel %vm1444, %v3281, %v3288
        %v3291 = vshrl.u32 %v3075, 16
        %v3293 = vrot.slane %v3291, 7
        %v3294 = vrot.slane %v3293, 4
        %v3296 = vshrl.u32 %v3076, 16
        %v3298 = vrot.slane %v3296, 7
        %v3299 = vshll.u32 %v3076, 16
        %v3301 = vor.u32 %v3298, %v3299
        %v3302 = vsel %vm1444, %v3294, %v3301
        %v3303 = vrot.slane %v3298, 4
        %v3305 = vshrl.u32 %v3077, 16
        %v3307 = vrot.slane %v3305, 7
        %v3308 = vshll.u32 %v3077, 16
        %v3310 = vor.u32 %v3307, %v3308
        %v3311 = vsel %vm1444, %v3303, %v3310
        %v3312 = vrot.slane %v3307, 4
        %v3314 = vshrl.u32 %v3078, 16
        %v3316 = vrot.slane %v3314, 7
        %v3317 = vshll.u32 %v3078, 16
        %v3319 = vor.u32 %v3316, %v3317
        %v3320 = vsel %vm1444, %v3312, %v3319
        %v3321 = vrot.slane %v3316, 4
        %v3323 = vshrl.u32 %v3079, 16
        %v3325 = vrot.slane %v3323, 7
        %v3326 = vshll.u32 %v3079, 16
        %v3328 = vor.u32 %v3325, %v3326
        %v3329 = vsel %vm1444, %v3321, %v3328
        %v3331 = vshrl.u32 %v3080, 16
        %v3333 = vrot.slane %v3331, 7
        %v3334 = vrot.slane %v3333, 4
        %v3336 = vshrl.u32 %v3081, 16
        %v3338 = vrot.slane %v3336, 7
        %v3339 = vshll.u32 %v3081, 16
        %v3341 = vor.u32 %v3338, %v3339
        %v3342 = vsel %vm1444, %v3334, %v3341
        %v3343 = vrot.slane %v3338, 4
        %v3345 = vshrl.u32 %v3082, 16
        %v3347 = vrot.slane %v3345, 7
        %v3348 = vshll.u32 %v3082, 16
        %v3350 = vor.u32 %v3347, %v3348
        %v3351 = vsel %vm1444, %v3343, %v3350
        %v3352 = vrot.slane %v3347, 4
        %v3354 = vshrl.u32 %v3083, 16
        %v3356 = vrot.slane %v3354, 7
        %v3357 = vshll.u32 %v3083, 16
        %v3359 = vor.u32 %v3356, %v3357
        %v3360 = vsel %vm1444, %v3352, %v3359
        %v3361 = vrot.slane %v3356, 4
        %v3363 = vshrl.u32 %v3084, 16
        %v3365 = vrot.slane %v3363, 7
        %v3366 = vshll.u32 %v3084, 16
        %v3368 = vor.u32 %v3365, %v3366
        %v3369 = vsel %vm1444, %v3361, %v3368
        %v3371 = vshrl.u32 %v3085, 16
        %v3373 = vrot.slane %v3371, 7
        %v3374 = vrot.slane %v3373, 4
        %v3376 = vshrl.u32 %v3086, 16
        %v3378 = vrot.slane %v3376, 7
        %v3379 = vshll.u32 %v3086, 16
        %v3381 = vor.u32 %v3378, %v3379
        %v3382 = vsel %vm1444, %v3374, %v3381
        %v3383 = vrot.slane %v3378, 4
        %v3385 = vshrl.u32 %v3087, 16
        %v3387 = vrot.slane %v3385, 7
        %v3388 = vshll.u32 %v3087, 16
        %v3390 = vor.u32 %v3387, %v3388
        %v3391 = vsel %vm1444, %v3383, %v3390
        %v3392 = vrot.slane %v3387, 4
        %v3394 = vshrl.u32 %v3088, 16
        %v3396 = vrot.slane %v3394, 7
        %v3397 = vshll.u32 %v3088, 16
        %v3399 = vor.u32 %v3396, %v3397
        %v3400 = vsel %vm1444, %v3392, %v3399
        %v3401 = vrot.slane %v3396, 4
        %v3403 = vshrl.u32 %v3089, 16
        %v3405 = vrot.slane %v3403, 7
        %v3406 = vshll.u32 %v3089, 16
        %v3408 = vor.u32 %v3405, %v3406
        %v3409 = vsel %vm1444, %v3401, %v3408
        %s3410 = scalar_lea.vmem %s3, 48
        %v3411 = vld [vmem:[%s3410] sm:$0xf]
        %v3412 = vld [vmem:[%s3410 + $0x4] sm:$0xf]
        %v3413 = vld [vmem:[%s3410 + $0x8] sm:$0xf]
        %v3414 = vld [vmem:[%s3410 + $0xc] sm:$0xf]
        %v3415 = vunpack.c.l.b16 %v3102
        %v3416 = vunpack.c.l.b16 %v3111
        %v3417 = vunpack.c.l.b16 %v3120
        %v3418 = vunpack.c.l.b16 %v3129
        %v3419 = vunpack.c.l.b16 %v3142
        %v3420 = vunpack.c.l.b16 %v3151
        %v3421 = vunpack.c.l.b16 %v3160
        %v3422 = vunpack.c.l.b16 %v3169
        %v3423 = vunpack.c.l.b16 %v3182
        %v3424 = vunpack.c.l.b16 %v3191
        %v3425 = vunpack.c.l.b16 %v3200
        %v3426 = vunpack.c.l.b16 %v3209
        %v3427 = vunpack.c.l.b16 %v3222
        %v3428 = vunpack.c.l.b16 %v3231
        %v3429 = vunpack.c.l.b16 %v3240
        %v3430 = vunpack.c.l.b16 %v3249
        %v3431 = vunpack.c.l.b16 %v3262
        %v3432 = vunpack.c.l.b16 %v3271
        %v3433 = vunpack.c.l.b16 %v3280
        %v3434 = vunpack.c.l.b16 %v3289
        %v3435 = vunpack.c.l.b16 %v3302
        %v3436 = vunpack.c.l.b16 %v3311
        %v3437 = vunpack.c.l.b16 %v3320
        %v3438 = vunpack.c.l.b16 %v3329
        %v3439 = vunpack.c.l.b16 %v3342
        %v3440 = vunpack.c.l.b16 %v3351
        %v3441 = vunpack.c.l.b16 %v3360
        %v3442 = vunpack.c.l.b16 %v3369
        %v3443 = vunpack.c.l.b16 %v3382
        %v3444 = vunpack.c.l.b16 %v3391
        %v3445 = vunpack.c.l.b16 %v3400
        %v3446 = vunpack.c.l.b16 %v3409
        %v3447 = vpack.c.b16 %v3416, %v3415
        %v3448 = vpack.c.b16 %v3418, %v3417
        %v3449 = vpack.c.b16 %v3420, %v3419
        %v3450 = vpack.c.b16 %v3422, %v3421
        %v3451 = vpack.c.b16 %v3424, %v3423
        %v3452 = vpack.c.b16 %v3426, %v3425
        %v3453 = vpack.c.b16 %v3428, %v3427
        %v3454 = vpack.c.b16 %v3430, %v3429
        %v3455 = vpack.c.b16 %v3432, %v3431
        %v3456 = vpack.c.b16 %v3434, %v3433
        %v3457 = vpack.c.b16 %v3436, %v3435
        %v3458 = vpack.c.b16 %v3438, %v3437
        %v3459 = vpack.c.b16 %v3440, %v3439
        %v3460 = vpack.c.b16 %v3442, %v3441
        %v3461 = vpack.c.b16 %v3444, %v3443
        %v3462 = vpack.c.b16 %v3446, %v3445
        %v3467 = vunpack.c.l.b16 %v3411
        %v3468 = vunpack.c.l.b16 %v3412
        %v3469 = vunpack.c.l.b16 %v3413
        %v3470 = vunpack.c.l.b16 %v3414
        %v3471 = vpack.c.b16 %v3468, %v3467
        %v3472 = vpack.c.b16 %v3470, %v3469
        %v3476 = vsel %vm1866, %v3447, 0
        %v3479 = vsel %vm1866, %v3448, 0
        %v3482 = vsel %vm1866, %v3449, 0
        %v3485 = vsel %vm1866, %v3450, 0
        %v3488 = vsel %vm1866, %v3451, 0
        %v3491 = vsel %vm1866, %v3452, 0
        %v3494 = vsel %vm1866, %v3453, 0
        %v3497 = vsel %vm1866, %v3454, 0
        %v3500 = vsel %vm1866, %v3455, 0
        %v3503 = vsel %vm1866, %v3456, 0
        %v3506 = vsel %vm1866, %v3457, 0
        %v3509 = vsel %vm1866, %v3458, 0
        %v3512 = vsel %vm1866, %v3459, 0
        %v3515 = vsel %vm1866, %v3460, 0
        %v3518 = vsel %vm1866, %v3461, 0
        %v3521 = vsel %vm1866, %v3462, 0
        %3523 = vmatprep.subr.bf16.mxu0 0
        %3524 = vmatpush1.bf16.msra.mxu0 0
        %3525 = vmatprep.subr.bf16.mxu0 0
        %3526 = vmatpush1.bf16.msra.mxu0 0
        %3527 = vmatprep.subr.bf16.mxu0 0
        %3528 = vmatpush1.bf16.msra.mxu0 0
        %3529 = vmatprep.subr.bf16.mxu0 0
        %3530 = vmatpush1.bf16.msra.mxu0 0
        %3531 = vmatprep.subr.bf16.mxu0 0
        %3532 = vmatpush1.bf16.msra.mxu0 0
        %3533 = vmatprep.subr.bf16.mxu0 0
        %3534 = vmatpush1.bf16.msra.mxu0 0
        %3535 = vmatprep.subr.bf16.mxu0 0
        %3536 = vmatpush1.bf16.msra.mxu0 %v3472
        %3537 = vmatprep.subr.bf16.mxu0 0
        %3538 = vmatpush1.bf16.msra.mxu0 %v3471
        %3539 = vmatprep.subr.bf16.mxu0 0
        %3540 = vmatpush2.bf16.msra.mxu0 0
        %3541 = vmatprep.subr.bf16.mxu0 0
        %3542 = vmatpush2.bf16.msra.mxu0 0
        %3543 = vmatprep.subr.bf16.mxu0 0
        %3544 = vmatpush2.bf16.msra.mxu0 0
        %3545 = vmatprep.subr.bf16.mxu0 0
        %3546 = vmatpush2.bf16.msra.mxu0 0
        %3547 = vmatprep.subr.bf16.mxu0 0
        %3548 = vmatpush2.bf16.msra.mxu0 0
        %3549 = vmatprep.subr.bf16.mxu0 0
        %3550 = vmatpush2.bf16.msra.mxu0 0
        %3551 = vmatprep.subr.bf16.mxu0 0
        %3552 = vmatpush2.bf16.msra.mxu0 0
        %3553 = vmatprep.subr.bf16.mxu0 0
        %3554 = vmatpush2.bf16.msra.mxu0 0
        %3555 = vmatprep.mubr.bf16.mxu0 0
        %3556 = vmatmul.mubr.bf16.gmra.mxu0 %v3476
        %v3557 = vpop.f32.mrf.mxu0
        %v3558 = vadd.f32 0.0, %v3557
        %v3559 = vpop.f32.mrf.mxu0
        %v3560 = vpop.f32.mrf.mxu0
        %v3561 = vadd.f32 0.0, %v3560
        %v3562 = vpop.f32.mrf.mxu0
        %3563 = vmatprep.mubr.bf16.mxu0 0
        %3564 = vmatmul.mubr.bf16.gmra.mxu0 %v3479
        %v3565 = vpop.f32.mrf.mxu0
        %v3566 = vadd.f32 0.0, %v3565
        %v3567 = vpop.f32.mrf.mxu0
        %v3568 = vpop.f32.mrf.mxu0
        %v3569 = vadd.f32 0.0, %v3568
        %v3570 = vpop.f32.mrf.mxu0
        %3571 = vmatprep.mubr.bf16.mxu0 0
        %3572 = vmatmul.mubr.bf16.gmra.mxu0 %v3482
        %v3573 = vpop.f32.mrf.mxu0
        %v3574 = vadd.f32 0.0, %v3573
        %v3575 = vpop.f32.mrf.mxu0
        %v3576 = vpop.f32.mrf.mxu0
        %v3577 = vadd.f32 0.0, %v3576
        %v3578 = vpop.f32.mrf.mxu0
        %3579 = vmatprep.mubr.bf16.mxu0 0
        %3580 = vmatmul.mubr.bf16.gmra.mxu0 %v3485
        %v3581 = vpop.f32.mrf.mxu0
        %v3582 = vadd.f32 0.0, %v3581
        %v3583 = vpop.f32.mrf.mxu0
        %v3584 = vpop.f32.mrf.mxu0
        %v3585 = vadd.f32 0.0, %v3584
        %v3586 = vpop.f32.mrf.mxu0
        %3587 = vmatprep.mubr.bf16.mxu0 0
        %3588 = vmatmul.mubr.bf16.gmra.mxu0 %v3488
        %v3589 = vpop.f32.mrf.mxu0
        %v3590 = vadd.f32 0.0, %v3589
        %v3591 = vpop.f32.mrf.mxu0
        %v3592 = vpop.f32.mrf.mxu0
        %v3593 = vadd.f32 0.0, %v3592
        %v3594 = vpop.f32.mrf.mxu0
        %3595 = vmatprep.mubr.bf16.mxu0 0
        %3596 = vmatmul.mubr.bf16.gmra.mxu0 %v3491
        %v3597 = vpop.f32.mrf.mxu0
        %v3598 = vadd.f32 0.0, %v3597
        %v3599 = vpop.f32.mrf.mxu0
        %v3600 = vpop.f32.mrf.mxu0
        %v3601 = vadd.f32 0.0, %v3600
        %v3602 = vpop.f32.mrf.mxu0
        %3603 = vmatprep.mubr.bf16.mxu0 0
        %3604 = vmatmul.mubr.bf16.gmra.mxu0 %v3494
        %v3605 = vpop.f32.mrf.mxu0
        %v3606 = vadd.f32 0.0, %v3605
        %v3607 = vpop.f32.mrf.mxu0
        %v3608 = vpop.f32.mrf.mxu0
        %v3609 = vadd.f32 0.0, %v3608
        %v3610 = vpop.f32.mrf.mxu0
        %3611 = vmatprep.mubr.bf16.mxu0 0
        %3612 = vmatmul.mubr.bf16.gmra.mxu0 %v3497
        %v3613 = vpop.f32.mrf.mxu0
        %v3614 = vadd.f32 0.0, %v3613
        %v3615 = vpop.f32.mrf.mxu0
        %v3616 = vpop.f32.mrf.mxu0
        %v3617 = vadd.f32 0.0, %v3616
        %v3618 = vpop.f32.mrf.mxu0
        %3619 = vmatprep.mubr.bf16.mxu0 0
        %3620 = vmatmul.mubr.bf16.gmra.mxu0 %v3500
        %v3621 = vpop.f32.mrf.mxu0
        %v3622 = vadd.f32 0.0, %v3621
        %v3623 = vpop.f32.mrf.mxu0
        %v3624 = vpop.f32.mrf.mxu0
        %v3625 = vadd.f32 0.0, %v3624
        %v3626 = vpop.f32.mrf.mxu0
        %3627 = vmatprep.mubr.bf16.mxu0 0
        %3628 = vmatmul.mubr.bf16.gmra.mxu0 %v3503
        %v3629 = vpop.f32.mrf.mxu0
        %v3630 = vadd.f32 0.0, %v3629
        %v3631 = vpop.f32.mrf.mxu0
        %v3632 = vpop.f32.mrf.mxu0
        %v3633 = vadd.f32 0.0, %v3632
        %v3634 = vpop.f32.mrf.mxu0
        %3635 = vmatprep.mubr.bf16.mxu0 0
        %3636 = vmatmul.mubr.bf16.gmra.mxu0 %v3506
        %v3637 = vpop.f32.mrf.mxu0
        %v3638 = vadd.f32 0.0, %v3637
        %v3639 = vpop.f32.mrf.mxu0
        %v3640 = vpop.f32.mrf.mxu0
        %v3641 = vadd.f32 0.0, %v3640
        %v3642 = vpop.f32.mrf.mxu0
        %3643 = vmatprep.mubr.bf16.mxu0 0
        %3644 = vmatmul.mubr.bf16.gmra.mxu0 %v3509
        %v3645 = vpop.f32.mrf.mxu0
        %v3646 = vadd.f32 0.0, %v3645
        %v3647 = vpop.f32.mrf.mxu0
        %v3648 = vpop.f32.mrf.mxu0
        %v3649 = vadd.f32 0.0, %v3648
        %v3650 = vpop.f32.mrf.mxu0
        %3651 = vmatprep.mubr.bf16.mxu0 0
        %3652 = vmatmul.mubr.bf16.gmra.mxu0 %v3512
        %v3653 = vpop.f32.mrf.mxu0
        %v3654 = vadd.f32 0.0, %v3653
        %v3655 = vpop.f32.mrf.mxu0
        %v3656 = vpop.f32.mrf.mxu0
        %v3657 = vadd.f32 0.0, %v3656
        %v3658 = vpop.f32.mrf.mxu0
        %3659 = vmatprep.mubr.bf16.mxu0 0
        %3660 = vmatmul.mubr.bf16.gmra.mxu0 %v3515
        %v3661 = vpop.f32.mrf.mxu0
        %v3662 = vadd.f32 0.0, %v3661
        %v3663 = vpop.f32.mrf.mxu0
        %v3664 = vpop.f32.mrf.mxu0
        %v3665 = vadd.f32 0.0, %v3664
        %v3666 = vpop.f32.mrf.mxu0
        %3667 = vmatprep.mubr.bf16.mxu0 0
        %3668 = vmatmul.mubr.bf16.gmra.mxu0 %v3518
        %v3669 = vpop.f32.mrf.mxu0
        %v3670 = vadd.f32 0.0, %v3669
        %v3671 = vpop.f32.mrf.mxu0
        %v3672 = vpop.f32.mrf.mxu0
        %v3673 = vadd.f32 0.0, %v3672
        %v3674 = vpop.f32.mrf.mxu0
        %3675 = vmatprep.mubr.bf16.mxu0 0
        %3676 = vmatmul.mubr.bf16.gmra.mxu0 %v3521
        %v3677 = vpop.f32.mrf.mxu0
        %v3678 = vadd.f32 0.0, %v3677
        %v3679 = vpop.f32.mrf.mxu0
        %v3680 = vpop.f32.mrf.mxu0
        %v3681 = vadd.f32 0.0, %v3680
        %v3682 = vpop.f32.mrf.mxu0
        %3683 = vdwg.mxu0
        %v3684 = vadd.f32 %v3014, %v3558
        %v3685 = vadd.f32 %v3015, %v3561
        %v3686 = vadd.f32 %v3016, %v3566
        %v3687 = vadd.f32 %v3017, %v3569
        %v3688 = vadd.f32 %v3018, %v3574
        %v3689 = vadd.f32 %v3019, %v3577
        %v3690 = vadd.f32 %v3020, %v3582
        %v3691 = vadd.f32 %v3021, %v3585
        %v3692 = vadd.f32 %v3022, %v3590
        %v3693 = vadd.f32 %v3023, %v3593
        %v3694 = vadd.f32 %v3024, %v3598
        %v3695 = vadd.f32 %v3025, %v3601
        %v3696 = vadd.f32 %v3026, %v3606
        %v3697 = vadd.f32 %v3027, %v3609
        %v3698 = vadd.f32 %v3028, %v3614
        %v3699 = vadd.f32 %v3029, %v3617
        %v3700 = vadd.f32 %v3030, %v3622
        %v3701 = vadd.f32 %v3031, %v3625
        %v3702 = vadd.f32 %v3032, %v3630
        %v3703 = vadd.f32 %v3033, %v3633
        %v3704 = vadd.f32 %v3034, %v3638
        %v3705 = vadd.f32 %v3035, %v3641
        %v3706 = vadd.f32 %v3036, %v3646
        %v3707 = vadd.f32 %v3037, %v3649
        %v3708 = vadd.f32 %v3038, %v3654
        %v3709 = vadd.f32 %v3039, %v3657
        %v3710 = vadd.f32 %v3040, %v3662
        %v3711 = vadd.f32 %v3041, %v3665
        %v3712 = vadd.f32 %v3042, %v3670
        %v3713 = vadd.f32 %v3043, %v3673
        %v3714 = vadd.f32 %v3044, %v3678
        %v3715 = vadd.f32 %v3045, %v3681
        %s3716 = scalar_lea.vmem %s3, 64
        %v3717 = vld [vmem:[%s3716] sm:$0xf]
        %v3718 = vld [vmem:[%s3716 + $0x4] sm:$0xf]
        %v3719 = vld [vmem:[%s3716 + $0x8] sm:$0xf]
        %v3720 = vld [vmem:[%s3716 + $0xc] sm:$0xf]
        %v3753 = vunpack.c.l.b16 %v3051
        %v3754 = vunpack.c.l.b16 %v3052
        %v3755 = vunpack.c.l.b16 %v3053
        %v3756 = vunpack.c.l.b16 %v3054
        %v3757 = vunpack.c.l.b16 %v3056
        %v3758 = vunpack.c.l.b16 %v3057
        %v3759 = vunpack.c.l.b16 %v3058
        %v3760 = vunpack.c.l.b16 %v3059
        %v3761 = vunpack.c.l.b16 %v3061
        %v3762 = vunpack.c.l.b16 %v3062
        %v3763 = vunpack.c.l.b16 %v3063
        %v3764 = vunpack.c.l.b16 %v3064
        %v3765 = vunpack.c.l.b16 %v3066
        %v3766 = vunpack.c.l.b16 %v3067
        %v3767 = vunpack.c.l.b16 %v3068
        %v3768 = vunpack.c.l.b16 %v3069
        %v3769 = vunpack.c.l.b16 %v3071
        %v3770 = vunpack.c.l.b16 %v3072
        %v3771 = vunpack.c.l.b16 %v3073
        %v3772 = vunpack.c.l.b16 %v3074
        %v3773 = vunpack.c.l.b16 %v3076
        %v3774 = vunpack.c.l.b16 %v3077
        %v3775 = vunpack.c.l.b16 %v3078
        %v3776 = vunpack.c.l.b16 %v3079
        %v3777 = vunpack.c.l.b16 %v3081
        %v3778 = vunpack.c.l.b16 %v3082
        %v3779 = vunpack.c.l.b16 %v3083
        %v3780 = vunpack.c.l.b16 %v3084
        %v3781 = vunpack.c.l.b16 %v3086
        %v3782 = vunpack.c.l.b16 %v3087
        %v3783 = vunpack.c.l.b16 %v3088
        %v3784 = vunpack.c.l.b16 %v3089
        %v3785 = vpack.c.b16 %v3754, %v3753
        %v3786 = vpack.c.b16 %v3756, %v3755
        %v3787 = vpack.c.b16 %v3758, %v3757
        %v3788 = vpack.c.b16 %v3760, %v3759
        %v3789 = vpack.c.b16 %v3762, %v3761
        %v3790 = vpack.c.b16 %v3764, %v3763
        %v3791 = vpack.c.b16 %v3766, %v3765
        %v3792 = vpack.c.b16 %v3768, %v3767
        %v3793 = vpack.c.b16 %v3770, %v3769
        %v3794 = vpack.c.b16 %v3772, %v3771
        %v3795 = vpack.c.b16 %v3774, %v3773
        %v3796 = vpack.c.b16 %v3776, %v3775
        %v3797 = vpack.c.b16 %v3778, %v3777
        %v3798 = vpack.c.b16 %v3780, %v3779
        %v3799 = vpack.c.b16 %v3782, %v3781
        %v3800 = vpack.c.b16 %v3784, %v3783
        %v3805 = vunpack.c.l.b16 %v3717
        %v3806 = vunpack.c.l.b16 %v3718
        %v3807 = vunpack.c.l.b16 %v3719
        %v3808 = vunpack.c.l.b16 %v3720
        %v3809 = vpack.c.b16 %v3806, %v3805
        %v3810 = vpack.c.b16 %v3808, %v3807
        %v3814 = vsel %vm1866, %v3785, 0
        %v3817 = vsel %vm1866, %v3786, 0
        %v3820 = vsel %vm1866, %v3787, 0
        %v3823 = vsel %vm1866, %v3788, 0
        %v3826 = vsel %vm1866, %v3789, 0
        %v3829 = vsel %vm1866, %v3790, 0
        %v3832 = vsel %vm1866, %v3791, 0
        %v3835 = vsel %vm1866, %v3792, 0
        %v3838 = vsel %vm1866, %v3793, 0
        %v3841 = vsel %vm1866, %v3794, 0
        %v3844 = vsel %vm1866, %v3795, 0
        %v3847 = vsel %vm1866, %v3796, 0
        %v3850 = vsel %vm1866, %v3797, 0
        %v3853 = vsel %vm1866, %v3798, 0
        %v3856 = vsel %vm1866, %v3799, 0
        %v3859 = vsel %vm1866, %v3800, 0
        %3861 = vmatprep.subr.bf16.mxu0 0
        %3862 = vmatpush1.bf16.msra.mxu0 0
        %3863 = vmatprep.subr.bf16.mxu0 0
        %3864 = vmatpush1.bf16.msra.mxu0 0
        %3865 = vmatprep.subr.bf16.mxu0 0
        %3866 = vmatpush1.bf16.msra.mxu0 0
        %3867 = vmatprep.subr.bf16.mxu0 0
        %3868 = vmatpush1.bf16.msra.mxu0 0
        %3869 = vmatprep.subr.bf16.mxu0 0
        %3870 = vmatpush1.bf16.msra.mxu0 0
        %3871 = vmatprep.subr.bf16.mxu0 0
        %3872 = vmatpush1.bf16.msra.mxu0 0
        %3873 = vmatprep.subr.bf16.mxu0 0
        %3874 = vmatpush1.bf16.msra.mxu0 %v3810
        %3875 = vmatprep.subr.bf16.mxu0 0
        %3876 = vmatpush1.bf16.msra.mxu0 %v3809
        %3877 = vmatprep.subr.bf16.mxu0 0
        %3878 = vmatpush2.bf16.msra.mxu0 0
        %3879 = vmatprep.subr.bf16.mxu0 0
        %3880 = vmatpush2.bf16.msra.mxu0 0
        %3881 = vmatprep.subr.bf16.mxu0 0
        %3882 = vmatpush2.bf16.msra.mxu0 0
        %3883 = vmatprep.subr.bf16.mxu0 0
        %3884 = vmatpush2.bf16.msra.mxu0 0
        %3885 = vmatprep.subr.bf16.mxu0 0
        %3886 = vmatpush2.bf16.msra.mxu0 0
        %3887 = vmatprep.subr.bf16.mxu0 0
        %3888 = vmatpush2.bf16.msra.mxu0 0
        %3889 = vmatprep.subr.bf16.mxu0 0
        %3890 = vmatpush2.bf16.msra.mxu0 0
        %3891 = vmatprep.subr.bf16.mxu0 0
        %3892 = vmatpush2.bf16.msra.mxu0 0
        %3893 = vmatprep.mubr.bf16.mxu0 0
        %3894 = vmatmul.mubr.bf16.gmra.mxu0 %v3814
        %v3895 = vpop.f32.mrf.mxu0
        %v3896 = vadd.f32 0.0, %v3895
        %v3897 = vpop.f32.mrf.mxu0
        %v3898 = vpop.f32.mrf.mxu0
        %v3899 = vadd.f32 0.0, %v3898
        %v3900 = vpop.f32.mrf.mxu0
        %3901 = vmatprep.mubr.bf16.mxu0 0
        %3902 = vmatmul.mubr.bf16.gmra.mxu0 %v3817
        %v3903 = vpop.f32.mrf.mxu0
        %v3904 = vadd.f32 0.0, %v3903
        %v3905 = vpop.f32.mrf.mxu0
        %v3906 = vpop.f32.mrf.mxu0
        %v3907 = vadd.f32 0.0, %v3906
        %v3908 = vpop.f32.mrf.mxu0
        %3909 = vmatprep.mubr.bf16.mxu0 0
        %3910 = vmatmul.mubr.bf16.gmra.mxu0 %v3820
        %v3911 = vpop.f32.mrf.mxu0
        %v3912 = vadd.f32 0.0, %v3911
        %v3913 = vpop.f32.mrf.mxu0
        %v3914 = vpop.f32.mrf.mxu0
        %v3915 = vadd.f32 0.0, %v3914
        %v3916 = vpop.f32.mrf.mxu0
        %3917 = vmatprep.mubr.bf16.mxu0 0
        %3918 = vmatmul.mubr.bf16.gmra.mxu0 %v3823
        %v3919 = vpop.f32.mrf.mxu0
        %v3920 = vadd.f32 0.0, %v3919
        %v3921 = vpop.f32.mrf.mxu0
        %v3922 = vpop.f32.mrf.mxu0
        %v3923 = vadd.f32 0.0, %v3922
        %v3924 = vpop.f32.mrf.mxu0
        %3925 = vmatprep.mubr.bf16.mxu0 0
        %3926 = vmatmul.mubr.bf16.gmra.mxu0 %v3826
        %v3927 = vpop.f32.mrf.mxu0
        %v3928 = vadd.f32 0.0, %v3927
        %v3929 = vpop.f32.mrf.mxu0
        %v3930 = vpop.f32.mrf.mxu0
        %v3931 = vadd.f32 0.0, %v3930
        %v3932 = vpop.f32.mrf.mxu0
        %3933 = vmatprep.mubr.bf16.mxu0 0
        %3934 = vmatmul.mubr.bf16.gmra.mxu0 %v3829
        %v3935 = vpop.f32.mrf.mxu0
        %v3936 = vadd.f32 0.0, %v3935
        %v3937 = vpop.f32.mrf.mxu0
        %v3938 = vpop.f32.mrf.mxu0
        %v3939 = vadd.f32 0.0, %v3938
        %v3940 = vpop.f32.mrf.mxu0
        %3941 = vmatprep.mubr.bf16.mxu0 0
        %3942 = vmatmul.mubr.bf16.gmra.mxu0 %v3832
        %v3943 = vpop.f32.mrf.mxu0
        %v3944 = vadd.f32 0.0, %v3943
        %v3945 = vpop.f32.mrf.mxu0
        %v3946 = vpop.f32.mrf.mxu0
        %v3947 = vadd.f32 0.0, %v3946
        %v3948 = vpop.f32.mrf.mxu0
        %3949 = vmatprep.mubr.bf16.mxu0 0
        %3950 = vmatmul.mubr.bf16.gmra.mxu0 %v3835
        %v3951 = vpop.f32.mrf.mxu0
        %v3952 = vadd.f32 0.0, %v3951
        %v3953 = vpop.f32.mrf.mxu0
        %v3954 = vpop.f32.mrf.mxu0
        %v3955 = vadd.f32 0.0, %v3954
        %v3956 = vpop.f32.mrf.mxu0
        %3957 = vmatprep.mubr.bf16.mxu0 0
        %3958 = vmatmul.mubr.bf16.gmra.mxu0 %v3838
        %v3959 = vpop.f32.mrf.mxu0
        %v3960 = vadd.f32 0.0, %v3959
        %v3961 = vpop.f32.mrf.mxu0
        %v3962 = vpop.f32.mrf.mxu0
        %v3963 = vadd.f32 0.0, %v3962
        %v3964 = vpop.f32.mrf.mxu0
        %3965 = vmatprep.mubr.bf16.mxu0 0
        %3966 = vmatmul.mubr.bf16.gmra.mxu0 %v3841
        %v3967 = vpop.f32.mrf.mxu0
        %v3968 = vadd.f32 0.0, %v3967
        %v3969 = vpop.f32.mrf.mxu0
        %v3970 = vpop.f32.mrf.mxu0
        %v3971 = vadd.f32 0.0, %v3970
        %v3972 = vpop.f32.mrf.mxu0
        %3973 = vmatprep.mubr.bf16.mxu0 0
        %3974 = vmatmul.mubr.bf16.gmra.mxu0 %v3844
        %v3975 = vpop.f32.mrf.mxu0
        %v3976 = vadd.f32 0.0, %v3975
        %v3977 = vpop.f32.mrf.mxu0
        %v3978 = vpop.f32.mrf.mxu0
        %v3979 = vadd.f32 0.0, %v3978
        %v3980 = vpop.f32.mrf.mxu0
        %3981 = vmatprep.mubr.bf16.mxu0 0
        %3982 = vmatmul.mubr.bf16.gmra.mxu0 %v3847
        %v3983 = vpop.f32.mrf.mxu0
        %v3984 = vadd.f32 0.0, %v3983
        %v3985 = vpop.f32.mrf.mxu0
        %v3986 = vpop.f32.mrf.mxu0
        %v3987 = vadd.f32 0.0, %v3986
        %v3988 = vpop.f32.mrf.mxu0
        %3989 = vmatprep.mubr.bf16.mxu0 0
        %3990 = vmatmul.mubr.bf16.gmra.mxu0 %v3850
        %v3991 = vpop.f32.mrf.mxu0
        %v3992 = vadd.f32 0.0, %v3991
        %v3993 = vpop.f32.mrf.mxu0
        %v3994 = vpop.f32.mrf.mxu0
        %v3995 = vadd.f32 0.0, %v3994
        %v3996 = vpop.f32.mrf.mxu0
        %3997 = vmatprep.mubr.bf16.mxu0 0
        %3998 = vmatmul.mubr.bf16.gmra.mxu0 %v3853
        %v3999 = vpop.f32.mrf.mxu0
        %v4000 = vadd.f32 0.0, %v3999
        %v4001 = vpop.f32.mrf.mxu0
        %v4002 = vpop.f32.mrf.mxu0
        %v4003 = vadd.f32 0.0, %v4002
        %v4004 = vpop.f32.mrf.mxu0
        %4005 = vmatprep.mubr.bf16.mxu0 0
        %4006 = vmatmul.mubr.bf16.gmra.mxu0 %v3856
        %v4007 = vpop.f32.mrf.mxu0
        %v4008 = vadd.f32 0.0, %v4007
        %v4009 = vpop.f32.mrf.mxu0
        %v4010 = vpop.f32.mrf.mxu0
        %v4011 = vadd.f32 0.0, %v4010
        %v4012 = vpop.f32.mrf.mxu0
        %4013 = vmatprep.mubr.bf16.mxu0 0
        %4014 = vmatmul.mubr.bf16.gmra.mxu0 %v3859
        %v4015 = vpop.f32.mrf.mxu0
        %v4016 = vadd.f32 0.0, %v4015
        %v4017 = vpop.f32.mrf.mxu0
        %v4018 = vpop.f32.mrf.mxu0
        %v4019 = vadd.f32 0.0, %v4018
        %v4020 = vpop.f32.mrf.mxu0
        %4021 = vdwg.mxu0
        %v4022 = vadd.f32 %v3684, %v3896
        %v4023 = vadd.f32 %v3685, %v3899
        %v4024 = vadd.f32 %v3686, %v3904
        %v4025 = vadd.f32 %v3687, %v3907
        %v4026 = vadd.f32 %v3688, %v3912
        %v4027 = vadd.f32 %v3689, %v3915
        %v4028 = vadd.f32 %v3690, %v3920
        %v4029 = vadd.f32 %v3691, %v3923
        %v4030 = vadd.f32 %v3692, %v3928
        %v4031 = vadd.f32 %v3693, %v3931
        %v4032 = vadd.f32 %v3694, %v3936
        %v4033 = vadd.f32 %v3695, %v3939
        %v4034 = vadd.f32 %v3696, %v3944
        %v4035 = vadd.f32 %v3697, %v3947
        %v4036 = vadd.f32 %v3698, %v3952
        %v4037 = vadd.f32 %v3699, %v3955
        %v4038 = vadd.f32 %v3700, %v3960
        %v4039 = vadd.f32 %v3701, %v3963
        %v4040 = vadd.f32 %v3702, %v3968
        %v4041 = vadd.f32 %v3703, %v3971
        %v4042 = vadd.f32 %v3704, %v3976
        %v4043 = vadd.f32 %v3705, %v3979
        %v4044 = vadd.f32 %v3706, %v3984
        %v4045 = vadd.f32 %v3707, %v3987
        %v4046 = vadd.f32 %v3708, %v3992
        %v4047 = vadd.f32 %v3709, %v3995
        %v4048 = vadd.f32 %v3710, %v4000
        %v4049 = vadd.f32 %v3711, %v4003
        %v4050 = vadd.f32 %v3712, %v4008
        %v4051 = vadd.f32 %v3713, %v4011
        %v4052 = vadd.f32 %v3714, %v4016
        %v4053 = vadd.f32 %v3715, %v4019
        %v4054 = vld [vmem:[%s3049 + $0x4] sm:$0xf]
        %v4055 = vld [vmem:[%s3049 + $0x8] sm:$0xf]
        %v4056 = vld [vmem:[%s3049 + $0xc] sm:$0xf]
        %v4057 = vld [vmem:[%s3049 + $0x10] sm:$0xf]
        %v4058 = vld [vmem:[%s3049 + $0x14] sm:$0x1]
        %v4059 = vld [vmem:[%s3049 + $0x1c] sm:$0xf]
        %v4060 = vld [vmem:[%s3049 + $0x20] sm:$0xf]
        %v4061 = vld [vmem:[%s3049 + $0x24] sm:$0xf]
        %v4062 = vld [vmem:[%s3049 + $0x28] sm:$0xf]
        %v4063 = vld [vmem:[%s3049 + $0x2c] sm:$0x1]
        %v4064 = vld [vmem:[%s3049 + $0x34] sm:$0xf]
        %v4065 = vld [vmem:[%s3049 + $0x38] sm:$0xf]
        %v4066 = vld [vmem:[%s3049 + $0x3c] sm:$0xf]
        %v4067 = vld [vmem:[%s3049 + $0x40] sm:$0xf]
        %v4068 = vld [vmem:[%s3049 + $0x44] sm:$0x1]
        %v4069 = vld [vmem:[%s3049 + $0x4c] sm:$0xf]
        %v4070 = vld [vmem:[%s3049 + $0x50] sm:$0xf]
        %v4071 = vld [vmem:[%s3049 + $0x54] sm:$0xf]
        %v4072 = vld [vmem:[%s3049 + $0x58] sm:$0xf]
        %v4073 = vld [vmem:[%s3049 + $0x5c] sm:$0x1]
        %v4074 = vld [vmem:[%s3049 + $0x64] sm:$0xf]
        %v4075 = vld [vmem:[%s3049 + $0x68] sm:$0xf]
        %v4076 = vld [vmem:[%s3049 + $0x6c] sm:$0xf]
        %v4077 = vld [vmem:[%s3049 + $0x70] sm:$0xf]
        %v4078 = vld [vmem:[%s3049 + $0x74] sm:$0x1]
        %v4079 = vld [vmem:[%s3049 + $0x7c] sm:$0xf]
        %v4080 = vld [vmem:[%s3049 + $0x80] sm:$0xf]
        %v4081 = vld [vmem:[%s3049 + $0x84] sm:$0xf]
        %v4082 = vld [vmem:[%s3049 + $0x88] sm:$0xf]
        %v4083 = vld [vmem:[%s3049 + $0x8c] sm:$0x1]
        %v4084 = vld [vmem:[%s3049 + $0x94] sm:$0xf]
        %v4085 = vld [vmem:[%s3049 + $0x98] sm:$0xf]
        %v4086 = vld [vmem:[%s3049 + $0x9c] sm:$0xf]
        %v4087 = vld [vmem:[%s3049 + $0xa0] sm:$0xf]
        %v4088 = vld [vmem:[%s3049 + $0xa4] sm:$0x1]
        %v4089 = vld [vmem:[%s3049 + $0xac] sm:$0xf]
        %v4090 = vld [vmem:[%s3049 + $0xb0] sm:$0xf]
        %v4091 = vld [vmem:[%s3049 + $0xb4] sm:$0xf]
        %v4092 = vld [vmem:[%s3049 + $0xb8] sm:$0xf]
        %v4093 = vld [vmem:[%s3049 + $0xbc] sm:$0x1]
        %v4095 = vshrl.u32 %v4054, 16
        %v4097 = vrot.slane %v4095, 4
        %v4098 = vshll.u32 %v4054, 16
        %v4100 = vrot.slane %v4098, 5
        %v4101 = vor.u32 %v4097, %v4100
        %v4102 = vrot.slane %v4101, 4
        %v4104 = vshll.u32 %v4055, 16
        %v4106 = vrot.slane %v4104, 5
        %v4107 = vsel %vm2387, %v4102, %v4106
        %v4108 = vshrl.u32 %v4055, 16
        %v4110 = vrot.slane %v4108, 4
        %v4111 = vor.u32 %v4110, %v4106
        %v4112 = vrot.slane %v4111, 4
        %v4114 = vshll.u32 %v4056, 16
        %v4116 = vrot.slane %v4114, 5
        %v4117 = vsel %vm2387, %v4112, %v4116
        %v4118 = vshrl.u32 %v4056, 16
        %v4120 = vrot.slane %v4118, 4
        %v4121 = vor.u32 %v4120, %v4116
        %v4122 = vrot.slane %v4121, 4
        %v4124 = vshll.u32 %v4057, 16
        %v4126 = vrot.slane %v4124, 5
        %v4127 = vsel %vm2387, %v4122, %v4126
        %v4128 = vshrl.u32 %v4057, 16
        %v4130 = vrot.slane %v4128, 4
        %v4131 = vor.u32 %v4130, %v4126
        %v4132 = vrot.slane %v4131, 4
        %v4134 = vshll.u32 %v4058, 16
        %v4136 = vrot.slane %v4134, 5
        %v4137 = vsel %vm2387, %v4132, %v4136
        %v4139 = vshrl.u32 %v4059, 16
        %v4141 = vrot.slane %v4139, 4
        %v4142 = vshll.u32 %v4059, 16
        %v4144 = vrot.slane %v4142, 5
        %v4145 = vor.u32 %v4141, %v4144
        %v4146 = vrot.slane %v4145, 4
        %v4148 = vshll.u32 %v4060, 16
        %v4150 = vrot.slane %v4148, 5
        %v4151 = vsel %vm2387, %v4146, %v4150
        %v4152 = vshrl.u32 %v4060, 16
        %v4154 = vrot.slane %v4152, 4
        %v4155 = vor.u32 %v4154, %v4150
        %v4156 = vrot.slane %v4155, 4
        %v4158 = vshll.u32 %v4061, 16
        %v4160 = vrot.slane %v4158, 5
        %v4161 = vsel %vm2387, %v4156, %v4160
        %v4162 = vshrl.u32 %v4061, 16
        %v4164 = vrot.slane %v4162, 4
        %v4165 = vor.u32 %v4164, %v4160
        %v4166 = vrot.slane %v4165, 4
        %v4168 = vshll.u32 %v4062, 16
        %v4170 = vrot.slane %v4168, 5
        %v4171 = vsel %vm2387, %v4166, %v4170
        %v4172 = vshrl.u32 %v4062, 16
        %v4174 = vrot.slane %v4172, 4
        %v4175 = vor.u32 %v4174, %v4170
        %v4176 = vrot.slane %v4175, 4
        %v4178 = vshll.u32 %v4063, 16
        %v4180 = vrot.slane %v4178, 5
        %v4181 = vsel %vm2387, %v4176, %v4180
        %v4183 = vshrl.u32 %v4064, 16
        %v4185 = vrot.slane %v4183, 4
        %v4186 = vshll.u32 %v4064, 16
        %v4188 = vrot.slane %v4186, 5
        %v4189 = vor.u32 %v4185, %v4188
        %v4190 = vrot.slane %v4189, 4
        %v4192 = vshll.u32 %v4065, 16
        %v4194 = vrot.slane %v4192, 5
        %v4195 = vsel %vm2387, %v4190, %v4194
        %v4196 = vshrl.u32 %v4065, 16
        %v4198 = vrot.slane %v4196, 4
        %v4199 = vor.u32 %v4198, %v4194
        %v4200 = vrot.slane %v4199, 4
        %v4202 = vshll.u32 %v4066, 16
        %v4204 = vrot.slane %v4202, 5
        %v4205 = vsel %vm2387, %v4200, %v4204
        %v4206 = vshrl.u32 %v4066, 16
        %v4208 = vrot.slane %v4206, 4
        %v4209 = vor.u32 %v4208, %v4204
        %v4210 = vrot.slane %v4209, 4
        %v4212 = vshll.u32 %v4067, 16
        %v4214 = vrot.slane %v4212, 5
        %v4215 = vsel %vm2387, %v4210, %v4214
        %v4216 = vshrl.u32 %v4067, 16
        %v4218 = vrot.slane %v4216, 4
        %v4219 = vor.u32 %v4218, %v4214
        %v4220 = vrot.slane %v4219, 4
        %v4222 = vshll.u32 %v4068, 16
        %v4224 = vrot.slane %v4222, 5
        %v4225 = vsel %vm2387, %v4220, %v4224
        %v4227 = vshrl.u32 %v4069, 16
        %v4229 = vrot.slane %v4227, 4
        %v4230 = vshll.u32 %v4069, 16
        %v4232 = vrot.slane %v4230, 5
        %v4233 = vor.u32 %v4229, %v4232
        %v4234 = vrot.slane %v4233, 4
        %v4236 = vshll.u32 %v4070, 16
        %v4238 = vrot.slane %v4236, 5
        %v4239 = vsel %vm2387, %v4234, %v4238
        %v4240 = vshrl.u32 %v4070, 16
        %v4242 = vrot.slane %v4240, 4
        %v4243 = vor.u32 %v4242, %v4238
        %v4244 = vrot.slane %v4243, 4
        %v4246 = vshll.u32 %v4071, 16
        %v4248 = vrot.slane %v4246, 5
        %v4249 = vsel %vm2387, %v4244, %v4248
        %v4250 = vshrl.u32 %v4071, 16
        %v4252 = vrot.slane %v4250, 4
        %v4253 = vor.u32 %v4252, %v4248
        %v4254 = vrot.slane %v4253, 4
        %v4256 = vshll.u32 %v4072, 16
        %v4258 = vrot.slane %v4256, 5
        %v4259 = vsel %vm2387, %v4254, %v4258
        %v4260 = vshrl.u32 %v4072, 16
        %v4262 = vrot.slane %v4260, 4
        %v4263 = vor.u32 %v4262, %v4258
        %v4264 = vrot.slane %v4263, 4
        %v4266 = vshll.u32 %v4073, 16
        %v4268 = vrot.slane %v4266, 5
        %v4269 = vsel %vm2387, %v4264, %v4268
        %v4271 = vshrl.u32 %v4074, 16
        %v4273 = vrot.slane %v4271, 4
        %v4274 = vshll.u32 %v4074, 16
        %v4276 = vrot.slane %v4274, 5
        %v4277 = vor.u32 %v4273, %v4276
        %v4278 = vrot.slane %v4277, 4
        %v4280 = vshll.u32 %v4075, 16
        %v4282 = vrot.slane %v4280, 5
        %v4283 = vsel %vm2387, %v4278, %v4282
        %v4284 = vshrl.u32 %v4075, 16
        %v4286 = vrot.slane %v4284, 4
        %v4287 = vor.u32 %v4286, %v4282
        %v4288 = vrot.slane %v4287, 4
        %v4290 = vshll.u32 %v4076, 16
        %v4292 = vrot.slane %v4290, 5
        %v4293 = vsel %vm2387, %v4288, %v4292
        %v4294 = vshrl.u32 %v4076, 16
        %v4296 = vrot.slane %v4294, 4
        %v4297 = vor.u32 %v4296, %v4292
        %v4298 = vrot.slane %v4297, 4
        %v4300 = vshll.u32 %v4077, 16
        %v4302 = vrot.slane %v4300, 5
        %v4303 = vsel %vm2387, %v4298, %v4302
        %v4304 = vshrl.u32 %v4077, 16
        %v4306 = vrot.slane %v4304, 4
        %v4307 = vor.u32 %v4306, %v4302
        %v4308 = vrot.slane %v4307, 4
        %v4310 = vshll.u32 %v4078, 16
        %v4312 = vrot.slane %v4310, 5
        %v4313 = vsel %vm2387, %v4308, %v4312
        %v4315 = vshrl.u32 %v4079, 16
        %v4317 = vrot.slane %v4315, 4
        %v4318 = vshll.u32 %v4079, 16
        %v4320 = vrot.slane %v4318, 5
        %v4321 = vor.u32 %v4317, %v4320
        %v4322 = vrot.slane %v4321, 4
        %v4324 = vshll.u32 %v4080, 16
        %v4326 = vrot.slane %v4324, 5
        %v4327 = vsel %vm2387, %v4322, %v4326
        %v4328 = vshrl.u32 %v4080, 16
        %v4330 = vrot.slane %v4328, 4
        %v4331 = vor.u32 %v4330, %v4326
        %v4332 = vrot.slane %v4331, 4
        %v4334 = vshll.u32 %v4081, 16
        %v4336 = vrot.slane %v4334, 5
        %v4337 = vsel %vm2387, %v4332, %v4336
        %v4338 = vshrl.u32 %v4081, 16
        %v4340 = vrot.slane %v4338, 4
        %v4341 = vor.u32 %v4340, %v4336
        %v4342 = vrot.slane %v4341, 4
        %v4344 = vshll.u32 %v4082, 16
        %v4346 = vrot.slane %v4344, 5
        %v4347 = vsel %vm2387, %v4342, %v4346
        %v4348 = vshrl.u32 %v4082, 16
        %v4350 = vrot.slane %v4348, 4
        %v4351 = vor.u32 %v4350, %v4346
        %v4352 = vrot.slane %v4351, 4
        %v4354 = vshll.u32 %v4083, 16
        %v4356 = vrot.slane %v4354, 5
        %v4357 = vsel %vm2387, %v4352, %v4356
        %v4359 = vshrl.u32 %v4084, 16
        %v4361 = vrot.slane %v4359, 4
        %v4362 = vshll.u32 %v4084, 16
        %v4364 = vrot.slane %v4362, 5
        %v4365 = vor.u32 %v4361, %v4364
        %v4366 = vrot.slane %v4365, 4
        %v4368 = vshll.u32 %v4085, 16
        %v4370 = vrot.slane %v4368, 5
        %v4371 = vsel %vm2387, %v4366, %v4370
        %v4372 = vshrl.u32 %v4085, 16
        %v4374 = vrot.slane %v4372, 4
        %v4375 = vor.u32 %v4374, %v4370
        %v4376 = vrot.slane %v4375, 4
        %v4378 = vshll.u32 %v4086, 16
        %v4380 = vrot.slane %v4378, 5
        %v4381 = vsel %vm2387, %v4376, %v4380
        %v4382 = vshrl.u32 %v4086, 16
        %v4384 = vrot.slane %v4382, 4
        %v4385 = vor.u32 %v4384, %v4380
        %v4386 = vrot.slane %v4385, 4
        %v4388 = vshll.u32 %v4087, 16
        %v4390 = vrot.slane %v4388, 5
        %v4391 = vsel %vm2387, %v4386, %v4390
        %v4392 = vshrl.u32 %v4087, 16
        %v4394 = vrot.slane %v4392, 4
        %v4395 = vor.u32 %v4394, %v4390
        %v4396 = vrot.slane %v4395, 4
        %v4398 = vshll.u32 %v4088, 16
        %v4400 = vrot.slane %v4398, 5
        %v4401 = vsel %vm2387, %v4396, %v4400
        %v4403 = vshrl.u32 %v4089, 16
        %v4405 = vrot.slane %v4403, 4
        %v4406 = vshll.u32 %v4089, 16
        %v4408 = vrot.slane %v4406, 5
        %v4409 = vor.u32 %v4405, %v4408
        %v4410 = vrot.slane %v4409, 4
        %v4412 = vshll.u32 %v4090, 16
        %v4414 = vrot.slane %v4412, 5
        %v4415 = vsel %vm2387, %v4410, %v4414
        %v4416 = vshrl.u32 %v4090, 16
        %v4418 = vrot.slane %v4416, 4
        %v4419 = vor.u32 %v4418, %v4414
        %v4420 = vrot.slane %v4419, 4
        %v4422 = vshll.u32 %v4091, 16
        %v4424 = vrot.slane %v4422, 5
        %v4425 = vsel %vm2387, %v4420, %v4424
        %v4426 = vshrl.u32 %v4091, 16
        %v4428 = vrot.slane %v4426, 4
        %v4429 = vor.u32 %v4428, %v4424
        %v4430 = vrot.slane %v4429, 4
        %v4432 = vshll.u32 %v4092, 16
        %v4434 = vrot.slane %v4432, 5
        %v4435 = vsel %vm2387, %v4430, %v4434
        %v4436 = vshrl.u32 %v4092, 16
        %v4438 = vrot.slane %v4436, 4
        %v4439 = vor.u32 %v4438, %v4434
        %v4440 = vrot.slane %v4439, 4
        %v4442 = vshll.u32 %v4093, 16
        %v4444 = vrot.slane %v4442, 5
        %v4445 = vsel %vm2387, %v4440, %v4444
        %s4446 = scalar_lea.vmem %s3, 80
        %v4447 = vld [vmem:[%s4446] sm:$0xf]
        %v4448 = vld [vmem:[%s4446 + $0x4] sm:$0xf]
        %v4449 = vld [vmem:[%s4446 + $0x8] sm:$0xf]
        %v4450 = vld [vmem:[%s4446 + $0xc] sm:$0xf]
        %v4451 = vunpack.c.l.b16 %v4107
        %v4452 = vunpack.c.l.b16 %v4117
        %v4453 = vunpack.c.l.b16 %v4127
        %v4454 = vunpack.c.l.b16 %v4137
        %v4455 = vunpack.c.l.b16 %v4151
        %v4456 = vunpack.c.l.b16 %v4161
        %v4457 = vunpack.c.l.b16 %v4171
        %v4458 = vunpack.c.l.b16 %v4181
        %v4459 = vunpack.c.l.b16 %v4195
        %v4460 = vunpack.c.l.b16 %v4205
        %v4461 = vunpack.c.l.b16 %v4215
        %v4462 = vunpack.c.l.b16 %v4225
        %v4463 = vunpack.c.l.b16 %v4239
        %v4464 = vunpack.c.l.b16 %v4249
        %v4465 = vunpack.c.l.b16 %v4259
        %v4466 = vunpack.c.l.b16 %v4269
        %v4467 = vunpack.c.l.b16 %v4283
        %v4468 = vunpack.c.l.b16 %v4293
        %v4469 = vunpack.c.l.b16 %v4303
        %v4470 = vunpack.c.l.b16 %v4313
        %v4471 = vunpack.c.l.b16 %v4327
        %v4472 = vunpack.c.l.b16 %v4337
        %v4473 = vunpack.c.l.b16 %v4347
        %v4474 = vunpack.c.l.b16 %v4357
        %v4475 = vunpack.c.l.b16 %v4371
        %v4476 = vunpack.c.l.b16 %v4381
        %v4477 = vunpack.c.l.b16 %v4391
        %v4478 = vunpack.c.l.b16 %v4401
        %v4479 = vunpack.c.l.b16 %v4415
        %v4480 = vunpack.c.l.b16 %v4425
        %v4481 = vunpack.c.l.b16 %v4435
        %v4482 = vunpack.c.l.b16 %v4445
        %v4483 = vpack.c.b16 %v4452, %v4451
        %v4484 = vpack.c.b16 %v4454, %v4453
        %v4485 = vpack.c.b16 %v4456, %v4455
        %v4486 = vpack.c.b16 %v4458, %v4457
        %v4487 = vpack.c.b16 %v4460, %v4459
        %v4488 = vpack.c.b16 %v4462, %v4461
        %v4489 = vpack.c.b16 %v4464, %v4463
        %v4490 = vpack.c.b16 %v4466, %v4465
        %v4491 = vpack.c.b16 %v4468, %v4467
        %v4492 = vpack.c.b16 %v4470, %v4469
        %v4493 = vpack.c.b16 %v4472, %v4471
        %v4494 = vpack.c.b16 %v4474, %v4473
        %v4495 = vpack.c.b16 %v4476, %v4475
        %v4496 = vpack.c.b16 %v4478, %v4477
        %v4497 = vpack.c.b16 %v4480, %v4479
        %v4498 = vpack.c.b16 %v4482, %v4481
        %v4503 = vunpack.c.l.b16 %v4447
        %v4504 = vunpack.c.l.b16 %v4448
        %v4505 = vunpack.c.l.b16 %v4449
        %v4506 = vunpack.c.l.b16 %v4450
        %v4507 = vpack.c.b16 %v4504, %v4503
        %v4508 = vpack.c.b16 %v4506, %v4505
        %v4512 = vsel %vm1866, %v4483, 0
        %v4515 = vsel %vm1866, %v4484, 0
        %v4518 = vsel %vm1866, %v4485, 0
        %v4521 = vsel %vm1866, %v4486, 0
        %v4524 = vsel %vm1866, %v4487, 0
        %v4527 = vsel %vm1866, %v4488, 0
        %v4530 = vsel %vm1866, %v4489, 0
        %v4533 = vsel %vm1866, %v4490, 0
        %v4536 = vsel %vm1866, %v4491, 0
        %v4539 = vsel %vm1866, %v4492, 0
        %v4542 = vsel %vm1866, %v4493, 0
        %v4545 = vsel %vm1866, %v4494, 0
        %v4548 = vsel %vm1866, %v4495, 0
        %v4551 = vsel %vm1866, %v4496, 0
        %v4554 = vsel %vm1866, %v4497, 0
        %v4557 = vsel %vm1866, %v4498, 0
        %4559 = vmatprep.subr.bf16.mxu0 0
        %4560 = vmatpush1.bf16.msra.mxu0 0
        %4561 = vmatprep.subr.bf16.mxu0 0
        %4562 = vmatpush1.bf16.msra.mxu0 0
        %4563 = vmatprep.subr.bf16.mxu0 0
        %4564 = vmatpush1.bf16.msra.mxu0 0
        %4565 = vmatprep.subr.bf16.mxu0 0
        %4566 = vmatpush1.bf16.msra.mxu0 0
        %4567 = vmatprep.subr.bf16.mxu0 0
        %4568 = vmatpush1.bf16.msra.mxu0 0
        %4569 = vmatprep.subr.bf16.mxu0 0
        %4570 = vmatpush1.bf16.msra.mxu0 0
        %4571 = vmatprep.subr.bf16.mxu0 0
        %4572 = vmatpush1.bf16.msra.mxu0 %v4508
        %4573 = vmatprep.subr.bf16.mxu0 0
        %4574 = vmatpush1.bf16.msra.mxu0 %v4507
        %4575 = vmatprep.subr.bf16.mxu0 0
        %4576 = vmatpush2.bf16.msra.mxu0 0
        %4577 = vmatprep.subr.bf16.mxu0 0
        %4578 = vmatpush2.bf16.msra.mxu0 0
        %4579 = vmatprep.subr.bf16.mxu0 0
        %4580 = vmatpush2.bf16.msra.mxu0 0
        %4581 = vmatprep.subr.bf16.mxu0 0
        %4582 = vmatpush2.bf16.msra.mxu0 0
        %4583 = vmatprep.subr.bf16.mxu0 0
        %4584 = vmatpush2.bf16.msra.mxu0 0
        %4585 = vmatprep.subr.bf16.mxu0 0
        %4586 = vmatpush2.bf16.msra.mxu0 0
        %4587 = vmatprep.subr.bf16.mxu0 0
        %4588 = vmatpush2.bf16.msra.mxu0 0
        %4589 = vmatprep.subr.bf16.mxu0 0
        %4590 = vmatpush2.bf16.msra.mxu0 0
        %4591 = vmatprep.mubr.bf16.mxu0 0
        %4592 = vmatmul.mubr.bf16.gmra.mxu0 %v4512
        %v4593 = vpop.f32.mrf.mxu0
        %v4594 = vadd.f32 0.0, %v4593
        %v4595 = vpop.f32.mrf.mxu0
        %v4596 = vpop.f32.mrf.mxu0
        %v4597 = vadd.f32 0.0, %v4596
        %v4598 = vpop.f32.mrf.mxu0
        %4599 = vmatprep.mubr.bf16.mxu0 0
        %4600 = vmatmul.mubr.bf16.gmra.mxu0 %v4515
        %v4601 = vpop.f32.mrf.mxu0
        %v4602 = vadd.f32 0.0, %v4601
        %v4603 = vpop.f32.mrf.mxu0
        %v4604 = vpop.f32.mrf.mxu0
        %v4605 = vadd.f32 0.0, %v4604
        %v4606 = vpop.f32.mrf.mxu0
        %4607 = vmatprep.mubr.bf16.mxu0 0
        %4608 = vmatmul.mubr.bf16.gmra.mxu0 %v4518
        %v4609 = vpop.f32.mrf.mxu0
        %v4610 = vadd.f32 0.0, %v4609
        %v4611 = vpop.f32.mrf.mxu0
        %v4612 = vpop.f32.mrf.mxu0
        %v4613 = vadd.f32 0.0, %v4612
        %v4614 = vpop.f32.mrf.mxu0
        %4615 = vmatprep.mubr.bf16.mxu0 0
        %4616 = vmatmul.mubr.bf16.gmra.mxu0 %v4521
        %v4617 = vpop.f32.mrf.mxu0
        %v4618 = vadd.f32 0.0, %v4617
        %v4619 = vpop.f32.mrf.mxu0
        %v4620 = vpop.f32.mrf.mxu0
        %v4621 = vadd.f32 0.0, %v4620
        %v4622 = vpop.f32.mrf.mxu0
        %4623 = vmatprep.mubr.bf16.mxu0 0
        %4624 = vmatmul.mubr.bf16.gmra.mxu0 %v4524
        %v4625 = vpop.f32.mrf.mxu0
        %v4626 = vadd.f32 0.0, %v4625
        %v4627 = vpop.f32.mrf.mxu0
        %v4628 = vpop.f32.mrf.mxu0
        %v4629 = vadd.f32 0.0, %v4628
        %v4630 = vpop.f32.mrf.mxu0
        %4631 = vmatprep.mubr.bf16.mxu0 0
        %4632 = vmatmul.mubr.bf16.gmra.mxu0 %v4527
        %v4633 = vpop.f32.mrf.mxu0
        %v4634 = vadd.f32 0.0, %v4633
        %v4635 = vpop.f32.mrf.mxu0
        %v4636 = vpop.f32.mrf.mxu0
        %v4637 = vadd.f32 0.0, %v4636
        %v4638 = vpop.f32.mrf.mxu0
        %4639 = vmatprep.mubr.bf16.mxu0 0
        %4640 = vmatmul.mubr.bf16.gmra.mxu0 %v4530
        %v4641 = vpop.f32.mrf.mxu0
        %v4642 = vadd.f32 0.0, %v4641
        %v4643 = vpop.f32.mrf.mxu0
        %v4644 = vpop.f32.mrf.mxu0
        %v4645 = vadd.f32 0.0, %v4644
        %v4646 = vpop.f32.mrf.mxu0
        %4647 = vmatprep.mubr.bf16.mxu0 0
        %4648 = vmatmul.mubr.bf16.gmra.mxu0 %v4533
        %v4649 = vpop.f32.mrf.mxu0
        %v4650 = vadd.f32 0.0, %v4649
        %v4651 = vpop.f32.mrf.mxu0
        %v4652 = vpop.f32.mrf.mxu0
        %v4653 = vadd.f32 0.0, %v4652
        %v4654 = vpop.f32.mrf.mxu0
        %4655 = vmatprep.mubr.bf16.mxu0 0
        %4656 = vmatmul.mubr.bf16.gmra.mxu0 %v4536
        %v4657 = vpop.f32.mrf.mxu0
        %v4658 = vadd.f32 0.0, %v4657
        %v4659 = vpop.f32.mrf.mxu0
        %v4660 = vpop.f32.mrf.mxu0
        %v4661 = vadd.f32 0.0, %v4660
        %v4662 = vpop.f32.mrf.mxu0
        %4663 = vmatprep.mubr.bf16.mxu0 0
        %4664 = vmatmul.mubr.bf16.gmra.mxu0 %v4539
        %v4665 = vpop.f32.mrf.mxu0
        %v4666 = vadd.f32 0.0, %v4665
        %v4667 = vpop.f32.mrf.mxu0
        %v4668 = vpop.f32.mrf.mxu0
        %v4669 = vadd.f32 0.0, %v4668
        %v4670 = vpop.f32.mrf.mxu0
        %4671 = vmatprep.mubr.bf16.mxu0 0
        %4672 = vmatmul.mubr.bf16.gmra.mxu0 %v4542
        %v4673 = vpop.f32.mrf.mxu0
        %v4674 = vadd.f32 0.0, %v4673
        %v4675 = vpop.f32.mrf.mxu0
        %v4676 = vpop.f32.mrf.mxu0
        %v4677 = vadd.f32 0.0, %v4676
        %v4678 = vpop.f32.mrf.mxu0
        %4679 = vmatprep.mubr.bf16.mxu0 0
        %4680 = vmatmul.mubr.bf16.gmra.mxu0 %v4545
        %v4681 = vpop.f32.mrf.mxu0
        %v4682 = vadd.f32 0.0, %v4681
        %v4683 = vpop.f32.mrf.mxu0
        %v4684 = vpop.f32.mrf.mxu0
        %v4685 = vadd.f32 0.0, %v4684
        %v4686 = vpop.f32.mrf.mxu0
        %4687 = vmatprep.mubr.bf16.mxu0 0
        %4688 = vmatmul.mubr.bf16.gmra.mxu0 %v4548
        %v4689 = vpop.f32.mrf.mxu0
        %v4690 = vadd.f32 0.0, %v4689
        %v4691 = vpop.f32.mrf.mxu0
        %v4692 = vpop.f32.mrf.mxu0
        %v4693 = vadd.f32 0.0, %v4692
        %v4694 = vpop.f32.mrf.mxu0
        %4695 = vmatprep.mubr.bf16.mxu0 0
        %4696 = vmatmul.mubr.bf16.gmra.mxu0 %v4551
        %v4697 = vpop.f32.mrf.mxu0
        %v4698 = vadd.f32 0.0, %v4697
        %v4699 = vpop.f32.mrf.mxu0
        %v4700 = vpop.f32.mrf.mxu0
        %v4701 = vadd.f32 0.0, %v4700
        %v4702 = vpop.f32.mrf.mxu0
        %4703 = vmatprep.mubr.bf16.mxu0 0
        %4704 = vmatmul.mubr.bf16.gmra.mxu0 %v4554
        %v4705 = vpop.f32.mrf.mxu0
        %v4706 = vadd.f32 0.0, %v4705
        %v4707 = vpop.f32.mrf.mxu0
        %v4708 = vpop.f32.mrf.mxu0
        %v4709 = vadd.f32 0.0, %v4708
        %v4710 = vpop.f32.mrf.mxu0
        %4711 = vmatprep.mubr.bf16.mxu0 0
        %4712 = vmatmul.mubr.bf16.gmra.mxu0 %v4557
        %v4713 = vpop.f32.mrf.mxu0
        %v4714 = vadd.f32 0.0, %v4713
        %v4715 = vpop.f32.mrf.mxu0
        %v4716 = vpop.f32.mrf.mxu0
        %v4717 = vadd.f32 0.0, %v4716
        %v4718 = vpop.f32.mrf.mxu0
        %4719 = vdwg.mxu0
        %v4720 = vadd.f32 %v4022, %v4594
        %v4721 = vadd.f32 %v4023, %v4597
        %v4722 = vadd.f32 %v4024, %v4602
        %v4723 = vadd.f32 %v4025, %v4605
        %v4724 = vadd.f32 %v4026, %v4610
        %v4725 = vadd.f32 %v4027, %v4613
        %v4726 = vadd.f32 %v4028, %v4618
        %v4727 = vadd.f32 %v4029, %v4621
        %v4728 = vadd.f32 %v4030, %v4626
        %v4729 = vadd.f32 %v4031, %v4629
        %v4730 = vadd.f32 %v4032, %v4634
        %v4731 = vadd.f32 %v4033, %v4637
        %v4732 = vadd.f32 %v4034, %v4642
        %v4733 = vadd.f32 %v4035, %v4645
        %v4734 = vadd.f32 %v4036, %v4650
        %v4735 = vadd.f32 %v4037, %v4653
        %v4736 = vadd.f32 %v4038, %v4658
        %v4737 = vadd.f32 %v4039, %v4661
        %v4738 = vadd.f32 %v4040, %v4666
        %v4739 = vadd.f32 %v4041, %v4669
        %v4740 = vadd.f32 %v4042, %v4674
        %v4741 = vadd.f32 %v4043, %v4677
        %v4742 = vadd.f32 %v4044, %v4682
        %v4743 = vadd.f32 %v4045, %v4685
        %v4744 = vadd.f32 %v4046, %v4690
        %v4745 = vadd.f32 %v4047, %v4693
        %v4746 = vadd.f32 %v4048, %v4698
        %v4747 = vadd.f32 %v4049, %v4701
        %v4748 = vadd.f32 %v4050, %v4706
        %v4749 = vadd.f32 %v4051, %v4709
        %v4750 = vadd.f32 %v4052, %v4714
        %v4751 = vadd.f32 %v4053, %v4717
        %s4752 = sadd.s32 %s1399, 2
        %s4753 = smul.u32 %s4752, 6
        %s4754 = smul.addr %s4753, 4
        %s4755 = scalar_lea.vmem [#allocation2], %s4754
        %v4756 = vld [vmem:[%s4755] sm:$0x8]
        %v4757 = vld [vmem:[%s4755 + $0x4] sm:$0xf]
        %v4758 = vld [vmem:[%s4755 + $0x8] sm:$0xf]
        %v4759 = vld [vmem:[%s4755 + $0xc] sm:$0xf]
        %v4760 = vld [vmem:[%s4755 + $0x10] sm:$0xf]
        %v4761 = vld [vmem:[%s4755 + $0x18] sm:$0x8]
        %v4762 = vld [vmem:[%s4755 + $0x1c] sm:$0xf]
        %v4763 = vld [vmem:[%s4755 + $0x20] sm:$0xf]
        %v4764 = vld [vmem:[%s4755 + $0x24] sm:$0xf]
        %v4765 = vld [vmem:[%s4755 + $0x28] sm:$0xf]
        %v4766 = vld [vmem:[%s4755 + $0x30] sm:$0x8]
        %v4767 = vld [vmem:[%s4755 + $0x34] sm:$0xf]
        %v4768 = vld [vmem:[%s4755 + $0x38] sm:$0xf]
        %v4769 = vld [vmem:[%s4755 + $0x3c] sm:$0xf]
        %v4770 = vld [vmem:[%s4755 + $0x40] sm:$0xf]
        %v4771 = vld [vmem:[%s4755 + $0x48] sm:$0x8]
        %v4772 = vld [vmem:[%s4755 + $0x4c] sm:$0xf]
        %v4773 = vld [vmem:[%s4755 + $0x50] sm:$0xf]
        %v4774 = vld [vmem:[%s4755 + $0x54] sm:$0xf]
        %v4775 = vld [vmem:[%s4755 + $0x58] sm:$0xf]
        %v4776 = vld [vmem:[%s4755 + $0x60] sm:$0x8]
        %v4777 = vld [vmem:[%s4755 + $0x64] sm:$0xf]
        %v4778 = vld [vmem:[%s4755 + $0x68] sm:$0xf]
        %v4779 = vld [vmem:[%s4755 + $0x6c] sm:$0xf]
        %v4780 = vld [vmem:[%s4755 + $0x70] sm:$0xf]
        %v4781 = vld [vmem:[%s4755 + $0x78] sm:$0x8]
        %v4782 = vld [vmem:[%s4755 + $0x7c] sm:$0xf]
        %v4783 = vld [vmem:[%s4755 + $0x80] sm:$0xf]
        %v4784 = vld [vmem:[%s4755 + $0x84] sm:$0xf]
        %v4785 = vld [vmem:[%s4755 + $0x88] sm:$0xf]
        %v4786 = vld [vmem:[%s4755 + $0x90] sm:$0x8]
        %v4787 = vld [vmem:[%s4755 + $0x94] sm:$0xf]
        %v4788 = vld [vmem:[%s4755 + $0x98] sm:$0xf]
        %v4789 = vld [vmem:[%s4755 + $0x9c] sm:$0xf]
        %v4790 = vld [vmem:[%s4755 + $0xa0] sm:$0xf]
        %v4791 = vld [vmem:[%s4755 + $0xa8] sm:$0x8]
        %v4792 = vld [vmem:[%s4755 + $0xac] sm:$0xf]
        %v4793 = vld [vmem:[%s4755 + $0xb0] sm:$0xf]
        %v4794 = vld [vmem:[%s4755 + $0xb4] sm:$0xf]
        %v4795 = vld [vmem:[%s4755 + $0xb8] sm:$0xf]
        %v4797 = vshrl.u32 %v4756, 16
        %v4799 = vrot.slane %v4797, 7
        %v4800 = vrot.slane %v4799, 4
        %v4802 = vshrl.u32 %v4757, 16
        %v4804 = vrot.slane %v4802, 7
        %v4805 = vshll.u32 %v4757, 16
        %v4807 = vor.u32 %v4804, %v4805
        %v4808 = vsel %vm1444, %v4800, %v4807
        %v4809 = vrot.slane %v4804, 4
        %v4811 = vshrl.u32 %v4758, 16
        %v4813 = vrot.slane %v4811, 7
        %v4814 = vshll.u32 %v4758, 16
        %v4816 = vor.u32 %v4813, %v4814
        %v4817 = vsel %vm1444, %v4809, %v4816
        %v4818 = vrot.slane %v4813, 4
        %v4820 = vshrl.u32 %v4759, 16
        %v4822 = vrot.slane %v4820, 7
        %v4823 = vshll.u32 %v4759, 16
        %v4825 = vor.u32 %v4822, %v4823
        %v4826 = vsel %vm1444, %v4818, %v4825
        %v4827 = vrot.slane %v4822, 4
        %v4829 = vshrl.u32 %v4760, 16
        %v4831 = vrot.slane %v4829, 7
        %v4832 = vshll.u32 %v4760, 16
        %v4834 = vor.u32 %v4831, %v4832
        %v4835 = vsel %vm1444, %v4827, %v4834
        %v4837 = vshrl.u32 %v4761, 16
        %v4839 = vrot.slane %v4837, 7
        %v4840 = vrot.slane %v4839, 4
        %v4842 = vshrl.u32 %v4762, 16
        %v4844 = vrot.slane %v4842, 7
        %v4845 = vshll.u32 %v4762, 16
        %v4847 = vor.u32 %v4844, %v4845
        %v4848 = vsel %vm1444, %v4840, %v4847
        %v4849 = vrot.slane %v4844, 4
        %v4851 = vshrl.u32 %v4763, 16
        %v4853 = vrot.slane %v4851, 7
        %v4854 = vshll.u32 %v4763, 16
        %v4856 = vor.u32 %v4853, %v4854
        %v4857 = vsel %vm1444, %v4849, %v4856
        %v4858 = vrot.slane %v4853, 4
        %v4860 = vshrl.u32 %v4764, 16
        %v4862 = vrot.slane %v4860, 7
        %v4863 = vshll.u32 %v4764, 16
        %v4865 = vor.u32 %v4862, %v4863
        %v4866 = vsel %vm1444, %v4858, %v4865
        %v4867 = vrot.slane %v4862, 4
        %v4869 = vshrl.u32 %v4765, 16
        %v4871 = vrot.slane %v4869, 7
        %v4872 = vshll.u32 %v4765, 16
        %v4874 = vor.u32 %v4871, %v4872
        %v4875 = vsel %vm1444, %v4867, %v4874
        %v4877 = vshrl.u32 %v4766, 16
        %v4879 = vrot.slane %v4877, 7
        %v4880 = vrot.slane %v4879, 4
        %v4882 = vshrl.u32 %v4767, 16
        %v4884 = vrot.slane %v4882, 7
        %v4885 = vshll.u32 %v4767, 16
        %v4887 = vor.u32 %v4884, %v4885
        %v4888 = vsel %vm1444, %v4880, %v4887
        %v4889 = vrot.slane %v4884, 4
        %v4891 = vshrl.u32 %v4768, 16
        %v4893 = vrot.slane %v4891, 7
        %v4894 = vshll.u32 %v4768, 16
        %v4896 = vor.u32 %v4893, %v4894
        %v4897 = vsel %vm1444, %v4889, %v4896
        %v4898 = vrot.slane %v4893, 4
        %v4900 = vshrl.u32 %v4769, 16
        %v4902 = vrot.slane %v4900, 7
        %v4903 = vshll.u32 %v4769, 16
        %v4905 = vor.u32 %v4902, %v4903
        %v4906 = vsel %vm1444, %v4898, %v4905
        %v4907 = vrot.slane %v4902, 4
        %v4909 = vshrl.u32 %v4770, 16
        %v4911 = vrot.slane %v4909, 7
        %v4912 = vshll.u32 %v4770, 16
        %v4914 = vor.u32 %v4911, %v4912
        %v4915 = vsel %vm1444, %v4907, %v4914
        %v4917 = vshrl.u32 %v4771, 16
        %v4919 = vrot.slane %v4917, 7
        %v4920 = vrot.slane %v4919, 4
        %v4922 = vshrl.u32 %v4772, 16
        %v4924 = vrot.slane %v4922, 7
        %v4925 = vshll.u32 %v4772, 16
        %v4927 = vor.u32 %v4924, %v4925
        %v4928 = vsel %vm1444, %v4920, %v4927
        %v4929 = vrot.slane %v4924, 4
        %v4931 = vshrl.u32 %v4773, 16
        %v4933 = vrot.slane %v4931, 7
        %v4934 = vshll.u32 %v4773, 16
        %v4936 = vor.u32 %v4933, %v4934
        %v4937 = vsel %vm1444, %v4929, %v4936
        %v4938 = vrot.slane %v4933, 4
        %v4940 = vshrl.u32 %v4774, 16
        %v4942 = vrot.slane %v4940, 7
        %v4943 = vshll.u32 %v4774, 16
        %v4945 = vor.u32 %v4942, %v4943
        %v4946 = vsel %vm1444, %v4938, %v4945
        %v4947 = vrot.slane %v4942, 4
        %v4949 = vshrl.u32 %v4775, 16
        %v4951 = vrot.slane %v4949, 7
        %v4952 = vshll.u32 %v4775, 16
        %v4954 = vor.u32 %v4951, %v4952
        %v4955 = vsel %vm1444, %v4947, %v4954
        %v4957 = vshrl.u32 %v4776, 16
        %v4959 = vrot.slane %v4957, 7
        %v4960 = vrot.slane %v4959, 4
        %v4962 = vshrl.u32 %v4777, 16
        %v4964 = vrot.slane %v4962, 7
        %v4965 = vshll.u32 %v4777, 16
        %v4967 = vor.u32 %v4964, %v4965
        %v4968 = vsel %vm1444, %v4960, %v4967
        %v4969 = vrot.slane %v4964, 4
        %v4971 = vshrl.u32 %v4778, 16
        %v4973 = vrot.slane %v4971, 7
        %v4974 = vshll.u32 %v4778, 16
        %v4976 = vor.u32 %v4973, %v4974
        %v4977 = vsel %vm1444, %v4969, %v4976
        %v4978 = vrot.slane %v4973, 4
        %v4980 = vshrl.u32 %v4779, 16
        %v4982 = vrot.slane %v4980, 7
        %v4983 = vshll.u32 %v4779, 16
        %v4985 = vor.u32 %v4982, %v4983
        %v4986 = vsel %vm1444, %v4978, %v4985
        %v4987 = vrot.slane %v4982, 4
        %v4989 = vshrl.u32 %v4780, 16
        %v4991 = vrot.slane %v4989, 7
        %v4992 = vshll.u32 %v4780, 16
        %v4994 = vor.u32 %v4991, %v4992
        %v4995 = vsel %vm1444, %v4987, %v4994
        %v4997 = vshrl.u32 %v4781, 16
        %v4999 = vrot.slane %v4997, 7
        %v5000 = vrot.slane %v4999, 4
        %v5002 = vshrl.u32 %v4782, 16
        %v5004 = vrot.slane %v5002, 7
        %v5005 = vshll.u32 %v4782, 16
        %v5007 = vor.u32 %v5004, %v5005
        %v5008 = vsel %vm1444, %v5000, %v5007
        %v5009 = vrot.slane %v5004, 4
        %v5011 = vshrl.u32 %v4783, 16
        %v5013 = vrot.slane %v5011, 7
        %v5014 = vshll.u32 %v4783, 16
        %v5016 = vor.u32 %v5013, %v5014
        %v5017 = vsel %vm1444, %v5009, %v5016
        %v5018 = vrot.slane %v5013, 4
        %v5020 = vshrl.u32 %v4784, 16
        %v5022 = vrot.slane %v5020, 7
        %v5023 = vshll.u32 %v4784, 16
        %v5025 = vor.u32 %v5022, %v5023
        %v5026 = vsel %vm1444, %v5018, %v5025
        %v5027 = vrot.slane %v5022, 4
        %v5029 = vshrl.u32 %v4785, 16
        %v5031 = vrot.slane %v5029, 7
        %v5032 = vshll.u32 %v4785, 16
        %v5034 = vor.u32 %v5031, %v5032
        %v5035 = vsel %vm1444, %v5027, %v5034
        %v5037 = vshrl.u32 %v4786, 16
        %v5039 = vrot.slane %v5037, 7
        %v5040 = vrot.slane %v5039, 4
        %v5042 = vshrl.u32 %v4787, 16
        %v5044 = vrot.slane %v5042, 7
        %v5045 = vshll.u32 %v4787, 16
        %v5047 = vor.u32 %v5044, %v5045
        %v5048 = vsel %vm1444, %v5040, %v5047
        %v5049 = vrot.slane %v5044, 4
        %v5051 = vshrl.u32 %v4788, 16
        %v5053 = vrot.slane %v5051, 7
        %v5054 = vshll.u32 %v4788, 16
        %v5056 = vor.u32 %v5053, %v5054
        %v5057 = vsel %vm1444, %v5049, %v5056
        %v5058 = vrot.slane %v5053, 4
        %v5060 = vshrl.u32 %v4789, 16
        %v5062 = vrot.slane %v5060, 7
        %v5063 = vshll.u32 %v4789, 16
        %v5065 = vor.u32 %v5062, %v5063
        %v5066 = vsel %vm1444, %v5058, %v5065
        %v5067 = vrot.slane %v5062, 4
        %v5069 = vshrl.u32 %v4790, 16
        %v5071 = vrot.slane %v5069, 7
        %v5072 = vshll.u32 %v4790, 16
        %v5074 = vor.u32 %v5071, %v5072
        %v5075 = vsel %vm1444, %v5067, %v5074
        %v5077 = vshrl.u32 %v4791, 16
        %v5079 = vrot.slane %v5077, 7
        %v5080 = vrot.slane %v5079, 4
        %v5082 = vshrl.u32 %v4792, 16
        %v5084 = vrot.slane %v5082, 7
        %v5085 = vshll.u32 %v4792, 16
        %v5087 = vor.u32 %v5084, %v5085
        %v5088 = vsel %vm1444, %v5080, %v5087
        %v5089 = vrot.slane %v5084, 4
        %v5091 = vshrl.u32 %v4793, 16
        %v5093 = vrot.slane %v5091, 7
        %v5094 = vshll.u32 %v4793, 16
        %v5096 = vor.u32 %v5093, %v5094
        %v5097 = vsel %vm1444, %v5089, %v5096
        %v5098 = vrot.slane %v5093, 4
        %v5100 = vshrl.u32 %v4794, 16
        %v5102 = vrot.slane %v5100, 7
        %v5103 = vshll.u32 %v4794, 16
        %v5105 = vor.u32 %v5102, %v5103
        %v5106 = vsel %vm1444, %v5098, %v5105
        %v5107 = vrot.slane %v5102, 4
        %v5109 = vshrl.u32 %v4795, 16
        %v5111 = vrot.slane %v5109, 7
        %v5112 = vshll.u32 %v4795, 16
        %v5114 = vor.u32 %v5111, %v5112
        %v5115 = vsel %vm1444, %v5107, %v5114
        %s5116 = scalar_lea.vmem %s3, 96
        %v5117 = vld [vmem:[%s5116] sm:$0xf]
        %v5118 = vld [vmem:[%s5116 + $0x4] sm:$0xf]
        %v5119 = vld [vmem:[%s5116 + $0x8] sm:$0xf]
        %v5120 = vld [vmem:[%s5116 + $0xc] sm:$0xf]
        %v5121 = vunpack.c.l.b16 %v4808
        %v5122 = vunpack.c.l.b16 %v4817
        %v5123 = vunpack.c.l.b16 %v4826
        %v5124 = vunpack.c.l.b16 %v4835
        %v5125 = vunpack.c.l.b16 %v4848
        %v5126 = vunpack.c.l.b16 %v4857
        %v5127 = vunpack.c.l.b16 %v4866
        %v5128 = vunpack.c.l.b16 %v4875
        %v5129 = vunpack.c.l.b16 %v4888
        %v5130 = vunpack.c.l.b16 %v4897
        %v5131 = vunpack.c.l.b16 %v4906
        %v5132 = vunpack.c.l.b16 %v4915
        %v5133 = vunpack.c.l.b16 %v4928
        %v5134 = vunpack.c.l.b16 %v4937
        %v5135 = vunpack.c.l.b16 %v4946
        %v5136 = vunpack.c.l.b16 %v4955
        %v5137 = vunpack.c.l.b16 %v4968
        %v5138 = vunpack.c.l.b16 %v4977
        %v5139 = vunpack.c.l.b16 %v4986
        %v5140 = vunpack.c.l.b16 %v4995
        %v5141 = vunpack.c.l.b16 %v5008
        %v5142 = vunpack.c.l.b16 %v5017
        %v5143 = vunpack.c.l.b16 %v5026
        %v5144 = vunpack.c.l.b16 %v5035
        %v5145 = vunpack.c.l.b16 %v5048
        %v5146 = vunpack.c.l.b16 %v5057
        %v5147 = vunpack.c.l.b16 %v5066
        %v5148 = vunpack.c.l.b16 %v5075
        %v5149 = vunpack.c.l.b16 %v5088
        %v5150 = vunpack.c.l.b16 %v5097
        %v5151 = vunpack.c.l.b16 %v5106
        %v5152 = vunpack.c.l.b16 %v5115
        %v5153 = vpack.c.b16 %v5122, %v5121
        %v5154 = vpack.c.b16 %v5124, %v5123
        %v5155 = vpack.c.b16 %v5126, %v5125
        %v5156 = vpack.c.b16 %v5128, %v5127
        %v5157 = vpack.c.b16 %v5130, %v5129
        %v5158 = vpack.c.b16 %v5132, %v5131
        %v5159 = vpack.c.b16 %v5134, %v5133
        %v5160 = vpack.c.b16 %v5136, %v5135
        %v5161 = vpack.c.b16 %v5138, %v5137
        %v5162 = vpack.c.b16 %v5140, %v5139
        %v5163 = vpack.c.b16 %v5142, %v5141
        %v5164 = vpack.c.b16 %v5144, %v5143
        %v5165 = vpack.c.b16 %v5146, %v5145
        %v5166 = vpack.c.b16 %v5148, %v5147
        %v5167 = vpack.c.b16 %v5150, %v5149
        %v5168 = vpack.c.b16 %v5152, %v5151
        %v5173 = vunpack.c.l.b16 %v5117
        %v5174 = vunpack.c.l.b16 %v5118
        %v5175 = vunpack.c.l.b16 %v5119
        %v5176 = vunpack.c.l.b16 %v5120
        %v5177 = vpack.c.b16 %v5174, %v5173
        %v5178 = vpack.c.b16 %v5176, %v5175
        %v5182 = vsel %vm1866, %v5153, 0
        %v5185 = vsel %vm1866, %v5154, 0
        %v5188 = vsel %vm1866, %v5155, 0
        %v5191 = vsel %vm1866, %v5156, 0
        %v5194 = vsel %vm1866, %v5157, 0
        %v5197 = vsel %vm1866, %v5158, 0
        %v5200 = vsel %vm1866, %v5159, 0
        %v5203 = vsel %vm1866, %v5160, 0
        %v5206 = vsel %vm1866, %v5161, 0
        %v5209 = vsel %vm1866, %v5162, 0
        %v5212 = vsel %vm1866, %v5163, 0
        %v5215 = vsel %vm1866, %v5164, 0
        %v5218 = vsel %vm1866, %v5165, 0
        %v5221 = vsel %vm1866, %v5166, 0
        %v5224 = vsel %vm1866, %v5167, 0
        %v5227 = vsel %vm1866, %v5168, 0
        %5229 = vmatprep.subr.bf16.mxu0 0
        %5230 = vmatpush1.bf16.msra.mxu0 0
        %5231 = vmatprep.subr.bf16.mxu0 0
        %5232 = vmatpush1.bf16.msra.mxu0 0
        %5233 = vmatprep.subr.bf16.mxu0 0
        %5234 = vmatpush1.bf16.msra.mxu0 0
        %5235 = vmatprep.subr.bf16.mxu0 0
        %5236 = vmatpush1.bf16.msra.mxu0 0
        %5237 = vmatprep.subr.bf16.mxu0 0
        %5238 = vmatpush1.bf16.msra.mxu0 0
        %5239 = vmatprep.subr.bf16.mxu0 0
        %5240 = vmatpush1.bf16.msra.mxu0 0
        %5241 = vmatprep.subr.bf16.mxu0 0
        %5242 = vmatpush1.bf16.msra.mxu0 %v5178
        %5243 = vmatprep.subr.bf16.mxu0 0
        %5244 = vmatpush1.bf16.msra.mxu0 %v5177
        %5245 = vmatprep.subr.bf16.mxu0 0
        %5246 = vmatpush2.bf16.msra.mxu0 0
        %5247 = vmatprep.subr.bf16.mxu0 0
        %5248 = vmatpush2.bf16.msra.mxu0 0
        %5249 = vmatprep.subr.bf16.mxu0 0
        %5250 = vmatpush2.bf16.msra.mxu0 0
        %5251 = vmatprep.subr.bf16.mxu0 0
        %5252 = vmatpush2.bf16.msra.mxu0 0
        %5253 = vmatprep.subr.bf16.mxu0 0
        %5254 = vmatpush2.bf16.msra.mxu0 0
        %5255 = vmatprep.subr.bf16.mxu0 0
        %5256 = vmatpush2.bf16.msra.mxu0 0
        %5257 = vmatprep.subr.bf16.mxu0 0
        %5258 = vmatpush2.bf16.msra.mxu0 0
        %5259 = vmatprep.subr.bf16.mxu0 0
        %5260 = vmatpush2.bf16.msra.mxu0 0
        %5261 = vmatprep.mubr.bf16.mxu0 0
        %5262 = vmatmul.mubr.bf16.gmra.mxu0 %v5182
        %v5263 = vpop.f32.mrf.mxu0
        %v5264 = vadd.f32 0.0, %v5263
        %v5265 = vpop.f32.mrf.mxu0
        %v5266 = vpop.f32.mrf.mxu0
        %v5267 = vadd.f32 0.0, %v5266
        %v5268 = vpop.f32.mrf.mxu0
        %5269 = vmatprep.mubr.bf16.mxu0 0
        %5270 = vmatmul.mubr.bf16.gmra.mxu0 %v5185
        %v5271 = vpop.f32.mrf.mxu0
        %v5272 = vadd.f32 0.0, %v5271
        %v5273 = vpop.f32.mrf.mxu0
        %v5274 = vpop.f32.mrf.mxu0
        %v5275 = vadd.f32 0.0, %v5274
        %v5276 = vpop.f32.mrf.mxu0
        %5277 = vmatprep.mubr.bf16.mxu0 0
        %5278 = vmatmul.mubr.bf16.gmra.mxu0 %v5188
        %v5279 = vpop.f32.mrf.mxu0
        %v5280 = vadd.f32 0.0, %v5279
        %v5281 = vpop.f32.mrf.mxu0
        %v5282 = vpop.f32.mrf.mxu0
        %v5283 = vadd.f32 0.0, %v5282
        %v5284 = vpop.f32.mrf.mxu0
        %5285 = vmatprep.mubr.bf16.mxu0 0
        %5286 = vmatmul.mubr.bf16.gmra.mxu0 %v5191
        %v5287 = vpop.f32.mrf.mxu0
        %v5288 = vadd.f32 0.0, %v5287
        %v5289 = vpop.f32.mrf.mxu0
        %v5290 = vpop.f32.mrf.mxu0
        %v5291 = vadd.f32 0.0, %v5290
        %v5292 = vpop.f32.mrf.mxu0
        %5293 = vmatprep.mubr.bf16.mxu0 0
        %5294 = vmatmul.mubr.bf16.gmra.mxu0 %v5194
        %v5295 = vpop.f32.mrf.mxu0
        %v5296 = vadd.f32 0.0, %v5295
        %v5297 = vpop.f32.mrf.mxu0
        %v5298 = vpop.f32.mrf.mxu0
        %v5299 = vadd.f32 0.0, %v5298
        %v5300 = vpop.f32.mrf.mxu0
        %5301 = vmatprep.mubr.bf16.mxu0 0
        %5302 = vmatmul.mubr.bf16.gmra.mxu0 %v5197
        %v5303 = vpop.f32.mrf.mxu0
        %v5304 = vadd.f32 0.0, %v5303
        %v5305 = vpop.f32.mrf.mxu0
        %v5306 = vpop.f32.mrf.mxu0
        %v5307 = vadd.f32 0.0, %v5306
        %v5308 = vpop.f32.mrf.mxu0
        %5309 = vmatprep.mubr.bf16.mxu0 0
        %5310 = vmatmul.mubr.bf16.gmra.mxu0 %v5200
        %v5311 = vpop.f32.mrf.mxu0
        %v5312 = vadd.f32 0.0, %v5311
        %v5313 = vpop.f32.mrf.mxu0
        %v5314 = vpop.f32.mrf.mxu0
        %v5315 = vadd.f32 0.0, %v5314
        %v5316 = vpop.f32.mrf.mxu0
        %5317 = vmatprep.mubr.bf16.mxu0 0
        %5318 = vmatmul.mubr.bf16.gmra.mxu0 %v5203
        %v5319 = vpop.f32.mrf.mxu0
        %v5320 = vadd.f32 0.0, %v5319
        %v5321 = vpop.f32.mrf.mxu0
        %v5322 = vpop.f32.mrf.mxu0
        %v5323 = vadd.f32 0.0, %v5322
        %v5324 = vpop.f32.mrf.mxu0
        %5325 = vmatprep.mubr.bf16.mxu0 0
        %5326 = vmatmul.mubr.bf16.gmra.mxu0 %v5206
        %v5327 = vpop.f32.mrf.mxu0
        %v5328 = vadd.f32 0.0, %v5327
        %v5329 = vpop.f32.mrf.mxu0
        %v5330 = vpop.f32.mrf.mxu0
        %v5331 = vadd.f32 0.0, %v5330
        %v5332 = vpop.f32.mrf.mxu0
        %5333 = vmatprep.mubr.bf16.mxu0 0
        %5334 = vmatmul.mubr.bf16.gmra.mxu0 %v5209
        %v5335 = vpop.f32.mrf.mxu0
        %v5336 = vadd.f32 0.0, %v5335
        %v5337 = vpop.f32.mrf.mxu0
        %v5338 = vpop.f32.mrf.mxu0
        %v5339 = vadd.f32 0.0, %v5338
        %v5340 = vpop.f32.mrf.mxu0
        %5341 = vmatprep.mubr.bf16.mxu0 0
        %5342 = vmatmul.mubr.bf16.gmra.mxu0 %v5212
        %v5343 = vpop.f32.mrf.mxu0
        %v5344 = vadd.f32 0.0, %v5343
        %v5345 = vpop.f32.mrf.mxu0
        %v5346 = vpop.f32.mrf.mxu0
        %v5347 = vadd.f32 0.0, %v5346
        %v5348 = vpop.f32.mrf.mxu0
        %5349 = vmatprep.mubr.bf16.mxu0 0
        %5350 = vmatmul.mubr.bf16.gmra.mxu0 %v5215
        %v5351 = vpop.f32.mrf.mxu0
        %v5352 = vadd.f32 0.0, %v5351
        %v5353 = vpop.f32.mrf.mxu0
        %v5354 = vpop.f32.mrf.mxu0
        %v5355 = vadd.f32 0.0, %v5354
        %v5356 = vpop.f32.mrf.mxu0
        %5357 = vmatprep.mubr.bf16.mxu0 0
        %5358 = vmatmul.mubr.bf16.gmra.mxu0 %v5218
        %v5359 = vpop.f32.mrf.mxu0
        %v5360 = vadd.f32 0.0, %v5359
        %v5361 = vpop.f32.mrf.mxu0
        %v5362 = vpop.f32.mrf.mxu0
        %v5363 = vadd.f32 0.0, %v5362
        %v5364 = vpop.f32.mrf.mxu0
        %5365 = vmatprep.mubr.bf16.mxu0 0
        %5366 = vmatmul.mubr.bf16.gmra.mxu0 %v5221
        %v5367 = vpop.f32.mrf.mxu0
        %v5368 = vadd.f32 0.0, %v5367
        %v5369 = vpop.f32.mrf.mxu0
        %v5370 = vpop.f32.mrf.mxu0
        %v5371 = vadd.f32 0.0, %v5370
        %v5372 = vpop.f32.mrf.mxu0
        %5373 = vmatprep.mubr.bf16.mxu0 0
        %5374 = vmatmul.mubr.bf16.gmra.mxu0 %v5224
        %v5375 = vpop.f32.mrf.mxu0
        %v5376 = vadd.f32 0.0, %v5375
        %v5377 = vpop.f32.mrf.mxu0
        %v5378 = vpop.f32.mrf.mxu0
        %v5379 = vadd.f32 0.0, %v5378
        %v5380 = vpop.f32.mrf.mxu0
        %5381 = vmatprep.mubr.bf16.mxu0 0
        %5382 = vmatmul.mubr.bf16.gmra.mxu0 %v5227
        %v5383 = vpop.f32.mrf.mxu0
        %v5384 = vadd.f32 0.0, %v5383
        %v5385 = vpop.f32.mrf.mxu0
        %v5386 = vpop.f32.mrf.mxu0
        %v5387 = vadd.f32 0.0, %v5386
        %v5388 = vpop.f32.mrf.mxu0
        %5389 = vdwg.mxu0
        %v5390 = vadd.f32 %v4720, %v5264
        %v5391 = vadd.f32 %v4721, %v5267
        %v5392 = vadd.f32 %v4722, %v5272
        %v5393 = vadd.f32 %v4723, %v5275
        %v5394 = vadd.f32 %v4724, %v5280
        %v5395 = vadd.f32 %v4725, %v5283
        %v5396 = vadd.f32 %v4726, %v5288
        %v5397 = vadd.f32 %v4727, %v5291
        %v5398 = vadd.f32 %v4728, %v5296
        %v5399 = vadd.f32 %v4729, %v5299
        %v5400 = vadd.f32 %v4730, %v5304
        %v5401 = vadd.f32 %v4731, %v5307
        %v5402 = vadd.f32 %v4732, %v5312
        %v5403 = vadd.f32 %v4733, %v5315
        %v5404 = vadd.f32 %v4734, %v5320
        %v5405 = vadd.f32 %v4735, %v5323
        %v5406 = vadd.f32 %v4736, %v5328
        %v5407 = vadd.f32 %v4737, %v5331
        %v5408 = vadd.f32 %v4738, %v5336
        %v5409 = vadd.f32 %v4739, %v5339
        %v5410 = vadd.f32 %v4740, %v5344
        %v5411 = vadd.f32 %v4741, %v5347
        %v5412 = vadd.f32 %v4742, %v5352
        %v5413 = vadd.f32 %v4743, %v5355
        %v5414 = vadd.f32 %v4744, %v5360
        %v5415 = vadd.f32 %v4745, %v5363
        %v5416 = vadd.f32 %v4746, %v5368
        %v5417 = vadd.f32 %v4747, %v5371
        %v5418 = vadd.f32 %v4748, %v5376
        %v5419 = vadd.f32 %v4749, %v5379
        %v5420 = vadd.f32 %v4750, %v5384
        %v5421 = vadd.f32 %v4751, %v5387
        %s5422 = scalar_lea.vmem %s3, 112
        %v5423 = vld [vmem:[%s5422] sm:$0xf]
        %v5424 = vld [vmem:[%s5422 + $0x4] sm:$0xf]
        %v5425 = vld [vmem:[%s5422 + $0x8] sm:$0xf]
        %v5426 = vld [vmem:[%s5422 + $0xc] sm:$0xf]
        %v5459 = vunpack.c.l.b16 %v4757
        %v5460 = vunpack.c.l.b16 %v4758
        %v5461 = vunpack.c.l.b16 %v4759
        %v5462 = vunpack.c.l.b16 %v4760
        %v5463 = vunpack.c.l.b16 %v4762
        %v5464 = vunpack.c.l.b16 %v4763
        %v5465 = vunpack.c.l.b16 %v4764
        %v5466 = vunpack.c.l.b16 %v4765
        %v5467 = vunpack.c.l.b16 %v4767
        %v5468 = vunpack.c.l.b16 %v4768
        %v5469 = vunpack.c.l.b16 %v4769
        %v5470 = vunpack.c.l.b16 %v4770
        %v5471 = vunpack.c.l.b16 %v4772
        %v5472 = vunpack.c.l.b16 %v4773
        %v5473 = vunpack.c.l.b16 %v4774
        %v5474 = vunpack.c.l.b16 %v4775
        %v5475 = vunpack.c.l.b16 %v4777
        %v5476 = vunpack.c.l.b16 %v4778
        %v5477 = vunpack.c.l.b16 %v4779
        %v5478 = vunpack.c.l.b16 %v4780
        %v5479 = vunpack.c.l.b16 %v4782
        %v5480 = vunpack.c.l.b16 %v4783
        %v5481 = vunpack.c.l.b16 %v4784
        %v5482 = vunpack.c.l.b16 %v4785
        %v5483 = vunpack.c.l.b16 %v4787
        %v5484 = vunpack.c.l.b16 %v4788
        %v5485 = vunpack.c.l.b16 %v4789
        %v5486 = vunpack.c.l.b16 %v4790
        %v5487 = vunpack.c.l.b16 %v4792
        %v5488 = vunpack.c.l.b16 %v4793
        %v5489 = vunpack.c.l.b16 %v4794
        %v5490 = vunpack.c.l.b16 %v4795
        %v5491 = vpack.c.b16 %v5460, %v5459
        %v5492 = vpack.c.b16 %v5462, %v5461
        %v5493 = vpack.c.b16 %v5464, %v5463
        %v5494 = vpack.c.b16 %v5466, %v5465
        %v5495 = vpack.c.b16 %v5468, %v5467
        %v5496 = vpack.c.b16 %v5470, %v5469
        %v5497 = vpack.c.b16 %v5472, %v5471
        %v5498 = vpack.c.b16 %v5474, %v5473
        %v5499 = vpack.c.b16 %v5476, %v5475
        %v5500 = vpack.c.b16 %v5478, %v5477
        %v5501 = vpack.c.b16 %v5480, %v5479
        %v5502 = vpack.c.b16 %v5482, %v5481
        %v5503 = vpack.c.b16 %v5484, %v5483
        %v5504 = vpack.c.b16 %v5486, %v5485
        %v5505 = vpack.c.b16 %v5488, %v5487
        %v5506 = vpack.c.b16 %v5490, %v5489
        %v5511 = vunpack.c.l.b16 %v5423
        %v5512 = vunpack.c.l.b16 %v5424
        %v5513 = vunpack.c.l.b16 %v5425
        %v5514 = vunpack.c.l.b16 %v5426
        %v5515 = vpack.c.b16 %v5512, %v5511
        %v5516 = vpack.c.b16 %v5514, %v5513
        %v5520 = vsel %vm1866, %v5491, 0
        %v5523 = vsel %vm1866, %v5492, 0
        %v5526 = vsel %vm1866, %v5493, 0
        %v5529 = vsel %vm1866, %v5494, 0
        %v5532 = vsel %vm1866, %v5495, 0
        %v5535 = vsel %vm1866, %v5496, 0
        %v5538 = vsel %vm1866, %v5497, 0
        %v5541 = vsel %vm1866, %v5498, 0
        %v5544 = vsel %vm1866, %v5499, 0
        %v5547 = vsel %vm1866, %v5500, 0
        %v5550 = vsel %vm1866, %v5501, 0
        %v5553 = vsel %vm1866, %v5502, 0
        %v5556 = vsel %vm1866, %v5503, 0
        %v5559 = vsel %vm1866, %v5504, 0
        %v5562 = vsel %vm1866, %v5505, 0
        %v5565 = vsel %vm1866, %v5506, 0
        %5567 = vmatprep.subr.bf16.mxu0 0
        %5568 = vmatpush1.bf16.msra.mxu0 0
        %5569 = vmatprep.subr.bf16.mxu0 0
        %5570 = vmatpush1.bf16.msra.mxu0 0
        %5571 = vmatprep.subr.bf16.mxu0 0
        %5572 = vmatpush1.bf16.msra.mxu0 0
        %5573 = vmatprep.subr.bf16.mxu0 0
        %5574 = vmatpush1.bf16.msra.mxu0 0
        %5575 = vmatprep.subr.bf16.mxu0 0
        %5576 = vmatpush1.bf16.msra.mxu0 0
        %5577 = vmatprep.subr.bf16.mxu0 0
        %5578 = vmatpush1.bf16.msra.mxu0 0
        %5579 = vmatprep.subr.bf16.mxu0 0
        %5580 = vmatpush1.bf16.msra.mxu0 %v5516
        %5581 = vmatprep.subr.bf16.mxu0 0
        %5582 = vmatpush1.bf16.msra.mxu0 %v5515
        %5583 = vmatprep.subr.bf16.mxu0 0
        %5584 = vmatpush2.bf16.msra.mxu0 0
        %5585 = vmatprep.subr.bf16.mxu0 0
        %5586 = vmatpush2.bf16.msra.mxu0 0
        %5587 = vmatprep.subr.bf16.mxu0 0
        %5588 = vmatpush2.bf16.msra.mxu0 0
        %5589 = vmatprep.subr.bf16.mxu0 0
        %5590 = vmatpush2.bf16.msra.mxu0 0
        %5591 = vmatprep.subr.bf16.mxu0 0
        %5592 = vmatpush2.bf16.msra.mxu0 0
        %5593 = vmatprep.subr.bf16.mxu0 0
        %5594 = vmatpush2.bf16.msra.mxu0 0
        %5595 = vmatprep.subr.bf16.mxu0 0
        %5596 = vmatpush2.bf16.msra.mxu0 0
        %5597 = vmatprep.subr.bf16.mxu0 0
        %5598 = vmatpush2.bf16.msra.mxu0 0
        %5599 = vmatprep.mubr.bf16.mxu0 0
        %5600 = vmatmul.mubr.bf16.gmra.mxu0 %v5520
        %v5601 = vpop.f32.mrf.mxu0
        %v5602 = vadd.f32 0.0, %v5601
        %v5603 = vpop.f32.mrf.mxu0
        %v5604 = vpop.f32.mrf.mxu0
        %v5605 = vadd.f32 0.0, %v5604
        %v5606 = vpop.f32.mrf.mxu0
        %5607 = vmatprep.mubr.bf16.mxu0 0
        %5608 = vmatmul.mubr.bf16.gmra.mxu0 %v5523
        %v5609 = vpop.f32.mrf.mxu0
        %v5610 = vadd.f32 0.0, %v5609
        %v5611 = vpop.f32.mrf.mxu0
        %v5612 = vpop.f32.mrf.mxu0
        %v5613 = vadd.f32 0.0, %v5612
        %v5614 = vpop.f32.mrf.mxu0
        %5615 = vmatprep.mubr.bf16.mxu0 0
        %5616 = vmatmul.mubr.bf16.gmra.mxu0 %v5526
        %v5617 = vpop.f32.mrf.mxu0
        %v5618 = vadd.f32 0.0, %v5617
        %v5619 = vpop.f32.mrf.mxu0
        %v5620 = vpop.f32.mrf.mxu0
        %v5621 = vadd.f32 0.0, %v5620
        %v5622 = vpop.f32.mrf.mxu0
        %5623 = vmatprep.mubr.bf16.mxu0 0
        %5624 = vmatmul.mubr.bf16.gmra.mxu0 %v5529
        %v5625 = vpop.f32.mrf.mxu0
        %v5626 = vadd.f32 0.0, %v5625
        %v5627 = vpop.f32.mrf.mxu0
        %v5628 = vpop.f32.mrf.mxu0
        %v5629 = vadd.f32 0.0, %v5628
        %v5630 = vpop.f32.mrf.mxu0
        %5631 = vmatprep.mubr.bf16.mxu0 0
        %5632 = vmatmul.mubr.bf16.gmra.mxu0 %v5532
        %v5633 = vpop.f32.mrf.mxu0
        %v5634 = vadd.f32 0.0, %v5633
        %v5635 = vpop.f32.mrf.mxu0
        %v5636 = vpop.f32.mrf.mxu0
        %v5637 = vadd.f32 0.0, %v5636
        %v5638 = vpop.f32.mrf.mxu0
        %5639 = vmatprep.mubr.bf16.mxu0 0
        %5640 = vmatmul.mubr.bf16.gmra.mxu0 %v5535
        %v5641 = vpop.f32.mrf.mxu0
        %v5642 = vadd.f32 0.0, %v5641
        %v5643 = vpop.f32.mrf.mxu0
        %v5644 = vpop.f32.mrf.mxu0
        %v5645 = vadd.f32 0.0, %v5644
        %v5646 = vpop.f32.mrf.mxu0
        %5647 = vmatprep.mubr.bf16.mxu0 0
        %5648 = vmatmul.mubr.bf16.gmra.mxu0 %v5538
        %v5649 = vpop.f32.mrf.mxu0
        %v5650 = vadd.f32 0.0, %v5649
        %v5651 = vpop.f32.mrf.mxu0
        %v5652 = vpop.f32.mrf.mxu0
        %v5653 = vadd.f32 0.0, %v5652
        %v5654 = vpop.f32.mrf.mxu0
        %5655 = vmatprep.mubr.bf16.mxu0 0
        %5656 = vmatmul.mubr.bf16.gmra.mxu0 %v5541
        %v5657 = vpop.f32.mrf.mxu0
        %v5658 = vadd.f32 0.0, %v5657
        %v5659 = vpop.f32.mrf.mxu0
        %v5660 = vpop.f32.mrf.mxu0
        %v5661 = vadd.f32 0.0, %v5660
        %v5662 = vpop.f32.mrf.mxu0
        %5663 = vmatprep.mubr.bf16.mxu0 0
        %5664 = vmatmul.mubr.bf16.gmra.mxu0 %v5544
        %v5665 = vpop.f32.mrf.mxu0
        %v5666 = vadd.f32 0.0, %v5665
        %v5667 = vpop.f32.mrf.mxu0
        %v5668 = vpop.f32.mrf.mxu0
        %v5669 = vadd.f32 0.0, %v5668
        %v5670 = vpop.f32.mrf.mxu0
        %5671 = vmatprep.mubr.bf16.mxu0 0
        %5672 = vmatmul.mubr.bf16.gmra.mxu0 %v5547
        %v5673 = vpop.f32.mrf.mxu0
        %v5674 = vadd.f32 0.0, %v5673
        %v5675 = vpop.f32.mrf.mxu0
        %v5676 = vpop.f32.mrf.mxu0
        %v5677 = vadd.f32 0.0, %v5676
        %v5678 = vpop.f32.mrf.mxu0
        %5679 = vmatprep.mubr.bf16.mxu0 0
        %5680 = vmatmul.mubr.bf16.gmra.mxu0 %v5550
        %v5681 = vpop.f32.mrf.mxu0
        %v5682 = vadd.f32 0.0, %v5681
        %v5683 = vpop.f32.mrf.mxu0
        %v5684 = vpop.f32.mrf.mxu0
        %v5685 = vadd.f32 0.0, %v5684
        %v5686 = vpop.f32.mrf.mxu0
        %5687 = vmatprep.mubr.bf16.mxu0 0
        %5688 = vmatmul.mubr.bf16.gmra.mxu0 %v5553
        %v5689 = vpop.f32.mrf.mxu0
        %v5690 = vadd.f32 0.0, %v5689
        %v5691 = vpop.f32.mrf.mxu0
        %v5692 = vpop.f32.mrf.mxu0
        %v5693 = vadd.f32 0.0, %v5692
        %v5694 = vpop.f32.mrf.mxu0
        %5695 = vmatprep.mubr.bf16.mxu0 0
        %5696 = vmatmul.mubr.bf16.gmra.mxu0 %v5556
        %v5697 = vpop.f32.mrf.mxu0
        %v5698 = vadd.f32 0.0, %v5697
        %v5699 = vpop.f32.mrf.mxu0
        %v5700 = vpop.f32.mrf.mxu0
        %v5701 = vadd.f32 0.0, %v5700
        %v5702 = vpop.f32.mrf.mxu0
        %5703 = vmatprep.mubr.bf16.mxu0 0
        %5704 = vmatmul.mubr.bf16.gmra.mxu0 %v5559
        %v5705 = vpop.f32.mrf.mxu0
        %v5706 = vadd.f32 0.0, %v5705
        %v5707 = vpop.f32.mrf.mxu0
        %v5708 = vpop.f32.mrf.mxu0
        %v5709 = vadd.f32 0.0, %v5708
        %v5710 = vpop.f32.mrf.mxu0
        %5711 = vmatprep.mubr.bf16.mxu0 0
        %5712 = vmatmul.mubr.bf16.gmra.mxu0 %v5562
        %v5713 = vpop.f32.mrf.mxu0
        %v5714 = vadd.f32 0.0, %v5713
        %v5715 = vpop.f32.mrf.mxu0
        %v5716 = vpop.f32.mrf.mxu0
        %v5717 = vadd.f32 0.0, %v5716
        %v5718 = vpop.f32.mrf.mxu0
        %5719 = vmatprep.mubr.bf16.mxu0 0
        %5720 = vmatmul.mubr.bf16.gmra.mxu0 %v5565
        %v5721 = vpop.f32.mrf.mxu0
        %v5722 = vadd.f32 0.0, %v5721
        %v5723 = vpop.f32.mrf.mxu0
        %v5724 = vpop.f32.mrf.mxu0
        %v5725 = vadd.f32 0.0, %v5724
        %v5726 = vpop.f32.mrf.mxu0
        %5727 = vdwg.mxu0
        %v5728 = vadd.f32 %v5390, %v5602
        %v5729 = vadd.f32 %v5391, %v5605
        %v5730 = vadd.f32 %v5392, %v5610
        %v5731 = vadd.f32 %v5393, %v5613
        %v5732 = vadd.f32 %v5394, %v5618
        %v5733 = vadd.f32 %v5395, %v5621
        %v5734 = vadd.f32 %v5396, %v5626
        %v5735 = vadd.f32 %v5397, %v5629
        %v5736 = vadd.f32 %v5398, %v5634
        %v5737 = vadd.f32 %v5399, %v5637
        %v5738 = vadd.f32 %v5400, %v5642
        %v5739 = vadd.f32 %v5401, %v5645
        %v5740 = vadd.f32 %v5402, %v5650
        %v5741 = vadd.f32 %v5403, %v5653
        %v5742 = vadd.f32 %v5404, %v5658
        %v5743 = vadd.f32 %v5405, %v5661
        %v5744 = vadd.f32 %v5406, %v5666
        %v5745 = vadd.f32 %v5407, %v5669
        %v5746 = vadd.f32 %v5408, %v5674
        %v5747 = vadd.f32 %v5409, %v5677
        %v5748 = vadd.f32 %v5410, %v5682
        %v5749 = vadd.f32 %v5411, %v5685
        %v5750 = vadd.f32 %v5412, %v5690
        %v5751 = vadd.f32 %v5413, %v5693
        %v5752 = vadd.f32 %v5414, %v5698
        %v5753 = vadd.f32 %v5415, %v5701
        %v5754 = vadd.f32 %v5416, %v5706
        %v5755 = vadd.f32 %v5417, %v5709
        %v5756 = vadd.f32 %v5418, %v5714
        %v5757 = vadd.f32 %v5419, %v5717
        %v5758 = vadd.f32 %v5420, %v5722
        %v5759 = vadd.f32 %v5421, %v5725
        %v5760 = vld [vmem:[%s4755 + $0x4] sm:$0xf]
        %v5761 = vld [vmem:[%s4755 + $0x8] sm:$0xf]
        %v5762 = vld [vmem:[%s4755 + $0xc] sm:$0xf]
        %v5763 = vld [vmem:[%s4755 + $0x10] sm:$0xf]
        %v5764 = vld [vmem:[%s4755 + $0x14] sm:$0x1]
        %v5765 = vld [vmem:[%s4755 + $0x1c] sm:$0xf]
        %v5766 = vld [vmem:[%s4755 + $0x20] sm:$0xf]
        %v5767 = vld [vmem:[%s4755 + $0x24] sm:$0xf]
        %v5768 = vld [vmem:[%s4755 + $0x28] sm:$0xf]
        %v5769 = vld [vmem:[%s4755 + $0x2c] sm:$0x1]
        %v5770 = vld [vmem:[%s4755 + $0x34] sm:$0xf]
        %v5771 = vld [vmem:[%s4755 + $0x38] sm:$0xf]
        %v5772 = vld [vmem:[%s4755 + $0x3c] sm:$0xf]
        %v5773 = vld [vmem:[%s4755 + $0x40] sm:$0xf]
        %v5774 = vld [vmem:[%s4755 + $0x44] sm:$0x1]
        %v5775 = vld [vmem:[%s4755 + $0x4c] sm:$0xf]
        %v5776 = vld [vmem:[%s4755 + $0x50] sm:$0xf]
        %v5777 = vld [vmem:[%s4755 + $0x54] sm:$0xf]
        %v5778 = vld [vmem:[%s4755 + $0x58] sm:$0xf]
        %v5779 = vld [vmem:[%s4755 + $0x5c] sm:$0x1]
        %v5780 = vld [vmem:[%s4755 + $0x64] sm:$0xf]
        %v5781 = vld [vmem:[%s4755 + $0x68] sm:$0xf]
        %v5782 = vld [vmem:[%s4755 + $0x6c] sm:$0xf]
        %v5783 = vld [vmem:[%s4755 + $0x70] sm:$0xf]
        %v5784 = vld [vmem:[%s4755 + $0x74] sm:$0x1]
        %v5785 = vld [vmem:[%s4755 + $0x7c] sm:$0xf]
        %v5786 = vld [vmem:[%s4755 + $0x80] sm:$0xf]
        %v5787 = vld [vmem:[%s4755 + $0x84] sm:$0xf]
        %v5788 = vld [vmem:[%s4755 + $0x88] sm:$0xf]
        %v5789 = vld [vmem:[%s4755 + $0x8c] sm:$0x1]
        %v5790 = vld [vmem:[%s4755 + $0x94] sm:$0xf]
        %v5791 = vld [vmem:[%s4755 + $0x98] sm:$0xf]
        %v5792 = vld [vmem:[%s4755 + $0x9c] sm:$0xf]
        %v5793 = vld [vmem:[%s4755 + $0xa0] sm:$0xf]
        %v5794 = vld [vmem:[%s4755 + $0xa4] sm:$0x1]
        %v5795 = vld [vmem:[%s4755 + $0xac] sm:$0xf]
        %v5796 = vld [vmem:[%s4755 + $0xb0] sm:$0xf]
        %v5797 = vld [vmem:[%s4755 + $0xb4] sm:$0xf]
        %v5798 = vld [vmem:[%s4755 + $0xb8] sm:$0xf]
        %v5799 = vld [vmem:[%s4755 + $0xbc] sm:$0x1]
        %v5801 = vshrl.u32 %v5760, 16
        %v5803 = vrot.slane %v5801, 4
        %v5804 = vshll.u32 %v5760, 16
        %v5806 = vrot.slane %v5804, 5
        %v5807 = vor.u32 %v5803, %v5806
        %v5808 = vrot.slane %v5807, 4
        %v5810 = vshll.u32 %v5761, 16
        %v5812 = vrot.slane %v5810, 5
        %v5813 = vsel %vm2387, %v5808, %v5812
        %v5814 = vshrl.u32 %v5761, 16
        %v5816 = vrot.slane %v5814, 4
        %v5817 = vor.u32 %v5816, %v5812
        %v5818 = vrot.slane %v5817, 4
        %v5820 = vshll.u32 %v5762, 16
        %v5822 = vrot.slane %v5820, 5
        %v5823 = vsel %vm2387, %v5818, %v5822
        %v5824 = vshrl.u32 %v5762, 16
        %v5826 = vrot.slane %v5824, 4
        %v5827 = vor.u32 %v5826, %v5822
        %v5828 = vrot.slane %v5827, 4
        %v5830 = vshll.u32 %v5763, 16
        %v5832 = vrot.slane %v5830, 5
        %v5833 = vsel %vm2387, %v5828, %v5832
        %v5834 = vshrl.u32 %v5763, 16
        %v5836 = vrot.slane %v5834, 4
        %v5837 = vor.u32 %v5836, %v5832
        %v5838 = vrot.slane %v5837, 4
        %v5840 = vshll.u32 %v5764, 16
        %v5842 = vrot.slane %v5840, 5
        %v5843 = vsel %vm2387, %v5838, %v5842
        %v5845 = vshrl.u32 %v5765, 16
        %v5847 = vrot.slane %v5845, 4
        %v5848 = vshll.u32 %v5765, 16
        %v5850 = vrot.slane %v5848, 5
        %v5851 = vor.u32 %v5847, %v5850
        %v5852 = vrot.slane %v5851, 4
        %v5854 = vshll.u32 %v5766, 16
        %v5856 = vrot.slane %v5854, 5
        %v5857 = vsel %vm2387, %v5852, %v5856
        %v5858 = vshrl.u32 %v5766, 16
        %v5860 = vrot.slane %v5858, 4
        %v5861 = vor.u32 %v5860, %v5856
        %v5862 = vrot.slane %v5861, 4
        %v5864 = vshll.u32 %v5767, 16
        %v5866 = vrot.slane %v5864, 5
        %v5867 = vsel %vm2387, %v5862, %v5866
        %v5868 = vshrl.u32 %v5767, 16
        %v5870 = vrot.slane %v5868, 4
        %v5871 = vor.u32 %v5870, %v5866
        %v5872 = vrot.slane %v5871, 4
        %v5874 = vshll.u32 %v5768, 16
        %v5876 = vrot.slane %v5874, 5
        %v5877 = vsel %vm2387, %v5872, %v5876
        %v5878 = vshrl.u32 %v5768, 16
        %v5880 = vrot.slane %v5878, 4
        %v5881 = vor.u32 %v5880, %v5876
        %v5882 = vrot.slane %v5881, 4
        %v5884 = vshll.u32 %v5769, 16
        %v5886 = vrot.slane %v5884, 5
        %v5887 = vsel %vm2387, %v5882, %v5886
        %v5889 = vshrl.u32 %v5770, 16
        %v5891 = vrot.slane %v5889, 4
        %v5892 = vshll.u32 %v5770, 16
        %v5894 = vrot.slane %v5892, 5
        %v5895 = vor.u32 %v5891, %v5894
        %v5896 = vrot.slane %v5895, 4
        %v5898 = vshll.u32 %v5771, 16
        %v5900 = vrot.slane %v5898, 5
        %v5901 = vsel %vm2387, %v5896, %v5900
        %v5902 = vshrl.u32 %v5771, 16
        %v5904 = vrot.slane %v5902, 4
        %v5905 = vor.u32 %v5904, %v5900
        %v5906 = vrot.slane %v5905, 4
        %v5908 = vshll.u32 %v5772, 16
        %v5910 = vrot.slane %v5908, 5
        %v5911 = vsel %vm2387, %v5906, %v5910
        %v5912 = vshrl.u32 %v5772, 16
        %v5914 = vrot.slane %v5912, 4
        %v5915 = vor.u32 %v5914, %v5910
        %v5916 = vrot.slane %v5915, 4
        %v5918 = vshll.u32 %v5773, 16
        %v5920 = vrot.slane %v5918, 5
        %v5921 = vsel %vm2387, %v5916, %v5920
        %v5922 = vshrl.u32 %v5773, 16
        %v5924 = vrot.slane %v5922, 4
        %v5925 = vor.u32 %v5924, %v5920
        %v5926 = vrot.slane %v5925, 4
        %v5928 = vshll.u32 %v5774, 16
        %v5930 = vrot.slane %v5928, 5
        %v5931 = vsel %vm2387, %v5926, %v5930
        %v5933 = vshrl.u32 %v5775, 16
        %v5935 = vrot.slane %v5933, 4
        %v5936 = vshll.u32 %v5775, 16
        %v5938 = vrot.slane %v5936, 5
        %v5939 = vor.u32 %v5935, %v5938
        %v5940 = vrot.slane %v5939, 4
        %v5942 = vshll.u32 %v5776, 16
        %v5944 = vrot.slane %v5942, 5
        %v5945 = vsel %vm2387, %v5940, %v5944
        %v5946 = vshrl.u32 %v5776, 16
        %v5948 = vrot.slane %v5946, 4
        %v5949 = vor.u32 %v5948, %v5944
        %v5950 = vrot.slane %v5949, 4
        %v5952 = vshll.u32 %v5777, 16
        %v5954 = vrot.slane %v5952, 5
        %v5955 = vsel %vm2387, %v5950, %v5954
        %v5956 = vshrl.u32 %v5777, 16
        %v5958 = vrot.slane %v5956, 4
        %v5959 = vor.u32 %v5958, %v5954
        %v5960 = vrot.slane %v5959, 4
        %v5962 = vshll.u32 %v5778, 16
        %v5964 = vrot.slane %v5962, 5
        %v5965 = vsel %vm2387, %v5960, %v5964
        %v5966 = vshrl.u32 %v5778, 16
        %v5968 = vrot.slane %v5966, 4
        %v5969 = vor.u32 %v5968, %v5964
        %v5970 = vrot.slane %v5969, 4
        %v5972 = vshll.u32 %v5779, 16
        %v5974 = vrot.slane %v5972, 5
        %v5975 = vsel %vm2387, %v5970, %v5974
        %v5977 = vshrl.u32 %v5780, 16
        %v5979 = vrot.slane %v5977, 4
        %v5980 = vshll.u32 %v5780, 16
        %v5982 = vrot.slane %v5980, 5
        %v5983 = vor.u32 %v5979, %v5982
        %v5984 = vrot.slane %v5983, 4
        %v5986 = vshll.u32 %v5781, 16
        %v5988 = vrot.slane %v5986, 5
        %v5989 = vsel %vm2387, %v5984, %v5988
        %v5990 = vshrl.u32 %v5781, 16
        %v5992 = vrot.slane %v5990, 4
        %v5993 = vor.u32 %v5992, %v5988
        %v5994 = vrot.slane %v5993, 4
        %v5996 = vshll.u32 %v5782, 16
        %v5998 = vrot.slane %v5996, 5
        %v5999 = vsel %vm2387, %v5994, %v5998
        %v6000 = vshrl.u32 %v5782, 16
        %v6002 = vrot.slane %v6000, 4
        %v6003 = vor.u32 %v6002, %v5998
        %v6004 = vrot.slane %v6003, 4
        %v6006 = vshll.u32 %v5783, 16
        %v6008 = vrot.slane %v6006, 5
        %v6009 = vsel %vm2387, %v6004, %v6008
        %v6010 = vshrl.u32 %v5783, 16
        %v6012 = vrot.slane %v6010, 4
        %v6013 = vor.u32 %v6012, %v6008
        %v6014 = vrot.slane %v6013, 4
        %v6016 = vshll.u32 %v5784, 16
        %v6018 = vrot.slane %v6016, 5
        %v6019 = vsel %vm2387, %v6014, %v6018
        %v6021 = vshrl.u32 %v5785, 16
        %v6023 = vrot.slane %v6021, 4
        %v6024 = vshll.u32 %v5785, 16
        %v6026 = vrot.slane %v6024, 5
        %v6027 = vor.u32 %v6023, %v6026
        %v6028 = vrot.slane %v6027, 4
        %v6030 = vshll.u32 %v5786, 16
        %v6032 = vrot.slane %v6030, 5
        %v6033 = vsel %vm2387, %v6028, %v6032
        %v6034 = vshrl.u32 %v5786, 16
        %v6036 = vrot.slane %v6034, 4
        %v6037 = vor.u32 %v6036, %v6032
        %v6038 = vrot.slane %v6037, 4
        %v6040 = vshll.u32 %v5787, 16
        %v6042 = vrot.slane %v6040, 5
        %v6043 = vsel %vm2387, %v6038, %v6042
        %v6044 = vshrl.u32 %v5787, 16
        %v6046 = vrot.slane %v6044, 4
        %v6047 = vor.u32 %v6046, %v6042
        %v6048 = vrot.slane %v6047, 4
        %v6050 = vshll.u32 %v5788, 16
        %v6052 = vrot.slane %v6050, 5
        %v6053 = vsel %vm2387, %v6048, %v6052
        %v6054 = vshrl.u32 %v5788, 16
        %v6056 = vrot.slane %v6054, 4
        %v6057 = vor.u32 %v6056, %v6052
        %v6058 = vrot.slane %v6057, 4
        %v6060 = vshll.u32 %v5789, 16
        %v6062 = vrot.slane %v6060, 5
        %v6063 = vsel %vm2387, %v6058, %v6062
        %v6065 = vshrl.u32 %v5790, 16
        %v6067 = vrot.slane %v6065, 4
        %v6068 = vshll.u32 %v5790, 16
        %v6070 = vrot.slane %v6068, 5
        %v6071 = vor.u32 %v6067, %v6070
        %v6072 = vrot.slane %v6071, 4
        %v6074 = vshll.u32 %v5791, 16
        %v6076 = vrot.slane %v6074, 5
        %v6077 = vsel %vm2387, %v6072, %v6076
        %v6078 = vshrl.u32 %v5791, 16
        %v6080 = vrot.slane %v6078, 4
        %v6081 = vor.u32 %v6080, %v6076
        %v6082 = vrot.slane %v6081, 4
        %v6084 = vshll.u32 %v5792, 16
        %v6086 = vrot.slane %v6084, 5
        %v6087 = vsel %vm2387, %v6082, %v6086
        %v6088 = vshrl.u32 %v5792, 16
        %v6090 = vrot.slane %v6088, 4
        %v6091 = vor.u32 %v6090, %v6086
        %v6092 = vrot.slane %v6091, 4
        %v6094 = vshll.u32 %v5793, 16
        %v6096 = vrot.slane %v6094, 5
        %v6097 = vsel %vm2387, %v6092, %v6096
        %v6098 = vshrl.u32 %v5793, 16
        %v6100 = vrot.slane %v6098, 4
        %v6101 = vor.u32 %v6100, %v6096
        %v6102 = vrot.slane %v6101, 4
        %v6104 = vshll.u32 %v5794, 16
        %v6106 = vrot.slane %v6104, 5
        %v6107 = vsel %vm2387, %v6102, %v6106
        %v6109 = vshrl.u32 %v5795, 16
        %v6111 = vrot.slane %v6109, 4
        %v6112 = vshll.u32 %v5795, 16
        %v6114 = vrot.slane %v6112, 5
        %v6115 = vor.u32 %v6111, %v6114
        %v6116 = vrot.slane %v6115, 4
        %v6118 = vshll.u32 %v5796, 16
        %v6120 = vrot.slane %v6118, 5
        %v6121 = vsel %vm2387, %v6116, %v6120
        %v6122 = vshrl.u32 %v5796, 16
        %v6124 = vrot.slane %v6122, 4
        %v6125 = vor.u32 %v6124, %v6120
        %v6126 = vrot.slane %v6125, 4
        %v6128 = vshll.u32 %v5797, 16
        %v6130 = vrot.slane %v6128, 5
        %v6131 = vsel %vm2387, %v6126, %v6130
        %v6132 = vshrl.u32 %v5797, 16
        %v6134 = vrot.slane %v6132, 4
        %v6135 = vor.u32 %v6134, %v6130
        %v6136 = vrot.slane %v6135, 4
        %v6138 = vshll.u32 %v5798, 16
        %v6140 = vrot.slane %v6138, 5
        %v6141 = vsel %vm2387, %v6136, %v6140
        %v6142 = vshrl.u32 %v5798, 16
        %v6144 = vrot.slane %v6142, 4
        %v6145 = vor.u32 %v6144, %v6140
        %v6146 = vrot.slane %v6145, 4
        %v6148 = vshll.u32 %v5799, 16
        %v6150 = vrot.slane %v6148, 5
        %v6151 = vsel %vm2387, %v6146, %v6150
        %s6152 = scalar_lea.vmem %s3, 128
        %v6153 = vld [vmem:[%s6152] sm:$0xf]
        %v6154 = vld [vmem:[%s6152 + $0x4] sm:$0xf]
        %v6155 = vld [vmem:[%s6152 + $0x8] sm:$0xf]
        %v6156 = vld [vmem:[%s6152 + $0xc] sm:$0xf]
        %v6157 = vunpack.c.l.b16 %v5813
        %v6158 = vunpack.c.l.b16 %v5823
        %v6159 = vunpack.c.l.b16 %v5833
        %v6160 = vunpack.c.l.b16 %v5843
        %v6161 = vunpack.c.l.b16 %v5857
        %v6162 = vunpack.c.l.b16 %v5867
        %v6163 = vunpack.c.l.b16 %v5877
        %v6164 = vunpack.c.l.b16 %v5887
        %v6165 = vunpack.c.l.b16 %v5901
        %v6166 = vunpack.c.l.b16 %v5911
        %v6167 = vunpack.c.l.b16 %v5921
        %v6168 = vunpack.c.l.b16 %v5931
        %v6169 = vunpack.c.l.b16 %v5945
        %v6170 = vunpack.c.l.b16 %v5955
        %v6171 = vunpack.c.l.b16 %v5965
        %v6172 = vunpack.c.l.b16 %v5975
        %v6173 = vunpack.c.l.b16 %v5989
        %v6174 = vunpack.c.l.b16 %v5999
        %v6175 = vunpack.c.l.b16 %v6009
        %v6176 = vunpack.c.l.b16 %v6019
        %v6177 = vunpack.c.l.b16 %v6033
        %v6178 = vunpack.c.l.b16 %v6043
        %v6179 = vunpack.c.l.b16 %v6053
        %v6180 = vunpack.c.l.b16 %v6063
        %v6181 = vunpack.c.l.b16 %v6077
        %v6182 = vunpack.c.l.b16 %v6087
        %v6183 = vunpack.c.l.b16 %v6097
        %v6184 = vunpack.c.l.b16 %v6107
        %v6185 = vunpack.c.l.b16 %v6121
        %v6186 = vunpack.c.l.b16 %v6131
        %v6187 = vunpack.c.l.b16 %v6141
        %v6188 = vunpack.c.l.b16 %v6151
        %v6189 = vpack.c.b16 %v6158, %v6157
        %v6190 = vpack.c.b16 %v6160, %v6159
        %v6191 = vpack.c.b16 %v6162, %v6161
        %v6192 = vpack.c.b16 %v6164, %v6163
        %v6193 = vpack.c.b16 %v6166, %v6165
        %v6194 = vpack.c.b16 %v6168, %v6167
        %v6195 = vpack.c.b16 %v6170, %v6169
        %v6196 = vpack.c.b16 %v6172, %v6171
        %v6197 = vpack.c.b16 %v6174, %v6173
        %v6198 = vpack.c.b16 %v6176, %v6175
        %v6199 = vpack.c.b16 %v6178, %v6177
        %v6200 = vpack.c.b16 %v6180, %v6179
        %v6201 = vpack.c.b16 %v6182, %v6181
        %v6202 = vpack.c.b16 %v6184, %v6183
        %v6203 = vpack.c.b16 %v6186, %v6185
        %v6204 = vpack.c.b16 %v6188, %v6187
        %v6209 = vunpack.c.l.b16 %v6153
        %v6210 = vunpack.c.l.b16 %v6154
        %v6211 = vunpack.c.l.b16 %v6155
        %v6212 = vunpack.c.l.b16 %v6156
        %v6213 = vpack.c.b16 %v6210, %v6209
        %v6214 = vpack.c.b16 %v6212, %v6211
        %v6218 = vsel %vm1866, %v6189, 0
        %v6221 = vsel %vm1866, %v6190, 0
        %v6224 = vsel %vm1866, %v6191, 0
        %v6227 = vsel %vm1866, %v6192, 0
        %v6230 = vsel %vm1866, %v6193, 0
        %v6233 = vsel %vm1866, %v6194, 0
        %v6236 = vsel %vm1866, %v6195, 0
        %v6239 = vsel %vm1866, %v6196, 0
        %v6242 = vsel %vm1866, %v6197, 0
        %v6245 = vsel %vm1866, %v6198, 0
        %v6248 = vsel %vm1866, %v6199, 0
        %v6251 = vsel %vm1866, %v6200, 0
        %v6254 = vsel %vm1866, %v6201, 0
        %v6257 = vsel %vm1866, %v6202, 0
        %v6260 = vsel %vm1866, %v6203, 0
        %v6263 = vsel %vm1866, %v6204, 0
        %6265 = vmatprep.subr.bf16.mxu0 0
        %6266 = vmatpush1.bf16.msra.mxu0 0
        %6267 = vmatprep.subr.bf16.mxu0 0
        %6268 = vmatpush1.bf16.msra.mxu0 0
        %6269 = vmatprep.subr.bf16.mxu0 0
        %6270 = vmatpush1.bf16.msra.mxu0 0
        %6271 = vmatprep.subr.bf16.mxu0 0
        %6272 = vmatpush1.bf16.msra.mxu0 0
        %6273 = vmatprep.subr.bf16.mxu0 0
        %6274 = vmatpush1.bf16.msra.mxu0 0
        %6275 = vmatprep.subr.bf16.mxu0 0
        %6276 = vmatpush1.bf16.msra.mxu0 0
        %6277 = vmatprep.subr.bf16.mxu0 0
        %6278 = vmatpush1.bf16.msra.mxu0 %v6214
        %6279 = vmatprep.subr.bf16.mxu0 0
        %6280 = vmatpush1.bf16.msra.mxu0 %v6213
        %6281 = vmatprep.subr.bf16.mxu0 0
        %6282 = vmatpush2.bf16.msra.mxu0 0
        %6283 = vmatprep.subr.bf16.mxu0 0
        %6284 = vmatpush2.bf16.msra.mxu0 0
        %6285 = vmatprep.subr.bf16.mxu0 0
        %6286 = vmatpush2.bf16.msra.mxu0 0
        %6287 = vmatprep.subr.bf16.mxu0 0
        %6288 = vmatpush2.bf16.msra.mxu0 0
        %6289 = vmatprep.subr.bf16.mxu0 0
        %6290 = vmatpush2.bf16.msra.mxu0 0
        %6291 = vmatprep.subr.bf16.mxu0 0
        %6292 = vmatpush2.bf16.msra.mxu0 0
        %6293 = vmatprep.subr.bf16.mxu0 0
        %6294 = vmatpush2.bf16.msra.mxu0 0
        %6295 = vmatprep.subr.bf16.mxu0 0
        %6296 = vmatpush2.bf16.msra.mxu0 0
        %6297 = vmatprep.mubr.bf16.mxu0 0
        %6298 = vmatmul.mubr.bf16.gmra.mxu0 %v6218
        %v6299 = vpop.f32.mrf.mxu0
        %v6300 = vadd.f32 0.0, %v6299
        %v6301 = vpop.f32.mrf.mxu0
        %v6302 = vpop.f32.mrf.mxu0
        %v6303 = vadd.f32 0.0, %v6302
        %v6304 = vpop.f32.mrf.mxu0
        %6305 = vmatprep.mubr.bf16.mxu0 0
        %6306 = vmatmul.mubr.bf16.gmra.mxu0 %v6221
        %v6307 = vpop.f32.mrf.mxu0
        %v6308 = vadd.f32 0.0, %v6307
        %v6309 = vpop.f32.mrf.mxu0
        %v6310 = vpop.f32.mrf.mxu0
        %v6311 = vadd.f32 0.0, %v6310
        %v6312 = vpop.f32.mrf.mxu0
        %6313 = vmatprep.mubr.bf16.mxu0 0
        %6314 = vmatmul.mubr.bf16.gmra.mxu0 %v6224
        %v6315 = vpop.f32.mrf.mxu0
        %v6316 = vadd.f32 0.0, %v6315
        %v6317 = vpop.f32.mrf.mxu0
        %v6318 = vpop.f32.mrf.mxu0
        %v6319 = vadd.f32 0.0, %v6318
        %v6320 = vpop.f32.mrf.mxu0
        %6321 = vmatprep.mubr.bf16.mxu0 0
        %6322 = vmatmul.mubr.bf16.gmra.mxu0 %v6227
        %v6323 = vpop.f32.mrf.mxu0
        %v6324 = vadd.f32 0.0, %v6323
        %v6325 = vpop.f32.mrf.mxu0
        %v6326 = vpop.f32.mrf.mxu0
        %v6327 = vadd.f32 0.0, %v6326
        %v6328 = vpop.f32.mrf.mxu0
        %6329 = vmatprep.mubr.bf16.mxu0 0
        %6330 = vmatmul.mubr.bf16.gmra.mxu0 %v6230
        %v6331 = vpop.f32.mrf.mxu0
        %v6332 = vadd.f32 0.0, %v6331
        %v6333 = vpop.f32.mrf.mxu0
        %v6334 = vpop.f32.mrf.mxu0
        %v6335 = vadd.f32 0.0, %v6334
        %v6336 = vpop.f32.mrf.mxu0
        %6337 = vmatprep.mubr.bf16.mxu0 0
        %6338 = vmatmul.mubr.bf16.gmra.mxu0 %v6233
        %v6339 = vpop.f32.mrf.mxu0
        %v6340 = vadd.f32 0.0, %v6339
        %v6341 = vpop.f32.mrf.mxu0
        %v6342 = vpop.f32.mrf.mxu0
        %v6343 = vadd.f32 0.0, %v6342
        %v6344 = vpop.f32.mrf.mxu0
        %6345 = vmatprep.mubr.bf16.mxu0 0
        %6346 = vmatmul.mubr.bf16.gmra.mxu0 %v6236
        %v6347 = vpop.f32.mrf.mxu0
        %v6348 = vadd.f32 0.0, %v6347
        %v6349 = vpop.f32.mrf.mxu0
        %v6350 = vpop.f32.mrf.mxu0
        %v6351 = vadd.f32 0.0, %v6350
        %v6352 = vpop.f32.mrf.mxu0
        %6353 = vmatprep.mubr.bf16.mxu0 0
        %6354 = vmatmul.mubr.bf16.gmra.mxu0 %v6239
        %v6355 = vpop.f32.mrf.mxu0
        %v6356 = vadd.f32 0.0, %v6355
        %v6357 = vpop.f32.mrf.mxu0
        %v6358 = vpop.f32.mrf.mxu0
        %v6359 = vadd.f32 0.0, %v6358
        %v6360 = vpop.f32.mrf.mxu0
        %6361 = vmatprep.mubr.bf16.mxu0 0
        %6362 = vmatmul.mubr.bf16.gmra.mxu0 %v6242
        %v6363 = vpop.f32.mrf.mxu0
        %v6364 = vadd.f32 0.0, %v6363
        %v6365 = vpop.f32.mrf.mxu0
        %v6366 = vpop.f32.mrf.mxu0
        %v6367 = vadd.f32 0.0, %v6366
        %v6368 = vpop.f32.mrf.mxu0
        %6369 = vmatprep.mubr.bf16.mxu0 0
        %6370 = vmatmul.mubr.bf16.gmra.mxu0 %v6245
        %v6371 = vpop.f32.mrf.mxu0
        %v6372 = vadd.f32 0.0, %v6371
        %v6373 = vpop.f32.mrf.mxu0
        %v6374 = vpop.f32.mrf.mxu0
        %v6375 = vadd.f32 0.0, %v6374
        %v6376 = vpop.f32.mrf.mxu0
        %6377 = vmatprep.mubr.bf16.mxu0 0
        %6378 = vmatmul.mubr.bf16.gmra.mxu0 %v6248
        %v6379 = vpop.f32.mrf.mxu0
        %v6380 = vadd.f32 0.0, %v6379
        %v6381 = vpop.f32.mrf.mxu0
        %v6382 = vpop.f32.mrf.mxu0
        %v6383 = vadd.f32 0.0, %v6382
        %v6384 = vpop.f32.mrf.mxu0
        %6385 = vmatprep.mubr.bf16.mxu0 0
        %6386 = vmatmul.mubr.bf16.gmra.mxu0 %v6251
        %v6387 = vpop.f32.mrf.mxu0
        %v6388 = vadd.f32 0.0, %v6387
        %v6389 = vpop.f32.mrf.mxu0
        %v6390 = vpop.f32.mrf.mxu0
        %v6391 = vadd.f32 0.0, %v6390
        %v6392 = vpop.f32.mrf.mxu0
        %6393 = vmatprep.mubr.bf16.mxu0 0
        %6394 = vmatmul.mubr.bf16.gmra.mxu0 %v6254
        %v6395 = vpop.f32.mrf.mxu0
        %v6396 = vadd.f32 0.0, %v6395
        %v6397 = vpop.f32.mrf.mxu0
        %v6398 = vpop.f32.mrf.mxu0
        %v6399 = vadd.f32 0.0, %v6398
        %v6400 = vpop.f32.mrf.mxu0
        %6401 = vmatprep.mubr.bf16.mxu0 0
        %6402 = vmatmul.mubr.bf16.gmra.mxu0 %v6257
        %v6403 = vpop.f32.mrf.mxu0
        %v6404 = vadd.f32 0.0, %v6403
        %v6405 = vpop.f32.mrf.mxu0
        %v6406 = vpop.f32.mrf.mxu0
        %v6407 = vadd.f32 0.0, %v6406
        %v6408 = vpop.f32.mrf.mxu0
        %6409 = vmatprep.mubr.bf16.mxu0 0
        %6410 = vmatmul.mubr.bf16.gmra.mxu0 %v6260
        %v6411 = vpop.f32.mrf.mxu0
        %v6412 = vadd.f32 0.0, %v6411
        %v6413 = vpop.f32.mrf.mxu0
        %v6414 = vpop.f32.mrf.mxu0
        %v6415 = vadd.f32 0.0, %v6414
        %v6416 = vpop.f32.mrf.mxu0
        %6417 = vmatprep.mubr.bf16.mxu0 0
        %6418 = vmatmul.mubr.bf16.gmra.mxu0 %v6263
        %v6419 = vpop.f32.mrf.mxu0
        %v6420 = vadd.f32 0.0, %v6419
        %v6421 = vpop.f32.mrf.mxu0
        %v6422 = vpop.f32.mrf.mxu0
        %v6423 = vadd.f32 0.0, %v6422
        %v6424 = vpop.f32.mrf.mxu0
        %6425 = vdwg.mxu0
        %v6426 = vadd.f32 %v5728, %v6300
        %v6427 = vadd.f32 %v5729, %v6303
        %v6428 = vadd.f32 %v5730, %v6308
        %v6429 = vadd.f32 %v5731, %v6311
        %v6430 = vadd.f32 %v5732, %v6316
        %v6431 = vadd.f32 %v5733, %v6319
        %v6432 = vadd.f32 %v5734, %v6324
        %v6433 = vadd.f32 %v5735, %v6327
        %v6434 = vadd.f32 %v5736, %v6332
        %v6435 = vadd.f32 %v5737, %v6335
        %v6436 = vadd.f32 %v5738, %v6340
        %v6437 = vadd.f32 %v5739, %v6343
        %v6438 = vadd.f32 %v5740, %v6348
        %v6439 = vadd.f32 %v5741, %v6351
        %v6440 = vadd.f32 %v5742, %v6356
        %v6441 = vadd.f32 %v5743, %v6359
        %v6442 = vadd.f32 %v5744, %v6364
        %v6443 = vadd.f32 %v5745, %v6367
        %v6444 = vadd.f32 %v5746, %v6372
        %v6445 = vadd.f32 %v5747, %v6375
        %v6446 = vadd.f32 %v5748, %v6380
        %v6447 = vadd.f32 %v5749, %v6383
        %v6448 = vadd.f32 %v5750, %v6388
        %v6449 = vadd.f32 %v5751, %v6391
        %v6450 = vadd.f32 %v5752, %v6396
        %v6451 = vadd.f32 %v5753, %v6399
        %v6452 = vadd.f32 %v5754, %v6404
        %v6453 = vadd.f32 %v5755, %v6407
        %v6454 = vadd.f32 %v5756, %v6412
        %v6455 = vadd.f32 %v5757, %v6415
        %v6456 = vadd.f32 %v5758, %v6420
        %v6457 = vadd.f32 %v5759, %v6423
        %v6459 = vlaneseq
        %v6460 = vshrl.u32 %v6459, 7
        %v6461 = vsub.s32 0, %v6460
        %v6462 = vrot.slane %v455, %v6461
        %v6464 = vadd.f32 %v6426, %v6462
        %v6465 = vadd.f32 %v6427, %v6462
        %v6466 = vadd.f32 %v6428, %v6462
        %v6467 = vadd.f32 %v6429, %v6462
        %v6468 = vadd.f32 %v6430, %v6462
        %v6469 = vadd.f32 %v6431, %v6462
        %v6470 = vadd.f32 %v6432, %v6462
        %v6471 = vadd.f32 %v6433, %v6462
        %v6472 = vadd.f32 %v6434, %v6462
        %v6473 = vadd.f32 %v6435, %v6462
        %v6474 = vadd.f32 %v6436, %v6462
        %v6475 = vadd.f32 %v6437, %v6462
        %v6476 = vadd.f32 %v6438, %v6462
        %v6477 = vadd.f32 %v6439, %v6462
        %v6478 = vadd.f32 %v6440, %v6462
        %v6479 = vadd.f32 %v6441, %v6462
        %v6480 = vadd.f32 %v6442, %v6462
        %v6481 = vadd.f32 %v6443, %v6462
        %v6482 = vadd.f32 %v6444, %v6462
        %v6483 = vadd.f32 %v6445, %v6462
        %v6484 = vadd.f32 %v6446, %v6462
        %v6485 = vadd.f32 %v6447, %v6462
        %v6486 = vadd.f32 %v6448, %v6462
        %v6487 = vadd.f32 %v6449, %v6462
        %v6488 = vadd.f32 %v6450, %v6462
        %v6489 = vadd.f32 %v6451, %v6462
        %v6490 = vadd.f32 %v6452, %v6462
        %v6491 = vadd.f32 %v6453, %v6462
        %v6492 = vadd.f32 %v6454, %v6462
        %v6493 = vadd.f32 %v6455, %v6462
        %v6494 = vadd.f32 %v6456, %v6462
        %v6495 = vadd.f32 %v6457, %v6462
        %v6496 = vmax.f32 %v6464, 0.0
        %v6497 = vmax.f32 %v6465, 0.0
        %v6498 = vmax.f32 %v6466, 0.0
        %v6499 = vmax.f32 %v6467, 0.0
        %v6500 = vmax.f32 %v6468, 0.0
        %v6501 = vmax.f32 %v6469, 0.0
        %v6502 = vmax.f32 %v6470, 0.0
        %v6503 = vmax.f32 %v6471, 0.0
        %v6504 = vmax.f32 %v6472, 0.0
        %v6505 = vmax.f32 %v6473, 0.0
        %v6506 = vmax.f32 %v6474, 0.0
        %v6507 = vmax.f32 %v6475, 0.0
        %v6508 = vmax.f32 %v6476, 0.0
        %v6509 = vmax.f32 %v6477, 0.0
        %v6510 = vmax.f32 %v6478, 0.0
        %v6511 = vmax.f32 %v6479, 0.0
        %v6512 = vmax.f32 %v6480, 0.0
        %v6513 = vmax.f32 %v6481, 0.0
        %v6514 = vmax.f32 %v6482, 0.0
        %v6515 = vmax.f32 %v6483, 0.0
        %v6516 = vmax.f32 %v6484, 0.0
        %v6517 = vmax.f32 %v6485, 0.0
        %v6518 = vmax.f32 %v6486, 0.0
        %v6519 = vmax.f32 %v6487, 0.0
        %v6520 = vmax.f32 %v6488, 0.0
        %v6521 = vmax.f32 %v6489, 0.0
        %v6522 = vmax.f32 %v6490, 0.0
        %v6523 = vmax.f32 %v6491, 0.0
        %v6524 = vmax.f32 %v6492, 0.0
        %v6525 = vmax.f32 %v6493, 0.0
        %v6526 = vmax.f32 %v6494, 0.0
        %v6527 = vmax.f32 %v6495, 0.0
        %v6528 = vmax.f32 %v6496, %v6500
        %v6529 = vmax.f32 %v6497, %v6501
        %v6530 = vmax.f32 %v6498, %v6502
        %v6531 = vmax.f32 %v6499, %v6503
        %v6532 = vmax.f32 %v6504, %v6508
        %v6533 = vmax.f32 %v6505, %v6509
        %v6534 = vmax.f32 %v6506, %v6510
        %v6535 = vmax.f32 %v6507, %v6511
        %v6536 = vmax.f32 %v6512, %v6516
        %v6537 = vmax.f32 %v6513, %v6517
        %v6538 = vmax.f32 %v6514, %v6518
        %v6539 = vmax.f32 %v6515, %v6519
        %v6540 = vmax.f32 %v6520, %v6524
        %v6541 = vmax.f32 %v6521, %v6525
        %v6542 = vmax.f32 %v6522, %v6526
        %v6543 = vmax.f32 %v6523, %v6527
        %vm6544 = vcmask 523264
        %6545 = vst.msk [vmem:[#allocation4] sm:$0xff] %vm6544, %v6528
        %6546 = vst.msk [vmem:[#allocation4 + $0x8] sm:$0xff] %vm6544, %v6529
        %6547 = vst.msk [vmem:[#allocation4 + $0x10] sm:$0xff] %vm6544, %v6530
        %6548 = vst.msk [vmem:[#allocation4 + $0x18] sm:$0xff] %vm6544, %v6531
        %6549 = vst.msk [vmem:[#allocation4 + $0x20] sm:$0xff] %vm6544, %v6532
        %6550 = vst.msk [vmem:[#allocation4 + $0x28] sm:$0xff] %vm6544, %v6533
        %6551 = vst.msk [vmem:[#allocation4 + $0x30] sm:$0xff] %vm6544, %v6534
        %6552 = vst.msk [vmem:[#allocation4 + $0x38] sm:$0xff] %vm6544, %v6535
        %6553 = vst.msk [vmem:[#allocation4 + $0x40] sm:$0xff] %vm6544, %v6536
        %6554 = vst.msk [vmem:[#allocation4 + $0x48] sm:$0xff] %vm6544, %v6537
        %6555 = vst.msk [vmem:[#allocation4 + $0x50] sm:$0xff] %vm6544, %v6538
        %6556 = vst.msk [vmem:[#allocation4 + $0x58] sm:$0xff] %vm6544, %v6539
        %6557 = vst.msk [vmem:[#allocation4 + $0x60] sm:$0xff] %vm6544, %v6540
        %6558 = vst.msk [vmem:[#allocation4 + $0x68] sm:$0xff] %vm6544, %v6541
        %6559 = vst.msk [vmem:[#allocation4 + $0x70] sm:$0xff] %vm6544, %v6542
        %6560 = vst.msk [vmem:[#allocation4 + $0x78] sm:$0xff] %vm6544, %v6543
        %v6561 = vld [vmem:[#allocation4] ss:$2 sm:$0xff]
        %s6562 = scalar_lea.vmem [#allocation4], 16
        %v6563 = vld [vmem:[%s6562] ss:$2 sm:$0xff]
        %s6564 = scalar_lea.vmem [#allocation4], 32
        %v6565 = vld [vmem:[%s6564] ss:$2 sm:$0xff]
        %s6566 = scalar_lea.vmem [#allocation4], 48
        %v6567 = vld [vmem:[%s6566] ss:$2 sm:$0xff]
        %s6568 = scalar_lea.vmem [#allocation4], 64
        %v6569 = vld [vmem:[%s6568] ss:$2 sm:$0xff]
        %s6570 = scalar_lea.vmem [#allocation4], 80
        %v6571 = vld [vmem:[%s6570] ss:$2 sm:$0xff]
        %s6572 = scalar_lea.vmem [#allocation4], 96
        %v6573 = vld [vmem:[%s6572] ss:$2 sm:$0xff]
        %s6574 = scalar_lea.vmem [#allocation4], 112
        %v6575 = vld [vmem:[%s6574] ss:$2 sm:$0xff]
        %s6576 = scalar_lea.vmem [#allocation4], 1
        %v6577 = vld [vmem:[%s6576] ss:$2 sm:$0xff]
        %s6578 = scalar_lea.vmem [#allocation4], 17
        %v6579 = vld [vmem:[%s6578] ss:$2 sm:$0xff]
        %s6580 = scalar_lea.vmem [#allocation4], 33
        %v6581 = vld [vmem:[%s6580] ss:$2 sm:$0xff]
        %s6582 = scalar_lea.vmem [#allocation4], 49
        %v6583 = vld [vmem:[%s6582] ss:$2 sm:$0xff]
        %s6584 = scalar_lea.vmem [#allocation4], 65
        %v6585 = vld [vmem:[%s6584] ss:$2 sm:$0xff]
        %s6586 = scalar_lea.vmem [#allocation4], 81
        %v6587 = vld [vmem:[%s6586] ss:$2 sm:$0xff]
        %s6588 = scalar_lea.vmem [#allocation4], 97
        %v6589 = vld [vmem:[%s6588] ss:$2 sm:$0xff]
        %s6590 = scalar_lea.vmem [#allocation4], 113
        %v6591 = vld [vmem:[%s6590] ss:$2 sm:$0xff]
        %v6592 = vmax.f32 %v6561, %v6577
        %v6593 = vmax.f32 %v6563, %v6579
        %v6594 = vmax.f32 %v6565, %v6581
        %v6595 = vmax.f32 %v6567, %v6583
        %v6596 = vmax.f32 %v6569, %v6585
        %v6597 = vmax.f32 %v6571, %v6587
        %v6598 = vmax.f32 %v6573, %v6589
        %v6599 = vmax.f32 %v6575, %v6591
        %v6600 = vpack.c.bf16 %v6593, %v6592
        %v6601 = vpack.c.bf16 %v6595, %v6594
        %v6602 = vpack.c.bf16 %v6597, %v6596
        %v6603 = vpack.c.bf16 %v6599, %v6598
        %s6604 = smul.u32 %s1394, 4
        %v6609 = vunpack.c.l.b16 %v6600
        %v6610 = vunpack.c.h.b16 %v6600
        %v6611 = vunpack.c.l.b16 %v6601
        %v6612 = vunpack.c.h.b16 %v6601
        %v6613 = vunpack.c.l.b16 %v6602
        %v6614 = vunpack.c.h.b16 %v6602
        %v6615 = vunpack.c.l.b16 %v6603
        %v6616 = vunpack.c.h.b16 %v6603
        %v6617 = vpack.c.b16 %v6609, %v6609
        %v6618 = vpack.c.b16 %v6610, %v6610
        %v6619 = vpack.c.b16 %v6611, %v6611
        %v6620 = vpack.c.b16 %v6612, %v6612
        %v6621 = vpack.c.b16 %v6613, %v6613
        %v6622 = vpack.c.b16 %v6614, %v6614
        %v6623 = vpack.c.b16 %v6615, %v6615
        %v6624 = vpack.c.b16 %v6616, %v6616
        %s6633 = smul.u32 %s6604, 2
        %s6634 = smul.addr %s6633, 4
        %s6635 = scalar_lea.vmem %s224, %s6634
        %vm6636 = vcmask 519168
        %6637 = vst.msk [vmem:[%s6635] sm:$0xf] %vm6636, %v6617
        %6638 = vst.msk [vmem:[%s6635 + $0x4] sm:$0xf] %vm6636, %v6618
        %6639 = vst.msk [vmem:[%s6635 + $0x8] sm:$0xf] %vm6636, %v6619
        %6640 = vst.msk [vmem:[%s6635 + $0xc] sm:$0xf] %vm6636, %v6620
        %6641 = vst.msk [vmem:[%s6635 + $0x10] sm:$0xf] %vm6636, %v6621
        %6642 = vst.msk [vmem:[%s6635 + $0x14] sm:$0xf] %vm6636, %v6622
        %6643 = vst.msk [vmem:[%s6635 + $0x18] sm:$0xf] %vm6636, %v6623
        %6644 = vst.msk [vmem:[%s6635 + $0x1c] sm:$0xf] %vm6636, %v6624
      $region52: #{simple_cnn_forward.2} parent=39 // loop_footer
        %s1398 = sadd.s32 1, %s1394
      $region53: #{simple_cnn_forward.2} parent=39 // loop_footer_branch
        %1393 = sbr.rel target = $region49
      $region54: #{simple_cnn_forward.2} parent=39 // loop_exit
        _
      %p6645 = scmp.lt.s32.totalorder %s16, 1
      %s6646 = scalar_select %p6645, %s16, 1
      %s6647 = smul.addr %s6646, 32
      %s6648 = smul.addr %s6647, 4
      %s6649 = scalar_lea.vmem %s5, %s6648
      // Predicated region
      $region55: #{simple_cnn_forward.2} parent=39 // pred_check
        %p6650 = pneg %p144
      $region56: #{simple_cnn_forward.2} parent=39 // pred_check_branch
        %6652 = sbr.rel (%p6650) target = $region58
      $region57: #{simple_cnn_forward.2} parent=39 // pred_region
        _
      $region58: #{simple_cnn_forward.2} parent=39 // pred_fallthru
        _
    $region40: #{simple_cnn_forward.2} parent=5 // pred_fallthru
      _
    %p6653 = scmp.le.s32.totalorder 2, %s11
    // Predicated region
    $region59: #{simple_cnn_forward.2} parent=5 // pred_check
      %p6654 = pneg %p6653
    $region60: #{simple_cnn_forward.2} parent=5 // pred_check_branch
      %6656 = sbr.rel (%p6654) target = $region62
    $region61: #{simple_cnn_forward.2} parent=5 // pred_region
      %s6657 = ssub.s32 %s11, 2
      // Predicated region
      $region63: #{simple_cnn_forward.2} parent=61 // pred_check
        %p6658 = pneg %p150
      $region64: #{simple_cnn_forward.2} parent=61 // pred_check_branch
        %6660 = sbr.rel (%p6658) target = $region66
      $region65: #{simple_cnn_forward.2} parent=61 // pred_region
        %p6661 = scmp.lt.s32.totalorder %s17, 1
        %s6662 = scalar_select %p6661, %s17, 1
        %s6663 = smul.addr %s6662, 32
        %s6664 = smul.addr %s6663, 4
        %s6665 = scalar_lea.vmem %s5, %s6664
      $region66: #{simple_cnn_forward.2} parent=61 // pred_fallthru
        _
    $region62: #{simple_cnn_forward.2} parent=5 // pred_fallthru
      _
  $region6: #{simple_cnn_forward.2} parent=0 // loop_footer
    %s15 = sadd.s32 1, %s11
  $region7: #{simple_cnn_forward.2} parent=0 // loop_footer_branch
    %10 = sbr.rel target = $region3
  $region8: #{simple_cnn_forward.2} parent=0 // loop_exit
    _

</llo_original>
